<compile_context>
chip_gen: v6e
topology: v6e:2x2x1
jax: 0.10.0
libtpu: 0.0.40
codegen_flags: <defaults>
</compile_context>

<pallas_src>
import jax
import jax.numpy as jnp
from jax.experimental import pallas as pl
from jax.experimental.pallas import tpu as pltpu

NEG_SLOPE = 0.01          # nn.LeakyReLU default negative_slope
BN_EPS = 1e-5             # nn.BatchNorm2d default eps


# -----------------------------------------------------------------------------
# Fused kernel builder:
#   stage 1: conv1 (9 accumulating dots over shifted slabs) + BN-shift + LeakyReLU
#   hidden : masked + written into a zero-haloed VMEM scratch (never hits HBM)
#   stage 2: conv2 (9 accumulating dots over the scratch) + BN-shift + LeakyReLU
# -----------------------------------------------------------------------------
def _make_conv_h_call(B, H, W, C_in, mid, C_out, out_dtype=jnp.float32):
    P = W + 2                     # padded row width
    M = H * P                     # flat output rows per image (incl. 2 junk cols/row)
    XROWS = (H + 2) * P + 2       # flat padded-input rows (+2 so every tap slice is in bounds)

    def kernel(x_ref, w1_ref, s1_ref, w2_ref, s2_ref, o_ref, hpad_ref):
        # ---- stage 1: conv1 + folded BN + LeakyReLU --------------------------
        acc = jnp.zeros((M, mid), jnp.float32)
        for dh in range(3):
            for dw in range(3):
                off = dh * P + dw
                acc += jnp.dot(x_ref[off:off + M, :], w1_ref[dh * 3 + dw],
                               preferred_element_type=jnp.float32)
        h = acc + s1_ref[...]
        h = jnp.where(h >= 0.0, h, NEG_SLOPE * h)

        # zero the 2 junk columns of every spatial row so they become the halo
        col = jax.lax.broadcasted_iota(jnp.int32, (M, 1), 0) % P
        h = jnp.where(col < W, h, 0.0)

        # ---- re-pad the hidden activation inside VMEM (1-pixel zero halo) ----
        hpad_ref[...] = jnp.zeros_like(hpad_ref)
        hpad_ref[P + 1:P + 1 + M, :] = h

        # ---- stage 2: conv2 + folded BN + LeakyReLU --------------------------
        acc2 = jnp.zeros((M, C_out), jnp.float32)
        for dh in range(3):
            for dw in range(3):
                off = dh * P + dw
                acc2 += jnp.dot(hpad_ref[off:off + M, :], w2_ref[dh * 3 + dw],
                                preferred_element_type=jnp.float32)
        y = acc2 + s2_ref[...]
        o_ref[...] = jnp.where(y >= 0.0, y, NEG_SLOPE * y).astype(o_ref.dtype)

    flops = 2 * B * M * 9 * (C_in * mid + mid * C_out)
    bytes_accessed = 4 * (B * XROWS * C_in + B * M * C_out
                          + 9 * (C_in * mid + mid * C_out) + mid + C_out)

    return pl.pallas_call(
        kernel,
        out_shape=jax.ShapeDtypeStruct((B, M, C_out), out_dtype),
        grid=(B,),
        in_specs=[
            pl.BlockSpec((None, XROWS, C_in), lambda b: (b, 0, 0)),   # flat padded image
            pl.BlockSpec((9, C_in, mid), lambda b: (0, 0, 0)),        # conv1 weights (VMEM-resident)
            pl.BlockSpec((1, mid), lambda b: (0, 0)),                 # conv1 BN shift
            pl.BlockSpec((9, mid, C_out), lambda b: (0, 0, 0)),       # conv2 weights (VMEM-resident)
            pl.BlockSpec((1, C_out), lambda b: (0, 0)),               # conv2 BN shift
        ],
        out_specs=pl.BlockSpec((None, M, C_out), lambda b: (b, 0, 0)),
        scratch_shapes=[pltpu.VMEM((XROWS, mid), jnp.float32)],       # hidden act stays in VMEM
        compiler_params=pltpu.CompilerParams(
            dimension_semantics=("parallel",),                        # batch across TCs (v7x)
        ),
        cost_estimate=pl.CostEstimate(flops=flops, transcendentals=0,
                                      bytes_accessed=bytes_accessed),
    )


# -----------------------------------------------------------------------------
# Host-side glue: conv-weight / BatchNorm folding and layout plumbing
# -----------------------------------------------------------------------------
def _fold_conv_bn(w, b, gamma, beta, mean, var):
    """PyTorch Conv2d weight (C_out, C_in, 3, 3) -> (9, C_in, C_out) with the
    BN scale folded into the weight columns, plus per-channel shift folding the
    conv bias + BatchNorm (eval mode)."""
    c_out, c_in = w.shape[0], w.shape[1]
    scale = gamma * jax.lax.rsqrt(var + BN_EPS)
    w_eff = jnp.transpose(w, (2, 3, 1, 0)).reshape(9, c_in, c_out)   # (kh*3+kw, cin, cout)
    w_eff = (w_eff * scale[None, None, :]).astype(jnp.float32)
    shift = ((b - mean) * scale + beta).reshape(1, c_out).astype(jnp.float32)
    return w_eff, shift


def conv_h_forward(x_nchw, params):
    """Conv_h.forward(x): x is NCHW like the PyTorch module; returns NCHW."""
    B, C_in, H, W = x_nchw.shape
    P = W + 2

    w1e, s1 = _fold_conv_bn(params["w1"], params["b1"], params["g1"],
                            params["beta1"], params["m1"], params["v1"])
    w2e, s2 = _fold_conv_bn(params["w2"], params["b2"], params["g2"],
                            params["beta2"], params["m2"], params["v2"])
    mid, c_out = w1e.shape[2], w2e.shape[2]

    # NCHW -> NHWC, 1-pixel spatial zero pad, flatten (H+2, W+2) -> rows, and
    # append 2 extra zero rows so every in-kernel tap slice stays in bounds.
    x = jnp.transpose(x_nchw, (0, 2, 3, 1))
    x = jnp.pad(x, ((0, 0), (1, 1), (1, 1), (0, 0)))
    x = x.reshape(B, (H + 2) * P, C_in)
    x = jnp.pad(x, ((0, 0), (0, 2), (0, 0)))

    call = _make_conv_h_call(B, H, W, C_in, mid, c_out)
    out = call(x, w1e, s1, w2e, s2)                       # (B, H*(W+2), C_out)

    # Drop the 2 junk columns of each spatial row, back to NCHW.
    y = out.reshape(B, H, P, c_out)[:, :, :W, :]
    return jnp.transpose(y, (0, 3, 1, 2))


def init_params(key, c_in, c_out):
    mid = (c_in + c_out) // 2
    k1, k2, k3, k4 = jax.random.split(key, 4)
    s = 0.1
    return dict(
        # Conv2d(C_in, mid, 3, 1, 1) + BatchNorm2d(mid) (PyTorch default BN stats)
        w1=s * jax.random.normal(k1, (mid, c_in, 3, 3), jnp.float32),
        b1=s * jax.random.normal(k2, (mid,), jnp.float32),
        g1=jnp.ones((mid,), jnp.float32),
        beta1=jnp.zeros((mid,), jnp.float32),
        m1=jnp.zeros((mid,), jnp.float32),
        v1=jnp.ones((mid,), jnp.float32),
        # Conv2d(mid, C_out, 3, 1, 1) + BatchNorm2d(C_out)
        w2=s * jax.random.normal(k3, (c_out, mid, 3, 3), jnp.float32),
        b2=s * jax.random.normal(k4, (c_out,), jnp.float32),
        g2=jnp.ones((c_out,), jnp.float32),
        beta2=jnp.zeros((c_out,), jnp.float32),
        m2=jnp.zeros((c_out,), jnp.float32),
        v2=jnp.ones((c_out,), jnp.float32),
    )


# -----------------------------------------------------------------------------
# Pure-JAX reference (eval-mode Conv -> BN -> LeakyReLU, twice) for self-check
# -----------------------------------------------------------------------------
def _reference_forward(x, params):
    def block(x, w, b, g, beta, m, v):
        y = jax.lax.conv_general_dilated(
            x, w, window_strides=(1, 1), padding=((1, 1), (1, 1)),
            dimension_numbers=("NCHW", "OIHW", "NCHW"))
        y = y + b[None, :, None, None]
        y = (g[None, :, None, None] * (y - m[None, :, None, None])
             * jax.lax.rsqrt(v[None, :, None, None] + BN_EPS)
             + beta[None, :, None, None])
        return jnp.where(y >= 0.0, y, NEG_SLOPE * y)

    h = block(x, params["w1"], params["b1"], params["g1"],
              params["beta1"], params["m1"], params["v1"])
    return block(h, params["w2"], params["b2"], params["g2"],
                 params["beta2"], params["m2"], params["v2"])


if __name__ == "__main__":
    key = jax.random.PRNGKey(0)
    k_x, k_p = jax.random.split(key, 2)

    B, C_IN, C_OUT, H, W = 2, 4, 8, 16, 16
    x = jax.random.normal(k_x, (B, C_IN, H, W), jnp.float32)
    params = init_params(k_p, C_IN, C_OUT)

    fwd = jax.jit(conv_h_forward)
    out = fwd(x, params)
    jax.block_until_ready(out)

    assert out.shape == (B, C_OUT, H, W), out.shape
    assert bool(jnp.all(jnp.isfinite(out)))

    ref = _reference_forward(x, params)
    max_err = float(jnp.max(jnp.abs(out - ref)))
    assert jnp.allclose(out, ref, atol=1e-2, rtol=1e-2), max_err

    print("KERNEL_OK")
</pallas_src>

<mosaic_0001>
module attributes {stable_mosaic.version = 11 : i64} {
  func.func @kernel(%arg0: i32, %arg1: memref<1x326x4xf32, #tpu.memory_space<vmem>>, %arg2: memref<9x4x6xf32, #tpu.memory_space<vmem>>, %arg3: memref<1x6xf32, #tpu.memory_space<vmem>>, %arg4: memref<9x6x8xf32, #tpu.memory_space<vmem>>, %arg5: memref<1x8xf32, #tpu.memory_space<vmem>>, %arg6: memref<1x288x8xf32, #tpu.memory_space<vmem>>, %arg7: memref<326x6xf32, #tpu.memory_space<vmem>>) attributes {dimension_semantics = [#tpu.dimension_semantics<parallel>], iteration_bounds = array<i64: 2>, scalar_prefetch = 0 : i64, scratch_operands = 1 : i64, tpu.core_type = #tpu.core_type<tc>, window_params = [{transform_indices = @transform_0, window_bounds = array<i64: 1, 326, 4>}, {pipeline_mode = #tpu.pipeline_mode<synchronous>, transform_indices = @transform_1, window_bounds = array<i64: 9, 4, 6>}, {pipeline_mode = #tpu.pipeline_mode<synchronous>, transform_indices = @transform_2, window_bounds = array<i64: 1, 6>}, {pipeline_mode = #tpu.pipeline_mode<synchronous>, transform_indices = @transform_3, window_bounds = array<i64: 9, 6, 8>}, {pipeline_mode = #tpu.pipeline_mode<synchronous>, transform_indices = @transform_4, window_bounds = array<i64: 1, 8>}, {transform_indices = @transform_5, window_bounds = array<i64: 1, 288, 8>}]} {
    %cst = arith.constant 0.000000e+00 : f32
    %0 = vector.broadcast %cst : f32 to vector<288x6xf32>
    %c0 = arith.constant 0 : index
    %c0_0 = arith.constant 0 : index
    %c0_1 = arith.constant 0 : index
    %1 = vector.load %arg1[%c0, %c0_0, %c0_1] : memref<1x326x4xf32, #tpu.memory_space<vmem>>, vector<1x288x4xf32>
    %2 = vector.shape_cast %1 : vector<1x288x4xf32> to vector<288x4xf32>
    %c0_2 = arith.constant 0 : index
    %c0_3 = arith.constant 0 : index
    %c0_4 = arith.constant 0 : index
    %3 = vector.load %arg2[%c0_2, %c0_3, %c0_4] : memref<9x4x6xf32, #tpu.memory_space<vmem>>, vector<1x4x6xf32>
    %4 = vector.shape_cast %3 : vector<1x4x6xf32> to vector<4x6xf32>
    %cst_5 = arith.constant dense<0.000000e+00> : vector<288x6xf32>
    %5 = tpu.matmul %2, %4, %cst_5 {dimension_numbers = #tpu.dot_dimension_numbers<[1], [0], [0], [1], [0, 0, 1, 1], [], []>} : vector<288x4xf32>, vector<4x6xf32>, vector<288x6xf32> -> vector<288x6xf32>
    %6 = arith.addf %0, %5 : vector<288x6xf32>
    %c0_6 = arith.constant 0 : index
    %c1 = arith.constant 1 : index
    %c0_7 = arith.constant 0 : index
    %7 = vector.load %arg1[%c0_6, %c1, %c0_7] : memref<1x326x4xf32, #tpu.memory_space<vmem>>, vector<1x288x4xf32>
    %8 = vector.shape_cast %7 : vector<1x288x4xf32> to vector<288x4xf32>
    %c1_8 = arith.constant 1 : index
    %c0_9 = arith.constant 0 : index
    %c0_10 = arith.constant 0 : index
    %9 = vector.load %arg2[%c1_8, %c0_9, %c0_10] : memref<9x4x6xf32, #tpu.memory_space<vmem>>, vector<1x4x6xf32>
    %10 = vector.shape_cast %9 : vector<1x4x6xf32> to vector<4x6xf32>
    %cst_11 = arith.constant dense<0.000000e+00> : vector<288x6xf32>
    %11 = tpu.matmul %8, %10, %cst_11 {dimension_numbers = #tpu.dot_dimension_numbers<[1], [0], [0], [1], [0, 0, 1, 1], [], []>} : vector<288x4xf32>, vector<4x6xf32>, vector<288x6xf32> -> vector<288x6xf32>
    %12 = arith.addf %6, %11 : vector<288x6xf32>
    %c0_12 = arith.constant 0 : index
    %c2 = arith.constant 2 : index
    %c0_13 = arith.constant 0 : index
    %13 = vector.load %arg1[%c0_12, %c2, %c0_13] : memref<1x326x4xf32, #tpu.memory_space<vmem>>, vector<1x288x4xf32>
    %14 = vector.shape_cast %13 : vector<1x288x4xf32> to vector<288x4xf32>
    %c2_14 = arith.constant 2 : index
    %c0_15 = arith.constant 0 : index
    %c0_16 = arith.constant 0 : index
    %15 = vector.load %arg2[%c2_14, %c0_15, %c0_16] : memref<9x4x6xf32, #tpu.memory_space<vmem>>, vector<1x4x6xf32>
    %16 = vector.shape_cast %15 : vector<1x4x6xf32> to vector<4x6xf32>
    %cst_17 = arith.constant dense<0.000000e+00> : vector<288x6xf32>
    %17 = tpu.matmul %14, %16, %cst_17 {dimension_numbers = #tpu.dot_dimension_numbers<[1], [0], [0], [1], [0, 0, 1, 1], [], []>} : vector<288x4xf32>, vector<4x6xf32>, vector<288x6xf32> -> vector<288x6xf32>
    %18 = arith.addf %12, %17 : vector<288x6xf32>
    %c0_18 = arith.constant 0 : index
    %c18 = arith.constant 18 : index
    %c0_19 = arith.constant 0 : index
    %19 = vector.load %arg1[%c0_18, %c18, %c0_19] : memref<1x326x4xf32, #tpu.memory_space<vmem>>, vector<1x288x4xf32>
    %20 = vector.shape_cast %19 : vector<1x288x4xf32> to vector<288x4xf32>
    %c3 = arith.constant 3 : index
    %c0_20 = arith.constant 0 : index
    %c0_21 = arith.constant 0 : index
    %21 = vector.load %arg2[%c3, %c0_20, %c0_21] : memref<9x4x6xf32, #tpu.memory_space<vmem>>, vector<1x4x6xf32>
    %22 = vector.shape_cast %21 : vector<1x4x6xf32> to vector<4x6xf32>
    %cst_22 = arith.constant dense<0.000000e+00> : vector<288x6xf32>
    %23 = tpu.matmul %20, %22, %cst_22 {dimension_numbers = #tpu.dot_dimension_numbers<[1], [0], [0], [1], [0, 0, 1, 1], [], []>} : vector<288x4xf32>, vector<4x6xf32>, vector<288x6xf32> -> vector<288x6xf32>
    %24 = arith.addf %18, %23 : vector<288x6xf32>
    %c0_23 = arith.constant 0 : index
    %c19 = arith.constant 19 : index
    %c0_24 = arith.constant 0 : index
    %25 = vector.load %arg1[%c0_23, %c19, %c0_24] : memref<1x326x4xf32, #tpu.memory_space<vmem>>, vector<1x288x4xf32>
    %26 = vector.shape_cast %25 : vector<1x288x4xf32> to vector<288x4xf32>
    %c4 = arith.constant 4 : index
    %c0_25 = arith.constant 0 : index
    %c0_26 = arith.constant 0 : index
    %27 = vector.load %arg2[%c4, %c0_25, %c0_26] : memref<9x4x6xf32, #tpu.memory_space<vmem>>, vector<1x4x6xf32>
    %28 = vector.shape_cast %27 : vector<1x4x6xf32> to vector<4x6xf32>
    %cst_27 = arith.constant dense<0.000000e+00> : vector<288x6xf32>
    %29 = tpu.matmul %26, %28, %cst_27 {dimension_numbers = #tpu.dot_dimension_numbers<[1], [0], [0], [1], [0, 0, 1, 1], [], []>} : vector<288x4xf32>, vector<4x6xf32>, vector<288x6xf32> -> vector<288x6xf32>
    %30 = arith.addf %24, %29 : vector<288x6xf32>
    %c0_28 = arith.constant 0 : index
    %c20 = arith.constant 20 : index
    %c0_29 = arith.constant 0 : index
    %31 = vector.load %arg1[%c0_28, %c20, %c0_29] : memref<1x326x4xf32, #tpu.memory_space<vmem>>, vector<1x288x4xf32>
    %32 = vector.shape_cast %31 : vector<1x288x4xf32> to vector<288x4xf32>
    %c5 = arith.constant 5 : index
    %c0_30 = arith.constant 0 : index
    %c0_31 = arith.constant 0 : index
    %33 = vector.load %arg2[%c5, %c0_30, %c0_31] : memref<9x4x6xf32, #tpu.memory_space<vmem>>, vector<1x4x6xf32>
    %34 = vector.shape_cast %33 : vector<1x4x6xf32> to vector<4x6xf32>
    %cst_32 = arith.constant dense<0.000000e+00> : vector<288x6xf32>
    %35 = tpu.matmul %32, %34, %cst_32 {dimension_numbers = #tpu.dot_dimension_numbers<[1], [0], [0], [1], [0, 0, 1, 1], [], []>} : vector<288x4xf32>, vector<4x6xf32>, vector<288x6xf32> -> vector<288x6xf32>
    %36 = arith.addf %30, %35 : vector<288x6xf32>
    %c0_33 = arith.constant 0 : index
    %c36 = arith.constant 36 : index
    %c0_34 = arith.constant 0 : index
    %37 = vector.load %arg1[%c0_33, %c36, %c0_34] : memref<1x326x4xf32, #tpu.memory_space<vmem>>, vector<1x288x4xf32>
    %38 = vector.shape_cast %37 : vector<1x288x4xf32> to vector<288x4xf32>
    %c6 = arith.constant 6 : index
    %c0_35 = arith.constant 0 : index
    %c0_36 = arith.constant 0 : index
    %39 = vector.load %arg2[%c6, %c0_35, %c0_36] : memref<9x4x6xf32, #tpu.memory_space<vmem>>, vector<1x4x6xf32>
    %40 = vector.shape_cast %39 : vector<1x4x6xf32> to vector<4x6xf32>
    %cst_37 = arith.constant dense<0.000000e+00> : vector<288x6xf32>
    %41 = tpu.matmul %38, %40, %cst_37 {dimension_numbers = #tpu.dot_dimension_numbers<[1], [0], [0], [1], [0, 0, 1, 1], [], []>} : vector<288x4xf32>, vector<4x6xf32>, vector<288x6xf32> -> vector<288x6xf32>
    %42 = arith.addf %36, %41 : vector<288x6xf32>
    %c0_38 = arith.constant 0 : index
    %c37 = arith.constant 37 : index
    %c0_39 = arith.constant 0 : index
    %43 = vector.load %arg1[%c0_38, %c37, %c0_39] : memref<1x326x4xf32, #tpu.memory_space<vmem>>, vector<1x288x4xf32>
    %44 = vector.shape_cast %43 : vector<1x288x4xf32> to vector<288x4xf32>
    %c7 = arith.constant 7 : index
    %c0_40 = arith.constant 0 : index
    %c0_41 = arith.constant 0 : index
    %45 = vector.load %arg2[%c7, %c0_40, %c0_41] : memref<9x4x6xf32, #tpu.memory_space<vmem>>, vector<1x4x6xf32>
    %46 = vector.shape_cast %45 : vector<1x4x6xf32> to vector<4x6xf32>
    %cst_42 = arith.constant dense<0.000000e+00> : vector<288x6xf32>
    %47 = tpu.matmul %44, %46, %cst_42 {dimension_numbers = #tpu.dot_dimension_numbers<[1], [0], [0], [1], [0, 0, 1, 1], [], []>} : vector<288x4xf32>, vector<4x6xf32>, vector<288x6xf32> -> vector<288x6xf32>
    %48 = arith.addf %42, %47 : vector<288x6xf32>
    %c0_43 = arith.constant 0 : index
    %c38 = arith.constant 38 : index
    %c0_44 = arith.constant 0 : index
    %49 = vector.load %arg1[%c0_43, %c38, %c0_44] : memref<1x326x4xf32, #tpu.memory_space<vmem>>, vector<1x288x4xf32>
    %50 = vector.shape_cast %49 : vector<1x288x4xf32> to vector<288x4xf32>
    %c8 = arith.constant 8 : index
    %c0_45 = arith.constant 0 : index
    %c0_46 = arith.constant 0 : index
    %51 = vector.load %arg2[%c8, %c0_45, %c0_46] : memref<9x4x6xf32, #tpu.memory_space<vmem>>, vector<1x4x6xf32>
    %52 = vector.shape_cast %51 : vector<1x4x6xf32> to vector<4x6xf32>
    %cst_47 = arith.constant dense<0.000000e+00> : vector<288x6xf32>
    %53 = tpu.matmul %50, %52, %cst_47 {dimension_numbers = #tpu.dot_dimension_numbers<[1], [0], [0], [1], [0, 0, 1, 1], [], []>} : vector<288x4xf32>, vector<4x6xf32>, vector<288x6xf32> -> vector<288x6xf32>
    %54 = arith.addf %48, %53 : vector<288x6xf32>
    %c0_48 = arith.constant 0 : index
    %c0_49 = arith.constant 0 : index
    %55 = vector.load %arg3[%c0_48, %c0_49] : memref<1x6xf32, #tpu.memory_space<vmem>>, vector<1x6xf32>
    %56 = vector.broadcast %55 : vector<1x6xf32> to vector<288x6xf32>
    %57 = arith.addf %54, %56 : vector<288x6xf32>
    %cst_50 = arith.constant 0.000000e+00 : f32
    %58 = vector.broadcast %cst_50 : f32 to vector<288x6xf32>
    %59 = arith.cmpf oge, %57, %58 : vector<288x6xf32>
    %cst_51 = arith.constant 0.00999999977 : f32
    %60 = vector.broadcast %cst_51 : f32 to vector<288x6xf32>
    %61 = arith.mulf %60, %57 : vector<288x6xf32>
    %62 = arith.select %59, %57, %61 : vector<288x6xi1>, vector<288x6xf32>
    %63 = tpu.iota {dimensions = array<i32: 0>} : vector<288x1xi32>
    %c18_i32 = arith.constant 18 : i32
    %c0_i32 = arith.constant 0 : i32
    %64 = arith.cmpi eq, %c18_i32, %c0_i32 : i32
    %c1_i32 = arith.constant 1 : i32
    %65 = arith.select %64, %c1_i32, %c18_i32 : i32
    %66 = vector.broadcast %65 : i32 to vector<288x1xi32>
    %67 = arith.remsi %63, %66 : vector<288x1xi32>
    %c0_i32_52 = arith.constant 0 : i32
    %68 = vector.broadcast %c0_i32_52 : i32 to vector<288x1xi32>
    %69 = arith.cmpi ne, %67, %68 : vector<288x1xi32>
    %c0_i32_53 = arith.constant 0 : i32
    %70 = vector.broadcast %c0_i32_53 : i32 to vector<288x1xi32>
    %71 = arith.cmpi slt, %67, %70 : vector<288x1xi32>
    %c0_i32_54 = arith.constant 0 : i32
    %72 = arith.cmpi slt, %65, %c0_i32_54 : i32
    %73 = vector.broadcast %72 : i1 to vector<288x1xi1>
    %74 = vector.broadcast %73 : vector<288x1xi1> to vector<288x1xi1>
    %75 = arith.xori %71, %74 : vector<288x1xi1>
    %76 = arith.andi %75, %69 : vector<288x1xi1>
    %77 = vector.broadcast %65 : i32 to vector<288x1xi32>
    %78 = arith.addi %67, %77 : vector<288x1xi32>
    %79 = arith.select %76, %78, %67 : vector<288x1xi1>, vector<288x1xi32>
    %c16_i32 = arith.constant 16 : i32
    %80 = vector.broadcast %c16_i32 : i32 to vector<288x1xi32>
    %81 = arith.cmpi slt, %79, %80 : vector<288x1xi32>
    %cst_55 = arith.constant 0.000000e+00 : f32
    %82 = vector.shape_cast %81 : vector<288x1xi1> to vector<288x1xi1>
    %83 = vector.broadcast %82 : vector<288x1xi1> to vector<288x6xi1>
    %84 = vector.broadcast %cst_55 : f32 to vector<288x6xf32>
    %85 = arith.select %83, %62, %84 : vector<288x6xi1>, vector<288x6xf32>
    %cst_56 = arith.constant 0.000000e+00 : f32
    %86 = vector.broadcast %cst_56 : f32 to vector<326x6xf32>
    %c0_57 = arith.constant 0 : index
    %c0_58 = arith.constant 0 : index
    %87 = vector.load %arg7[%c0_57, %c0_58] : memref<326x6xf32, #tpu.memory_space<vmem>>, vector<326x6xf32>
    tpu.vector_store %arg7[%c0_57, %c0_58], %86 {strides = array<i32>} : memref<326x6xf32, #tpu.memory_space<vmem>>, vector<326x6xf32>,
    %c19_59 = arith.constant 19 : index
    %c0_60 = arith.constant 0 : index
    %88 = vector.load %arg7[%c19_59, %c0_60] : memref<326x6xf32, #tpu.memory_space<vmem>>, vector<288x6xf32>
    tpu.vector_store %arg7[%c19_59, %c0_60], %85 {strides = array<i32>} : memref<326x6xf32, #tpu.memory_space<vmem>>, vector<288x6xf32>,
    %cst_61 = arith.constant 0.000000e+00 : f32
    %89 = vector.broadcast %cst_61 : f32 to vector<288x8xf32>
    %c0_62 = arith.constant 0 : index
    %c0_63 = arith.constant 0 : index
    %90 = vector.load %arg7[%c0_62, %c0_63] : memref<326x6xf32, #tpu.memory_space<vmem>>, vector<288x6xf32>
    %c0_64 = arith.constant 0 : index
    %c0_65 = arith.constant 0 : index
    %c0_66 = arith.constant 0 : index
    %91 = vector.load %arg4[%c0_64, %c0_65, %c0_66] : memref<9x6x8xf32, #tpu.memory_space<vmem>>, vector<1x6x8xf32>
    %92 = vector.shape_cast %91 : vector<1x6x8xf32> to vector<6x8xf32>
    %cst_67 = arith.constant dense<0.000000e+00> : vector<288x8xf32>
    %93 = tpu.matmul %90, %92, %cst_67 {dimension_numbers = #tpu.dot_dimension_numbers<[1], [0], [0], [1], [0, 0, 1, 1], [], []>} : vector<288x6xf32>, vector<6x8xf32>, vector<288x8xf32> -> vector<288x8xf32>
    %94 = arith.addf %89, %93 : vector<288x8xf32>
    %c1_68 = arith.constant 1 : index
    %c0_69 = arith.constant 0 : index
    %95 = vector.load %arg7[%c1_68, %c0_69] : memref<326x6xf32, #tpu.memory_space<vmem>>, vector<288x6xf32>
    %c1_70 = arith.constant 1 : index
    %c0_71 = arith.constant 0 : index
    %c0_72 = arith.constant 0 : index
    %96 = vector.load %arg4[%c1_70, %c0_71, %c0_72] : memref<9x6x8xf32, #tpu.memory_space<vmem>>, vector<1x6x8xf32>
    %97 = vector.shape_cast %96 : vector<1x6x8xf32> to vector<6x8xf32>
    %cst_73 = arith.constant dense<0.000000e+00> : vector<288x8xf32>
    %98 = tpu.matmul %95, %97, %cst_73 {dimension_numbers = #tpu.dot_dimension_numbers<[1], [0], [0], [1], [0, 0, 1, 1], [], []>} : vector<288x6xf32>, vector<6x8xf32>, vector<288x8xf32> -> vector<288x8xf32>
    %99 = arith.addf %94, %98 : vector<288x8xf32>
    %c2_74 = arith.constant 2 : index
    %c0_75 = arith.constant 0 : index
    %100 = vector.load %arg7[%c2_74, %c0_75] : memref<326x6xf32, #tpu.memory_space<vmem>>, vector<288x6xf32>
    %c2_76 = arith.constant 2 : index
    %c0_77 = arith.constant 0 : index
    %c0_78 = arith.constant 0 : index
    %101 = vector.load %arg4[%c2_76, %c0_77, %c0_78] : memref<9x6x8xf32, #tpu.memory_space<vmem>>, vector<1x6x8xf32>
    %102 = vector.shape_cast %101 : vector<1x6x8xf32> to vector<6x8xf32>
    %cst_79 = arith.constant dense<0.000000e+00> : vector<288x8xf32>
    %103 = tpu.matmul %100, %102, %cst_79 {dimension_numbers = #tpu.dot_dimension_numbers<[1], [0], [0], [1], [0, 0, 1, 1], [], []>} : vector<288x6xf32>, vector<6x8xf32>, vector<288x8xf32> -> vector<288x8xf32>
    %104 = arith.addf %99, %103 : vector<288x8xf32>
    %c18_80 = arith.constant 18 : index
    %c0_81 = arith.constant 0 : index
    %105 = vector.load %arg7[%c18_80, %c0_81] : memref<326x6xf32, #tpu.memory_space<vmem>>, vector<288x6xf32>
    %c3_82 = arith.constant 3 : index
    %c0_83 = arith.constant 0 : index
    %c0_84 = arith.constant 0 : index
    %106 = vector.load %arg4[%c3_82, %c0_83, %c0_84] : memref<9x6x8xf32, #tpu.memory_space<vmem>>, vector<1x6x8xf32>
    %107 = vector.shape_cast %106 : vector<1x6x8xf32> to vector<6x8xf32>
    %cst_85 = arith.constant dense<0.000000e+00> : vector<288x8xf32>
    %108 = tpu.matmul %105, %107, %cst_85 {dimension_numbers = #tpu.dot_dimension_numbers<[1], [0], [0], [1], [0, 0, 1, 1], [], []>} : vector<288x6xf32>, vector<6x8xf32>, vector<288x8xf32> -> vector<288x8xf32>
    %109 = arith.addf %104, %108 : vector<288x8xf32>
    %c19_86 = arith.constant 19 : index
    %c0_87 = arith.constant 0 : index
    %110 = vector.load %arg7[%c19_86, %c0_87] : memref<326x6xf32, #tpu.memory_space<vmem>>, vector<288x6xf32>
    %c4_88 = arith.constant 4 : index
    %c0_89 = arith.constant 0 : index
    %c0_90 = arith.constant 0 : index
    %111 = vector.load %arg4[%c4_88, %c0_89, %c0_90] : memref<9x6x8xf32, #tpu.memory_space<vmem>>, vector<1x6x8xf32>
    %112 = vector.shape_cast %111 : vector<1x6x8xf32> to vector<6x8xf32>
    %cst_91 = arith.constant dense<0.000000e+00> : vector<288x8xf32>
    %113 = tpu.matmul %110, %112, %cst_91 {dimension_numbers = #tpu.dot_dimension_numbers<[1], [0], [0], [1], [0, 0, 1, 1], [], []>} : vector<288x6xf32>, vector<6x8xf32>, vector<288x8xf32> -> vector<288x8xf32>
    %114 = arith.addf %109, %113 : vector<288x8xf32>
    %c20_92 = arith.constant 20 : index
    %c0_93 = arith.constant 0 : index
    %115 = vector.load %arg7[%c20_92, %c0_93] : memref<326x6xf32, #tpu.memory_space<vmem>>, vector<288x6xf32>
    %c5_94 = arith.constant 5 : index
    %c0_95 = arith.constant 0 : index
    %c0_96 = arith.constant 0 : index
    %116 = vector.load %arg4[%c5_94, %c0_95, %c0_96] : memref<9x6x8xf32, #tpu.memory_space<vmem>>, vector<1x6x8xf32>
    %117 = vector.shape_cast %116 : vector<1x6x8xf32> to vector<6x8xf32>
    %cst_97 = arith.constant dense<0.000000e+00> : vector<288x8xf32>
    %118 = tpu.matmul %115, %117, %cst_97 {dimension_numbers = #tpu.dot_dimension_numbers<[1], [0], [0], [1], [0, 0, 1, 1], [], []>} : vector<288x6xf32>, vector<6x8xf32>, vector<288x8xf32> -> vector<288x8xf32>
    %119 = arith.addf %114, %118 : vector<288x8xf32>
    %c36_98 = arith.constant 36 : index
    %c0_99 = arith.constant 0 : index
    %120 = vector.load %arg7[%c36_98, %c0_99] : memref<326x6xf32, #tpu.memory_space<vmem>>, vector<288x6xf32>
    %c6_100 = arith.constant 6 : index
    %c0_101 = arith.constant 0 : index
    %c0_102 = arith.constant 0 : index
    %121 = vector.load %arg4[%c6_100, %c0_101, %c0_102] : memref<9x6x8xf32, #tpu.memory_space<vmem>>, vector<1x6x8xf32>
    %122 = vector.shape_cast %121 : vector<1x6x8xf32> to vector<6x8xf32>
    %cst_103 = arith.constant dense<0.000000e+00> : vector<288x8xf32>
    %123 = tpu.matmul %120, %122, %cst_103 {dimension_numbers = #tpu.dot_dimension_numbers<[1], [0], [0], [1], [0, 0, 1, 1], [], []>} : vector<288x6xf32>, vector<6x8xf32>, vector<288x8xf32> -> vector<288x8xf32>
    %124 = arith.addf %119, %123 : vector<288x8xf32>
    %c37_104 = arith.constant 37 : index
    %c0_105 = arith.constant 0 : index
    %125 = vector.load %arg7[%c37_104, %c0_105] : memref<326x6xf32, #tpu.memory_space<vmem>>, vector<288x6xf32>
    %c7_106 = arith.constant 7 : index
    %c0_107 = arith.constant 0 : index
    %c0_108 = arith.constant 0 : index
    %126 = vector.load %arg4[%c7_106, %c0_107, %c0_108] : memref<9x6x8xf32, #tpu.memory_space<vmem>>, vector<1x6x8xf32>
    %127 = vector.shape_cast %126 : vector<1x6x8xf32> to vector<6x8xf32>
    %cst_109 = arith.constant dense<0.000000e+00> : vector<288x8xf32>
    %128 = tpu.matmul %125, %127, %cst_109 {dimension_numbers = #tpu.dot_dimension_numbers<[1], [0], [0], [1], [0, 0, 1, 1], [], []>} : vector<288x6xf32>, vector<6x8xf32>, vector<288x8xf32> -> vector<288x8xf32>
    %129 = arith.addf %124, %128 : vector<288x8xf32>
    %c38_110 = arith.constant 38 : index
    %c0_111 = arith.constant 0 : index
    %130 = vector.load %arg7[%c38_110, %c0_111] : memref<326x6xf32, #tpu.memory_space<vmem>>, vector<288x6xf32>
    %c8_112 = arith.constant 8 : index
    %c0_113 = arith.constant 0 : index
    %c0_114 = arith.constant 0 : index
    %131 = vector.load %arg4[%c8_112, %c0_113, %c0_114] : memref<9x6x8xf32, #tpu.memory_space<vmem>>, vector<1x6x8xf32>
    %132 = vector.shape_cast %131 : vector<1x6x8xf32> to vector<6x8xf32>
    %cst_115 = arith.constant dense<0.000000e+00> : vector<288x8xf32>
    %133 = tpu.matmul %130, %132, %cst_115 {dimension_numbers = #tpu.dot_dimension_numbers<[1], [0], [0], [1], [0, 0, 1, 1], [], []>} : vector<288x6xf32>, vector<6x8xf32>, vector<288x8xf32> -> vector<288x8xf32>
    %134 = arith.addf %129, %133 : vector<288x8xf32>
    %c0_116 = arith.constant 0 : index
    %c0_117 = arith.constant 0 : index
    %135 = vector.load %arg5[%c0_116, %c0_117] : memref<1x8xf32, #tpu.memory_space<vmem>>, vector<1x8xf32>
    %136 = vector.broadcast %135 : vector<1x8xf32> to vector<288x8xf32>
    %137 = arith.addf %134, %136 : vector<288x8xf32>
    %cst_118 = arith.constant 0.000000e+00 : f32
    %138 = vector.broadcast %cst_118 : f32 to vector<288x8xf32>
    %139 = arith.cmpf oge, %137, %138 : vector<288x8xf32>
    %cst_119 = arith.constant 0.00999999977 : f32
    %140 = vector.broadcast %cst_119 : f32 to vector<288x8xf32>
    %141 = arith.mulf %140, %137 : vector<288x8xf32>
    %142 = arith.select %139, %137, %141 : vector<288x8xi1>, vector<288x8xf32>
    %c0_120 = arith.constant 0 : index
    %c0_121 = arith.constant 0 : index
    %c0_122 = arith.constant 0 : index
    %143 = vector.load %arg6[%c0_120, %c0_121, %c0_122] : memref<1x288x8xf32, #tpu.memory_space<vmem>>, vector<1x288x8xf32>
    %144 = vector.shape_cast %143 : vector<1x288x8xf32> to vector<288x8xf32>
    %145 = vector.shape_cast %142 : vector<288x8xf32> to vector<1x288x8xf32>
    tpu.vector_store %arg6[%c0_120, %c0_121, %c0_122], %145 {strides = array<i32>} : memref<1x288x8xf32, #tpu.memory_space<vmem>>, vector<1x288x8xf32>,
    return
  }
  func.func @transform_0(%arg0: i32) -> (i32, i32, i32) {
    %c0_i32 = arith.constant 0 : i32
    %c0_i32_0 = arith.constant 0 : i32
    %c0_i32_1 = arith.constant 0 : i32
    return %arg0, %c0_i32, %c0_i32_0 : i32, i32, i32
  }
  func.func @transform_1(%arg0: i32) -> (i32, i32, i32) {
    %c0_i32 = arith.constant 0 : i32
    %c0_i32_0 = arith.constant 0 : i32
    %c0_i32_1 = arith.constant 0 : i32
    %c0_i32_2 = arith.constant 0 : i32
    return %c0_i32, %c0_i32_0, %c0_i32_1 : i32, i32, i32
  }
  func.func @transform_2(%arg0: i32) -> (i32, i32) {
    %c0_i32 = arith.constant 0 : i32
    %c0_i32_0 = arith.constant 0 : i32
    %c0_i32_1 = arith.constant 0 : i32
    return %c0_i32, %c0_i32_0 : i32, i32
  }
  func.func @transform_3(%arg0: i32) -> (i32, i32, i32) {
    %c0_i32 = arith.constant 0 : i32
    %c0_i32_0 = arith.constant 0 : i32
    %c0_i32_1 = arith.constant 0 : i32
    %c0_i32_2 = arith.constant 0 : i32
    return %c0_i32, %c0_i32_0, %c0_i32_1 : i32, i32, i32
  }
  func.func @transform_4(%arg0: i32) -> (i32, i32) {
    %c0_i32 = arith.constant 0 : i32
    %c0_i32_0 = arith.constant 0 : i32
    %c0_i32_1 = arith.constant 0 : i32
    return %c0_i32, %c0_i32_0 : i32, i32
  }
  func.func @transform_5(%arg0: i32) -> (i32, i32, i32) {
    %c0_i32 = arith.constant 0 : i32
    %c0_i32_0 = arith.constant 0 : i32
    %c0_i32_1 = arith.constant 0 : i32
    return %arg0, %c0_i32, %c0_i32_0 : i32, i32, i32
  }
}

</mosaic_0001>

<llo_original>
// kernel: conv_h_forward.1
$region0: #{conv_h_forward.1}
  #allocation0 [shape = 'u32[]', space=smem, size = 0x4, offset = 0x4, fixed_abs, tag = 'smem constant byte address 0x4 - core index']
  #allocation1 [shape = 'u32[144,128]{1,0:T(1,128)}', space=vmem, size = 0x12000, scoped, tag = 'internal scratch']
  #allocation2 [shape = 'f32[326,6]{1,0:T(8,128)}', space=vmem, size = 0x29000, scoped, tag = 'scratch operand']
  %s0 = inlined_call_operand.vmem [shape: f32[2,326,4], index: 0, kind: input, shape index: {}]
  %s1 = inlined_call_operand.vmem [shape: f32[9,4,6], index: 1, kind: input, shape index: {}]
  %s2 = inlined_call_operand.vmem [shape: f32[1,6], index: 2, kind: input, shape index: {}]
  %s3 = inlined_call_operand.vmem [shape: f32[9,6,8], index: 3, kind: input, shape index: {}]
  %s4 = inlined_call_operand.vmem [shape: f32[1,8], index: 4, kind: input, shape index: {}]
  %s5 = inlined_call_operand.vmem [shape: f32[2,288,8], index: 5, kind: output, shape index: {}]
  %s6 = sld [smem:[#allocation0]]
  $region53: #{conv_h_forward.1} parent=0
    _
  %s8 = ssub.s32 1, %s6
  %s9 = scalar_select 0, %s8, %s6
  loop: start=0, step=1, limit=4
  $region2: #{conv_h_forward.1} parent=0 // loop_pre_header
    _
  $region3: #{conv_h_forward.1} parent=0 // loop_header
    %s11 = sphi 0, %s15
    %p12 = scmp.ge.s32.totalorder %s11, 4
    %s21 = sphi 0, %s23
    %s24 = sphi 0, %s21
    %s25 = sphi 0, %s24
    %s41 = sphi 0, %s25
    %s45 = sphi 0, %s45
    %s47 = sphi 0, %s45
    %s48 = sphi 0, %s47
    %s62 = sphi 0, %s48
    %s66 = sphi 0, %s66
    %s68 = sphi 0, %s66
    %s69 = sphi 0, %s68
    %s83 = sphi 0, %s69
    %s87 = sphi 0, %s87
    %s89 = sphi 0, %s87
    %s90 = sphi 0, %s89
    %s104 = sphi 0, %s90
    %s108 = sphi 0, %s108
    %s110 = sphi 0, %s108
    %s111 = sphi 0, %s110
    %s125 = sphi 0, %s111
    %s131 = sphi 0, %s133
    %s134 = sphi 0, %s131
    %s135 = sphi 0, %s134
    %s151 = sphi 0, %s135
  $region4: #{conv_h_forward.1} parent=0 // loop_header_branch
    %14 = sbr.rel (%p12) target = $region8
  $region5: #{conv_h_forward.1} parent=0 // loop_body
    %s16 = ssub.s32 %s11, 1
    %s17 = ssub.s32 %s11, 2
    %s18 = sadd.s32 %s11, 1
    %s19 = ssub.s32 %s11, %s18
    %p20 = scmp.eq.s32.totalorder %s19, 0
    %s22 = sadd.s32 %s21, 1
    %s23 = scalar_select %p20, %s21, %s22
    %p26 = pneg %p20
    %p27 = scmp.eq.s32.totalorder %s11, 1
    %p28 = por %p26, %p27
    %p29 = scmp.ne.s32.totalorder %s21, %s24
    %p30 = scmp.eq.s32.totalorder %s11, 0
    %p31 = por %p29, %p30
    %p32 = scmp.ne.s32.totalorder %s21, %s24
    %p33 = scmp.eq.s32.totalorder %s16, 1
    %p34 = por %p32, %p33
    %p35 = scmp.ne.s32.totalorder %s24, %s25
    %p36 = scmp.eq.s32.totalorder %s16, 0
    %p37 = por %p35, %p36
    %p38 = scmp.ne.s32.totalorder %s24, %s25
    %p39 = scmp.eq.s32.totalorder %s17, 1
    %p40 = por %p38, %p39
    %p42 = scmp.ne.s32.totalorder %s25, %s41
    %p43 = scmp.eq.s32.totalorder %s17, 0
    %p44 = por %p42, %p43
    %s46 = sadd.s32 %s45, 1
    %p49 = scmp.eq.s32.totalorder %s11, 1
    %p50 = scmp.ne.s32.totalorder %s45, %s47
    %p51 = scmp.eq.s32.totalorder %s11, 0
    %p52 = por %p50, %p51
    %p53 = scmp.ne.s32.totalorder %s45, %s47
    %p54 = scmp.eq.s32.totalorder %s16, 1
    %p55 = por %p53, %p54
    %p56 = scmp.ne.s32.totalorder %s47, %s48
    %p57 = scmp.eq.s32.totalorder %s16, 0
    %p58 = por %p56, %p57
    %p59 = scmp.ne.s32.totalorder %s47, %s48
    %p60 = scmp.eq.s32.totalorder %s17, 1
    %p61 = por %p59, %p60
    %p63 = scmp.ne.s32.totalorder %s48, %s62
    %p64 = scmp.eq.s32.totalorder %s17, 0
    %p65 = por %p63, %p64
    %s67 = sadd.s32 %s66, 1
    %p70 = scmp.eq.s32.totalorder %s11, 1
    %p71 = scmp.ne.s32.totalorder %s66, %s68
    %p72 = scmp.eq.s32.totalorder %s11, 0
    %p73 = por %p71, %p72
    %p74 = scmp.ne.s32.totalorder %s66, %s68
    %p75 = scmp.eq.s32.totalorder %s16, 1
    %p76 = por %p74, %p75
    %p77 = scmp.ne.s32.totalorder %s68, %s69
    %p78 = scmp.eq.s32.totalorder %s16, 0
    %p79 = por %p77, %p78
    %p80 = scmp.ne.s32.totalorder %s68, %s69
    %p81 = scmp.eq.s32.totalorder %s17, 1
    %p82 = por %p80, %p81
    %p84 = scmp.ne.s32.totalorder %s69, %s83
    %p85 = scmp.eq.s32.totalorder %s17, 0
    %p86 = por %p84, %p85
    %s88 = sadd.s32 %s87, 1
    %p91 = scmp.eq.s32.totalorder %s11, 1
    %p92 = scmp.ne.s32.totalorder %s87, %s89
    %p93 = scmp.eq.s32.totalorder %s11, 0
    %p94 = por %p92, %p93
    %p95 = scmp.ne.s32.totalorder %s87, %s89
    %p96 = scmp.eq.s32.totalorder %s16, 1
    %p97 = por %p95, %p96
    %p98 = scmp.ne.s32.totalorder %s89, %s90
    %p99 = scmp.eq.s32.totalorder %s16, 0
    %p100 = por %p98, %p99
    %p101 = scmp.ne.s32.totalorder %s89, %s90
    %p102 = scmp.eq.s32.totalorder %s17, 1
    %p103 = por %p101, %p102
    %p105 = scmp.ne.s32.totalorder %s90, %s104
    %p106 = scmp.eq.s32.totalorder %s17, 0
    %p107 = por %p105, %p106
    %s109 = sadd.s32 %s108, 1
    %p112 = scmp.eq.s32.totalorder %s11, 1
    %p113 = scmp.ne.s32.totalorder %s108, %s110
    %p114 = scmp.eq.s32.totalorder %s11, 0
    %p115 = por %p113, %p114
    %p116 = scmp.ne.s32.totalorder %s108, %s110
    %p117 = scmp.eq.s32.totalorder %s16, 1
    %p118 = por %p116, %p117
    %p119 = scmp.ne.s32.totalorder %s110, %s111
    %p120 = scmp.eq.s32.totalorder %s16, 0
    %p121 = por %p119, %p120
    %p122 = scmp.ne.s32.totalorder %s110, %s111
    %p123 = scmp.eq.s32.totalorder %s17, 1
    %p124 = por %p122, %p123
    %p126 = scmp.ne.s32.totalorder %s111, %s125
    %p127 = scmp.eq.s32.totalorder %s17, 0
    %p128 = por %p126, %p127
    %s129 = ssub.s32 %s11, %s18
    %p130 = scmp.eq.s32.totalorder %s129, 0
    %s132 = sadd.s32 %s131, 1
    %s133 = scalar_select %p130, %s131, %s132
    %p136 = pneg %p130
    %p137 = scmp.eq.s32.totalorder %s11, 1
    %p138 = por %p136, %p137
    %p139 = scmp.ne.s32.totalorder %s131, %s134
    %p140 = scmp.eq.s32.totalorder %s11, 0
    %p141 = por %p139, %p140
    %p142 = scmp.ne.s32.totalorder %s131, %s134
    %p143 = scmp.eq.s32.totalorder %s16, 1
    %p144 = por %p142, %p143
    %p145 = scmp.ne.s32.totalorder %s134, %s135
    %p146 = scmp.eq.s32.totalorder %s16, 0
    %p147 = por %p145, %p146
    %p148 = scmp.ne.s32.totalorder %s134, %s135
    %p149 = scmp.eq.s32.totalorder %s17, 1
    %p150 = por %p148, %p149
    %p152 = scmp.ne.s32.totalorder %s135, %s151
    %p153 = scmp.eq.s32.totalorder %s17, 0
    %p154 = por %p152, %p153
    %p155 = scmp.le.s32.totalorder 1, %s11
    %p156 = scmp.lt.s32.totalorder %s11, 3
    %p157 = pnand %p155, %p156
    %p158 = pneg %p157
    // Predicated region
    $region9: #{conv_h_forward.1} parent=5 // pred_check
      _
    $region10: #{conv_h_forward.1} parent=5 // pred_check_branch
      %160 = sbr.rel (%p157) target = $region12
    $region11: #{conv_h_forward.1} parent=5 // pred_region
      %s161 = ssub.s32 %s11, 1
      // Predicated region
      $region13: #{conv_h_forward.1} parent=11 // pred_check
        %p162 = pneg %p58
      $region14: #{conv_h_forward.1} parent=11 // pred_check_branch
        %164 = sbr.rel (%p162) target = $region16
      $region15: #{conv_h_forward.1} parent=11 // pred_region
        _
      $region16: #{conv_h_forward.1} parent=11 // pred_fallthru
        _
      // Predicated region
      $region17: #{conv_h_forward.1} parent=11 // pred_check
        %p165 = pneg %p79
      $region18: #{conv_h_forward.1} parent=11 // pred_check_branch
        %167 = sbr.rel (%p165) target = $region20
      $region19: #{conv_h_forward.1} parent=11 // pred_region
        _
      $region20: #{conv_h_forward.1} parent=11 // pred_fallthru
        _
      // Predicated region
      $region21: #{conv_h_forward.1} parent=11 // pred_check
        %p168 = pneg %p100
      $region22: #{conv_h_forward.1} parent=11 // pred_check_branch
        %170 = sbr.rel (%p168) target = $region24
      $region23: #{conv_h_forward.1} parent=11 // pred_region
        _
      $region24: #{conv_h_forward.1} parent=11 // pred_fallthru
        _
      // Predicated region
      $region25: #{conv_h_forward.1} parent=11 // pred_check
        %p171 = pneg %p121
      $region26: #{conv_h_forward.1} parent=11 // pred_check_branch
        %173 = sbr.rel (%p171) target = $region28
      $region27: #{conv_h_forward.1} parent=11 // pred_region
        _
      $region28: #{conv_h_forward.1} parent=11 // pred_fallthru
        _
    $region12: #{conv_h_forward.1} parent=5 // pred_fallthru
      _
    %p174 = scmp.lt.s32.totalorder %s11, 2
    // Predicated region
    $region29: #{conv_h_forward.1} parent=5 // pred_check
      %p175 = pneg %p174
    $region30: #{conv_h_forward.1} parent=5 // pred_check_branch
      %177 = sbr.rel (%p175) target = $region32
    $region31: #{conv_h_forward.1} parent=5 // pred_region
      // Predicated region
      $region33: #{conv_h_forward.1} parent=31 // pred_check
        %p178 = pneg %p31
      $region34: #{conv_h_forward.1} parent=31 // pred_check_branch
        %180 = sbr.rel (%p178) target = $region36
      $region35: #{conv_h_forward.1} parent=31 // pred_region
        %p181 = scmp.lt.s32.totalorder %s11, 1
        %s182 = scalar_select %p181, %s11, 1
        %s183 = smul.addr %s182, 41
        %s184 = smul.addr %s183, 8
        %s185 = scalar_lea.vmem %s0, %s184
      $region36: #{conv_h_forward.1} parent=31 // pred_fallthru
        _
    $region32: #{conv_h_forward.1} parent=5 // pred_fallthru
      _
    %p186 = scmp.le.s32.totalorder 1, %s11
    %p187 = scmp.lt.s32.totalorder %s11, 3
    %p188 = pnand %p186, %p187
    %p189 = pneg %p188
    // Predicated region
    $region37: #{conv_h_forward.1} parent=5 // pred_check
      _
    $region38: #{conv_h_forward.1} parent=5 // pred_check_branch
      %191 = sbr.rel (%p188) target = $region40
    $region39: #{conv_h_forward.1} parent=5 // pred_region
      %s192 = ssub.s32 %s11, 1
      %p193 = scmp.lt.s32.totalorder %s16, 1
      %s194 = scalar_select %p193, %s16, 1
      %s195 = smul.addr %s194, 41
      %s196 = smul.addr %s195, 8
      %s197 = scalar_lea.vmem %s0, %s196
      %p198 = pneg %p37
      %p199 = pneg %p34
      %p200 = pneg %p58
      %p201 = pneg %p55
      %p202 = pneg %p79
      %p203 = pneg %p76
      %p204 = pneg %p100
      %p205 = pneg %p97
      %p206 = pneg %p121
      %p207 = pneg %p118
      %p208 = pneg %p147
      %p209 = pneg %p144
      %p210 = scmp.lt.s32.totalorder %s16, 1
      %s211 = scalar_select %p210, %s16, 1
      %s212 = smul.addr %s211, 36
      %s213 = smul.addr %s212, 8
      %s214 = scalar_lea.vmem %s5, %s213
      %p215 = scmp.lt.s32.totalorder %s16, 1
      %s216 = scalar_select %p215, %s16, 1
      %s217 = smul.addr %s216, 41
      %s218 = smul.addr %s217, 8
      %s219 = scalar_lea.vmem %s0, %s218
      %p220 = scmp.lt.s32.totalorder %s16, 1
      %s221 = scalar_select %p220, %s16, 1
      %s222 = smul.addr %s221, 36
      %s223 = smul.addr %s222, 8
      %s224 = scalar_lea.vmem %s5, %s223
      %v225 = vld [vmem:[%s219] sm:$0xff]
      %v226 = vld [vmem:[%s219 + $0x8] sm:$0xff]
      %v227 = vld [vmem:[%s219 + $0x10] sm:$0xff]
      %v228 = vld [vmem:[%s219 + $0x18] sm:$0xff]
      %v229 = vld [vmem:[%s219 + $0x20] sm:$0xff]
      %v230 = vld [vmem:[%s219 + $0x28] sm:$0xff]
      %v231 = vld [vmem:[%s219 + $0x30] sm:$0xff]
      %v232 = vld [vmem:[%s219 + $0x38] sm:$0xff]
      %v233 = vld [vmem:[%s219 + $0x40] sm:$0xff]
      %v234 = vld [vmem:[%s219 + $0x48] sm:$0xff]
      %v235 = vld [vmem:[%s219 + $0x50] sm:$0xff]
      %v236 = vld [vmem:[%s219 + $0x58] sm:$0xff]
      %v237 = vld [vmem:[%s219 + $0x60] sm:$0xff]
      %v238 = vld [vmem:[%s219 + $0x68] sm:$0xff]
      %v239 = vld [vmem:[%s219 + $0x70] sm:$0xff]
      %v240 = vld [vmem:[%s219 + $0x78] sm:$0xff]
      %v241 = vld [vmem:[%s219 + $0x80] sm:$0xff]
      %v242 = vld [vmem:[%s219 + $0x88] sm:$0xff]
      %v243 = vld [vmem:[%s219 + $0x90] sm:$0xff]
      %v244 = vld [vmem:[%s219 + $0x98] sm:$0xff]
      %v245 = vld [vmem:[%s219 + $0xa0] sm:$0xff]
      %v246 = vld [vmem:[%s219 + $0xa8] sm:$0xff]
      %v247 = vld [vmem:[%s219 + $0xb0] sm:$0xff]
      %v248 = vld [vmem:[%s219 + $0xb8] sm:$0xff]
      %v249 = vld [vmem:[%s219 + $0xc0] sm:$0xff]
      %v250 = vld [vmem:[%s219 + $0xc8] sm:$0xff]
      %v251 = vld [vmem:[%s219 + $0xd0] sm:$0xff]
      %v252 = vld [vmem:[%s219 + $0xd8] sm:$0xff]
      %v253 = vld [vmem:[%s219 + $0xe0] sm:$0xff]
      %v254 = vld [vmem:[%s219 + $0xe8] sm:$0xff]
      %v255 = vld [vmem:[%s219 + $0xf0] sm:$0xff]
      %v256 = vld [vmem:[%s219 + $0xf8] sm:$0xff]
      %v257 = vld [vmem:[%s219 + $0x100] sm:$0xff]
      %v258 = vld [vmem:[%s219 + $0x108] sm:$0xff]
      %v259 = vld [vmem:[%s219 + $0x110] sm:$0xff]
      %v260 = vld [vmem:[%s219 + $0x118] sm:$0xff]
      %v261 = vld [vmem:[%s1] sm:$0xf]
      %v262 = vld [vmem:[%s219 + $0x1] sm:$0xff]
      %v263 = vld [vmem:[%s219 + $0x9] sm:$0xff]
      %v264 = vld [vmem:[%s219 + $0x11] sm:$0xff]
      %v265 = vld [vmem:[%s219 + $0x19] sm:$0xff]
      %v266 = vld [vmem:[%s219 + $0x21] sm:$0xff]
      %v267 = vld [vmem:[%s219 + $0x29] sm:$0xff]
      %v268 = vld [vmem:[%s219 + $0x31] sm:$0xff]
      %v269 = vld [vmem:[%s219 + $0x39] sm:$0xff]
      %v270 = vld [vmem:[%s219 + $0x41] sm:$0xff]
      %v271 = vld [vmem:[%s219 + $0x49] sm:$0xff]
      %v272 = vld [vmem:[%s219 + $0x51] sm:$0xff]
      %v273 = vld [vmem:[%s219 + $0x59] sm:$0xff]
      %v274 = vld [vmem:[%s219 + $0x61] sm:$0xff]
      %v275 = vld [vmem:[%s219 + $0x69] sm:$0xff]
      %v276 = vld [vmem:[%s219 + $0x71] sm:$0xff]
      %v277 = vld [vmem:[%s219 + $0x79] sm:$0xff]
      %v278 = vld [vmem:[%s219 + $0x81] sm:$0xff]
      %v279 = vld [vmem:[%s219 + $0x89] sm:$0xff]
      %v280 = vld [vmem:[%s219 + $0x91] sm:$0xff]
      %v281 = vld [vmem:[%s219 + $0x99] sm:$0xff]
      %v282 = vld [vmem:[%s219 + $0xa1] sm:$0xff]
      %v283 = vld [vmem:[%s219 + $0xa9] sm:$0xff]
      %v284 = vld [vmem:[%s219 + $0xb1] sm:$0xff]
      %v285 = vld [vmem:[%s219 + $0xb9] sm:$0xff]
      %v286 = vld [vmem:[%s219 + $0xc1] sm:$0xff]
      %v287 = vld [vmem:[%s219 + $0xc9] sm:$0xff]
      %v288 = vld [vmem:[%s219 + $0xd1] sm:$0xff]
      %v289 = vld [vmem:[%s219 + $0xd9] sm:$0xff]
      %v290 = vld [vmem:[%s219 + $0xe1] sm:$0xff]
      %v291 = vld [vmem:[%s219 + $0xe9] sm:$0xff]
      %v292 = vld [vmem:[%s219 + $0xf1] sm:$0xff]
      %v293 = vld [vmem:[%s219 + $0xf9] sm:$0xff]
      %v294 = vld [vmem:[%s219 + $0x101] sm:$0xff]
      %v295 = vld [vmem:[%s219 + $0x109] sm:$0xff]
      %v296 = vld [vmem:[%s219 + $0x111] sm:$0xff]
      %v297 = vld [vmem:[%s219 + $0x119] sm:$0xff]
      %s298 = scalar_lea.vmem %s1, 4
      %v299 = vld [vmem:[%s298] sm:$0xf]
      %vm300 = vcmask 31744
      %v302 = vsel %vm300, %v262, 0
      %v305 = vsel %vm300, %v263, 0
      %v308 = vsel %vm300, %v264, 0
      %v311 = vsel %vm300, %v265, 0
      %v314 = vsel %vm300, %v266, 0
      %v317 = vsel %vm300, %v267, 0
      %v320 = vsel %vm300, %v268, 0
      %v323 = vsel %vm300, %v269, 0
      %v326 = vsel %vm300, %v270, 0
      %v329 = vsel %vm300, %v271, 0
      %v332 = vsel %vm300, %v272, 0
      %v335 = vsel %vm300, %v273, 0
      %v338 = vsel %vm300, %v274, 0
      %v341 = vsel %vm300, %v275, 0
      %v344 = vsel %vm300, %v276, 0
      %v347 = vsel %vm300, %v277, 0
      %v350 = vsel %vm300, %v278, 0
      %v353 = vsel %vm300, %v279, 0
      %v356 = vsel %vm300, %v280, 0
      %v359 = vsel %vm300, %v281, 0
      %v362 = vsel %vm300, %v282, 0
      %v365 = vsel %vm300, %v283, 0
      %v368 = vsel %vm300, %v284, 0
      %v371 = vsel %vm300, %v285, 0
      %v374 = vsel %vm300, %v286, 0
      %v377 = vsel %vm300, %v287, 0
      %v380 = vsel %vm300, %v288, 0
      %v383 = vsel %vm300, %v289, 0
      %v386 = vsel %vm300, %v290, 0
      %v389 = vsel %vm300, %v291, 0
      %v392 = vsel %vm300, %v292, 0
      %v395 = vsel %vm300, %v293, 0
      %v398 = vsel %vm300, %v294, 0
      %v401 = vsel %vm300, %v295, 0
      %v404 = vsel %vm300, %v296, 0
      %v407 = vsel %vm300, %v297, 0
      %vm409 = vcmask 1043456
      %v411 = vsel %vm409, %v299, 0
      %413 = vmatprep.subr.mxu0 0.0
      %414 = vmatpush1.msra.mxu0 0.0
      %415 = vmatprep.subr.mxu0 0.0
      %416 = vmatpush1.msra.mxu0 0.0
      %417 = vmatprep.subr.mxu0 0.0
      %418 = vmatpush1.msra.mxu0 0.0
      %419 = vmatprep.subr.mxu0 0.0
      %420 = vmatpush1.msra.mxu0 0.0
      %421 = vmatprep.subr.mxu0 0.0
      %422 = vmatpush1.msra.mxu0 0.0
      %423 = vmatprep.subr.mxu0 0.0
      %424 = vmatpush1.msra.mxu0 0.0
      %425 = vmatprep.subr.mxu0 0.0
      %426 = vmatpush1.msra.mxu0 0.0
      %427 = vmatprep.subr.mxu0 0.0
      %428 = vmatpush1.msra.mxu0 0.0
      %429 = vmatprep.subr.mxu0 0.0
      %430 = vmatpush1.msra.mxu0 0.0
      %431 = vmatprep.subr.mxu0 0.0
      %432 = vmatpush1.msra.mxu0 0.0
      %433 = vmatprep.subr.mxu0 0.0
      %434 = vmatpush1.msra.mxu0 0.0
      %435 = vmatprep.subr.mxu0 0.0
      %436 = vmatpush1.msra.mxu0 0.0
      %437 = vmatprep.subr.mxu0 0.0
      %438 = vmatpush1.msra.mxu0 0.0
      %439 = vmatprep.subr.mxu0 0.0
      %440 = vmatpush1.msra.mxu0 0.0
      %441 = vmatprep.subr.mxu0 0.0
      %442 = vmatpush1.msra.mxu0 0.0
      %443 = vmatprep.subr.mxu0 0.0
      %444 = vmatpush1.msra.mxu0 %v411
      %445 = vmatprep.subr.mxu0 0.0
      %446 = vmatpush2.msra.mxu0 0.0
      %447 = vmatprep.subr.mxu0 0.0
      %448 = vmatpush2.msra.mxu0 0.0
      %449 = vmatprep.subr.mxu0 0.0
      %450 = vmatpush2.msra.mxu0 0.0
      %451 = vmatprep.subr.mxu0 0.0
      %452 = vmatpush2.msra.mxu0 0.0
      %453 = vmatprep.subr.mxu0 0.0
      %454 = vmatpush2.msra.mxu0 0.0
      %455 = vmatprep.subr.mxu0 0.0
      %456 = vmatpush2.msra.mxu0 0.0
      %457 = vmatprep.subr.mxu0 0.0
      %458 = vmatpush2.msra.mxu0 0.0
      %459 = vmatprep.subr.mxu0 0.0
      %460 = vmatpush2.msra.mxu0 0.0
      %461 = vmatprep.subr.mxu0 0.0
      %462 = vmatpush2.msra.mxu0 0.0
      %463 = vmatprep.subr.mxu0 0.0
      %464 = vmatpush2.msra.mxu0 0.0
      %465 = vmatprep.subr.mxu0 0.0
      %466 = vmatpush2.msra.mxu0 0.0
      %467 = vmatprep.subr.mxu0 0.0
      %468 = vmatpush2.msra.mxu0 0.0
      %469 = vmatprep.subr.mxu0 0.0
      %470 = vmatpush2.msra.mxu0 0.0
      %471 = vmatprep.subr.mxu0 0.0
      %472 = vmatpush2.msra.mxu0 0.0
      %473 = vmatprep.subr.mxu0 0.0
      %474 = vmatpush2.msra.mxu0 0.0
      %475 = vmatprep.subr.mxu0 0.0
      %476 = vmatpush2.msra.mxu0 0.0
      %477 = vmatprep.mubr.f32.mxu0 0.0
      %478 = vmatmul.mubr.f32.gmra.mxu0 %v302
      %v479 = vpop.f32.mrf.mxu0
      %v480 = vadd.f32 0.0, %v479
      %v481 = vpop.f32.mrf.mxu0
      %482 = vmatprep.mubr.f32.mxu0 0.0
      %483 = vmatmul.mubr.f32.gmra.mxu0 %v305
      %v484 = vpop.f32.mrf.mxu0
      %v485 = vadd.f32 0.0, %v484
      %v486 = vpop.f32.mrf.mxu0
      %487 = vmatprep.mubr.f32.mxu0 0.0
      %488 = vmatmul.mubr.f32.gmra.mxu0 %v308
      %v489 = vpop.f32.mrf.mxu0
      %v490 = vadd.f32 0.0, %v489
      %v491 = vpop.f32.mrf.mxu0
      %492 = vmatprep.mubr.f32.mxu0 0.0
      %493 = vmatmul.mubr.f32.gmra.mxu0 %v311
      %v494 = vpop.f32.mrf.mxu0
      %v495 = vadd.f32 0.0, %v494
      %v496 = vpop.f32.mrf.mxu0
      %497 = vmatprep.mubr.f32.mxu0 0.0
      %498 = vmatmul.mubr.f32.gmra.mxu0 %v314
      %v499 = vpop.f32.mrf.mxu0
      %v500 = vadd.f32 0.0, %v499
      %v501 = vpop.f32.mrf.mxu0
      %502 = vmatprep.mubr.f32.mxu0 0.0
      %503 = vmatmul.mubr.f32.gmra.mxu0 %v317
      %v504 = vpop.f32.mrf.mxu0
      %v505 = vadd.f32 0.0, %v504
      %v506 = vpop.f32.mrf.mxu0
      %507 = vmatprep.mubr.f32.mxu0 0.0
      %508 = vmatmul.mubr.f32.gmra.mxu0 %v320
      %v509 = vpop.f32.mrf.mxu0
      %v510 = vadd.f32 0.0, %v509
      %v511 = vpop.f32.mrf.mxu0
      %512 = vmatprep.mubr.f32.mxu0 0.0
      %513 = vmatmul.mubr.f32.gmra.mxu0 %v323
      %v514 = vpop.f32.mrf.mxu0
      %v515 = vadd.f32 0.0, %v514
      %v516 = vpop.f32.mrf.mxu0
      %517 = vmatprep.mubr.f32.mxu0 0.0
      %518 = vmatmul.mubr.f32.gmra.mxu0 %v326
      %v519 = vpop.f32.mrf.mxu0
      %v520 = vadd.f32 0.0, %v519
      %v521 = vpop.f32.mrf.mxu0
      %522 = vmatprep.mubr.f32.mxu0 0.0
      %523 = vmatmul.mubr.f32.gmra.mxu0 %v329
      %v524 = vpop.f32.mrf.mxu0
      %v525 = vadd.f32 0.0, %v524
      %v526 = vpop.f32.mrf.mxu0
      %527 = vmatprep.mubr.f32.mxu0 0.0
      %528 = vmatmul.mubr.f32.gmra.mxu0 %v332
      %v529 = vpop.f32.mrf.mxu0
      %v530 = vadd.f32 0.0, %v529
      %v531 = vpop.f32.mrf.mxu0
      %532 = vmatprep.mubr.f32.mxu0 0.0
      %533 = vmatmul.mubr.f32.gmra.mxu0 %v335
      %v534 = vpop.f32.mrf.mxu0
      %v535 = vadd.f32 0.0, %v534
      %v536 = vpop.f32.mrf.mxu0
      %537 = vmatprep.mubr.f32.mxu0 0.0
      %538 = vmatmul.mubr.f32.gmra.mxu0 %v338
      %v539 = vpop.f32.mrf.mxu0
      %v540 = vadd.f32 0.0, %v539
      %v541 = vpop.f32.mrf.mxu0
      %542 = vmatprep.mubr.f32.mxu0 0.0
      %543 = vmatmul.mubr.f32.gmra.mxu0 %v341
      %v544 = vpop.f32.mrf.mxu0
      %v545 = vadd.f32 0.0, %v544
      %v546 = vpop.f32.mrf.mxu0
      %547 = vmatprep.mubr.f32.mxu0 0.0
      %548 = vmatmul.mubr.f32.gmra.mxu0 %v344
      %v549 = vpop.f32.mrf.mxu0
      %v550 = vadd.f32 0.0, %v549
      %v551 = vpop.f32.mrf.mxu0
      %552 = vmatprep.mubr.f32.mxu0 0.0
      %553 = vmatmul.mubr.f32.gmra.mxu0 %v347
      %v554 = vpop.f32.mrf.mxu0
      %v555 = vadd.f32 0.0, %v554
      %v556 = vpop.f32.mrf.mxu0
      %557 = vmatprep.mubr.f32.mxu0 0.0
      %558 = vmatmul.mubr.f32.gmra.mxu0 %v350
      %v559 = vpop.f32.mrf.mxu0
      %v560 = vadd.f32 0.0, %v559
      %v561 = vpop.f32.mrf.mxu0
      %562 = vmatprep.mubr.f32.mxu0 0.0
      %563 = vmatmul.mubr.f32.gmra.mxu0 %v353
      %v564 = vpop.f32.mrf.mxu0
      %v565 = vadd.f32 0.0, %v564
      %v566 = vpop.f32.mrf.mxu0
      %567 = vmatprep.mubr.f32.mxu0 0.0
      %568 = vmatmul.mubr.f32.gmra.mxu0 %v356
      %v569 = vpop.f32.mrf.mxu0
      %v570 = vadd.f32 0.0, %v569
      %v571 = vpop.f32.mrf.mxu0
      %572 = vmatprep.mubr.f32.mxu0 0.0
      %573 = vmatmul.mubr.f32.gmra.mxu0 %v359
      %v574 = vpop.f32.mrf.mxu0
      %v575 = vadd.f32 0.0, %v574
      %v576 = vpop.f32.mrf.mxu0
      %577 = vmatprep.mubr.f32.mxu0 0.0
      %578 = vmatmul.mubr.f32.gmra.mxu0 %v362
      %v579 = vpop.f32.mrf.mxu0
      %v580 = vadd.f32 0.0, %v579
      %v581 = vpop.f32.mrf.mxu0
      %582 = vmatprep.mubr.f32.mxu0 0.0
      %583 = vmatmul.mubr.f32.gmra.mxu0 %v365
      %v584 = vpop.f32.mrf.mxu0
      %v585 = vadd.f32 0.0, %v584
      %v586 = vpop.f32.mrf.mxu0
      %587 = vmatprep.mubr.f32.mxu0 0.0
      %588 = vmatmul.mubr.f32.gmra.mxu0 %v368
      %v589 = vpop.f32.mrf.mxu0
      %v590 = vadd.f32 0.0, %v589
      %v591 = vpop.f32.mrf.mxu0
      %592 = vmatprep.mubr.f32.mxu0 0.0
      %593 = vmatmul.mubr.f32.gmra.mxu0 %v371
      %v594 = vpop.f32.mrf.mxu0
      %v595 = vadd.f32 0.0, %v594
      %v596 = vpop.f32.mrf.mxu0
      %597 = vmatprep.mubr.f32.mxu0 0.0
      %598 = vmatmul.mubr.f32.gmra.mxu0 %v374
      %v599 = vpop.f32.mrf.mxu0
      %v600 = vadd.f32 0.0, %v599
      %v601 = vpop.f32.mrf.mxu0
      %602 = vmatprep.mubr.f32.mxu0 0.0
      %603 = vmatmul.mubr.f32.gmra.mxu0 %v377
      %v604 = vpop.f32.mrf.mxu0
      %v605 = vadd.f32 0.0, %v604
      %v606 = vpop.f32.mrf.mxu0
      %607 = vmatprep.mubr.f32.mxu0 0.0
      %608 = vmatmul.mubr.f32.gmra.mxu0 %v380
      %v609 = vpop.f32.mrf.mxu0
      %v610 = vadd.f32 0.0, %v609
      %v611 = vpop.f32.mrf.mxu0
      %612 = vmatprep.mubr.f32.mxu0 0.0
      %613 = vmatmul.mubr.f32.gmra.mxu0 %v383
      %v614 = vpop.f32.mrf.mxu0
      %v615 = vadd.f32 0.0, %v614
      %v616 = vpop.f32.mrf.mxu0
      %617 = vmatprep.mubr.f32.mxu0 0.0
      %618 = vmatmul.mubr.f32.gmra.mxu0 %v386
      %v619 = vpop.f32.mrf.mxu0
      %v620 = vadd.f32 0.0, %v619
      %v621 = vpop.f32.mrf.mxu0
      %622 = vmatprep.mubr.f32.mxu0 0.0
      %623 = vmatmul.mubr.f32.gmra.mxu0 %v389
      %v624 = vpop.f32.mrf.mxu0
      %v625 = vadd.f32 0.0, %v624
      %v626 = vpop.f32.mrf.mxu0
      %627 = vmatprep.mubr.f32.mxu0 0.0
      %628 = vmatmul.mubr.f32.gmra.mxu0 %v392
      %v629 = vpop.f32.mrf.mxu0
      %v630 = vadd.f32 0.0, %v629
      %v631 = vpop.f32.mrf.mxu0
      %632 = vmatprep.mubr.f32.mxu0 0.0
      %633 = vmatmul.mubr.f32.gmra.mxu0 %v395
      %v634 = vpop.f32.mrf.mxu0
      %v635 = vadd.f32 0.0, %v634
      %v636 = vpop.f32.mrf.mxu0
      %637 = vmatprep.mubr.f32.mxu0 0.0
      %638 = vmatmul.mubr.f32.gmra.mxu0 %v398
      %v639 = vpop.f32.mrf.mxu0
      %v640 = vadd.f32 0.0, %v639
      %v641 = vpop.f32.mrf.mxu0
      %642 = vmatprep.mubr.f32.mxu0 0.0
      %643 = vmatmul.mubr.f32.gmra.mxu0 %v401
      %v644 = vpop.f32.mrf.mxu0
      %v645 = vadd.f32 0.0, %v644
      %v646 = vpop.f32.mrf.mxu0
      %647 = vmatprep.mubr.f32.mxu0 0.0
      %648 = vmatmul.mubr.f32.gmra.mxu0 %v404
      %v649 = vpop.f32.mrf.mxu0
      %v650 = vadd.f32 0.0, %v649
      %v651 = vpop.f32.mrf.mxu0
      %652 = vmatprep.mubr.f32.mxu0 0.0
      %653 = vmatmul.mubr.f32.gmra.mxu0 %v407
      %v654 = vpop.f32.mrf.mxu0
      %v655 = vadd.f32 0.0, %v654
      %v656 = vpop.f32.mrf.mxu0
      %657 = vdwg.mxu0
      %v659 = vsel %vm300, %v225, 0
      %v662 = vsel %vm300, %v226, 0
      %v665 = vsel %vm300, %v227, 0
      %v668 = vsel %vm300, %v228, 0
      %v671 = vsel %vm300, %v229, 0
      %v674 = vsel %vm300, %v230, 0
      %v677 = vsel %vm300, %v231, 0
      %v680 = vsel %vm300, %v232, 0
      %v683 = vsel %vm300, %v233, 0
      %v686 = vsel %vm300, %v234, 0
      %v689 = vsel %vm300, %v235, 0
      %v692 = vsel %vm300, %v236, 0
      %v695 = vsel %vm300, %v237, 0
      %v698 = vsel %vm300, %v238, 0
      %v701 = vsel %vm300, %v239, 0
      %v704 = vsel %vm300, %v240, 0
      %v707 = vsel %vm300, %v241, 0
      %v710 = vsel %vm300, %v242, 0
      %v713 = vsel %vm300, %v243, 0
      %v716 = vsel %vm300, %v244, 0
      %v719 = vsel %vm300, %v245, 0
      %v722 = vsel %vm300, %v246, 0
      %v725 = vsel %vm300, %v247, 0
      %v728 = vsel %vm300, %v248, 0
      %v731 = vsel %vm300, %v249, 0
      %v734 = vsel %vm300, %v250, 0
      %v737 = vsel %vm300, %v251, 0
      %v740 = vsel %vm300, %v252, 0
      %v743 = vsel %vm300, %v253, 0
      %v746 = vsel %vm300, %v254, 0
      %v749 = vsel %vm300, %v255, 0
      %v752 = vsel %vm300, %v256, 0
      %v755 = vsel %vm300, %v257, 0
      %v758 = vsel %vm300, %v258, 0
      %v761 = vsel %vm300, %v259, 0
      %v764 = vsel %vm300, %v260, 0
      %v767 = vsel %vm409, %v261, 0
      %769 = vmatprep.subr.mxu0 0.0
      %770 = vmatpush1.msra.mxu0 0.0
      %771 = vmatprep.subr.mxu0 0.0
      %772 = vmatpush1.msra.mxu0 0.0
      %773 = vmatprep.subr.mxu0 0.0
      %774 = vmatpush1.msra.mxu0 0.0
      %775 = vmatprep.subr.mxu0 0.0
      %776 = vmatpush1.msra.mxu0 0.0
      %777 = vmatprep.subr.mxu0 0.0
      %778 = vmatpush1.msra.mxu0 0.0
      %779 = vmatprep.subr.mxu0 0.0
      %780 = vmatpush1.msra.mxu0 0.0
      %781 = vmatprep.subr.mxu0 0.0
      %782 = vmatpush1.msra.mxu0 0.0
      %783 = vmatprep.subr.mxu0 0.0
      %784 = vmatpush1.msra.mxu0 0.0
      %785 = vmatprep.subr.mxu0 0.0
      %786 = vmatpush1.msra.mxu0 0.0
      %787 = vmatprep.subr.mxu0 0.0
      %788 = vmatpush1.msra.mxu0 0.0
      %789 = vmatprep.subr.mxu0 0.0
      %790 = vmatpush1.msra.mxu0 0.0
      %791 = vmatprep.subr.mxu0 0.0
      %792 = vmatpush1.msra.mxu0 0.0
      %793 = vmatprep.subr.mxu0 0.0
      %794 = vmatpush1.msra.mxu0 0.0
      %795 = vmatprep.subr.mxu0 0.0
      %796 = vmatpush1.msra.mxu0 0.0
      %797 = vmatprep.subr.mxu0 0.0
      %798 = vmatpush1.msra.mxu0 0.0
      %799 = vmatprep.subr.mxu0 0.0
      %800 = vmatpush1.msra.mxu0 %v767
      %801 = vmatprep.subr.mxu0 0.0
      %802 = vmatpush2.msra.mxu0 0.0
      %803 = vmatprep.subr.mxu0 0.0
      %804 = vmatpush2.msra.mxu0 0.0
      %805 = vmatprep.subr.mxu0 0.0
      %806 = vmatpush2.msra.mxu0 0.0
      %807 = vmatprep.subr.mxu0 0.0
      %808 = vmatpush2.msra.mxu0 0.0
      %809 = vmatprep.subr.mxu0 0.0
      %810 = vmatpush2.msra.mxu0 0.0
      %811 = vmatprep.subr.mxu0 0.0
      %812 = vmatpush2.msra.mxu0 0.0
      %813 = vmatprep.subr.mxu0 0.0
      %814 = vmatpush2.msra.mxu0 0.0
      %815 = vmatprep.subr.mxu0 0.0
      %816 = vmatpush2.msra.mxu0 0.0
      %817 = vmatprep.subr.mxu0 0.0
      %818 = vmatpush2.msra.mxu0 0.0
      %819 = vmatprep.subr.mxu0 0.0
      %820 = vmatpush2.msra.mxu0 0.0
      %821 = vmatprep.subr.mxu0 0.0
      %822 = vmatpush2.msra.mxu0 0.0
      %823 = vmatprep.subr.mxu0 0.0
      %824 = vmatpush2.msra.mxu0 0.0
      %825 = vmatprep.subr.mxu0 0.0
      %826 = vmatpush2.msra.mxu0 0.0
      %827 = vmatprep.subr.mxu0 0.0
      %828 = vmatpush2.msra.mxu0 0.0
      %829 = vmatprep.subr.mxu0 0.0
      %830 = vmatpush2.msra.mxu0 0.0
      %831 = vmatprep.subr.mxu0 0.0
      %832 = vmatpush2.msra.mxu0 0.0
      %833 = vmatprep.mubr.f32.mxu0 0.0
      %834 = vmatmul.mubr.f32.gmra.mxu0 %v659
      %v835 = vpop.f32.mrf.mxu0
      %v836 = vadd.f32 %v480, %v835
      %v837 = vpop.f32.mrf.mxu0
      %838 = vmatprep.mubr.f32.mxu0 0.0
      %839 = vmatmul.mubr.f32.gmra.mxu0 %v662
      %v840 = vpop.f32.mrf.mxu0
      %v841 = vadd.f32 %v485, %v840
      %v842 = vpop.f32.mrf.mxu0
      %843 = vmatprep.mubr.f32.mxu0 0.0
      %844 = vmatmul.mubr.f32.gmra.mxu0 %v665
      %v845 = vpop.f32.mrf.mxu0
      %v846 = vadd.f32 %v490, %v845
      %v847 = vpop.f32.mrf.mxu0
      %848 = vmatprep.mubr.f32.mxu0 0.0
      %849 = vmatmul.mubr.f32.gmra.mxu0 %v668
      %v850 = vpop.f32.mrf.mxu0
      %v851 = vadd.f32 %v495, %v850
      %v852 = vpop.f32.mrf.mxu0
      %853 = vmatprep.mubr.f32.mxu0 0.0
      %854 = vmatmul.mubr.f32.gmra.mxu0 %v671
      %v855 = vpop.f32.mrf.mxu0
      %v856 = vadd.f32 %v500, %v855
      %v857 = vpop.f32.mrf.mxu0
      %858 = vmatprep.mubr.f32.mxu0 0.0
      %859 = vmatmul.mubr.f32.gmra.mxu0 %v674
      %v860 = vpop.f32.mrf.mxu0
      %v861 = vadd.f32 %v505, %v860
      %v862 = vpop.f32.mrf.mxu0
      %863 = vmatprep.mubr.f32.mxu0 0.0
      %864 = vmatmul.mubr.f32.gmra.mxu0 %v677
      %v865 = vpop.f32.mrf.mxu0
      %v866 = vadd.f32 %v510, %v865
      %v867 = vpop.f32.mrf.mxu0
      %868 = vmatprep.mubr.f32.mxu0 0.0
      %869 = vmatmul.mubr.f32.gmra.mxu0 %v680
      %v870 = vpop.f32.mrf.mxu0
      %v871 = vadd.f32 %v515, %v870
      %v872 = vpop.f32.mrf.mxu0
      %873 = vmatprep.mubr.f32.mxu0 0.0
      %874 = vmatmul.mubr.f32.gmra.mxu0 %v683
      %v875 = vpop.f32.mrf.mxu0
      %v876 = vadd.f32 %v520, %v875
      %v877 = vpop.f32.mrf.mxu0
      %878 = vmatprep.mubr.f32.mxu0 0.0
      %879 = vmatmul.mubr.f32.gmra.mxu0 %v686
      %v880 = vpop.f32.mrf.mxu0
      %v881 = vadd.f32 %v525, %v880
      %v882 = vpop.f32.mrf.mxu0
      %883 = vmatprep.mubr.f32.mxu0 0.0
      %884 = vmatmul.mubr.f32.gmra.mxu0 %v689
      %v885 = vpop.f32.mrf.mxu0
      %v886 = vadd.f32 %v530, %v885
      %v887 = vpop.f32.mrf.mxu0
      %888 = vmatprep.mubr.f32.mxu0 0.0
      %889 = vmatmul.mubr.f32.gmra.mxu0 %v692
      %v890 = vpop.f32.mrf.mxu0
      %v891 = vadd.f32 %v535, %v890
      %v892 = vpop.f32.mrf.mxu0
      %893 = vmatprep.mubr.f32.mxu0 0.0
      %894 = vmatmul.mubr.f32.gmra.mxu0 %v695
      %v895 = vpop.f32.mrf.mxu0
      %v896 = vadd.f32 %v540, %v895
      %v897 = vpop.f32.mrf.mxu0
      %898 = vmatprep.mubr.f32.mxu0 0.0
      %899 = vmatmul.mubr.f32.gmra.mxu0 %v698
      %v900 = vpop.f32.mrf.mxu0
      %v901 = vadd.f32 %v545, %v900
      %v902 = vpop.f32.mrf.mxu0
      %903 = vmatprep.mubr.f32.mxu0 0.0
      %904 = vmatmul.mubr.f32.gmra.mxu0 %v701
      %v905 = vpop.f32.mrf.mxu0
      %v906 = vadd.f32 %v550, %v905
      %v907 = vpop.f32.mrf.mxu0
      %908 = vmatprep.mubr.f32.mxu0 0.0
      %909 = vmatmul.mubr.f32.gmra.mxu0 %v704
      %v910 = vpop.f32.mrf.mxu0
      %v911 = vadd.f32 %v555, %v910
      %v912 = vpop.f32.mrf.mxu0
      %913 = vmatprep.mubr.f32.mxu0 0.0
      %914 = vmatmul.mubr.f32.gmra.mxu0 %v707
      %v915 = vpop.f32.mrf.mxu0
      %v916 = vadd.f32 %v560, %v915
      %v917 = vpop.f32.mrf.mxu0
      %918 = vmatprep.mubr.f32.mxu0 0.0
      %919 = vmatmul.mubr.f32.gmra.mxu0 %v710
      %v920 = vpop.f32.mrf.mxu0
      %v921 = vadd.f32 %v565, %v920
      %v922 = vpop.f32.mrf.mxu0
      %923 = vmatprep.mubr.f32.mxu0 0.0
      %924 = vmatmul.mubr.f32.gmra.mxu0 %v713
      %v925 = vpop.f32.mrf.mxu0
      %v926 = vadd.f32 %v570, %v925
      %v927 = vpop.f32.mrf.mxu0
      %928 = vmatprep.mubr.f32.mxu0 0.0
      %929 = vmatmul.mubr.f32.gmra.mxu0 %v716
      %v930 = vpop.f32.mrf.mxu0
      %v931 = vadd.f32 %v575, %v930
      %v932 = vpop.f32.mrf.mxu0
      %933 = vmatprep.mubr.f32.mxu0 0.0
      %934 = vmatmul.mubr.f32.gmra.mxu0 %v719
      %v935 = vpop.f32.mrf.mxu0
      %v936 = vadd.f32 %v580, %v935
      %v937 = vpop.f32.mrf.mxu0
      %938 = vmatprep.mubr.f32.mxu0 0.0
      %939 = vmatmul.mubr.f32.gmra.mxu0 %v722
      %v940 = vpop.f32.mrf.mxu0
      %v941 = vadd.f32 %v585, %v940
      %v942 = vpop.f32.mrf.mxu0
      %943 = vmatprep.mubr.f32.mxu0 0.0
      %944 = vmatmul.mubr.f32.gmra.mxu0 %v725
      %v945 = vpop.f32.mrf.mxu0
      %v946 = vadd.f32 %v590, %v945
      %v947 = vpop.f32.mrf.mxu0
      %948 = vmatprep.mubr.f32.mxu0 0.0
      %949 = vmatmul.mubr.f32.gmra.mxu0 %v728
      %v950 = vpop.f32.mrf.mxu0
      %v951 = vadd.f32 %v595, %v950
      %v952 = vpop.f32.mrf.mxu0
      %953 = vmatprep.mubr.f32.mxu0 0.0
      %954 = vmatmul.mubr.f32.gmra.mxu0 %v731
      %v955 = vpop.f32.mrf.mxu0
      %v956 = vadd.f32 %v600, %v955
      %v957 = vpop.f32.mrf.mxu0
      %958 = vmatprep.mubr.f32.mxu0 0.0
      %959 = vmatmul.mubr.f32.gmra.mxu0 %v734
      %v960 = vpop.f32.mrf.mxu0
      %v961 = vadd.f32 %v605, %v960
      %v962 = vpop.f32.mrf.mxu0
      %963 = vmatprep.mubr.f32.mxu0 0.0
      %964 = vmatmul.mubr.f32.gmra.mxu0 %v737
      %v965 = vpop.f32.mrf.mxu0
      %v966 = vadd.f32 %v610, %v965
      %v967 = vpop.f32.mrf.mxu0
      %968 = vmatprep.mubr.f32.mxu0 0.0
      %969 = vmatmul.mubr.f32.gmra.mxu0 %v740
      %v970 = vpop.f32.mrf.mxu0
      %v971 = vadd.f32 %v615, %v970
      %v972 = vpop.f32.mrf.mxu0
      %973 = vmatprep.mubr.f32.mxu0 0.0
      %974 = vmatmul.mubr.f32.gmra.mxu0 %v743
      %v975 = vpop.f32.mrf.mxu0
      %v976 = vadd.f32 %v620, %v975
      %v977 = vpop.f32.mrf.mxu0
      %978 = vmatprep.mubr.f32.mxu0 0.0
      %979 = vmatmul.mubr.f32.gmra.mxu0 %v746
      %v980 = vpop.f32.mrf.mxu0
      %v981 = vadd.f32 %v625, %v980
      %v982 = vpop.f32.mrf.mxu0
      %983 = vmatprep.mubr.f32.mxu0 0.0
      %984 = vmatmul.mubr.f32.gmra.mxu0 %v749
      %v985 = vpop.f32.mrf.mxu0
      %v986 = vadd.f32 %v630, %v985
      %v987 = vpop.f32.mrf.mxu0
      %988 = vmatprep.mubr.f32.mxu0 0.0
      %989 = vmatmul.mubr.f32.gmra.mxu0 %v752
      %v990 = vpop.f32.mrf.mxu0
      %v991 = vadd.f32 %v635, %v990
      %v992 = vpop.f32.mrf.mxu0
      %993 = vmatprep.mubr.f32.mxu0 0.0
      %994 = vmatmul.mubr.f32.gmra.mxu0 %v755
      %v995 = vpop.f32.mrf.mxu0
      %v996 = vadd.f32 %v640, %v995
      %v997 = vpop.f32.mrf.mxu0
      %998 = vmatprep.mubr.f32.mxu0 0.0
      %999 = vmatmul.mubr.f32.gmra.mxu0 %v758
      %v1000 = vpop.f32.mrf.mxu0
      %v1001 = vadd.f32 %v645, %v1000
      %v1002 = vpop.f32.mrf.mxu0
      %1003 = vmatprep.mubr.f32.mxu0 0.0
      %1004 = vmatmul.mubr.f32.gmra.mxu0 %v761
      %v1005 = vpop.f32.mrf.mxu0
      %v1006 = vadd.f32 %v650, %v1005
      %v1007 = vpop.f32.mrf.mxu0
      %1008 = vmatprep.mubr.f32.mxu0 0.0
      %1009 = vmatmul.mubr.f32.gmra.mxu0 %v764
      %v1010 = vpop.f32.mrf.mxu0
      %v1011 = vadd.f32 %v655, %v1010
      %v1012 = vpop.f32.mrf.mxu0
      %1013 = vdwg.mxu0
      %v1014 = vld [vmem:[%s219 + $0x2] sm:$0xff]
      %v1015 = vld [vmem:[%s219 + $0xa] sm:$0xff]
      %v1016 = vld [vmem:[%s219 + $0x12] sm:$0xff]
      %v1017 = vld [vmem:[%s219 + $0x1a] sm:$0xff]
      %v1018 = vld [vmem:[%s219 + $0x22] sm:$0xff]
      %v1019 = vld [vmem:[%s219 + $0x2a] sm:$0xff]
      %v1020 = vld [vmem:[%s219 + $0x32] sm:$0xff]
      %v1021 = vld [vmem:[%s219 + $0x3a] sm:$0xff]
      %v1022 = vld [vmem:[%s219 + $0x42] sm:$0xff]
      %v1023 = vld [vmem:[%s219 + $0x4a] sm:$0xff]
      %v1024 = vld [vmem:[%s219 + $0x52] sm:$0xff]
      %v1025 = vld [vmem:[%s219 + $0x5a] sm:$0xff]
      %v1026 = vld [vmem:[%s219 + $0x62] sm:$0xff]
      %v1027 = vld [vmem:[%s219 + $0x6a] sm:$0xff]
      %v1028 = vld [vmem:[%s219 + $0x72] sm:$0xff]
      %v1029 = vld [vmem:[%s219 + $0x7a] sm:$0xff]
      %v1030 = vld [vmem:[%s219 + $0x82] sm:$0xff]
      %v1031 = vld [vmem:[%s219 + $0x8a] sm:$0xff]
      %v1032 = vld [vmem:[%s219 + $0x92] sm:$0xff]
      %v1033 = vld [vmem:[%s219 + $0x9a] sm:$0xff]
      %v1034 = vld [vmem:[%s219 + $0xa2] sm:$0xff]
      %v1035 = vld [vmem:[%s219 + $0xaa] sm:$0xff]
      %v1036 = vld [vmem:[%s219 + $0xb2] sm:$0xff]
      %v1037 = vld [vmem:[%s219 + $0xba] sm:$0xff]
      %v1038 = vld [vmem:[%s219 + $0xc2] sm:$0xff]
      %v1039 = vld [vmem:[%s219 + $0xca] sm:$0xff]
      %v1040 = vld [vmem:[%s219 + $0xd2] sm:$0xff]
      %v1041 = vld [vmem:[%s219 + $0xda] sm:$0xff]
      %v1042 = vld [vmem:[%s219 + $0xe2] sm:$0xff]
      %v1043 = vld [vmem:[%s219 + $0xea] sm:$0xff]
      %v1044 = vld [vmem:[%s219 + $0xf2] sm:$0xff]
      %v1045 = vld [vmem:[%s219 + $0xfa] sm:$0xff]
      %v1046 = vld [vmem:[%s219 + $0x102] sm:$0xff]
      %v1047 = vld [vmem:[%s219 + $0x10a] sm:$0xff]
      %v1048 = vld [vmem:[%s219 + $0x112] sm:$0xff]
      %v1049 = vld [vmem:[%s219 + $0x11a] sm:$0xff]
      %s1050 = scalar_lea.vmem %s1, 8
      %v1051 = vld [vmem:[%s1050] sm:$0xf]
      %v1053 = vsel %vm300, %v1014, 0
      %v1056 = vsel %vm300, %v1015, 0
      %v1059 = vsel %vm300, %v1016, 0
      %v1062 = vsel %vm300, %v1017, 0
      %v1065 = vsel %vm300, %v1018, 0
      %v1068 = vsel %vm300, %v1019, 0
      %v1071 = vsel %vm300, %v1020, 0
      %v1074 = vsel %vm300, %v1021, 0
      %v1077 = vsel %vm300, %v1022, 0
      %v1080 = vsel %vm300, %v1023, 0
      %v1083 = vsel %vm300, %v1024, 0
      %v1086 = vsel %vm300, %v1025, 0
      %v1089 = vsel %vm300, %v1026, 0
      %v1092 = vsel %vm300, %v1027, 0
      %v1095 = vsel %vm300, %v1028, 0
      %v1098 = vsel %vm300, %v1029, 0
      %v1101 = vsel %vm300, %v1030, 0
      %v1104 = vsel %vm300, %v1031, 0
      %v1107 = vsel %vm300, %v1032, 0
      %v1110 = vsel %vm300, %v1033, 0
      %v1113 = vsel %vm300, %v1034, 0
      %v1116 = vsel %vm300, %v1035, 0
      %v1119 = vsel %vm300, %v1036, 0
      %v1122 = vsel %vm300, %v1037, 0
      %v1125 = vsel %vm300, %v1038, 0
      %v1128 = vsel %vm300, %v1039, 0
      %v1131 = vsel %vm300, %v1040, 0
      %v1134 = vsel %vm300, %v1041, 0
      %v1137 = vsel %vm300, %v1042, 0
      %v1140 = vsel %vm300, %v1043, 0
      %v1143 = vsel %vm300, %v1044, 0
      %v1146 = vsel %vm300, %v1045, 0
      %v1149 = vsel %vm300, %v1046, 0
      %v1152 = vsel %vm300, %v1047, 0
      %v1155 = vsel %vm300, %v1048, 0
      %v1158 = vsel %vm300, %v1049, 0
      %v1161 = vsel %vm409, %v1051, 0
      %1163 = vmatprep.subr.mxu0 0.0
      %1164 = vmatpush1.msra.mxu0 0.0
      %1165 = vmatprep.subr.mxu0 0.0
      %1166 = vmatpush1.msra.mxu0 0.0
      %1167 = vmatprep.subr.mxu0 0.0
      %1168 = vmatpush1.msra.mxu0 0.0
      %1169 = vmatprep.subr.mxu0 0.0
      %1170 = vmatpush1.msra.mxu0 0.0
      %1171 = vmatprep.subr.mxu0 0.0
      %1172 = vmatpush1.msra.mxu0 0.0
      %1173 = vmatprep.subr.mxu0 0.0
      %1174 = vmatpush1.msra.mxu0 0.0
      %1175 = vmatprep.subr.mxu0 0.0
      %1176 = vmatpush1.msra.mxu0 0.0
      %1177 = vmatprep.subr.mxu0 0.0
      %1178 = vmatpush1.msra.mxu0 0.0
      %1179 = vmatprep.subr.mxu0 0.0
      %1180 = vmatpush1.msra.mxu0 0.0
      %1181 = vmatprep.subr.mxu0 0.0
      %1182 = vmatpush1.msra.mxu0 0.0
      %1183 = vmatprep.subr.mxu0 0.0
      %1184 = vmatpush1.msra.mxu0 0.0
      %1185 = vmatprep.subr.mxu0 0.0
      %1186 = vmatpush1.msra.mxu0 0.0
      %1187 = vmatprep.subr.mxu0 0.0
      %1188 = vmatpush1.msra.mxu0 0.0
      %1189 = vmatprep.subr.mxu0 0.0
      %1190 = vmatpush1.msra.mxu0 0.0
      %1191 = vmatprep.subr.mxu0 0.0
      %1192 = vmatpush1.msra.mxu0 0.0
      %1193 = vmatprep.subr.mxu0 0.0
      %1194 = vmatpush1.msra.mxu0 %v1161
      %1195 = vmatprep.subr.mxu0 0.0
      %1196 = vmatpush2.msra.mxu0 0.0
      %1197 = vmatprep.subr.mxu0 0.0
      %1198 = vmatpush2.msra.mxu0 0.0
      %1199 = vmatprep.subr.mxu0 0.0
      %1200 = vmatpush2.msra.mxu0 0.0
      %1201 = vmatprep.subr.mxu0 0.0
      %1202 = vmatpush2.msra.mxu0 0.0
      %1203 = vmatprep.subr.mxu0 0.0
      %1204 = vmatpush2.msra.mxu0 0.0
      %1205 = vmatprep.subr.mxu0 0.0
      %1206 = vmatpush2.msra.mxu0 0.0
      %1207 = vmatprep.subr.mxu0 0.0
      %1208 = vmatpush2.msra.mxu0 0.0
      %1209 = vmatprep.subr.mxu0 0.0
      %1210 = vmatpush2.msra.mxu0 0.0
      %1211 = vmatprep.subr.mxu0 0.0
      %1212 = vmatpush2.msra.mxu0 0.0
      %1213 = vmatprep.subr.mxu0 0.0
      %1214 = vmatpush2.msra.mxu0 0.0
      %1215 = vmatprep.subr.mxu0 0.0
      %1216 = vmatpush2.msra.mxu0 0.0
      %1217 = vmatprep.subr.mxu0 0.0
      %1218 = vmatpush2.msra.mxu0 0.0
      %1219 = vmatprep.subr.mxu0 0.0
      %1220 = vmatpush2.msra.mxu0 0.0
      %1221 = vmatprep.subr.mxu0 0.0
      %1222 = vmatpush2.msra.mxu0 0.0
      %1223 = vmatprep.subr.mxu0 0.0
      %1224 = vmatpush2.msra.mxu0 0.0
      %1225 = vmatprep.subr.mxu0 0.0
      %1226 = vmatpush2.msra.mxu0 0.0
      %1227 = vmatprep.mubr.f32.mxu0 0.0
      %1228 = vmatmul.mubr.f32.gmra.mxu0 %v1053
      %v1229 = vpop.f32.mrf.mxu0
      %v1230 = vadd.f32 0.0, %v1229
      %v1231 = vpop.f32.mrf.mxu0
      %1232 = vmatprep.mubr.f32.mxu0 0.0
      %1233 = vmatmul.mubr.f32.gmra.mxu0 %v1056
      %v1234 = vpop.f32.mrf.mxu0
      %v1235 = vadd.f32 0.0, %v1234
      %v1236 = vpop.f32.mrf.mxu0
      %1237 = vmatprep.mubr.f32.mxu0 0.0
      %1238 = vmatmul.mubr.f32.gmra.mxu0 %v1059
      %v1239 = vpop.f32.mrf.mxu0
      %v1240 = vadd.f32 0.0, %v1239
      %v1241 = vpop.f32.mrf.mxu0
      %1242 = vmatprep.mubr.f32.mxu0 0.0
      %1243 = vmatmul.mubr.f32.gmra.mxu0 %v1062
      %v1244 = vpop.f32.mrf.mxu0
      %v1245 = vadd.f32 0.0, %v1244
      %v1246 = vpop.f32.mrf.mxu0
      %1247 = vmatprep.mubr.f32.mxu0 0.0
      %1248 = vmatmul.mubr.f32.gmra.mxu0 %v1065
      %v1249 = vpop.f32.mrf.mxu0
      %v1250 = vadd.f32 0.0, %v1249
      %v1251 = vpop.f32.mrf.mxu0
      %1252 = vmatprep.mubr.f32.mxu0 0.0
      %1253 = vmatmul.mubr.f32.gmra.mxu0 %v1068
      %v1254 = vpop.f32.mrf.mxu0
      %v1255 = vadd.f32 0.0, %v1254
      %v1256 = vpop.f32.mrf.mxu0
      %1257 = vmatprep.mubr.f32.mxu0 0.0
      %1258 = vmatmul.mubr.f32.gmra.mxu0 %v1071
      %v1259 = vpop.f32.mrf.mxu0
      %v1260 = vadd.f32 0.0, %v1259
      %v1261 = vpop.f32.mrf.mxu0
      %1262 = vmatprep.mubr.f32.mxu0 0.0
      %1263 = vmatmul.mubr.f32.gmra.mxu0 %v1074
      %v1264 = vpop.f32.mrf.mxu0
      %v1265 = vadd.f32 0.0, %v1264
      %v1266 = vpop.f32.mrf.mxu0
      %1267 = vmatprep.mubr.f32.mxu0 0.0
      %1268 = vmatmul.mubr.f32.gmra.mxu0 %v1077
      %v1269 = vpop.f32.mrf.mxu0
      %v1270 = vadd.f32 0.0, %v1269
      %v1271 = vpop.f32.mrf.mxu0
      %1272 = vmatprep.mubr.f32.mxu0 0.0
      %1273 = vmatmul.mubr.f32.gmra.mxu0 %v1080
      %v1274 = vpop.f32.mrf.mxu0
      %v1275 = vadd.f32 0.0, %v1274
      %v1276 = vpop.f32.mrf.mxu0
      %1277 = vmatprep.mubr.f32.mxu0 0.0
      %1278 = vmatmul.mubr.f32.gmra.mxu0 %v1083
      %v1279 = vpop.f32.mrf.mxu0
      %v1280 = vadd.f32 0.0, %v1279
      %v1281 = vpop.f32.mrf.mxu0
      %1282 = vmatprep.mubr.f32.mxu0 0.0
      %1283 = vmatmul.mubr.f32.gmra.mxu0 %v1086
      %v1284 = vpop.f32.mrf.mxu0
      %v1285 = vadd.f32 0.0, %v1284
      %v1286 = vpop.f32.mrf.mxu0
      %1287 = vmatprep.mubr.f32.mxu0 0.0
      %1288 = vmatmul.mubr.f32.gmra.mxu0 %v1089
      %v1289 = vpop.f32.mrf.mxu0
      %v1290 = vadd.f32 0.0, %v1289
      %v1291 = vpop.f32.mrf.mxu0
      %1292 = vmatprep.mubr.f32.mxu0 0.0
      %1293 = vmatmul.mubr.f32.gmra.mxu0 %v1092
      %v1294 = vpop.f32.mrf.mxu0
      %v1295 = vadd.f32 0.0, %v1294
      %v1296 = vpop.f32.mrf.mxu0
      %1297 = vmatprep.mubr.f32.mxu0 0.0
      %1298 = vmatmul.mubr.f32.gmra.mxu0 %v1095
      %v1299 = vpop.f32.mrf.mxu0
      %v1300 = vadd.f32 0.0, %v1299
      %v1301 = vpop.f32.mrf.mxu0
      %1302 = vmatprep.mubr.f32.mxu0 0.0
      %1303 = vmatmul.mubr.f32.gmra.mxu0 %v1098
      %v1304 = vpop.f32.mrf.mxu0
      %v1305 = vadd.f32 0.0, %v1304
      %v1306 = vpop.f32.mrf.mxu0
      %1307 = vmatprep.mubr.f32.mxu0 0.0
      %1308 = vmatmul.mubr.f32.gmra.mxu0 %v1101
      %v1309 = vpop.f32.mrf.mxu0
      %v1310 = vadd.f32 0.0, %v1309
      %v1311 = vpop.f32.mrf.mxu0
      %1312 = vmatprep.mubr.f32.mxu0 0.0
      %1313 = vmatmul.mubr.f32.gmra.mxu0 %v1104
      %v1314 = vpop.f32.mrf.mxu0
      %v1315 = vadd.f32 0.0, %v1314
      %v1316 = vpop.f32.mrf.mxu0
      %1317 = vmatprep.mubr.f32.mxu0 0.0
      %1318 = vmatmul.mubr.f32.gmra.mxu0 %v1107
      %v1319 = vpop.f32.mrf.mxu0
      %v1320 = vadd.f32 0.0, %v1319
      %v1321 = vpop.f32.mrf.mxu0
      %1322 = vmatprep.mubr.f32.mxu0 0.0
      %1323 = vmatmul.mubr.f32.gmra.mxu0 %v1110
      %v1324 = vpop.f32.mrf.mxu0
      %v1325 = vadd.f32 0.0, %v1324
      %v1326 = vpop.f32.mrf.mxu0
      %1327 = vmatprep.mubr.f32.mxu0 0.0
      %1328 = vmatmul.mubr.f32.gmra.mxu0 %v1113
      %v1329 = vpop.f32.mrf.mxu0
      %v1330 = vadd.f32 0.0, %v1329
      %v1331 = vpop.f32.mrf.mxu0
      %1332 = vmatprep.mubr.f32.mxu0 0.0
      %1333 = vmatmul.mubr.f32.gmra.mxu0 %v1116
      %v1334 = vpop.f32.mrf.mxu0
      %v1335 = vadd.f32 0.0, %v1334
      %v1336 = vpop.f32.mrf.mxu0
      %1337 = vmatprep.mubr.f32.mxu0 0.0
      %1338 = vmatmul.mubr.f32.gmra.mxu0 %v1119
      %v1339 = vpop.f32.mrf.mxu0
      %v1340 = vadd.f32 0.0, %v1339
      %v1341 = vpop.f32.mrf.mxu0
      %1342 = vmatprep.mubr.f32.mxu0 0.0
      %1343 = vmatmul.mubr.f32.gmra.mxu0 %v1122
      %v1344 = vpop.f32.mrf.mxu0
      %v1345 = vadd.f32 0.0, %v1344
      %v1346 = vpop.f32.mrf.mxu0
      %1347 = vmatprep.mubr.f32.mxu0 0.0
      %1348 = vmatmul.mubr.f32.gmra.mxu0 %v1125
      %v1349 = vpop.f32.mrf.mxu0
      %v1350 = vadd.f32 0.0, %v1349
      %v1351 = vpop.f32.mrf.mxu0
      %1352 = vmatprep.mubr.f32.mxu0 0.0
      %1353 = vmatmul.mubr.f32.gmra.mxu0 %v1128
      %v1354 = vpop.f32.mrf.mxu0
      %v1355 = vadd.f32 0.0, %v1354
      %v1356 = vpop.f32.mrf.mxu0
      %1357 = vmatprep.mubr.f32.mxu0 0.0
      %1358 = vmatmul.mubr.f32.gmra.mxu0 %v1131
      %v1359 = vpop.f32.mrf.mxu0
      %v1360 = vadd.f32 0.0, %v1359
      %v1361 = vpop.f32.mrf.mxu0
      %1362 = vmatprep.mubr.f32.mxu0 0.0
      %1363 = vmatmul.mubr.f32.gmra.mxu0 %v1134
      %v1364 = vpop.f32.mrf.mxu0
      %v1365 = vadd.f32 0.0, %v1364
      %v1366 = vpop.f32.mrf.mxu0
      %1367 = vmatprep.mubr.f32.mxu0 0.0
      %1368 = vmatmul.mubr.f32.gmra.mxu0 %v1137
      %v1369 = vpop.f32.mrf.mxu0
      %v1370 = vadd.f32 0.0, %v1369
      %v1371 = vpop.f32.mrf.mxu0
      %1372 = vmatprep.mubr.f32.mxu0 0.0
      %1373 = vmatmul.mubr.f32.gmra.mxu0 %v1140
      %v1374 = vpop.f32.mrf.mxu0
      %v1375 = vadd.f32 0.0, %v1374
      %v1376 = vpop.f32.mrf.mxu0
      %1377 = vmatprep.mubr.f32.mxu0 0.0
      %1378 = vmatmul.mubr.f32.gmra.mxu0 %v1143
      %v1379 = vpop.f32.mrf.mxu0
      %v1380 = vadd.f32 0.0, %v1379
      %v1381 = vpop.f32.mrf.mxu0
      %1382 = vmatprep.mubr.f32.mxu0 0.0
      %1383 = vmatmul.mubr.f32.gmra.mxu0 %v1146
      %v1384 = vpop.f32.mrf.mxu0
      %v1385 = vadd.f32 0.0, %v1384
      %v1386 = vpop.f32.mrf.mxu0
      %1387 = vmatprep.mubr.f32.mxu0 0.0
      %1388 = vmatmul.mubr.f32.gmra.mxu0 %v1149
      %v1389 = vpop.f32.mrf.mxu0
      %v1390 = vadd.f32 0.0, %v1389
      %v1391 = vpop.f32.mrf.mxu0
      %1392 = vmatprep.mubr.f32.mxu0 0.0
      %1393 = vmatmul.mubr.f32.gmra.mxu0 %v1152
      %v1394 = vpop.f32.mrf.mxu0
      %v1395 = vadd.f32 0.0, %v1394
      %v1396 = vpop.f32.mrf.mxu0
      %1397 = vmatprep.mubr.f32.mxu0 0.0
      %1398 = vmatmul.mubr.f32.gmra.mxu0 %v1155
      %v1399 = vpop.f32.mrf.mxu0
      %v1400 = vadd.f32 0.0, %v1399
      %v1401 = vpop.f32.mrf.mxu0
      %1402 = vmatprep.mubr.f32.mxu0 0.0
      %1403 = vmatmul.mubr.f32.gmra.mxu0 %v1158
      %v1404 = vpop.f32.mrf.mxu0
      %v1405 = vadd.f32 0.0, %v1404
      %v1406 = vpop.f32.mrf.mxu0
      %1407 = vdwg.mxu0
      %v1408 = vadd.f32 %v836, %v1230
      %v1409 = vadd.f32 %v841, %v1235
      %v1410 = vadd.f32 %v846, %v1240
      %v1411 = vadd.f32 %v851, %v1245
      %v1412 = vadd.f32 %v856, %v1250
      %v1413 = vadd.f32 %v861, %v1255
      %v1414 = vadd.f32 %v866, %v1260
      %v1415 = vadd.f32 %v871, %v1265
      %v1416 = vadd.f32 %v876, %v1270
      %v1417 = vadd.f32 %v881, %v1275
      %v1418 = vadd.f32 %v886, %v1280
      %v1419 = vadd.f32 %v891, %v1285
      %v1420 = vadd.f32 %v896, %v1290
      %v1421 = vadd.f32 %v901, %v1295
      %v1422 = vadd.f32 %v906, %v1300
      %v1423 = vadd.f32 %v911, %v1305
      %v1424 = vadd.f32 %v916, %v1310
      %v1425 = vadd.f32 %v921, %v1315
      %v1426 = vadd.f32 %v926, %v1320
      %v1427 = vadd.f32 %v931, %v1325
      %v1428 = vadd.f32 %v936, %v1330
      %v1429 = vadd.f32 %v941, %v1335
      %v1430 = vadd.f32 %v946, %v1340
      %v1431 = vadd.f32 %v951, %v1345
      %v1432 = vadd.f32 %v956, %v1350
      %v1433 = vadd.f32 %v961, %v1355
      %v1434 = vadd.f32 %v966, %v1360
      %v1435 = vadd.f32 %v971, %v1365
      %v1436 = vadd.f32 %v976, %v1370
      %v1437 = vadd.f32 %v981, %v1375
      %v1438 = vadd.f32 %v986, %v1380
      %v1439 = vadd.f32 %v991, %v1385
      %v1440 = vadd.f32 %v996, %v1390
      %v1441 = vadd.f32 %v1001, %v1395
      %v1442 = vadd.f32 %v1006, %v1400
      %v1443 = vadd.f32 %v1011, %v1405
      %v1444 = vld [vmem:[%s219 + $0x12] sm:$0xff]
      %v1445 = vld [vmem:[%s219 + $0x1a] sm:$0xff]
      %v1446 = vld [vmem:[%s219 + $0x22] sm:$0xff]
      %v1447 = vld [vmem:[%s219 + $0x2a] sm:$0xff]
      %v1448 = vld [vmem:[%s219 + $0x32] sm:$0xff]
      %v1449 = vld [vmem:[%s219 + $0x3a] sm:$0xff]
      %v1450 = vld [vmem:[%s219 + $0x42] sm:$0xff]
      %v1451 = vld [vmem:[%s219 + $0x4a] sm:$0xff]
      %v1452 = vld [vmem:[%s219 + $0x52] sm:$0xff]
      %v1453 = vld [vmem:[%s219 + $0x5a] sm:$0xff]
      %v1454 = vld [vmem:[%s219 + $0x62] sm:$0xff]
      %v1455 = vld [vmem:[%s219 + $0x6a] sm:$0xff]
      %v1456 = vld [vmem:[%s219 + $0x72] sm:$0xff]
      %v1457 = vld [vmem:[%s219 + $0x7a] sm:$0xff]
      %v1458 = vld [vmem:[%s219 + $0x82] sm:$0xff]
      %v1459 = vld [vmem:[%s219 + $0x8a] sm:$0xff]
      %v1460 = vld [vmem:[%s219 + $0x92] sm:$0xff]
      %v1461 = vld [vmem:[%s219 + $0x9a] sm:$0xff]
      %v1462 = vld [vmem:[%s219 + $0xa2] sm:$0xff]
      %v1463 = vld [vmem:[%s219 + $0xaa] sm:$0xff]
      %v1464 = vld [vmem:[%s219 + $0xb2] sm:$0xff]
      %v1465 = vld [vmem:[%s219 + $0xba] sm:$0xff]
      %v1466 = vld [vmem:[%s219 + $0xc2] sm:$0xff]
      %v1467 = vld [vmem:[%s219 + $0xca] sm:$0xff]
      %v1468 = vld [vmem:[%s219 + $0xd2] sm:$0xff]
      %v1469 = vld [vmem:[%s219 + $0xda] sm:$0xff]
      %v1470 = vld [vmem:[%s219 + $0xe2] sm:$0xff]
      %v1471 = vld [vmem:[%s219 + $0xea] sm:$0xff]
      %v1472 = vld [vmem:[%s219 + $0xf2] sm:$0xff]
      %v1473 = vld [vmem:[%s219 + $0xfa] sm:$0xff]
      %v1474 = vld [vmem:[%s219 + $0x102] sm:$0xff]
      %v1475 = vld [vmem:[%s219 + $0x10a] sm:$0xff]
      %v1476 = vld [vmem:[%s219 + $0x112] sm:$0xff]
      %v1477 = vld [vmem:[%s219 + $0x11a] sm:$0xff]
      %v1478 = vld [vmem:[%s219 + $0x122] sm:$0xff]
      %v1479 = vld [vmem:[%s219 + $0x12a] sm:$0xff]
      %s1480 = scalar_lea.vmem %s1, 12
      %v1481 = vld [vmem:[%s1480] sm:$0xf]
      %v1483 = vsel %vm300, %v1444, 0
      %v1486 = vsel %vm300, %v1445, 0
      %v1489 = vsel %vm300, %v1446, 0
      %v1492 = vsel %vm300, %v1447, 0
      %v1495 = vsel %vm300, %v1448, 0
      %v1498 = vsel %vm300, %v1449, 0
      %v1501 = vsel %vm300, %v1450, 0
      %v1504 = vsel %vm300, %v1451, 0
      %v1507 = vsel %vm300, %v1452, 0
      %v1510 = vsel %vm300, %v1453, 0
      %v1513 = vsel %vm300, %v1454, 0
      %v1516 = vsel %vm300, %v1455, 0
      %v1519 = vsel %vm300, %v1456, 0
      %v1522 = vsel %vm300, %v1457, 0
      %v1525 = vsel %vm300, %v1458, 0
      %v1528 = vsel %vm300, %v1459, 0
      %v1531 = vsel %vm300, %v1460, 0
      %v1534 = vsel %vm300, %v1461, 0
      %v1537 = vsel %vm300, %v1462, 0
      %v1540 = vsel %vm300, %v1463, 0
      %v1543 = vsel %vm300, %v1464, 0
      %v1546 = vsel %vm300, %v1465, 0
      %v1549 = vsel %vm300, %v1466, 0
      %v1552 = vsel %vm300, %v1467, 0
      %v1555 = vsel %vm300, %v1468, 0
      %v1558 = vsel %vm300, %v1469, 0
      %v1561 = vsel %vm300, %v1470, 0
      %v1564 = vsel %vm300, %v1471, 0
      %v1567 = vsel %vm300, %v1472, 0
      %v1570 = vsel %vm300, %v1473, 0
      %v1573 = vsel %vm300, %v1474, 0
      %v1576 = vsel %vm300, %v1475, 0
      %v1579 = vsel %vm300, %v1476, 0
      %v1582 = vsel %vm300, %v1477, 0
      %v1585 = vsel %vm300, %v1478, 0
      %v1588 = vsel %vm300, %v1479, 0
      %v1591 = vsel %vm409, %v1481, 0
      %1593 = vmatprep.subr.mxu0 0.0
      %1594 = vmatpush1.msra.mxu0 0.0
      %1595 = vmatprep.subr.mxu0 0.0
      %1596 = vmatpush1.msra.mxu0 0.0
      %1597 = vmatprep.subr.mxu0 0.0
      %1598 = vmatpush1.msra.mxu0 0.0
      %1599 = vmatprep.subr.mxu0 0.0
      %1600 = vmatpush1.msra.mxu0 0.0
      %1601 = vmatprep.subr.mxu0 0.0
      %1602 = vmatpush1.msra.mxu0 0.0
      %1603 = vmatprep.subr.mxu0 0.0
      %1604 = vmatpush1.msra.mxu0 0.0
      %1605 = vmatprep.subr.mxu0 0.0
      %1606 = vmatpush1.msra.mxu0 0.0
      %1607 = vmatprep.subr.mxu0 0.0
      %1608 = vmatpush1.msra.mxu0 0.0
      %1609 = vmatprep.subr.mxu0 0.0
      %1610 = vmatpush1.msra.mxu0 0.0
      %1611 = vmatprep.subr.mxu0 0.0
      %1612 = vmatpush1.msra.mxu0 0.0
      %1613 = vmatprep.subr.mxu0 0.0
      %1614 = vmatpush1.msra.mxu0 0.0
      %1615 = vmatprep.subr.mxu0 0.0
      %1616 = vmatpush1.msra.mxu0 0.0
      %1617 = vmatprep.subr.mxu0 0.0
      %1618 = vmatpush1.msra.mxu0 0.0
      %1619 = vmatprep.subr.mxu0 0.0
      %1620 = vmatpush1.msra.mxu0 0.0
      %1621 = vmatprep.subr.mxu0 0.0
      %1622 = vmatpush1.msra.mxu0 0.0
      %1623 = vmatprep.subr.mxu0 0.0
      %1624 = vmatpush1.msra.mxu0 %v1591
      %1625 = vmatprep.subr.mxu0 0.0
      %1626 = vmatpush2.msra.mxu0 0.0
      %1627 = vmatprep.subr.mxu0 0.0
      %1628 = vmatpush2.msra.mxu0 0.0
      %1629 = vmatprep.subr.mxu0 0.0
      %1630 = vmatpush2.msra.mxu0 0.0
      %1631 = vmatprep.subr.mxu0 0.0
      %1632 = vmatpush2.msra.mxu0 0.0
      %1633 = vmatprep.subr.mxu0 0.0
      %1634 = vmatpush2.msra.mxu0 0.0
      %1635 = vmatprep.subr.mxu0 0.0
      %1636 = vmatpush2.msra.mxu0 0.0
      %1637 = vmatprep.subr.mxu0 0.0
      %1638 = vmatpush2.msra.mxu0 0.0
      %1639 = vmatprep.subr.mxu0 0.0
      %1640 = vmatpush2.msra.mxu0 0.0
      %1641 = vmatprep.subr.mxu0 0.0
      %1642 = vmatpush2.msra.mxu0 0.0
      %1643 = vmatprep.subr.mxu0 0.0
      %1644 = vmatpush2.msra.mxu0 0.0
      %1645 = vmatprep.subr.mxu0 0.0
      %1646 = vmatpush2.msra.mxu0 0.0
      %1647 = vmatprep.subr.mxu0 0.0
      %1648 = vmatpush2.msra.mxu0 0.0
      %1649 = vmatprep.subr.mxu0 0.0
      %1650 = vmatpush2.msra.mxu0 0.0
      %1651 = vmatprep.subr.mxu0 0.0
      %1652 = vmatpush2.msra.mxu0 0.0
      %1653 = vmatprep.subr.mxu0 0.0
      %1654 = vmatpush2.msra.mxu0 0.0
      %1655 = vmatprep.subr.mxu0 0.0
      %1656 = vmatpush2.msra.mxu0 0.0
      %1657 = vmatprep.mubr.f32.mxu0 0.0
      %1658 = vmatmul.mubr.f32.gmra.mxu0 %v1483
      %v1659 = vpop.f32.mrf.mxu0
      %v1660 = vadd.f32 0.0, %v1659
      %v1661 = vpop.f32.mrf.mxu0
      %1662 = vmatprep.mubr.f32.mxu0 0.0
      %1663 = vmatmul.mubr.f32.gmra.mxu0 %v1486
      %v1664 = vpop.f32.mrf.mxu0
      %v1665 = vadd.f32 0.0, %v1664
      %v1666 = vpop.f32.mrf.mxu0
      %1667 = vmatprep.mubr.f32.mxu0 0.0
      %1668 = vmatmul.mubr.f32.gmra.mxu0 %v1489
      %v1669 = vpop.f32.mrf.mxu0
      %v1670 = vadd.f32 0.0, %v1669
      %v1671 = vpop.f32.mrf.mxu0
      %1672 = vmatprep.mubr.f32.mxu0 0.0
      %1673 = vmatmul.mubr.f32.gmra.mxu0 %v1492
      %v1674 = vpop.f32.mrf.mxu0
      %v1675 = vadd.f32 0.0, %v1674
      %v1676 = vpop.f32.mrf.mxu0
      %1677 = vmatprep.mubr.f32.mxu0 0.0
      %1678 = vmatmul.mubr.f32.gmra.mxu0 %v1495
      %v1679 = vpop.f32.mrf.mxu0
      %v1680 = vadd.f32 0.0, %v1679
      %v1681 = vpop.f32.mrf.mxu0
      %1682 = vmatprep.mubr.f32.mxu0 0.0
      %1683 = vmatmul.mubr.f32.gmra.mxu0 %v1498
      %v1684 = vpop.f32.mrf.mxu0
      %v1685 = vadd.f32 0.0, %v1684
      %v1686 = vpop.f32.mrf.mxu0
      %1687 = vmatprep.mubr.f32.mxu0 0.0
      %1688 = vmatmul.mubr.f32.gmra.mxu0 %v1501
      %v1689 = vpop.f32.mrf.mxu0
      %v1690 = vadd.f32 0.0, %v1689
      %v1691 = vpop.f32.mrf.mxu0
      %1692 = vmatprep.mubr.f32.mxu0 0.0
      %1693 = vmatmul.mubr.f32.gmra.mxu0 %v1504
      %v1694 = vpop.f32.mrf.mxu0
      %v1695 = vadd.f32 0.0, %v1694
      %v1696 = vpop.f32.mrf.mxu0
      %1697 = vmatprep.mubr.f32.mxu0 0.0
      %1698 = vmatmul.mubr.f32.gmra.mxu0 %v1507
      %v1699 = vpop.f32.mrf.mxu0
      %v1700 = vadd.f32 0.0, %v1699
      %v1701 = vpop.f32.mrf.mxu0
      %1702 = vmatprep.mubr.f32.mxu0 0.0
      %1703 = vmatmul.mubr.f32.gmra.mxu0 %v1510
      %v1704 = vpop.f32.mrf.mxu0
      %v1705 = vadd.f32 0.0, %v1704
      %v1706 = vpop.f32.mrf.mxu0
      %1707 = vmatprep.mubr.f32.mxu0 0.0
      %1708 = vmatmul.mubr.f32.gmra.mxu0 %v1513
      %v1709 = vpop.f32.mrf.mxu0
      %v1710 = vadd.f32 0.0, %v1709
      %v1711 = vpop.f32.mrf.mxu0
      %1712 = vmatprep.mubr.f32.mxu0 0.0
      %1713 = vmatmul.mubr.f32.gmra.mxu0 %v1516
      %v1714 = vpop.f32.mrf.mxu0
      %v1715 = vadd.f32 0.0, %v1714
      %v1716 = vpop.f32.mrf.mxu0
      %1717 = vmatprep.mubr.f32.mxu0 0.0
      %1718 = vmatmul.mubr.f32.gmra.mxu0 %v1519
      %v1719 = vpop.f32.mrf.mxu0
      %v1720 = vadd.f32 0.0, %v1719
      %v1721 = vpop.f32.mrf.mxu0
      %1722 = vmatprep.mubr.f32.mxu0 0.0
      %1723 = vmatmul.mubr.f32.gmra.mxu0 %v1522
      %v1724 = vpop.f32.mrf.mxu0
      %v1725 = vadd.f32 0.0, %v1724
      %v1726 = vpop.f32.mrf.mxu0
      %1727 = vmatprep.mubr.f32.mxu0 0.0
      %1728 = vmatmul.mubr.f32.gmra.mxu0 %v1525
      %v1729 = vpop.f32.mrf.mxu0
      %v1730 = vadd.f32 0.0, %v1729
      %v1731 = vpop.f32.mrf.mxu0
      %1732 = vmatprep.mubr.f32.mxu0 0.0
      %1733 = vmatmul.mubr.f32.gmra.mxu0 %v1528
      %v1734 = vpop.f32.mrf.mxu0
      %v1735 = vadd.f32 0.0, %v1734
      %v1736 = vpop.f32.mrf.mxu0
      %1737 = vmatprep.mubr.f32.mxu0 0.0
      %1738 = vmatmul.mubr.f32.gmra.mxu0 %v1531
      %v1739 = vpop.f32.mrf.mxu0
      %v1740 = vadd.f32 0.0, %v1739
      %v1741 = vpop.f32.mrf.mxu0
      %1742 = vmatprep.mubr.f32.mxu0 0.0
      %1743 = vmatmul.mubr.f32.gmra.mxu0 %v1534
      %v1744 = vpop.f32.mrf.mxu0
      %v1745 = vadd.f32 0.0, %v1744
      %v1746 = vpop.f32.mrf.mxu0
      %1747 = vmatprep.mubr.f32.mxu0 0.0
      %1748 = vmatmul.mubr.f32.gmra.mxu0 %v1537
      %v1749 = vpop.f32.mrf.mxu0
      %v1750 = vadd.f32 0.0, %v1749
      %v1751 = vpop.f32.mrf.mxu0
      %1752 = vmatprep.mubr.f32.mxu0 0.0
      %1753 = vmatmul.mubr.f32.gmra.mxu0 %v1540
      %v1754 = vpop.f32.mrf.mxu0
      %v1755 = vadd.f32 0.0, %v1754
      %v1756 = vpop.f32.mrf.mxu0
      %1757 = vmatprep.mubr.f32.mxu0 0.0
      %1758 = vmatmul.mubr.f32.gmra.mxu0 %v1543
      %v1759 = vpop.f32.mrf.mxu0
      %v1760 = vadd.f32 0.0, %v1759
      %v1761 = vpop.f32.mrf.mxu0
      %1762 = vmatprep.mubr.f32.mxu0 0.0
      %1763 = vmatmul.mubr.f32.gmra.mxu0 %v1546
      %v1764 = vpop.f32.mrf.mxu0
      %v1765 = vadd.f32 0.0, %v1764
      %v1766 = vpop.f32.mrf.mxu0
      %1767 = vmatprep.mubr.f32.mxu0 0.0
      %1768 = vmatmul.mubr.f32.gmra.mxu0 %v1549
      %v1769 = vpop.f32.mrf.mxu0
      %v1770 = vadd.f32 0.0, %v1769
      %v1771 = vpop.f32.mrf.mxu0
      %1772 = vmatprep.mubr.f32.mxu0 0.0
      %1773 = vmatmul.mubr.f32.gmra.mxu0 %v1552
      %v1774 = vpop.f32.mrf.mxu0
      %v1775 = vadd.f32 0.0, %v1774
      %v1776 = vpop.f32.mrf.mxu0
      %1777 = vmatprep.mubr.f32.mxu0 0.0
      %1778 = vmatmul.mubr.f32.gmra.mxu0 %v1555
      %v1779 = vpop.f32.mrf.mxu0
      %v1780 = vadd.f32 0.0, %v1779
      %v1781 = vpop.f32.mrf.mxu0
      %1782 = vmatprep.mubr.f32.mxu0 0.0
      %1783 = vmatmul.mubr.f32.gmra.mxu0 %v1558
      %v1784 = vpop.f32.mrf.mxu0
      %v1785 = vadd.f32 0.0, %v1784
      %v1786 = vpop.f32.mrf.mxu0
      %1787 = vmatprep.mubr.f32.mxu0 0.0
      %1788 = vmatmul.mubr.f32.gmra.mxu0 %v1561
      %v1789 = vpop.f32.mrf.mxu0
      %v1790 = vadd.f32 0.0, %v1789
      %v1791 = vpop.f32.mrf.mxu0
      %1792 = vmatprep.mubr.f32.mxu0 0.0
      %1793 = vmatmul.mubr.f32.gmra.mxu0 %v1564
      %v1794 = vpop.f32.mrf.mxu0
      %v1795 = vadd.f32 0.0, %v1794
      %v1796 = vpop.f32.mrf.mxu0
      %1797 = vmatprep.mubr.f32.mxu0 0.0
      %1798 = vmatmul.mubr.f32.gmra.mxu0 %v1567
      %v1799 = vpop.f32.mrf.mxu0
      %v1800 = vadd.f32 0.0, %v1799
      %v1801 = vpop.f32.mrf.mxu0
      %1802 = vmatprep.mubr.f32.mxu0 0.0
      %1803 = vmatmul.mubr.f32.gmra.mxu0 %v1570
      %v1804 = vpop.f32.mrf.mxu0
      %v1805 = vadd.f32 0.0, %v1804
      %v1806 = vpop.f32.mrf.mxu0
      %1807 = vmatprep.mubr.f32.mxu0 0.0
      %1808 = vmatmul.mubr.f32.gmra.mxu0 %v1573
      %v1809 = vpop.f32.mrf.mxu0
      %v1810 = vadd.f32 0.0, %v1809
      %v1811 = vpop.f32.mrf.mxu0
      %1812 = vmatprep.mubr.f32.mxu0 0.0
      %1813 = vmatmul.mubr.f32.gmra.mxu0 %v1576
      %v1814 = vpop.f32.mrf.mxu0
      %v1815 = vadd.f32 0.0, %v1814
      %v1816 = vpop.f32.mrf.mxu0
      %1817 = vmatprep.mubr.f32.mxu0 0.0
      %1818 = vmatmul.mubr.f32.gmra.mxu0 %v1579
      %v1819 = vpop.f32.mrf.mxu0
      %v1820 = vadd.f32 0.0, %v1819
      %v1821 = vpop.f32.mrf.mxu0
      %1822 = vmatprep.mubr.f32.mxu0 0.0
      %1823 = vmatmul.mubr.f32.gmra.mxu0 %v1582
      %v1824 = vpop.f32.mrf.mxu0
      %v1825 = vadd.f32 0.0, %v1824
      %v1826 = vpop.f32.mrf.mxu0
      %1827 = vmatprep.mubr.f32.mxu0 0.0
      %1828 = vmatmul.mubr.f32.gmra.mxu0 %v1585
      %v1829 = vpop.f32.mrf.mxu0
      %v1830 = vadd.f32 0.0, %v1829
      %v1831 = vpop.f32.mrf.mxu0
      %1832 = vmatprep.mubr.f32.mxu0 0.0
      %1833 = vmatmul.mubr.f32.gmra.mxu0 %v1588
      %v1834 = vpop.f32.mrf.mxu0
      %v1835 = vadd.f32 0.0, %v1834
      %v1836 = vpop.f32.mrf.mxu0
      %1837 = vdwg.mxu0
      %v1838 = vadd.f32 %v1408, %v1660
      %v1839 = vadd.f32 %v1409, %v1665
      %v1840 = vadd.f32 %v1410, %v1670
      %v1841 = vadd.f32 %v1411, %v1675
      %v1842 = vadd.f32 %v1412, %v1680
      %v1843 = vadd.f32 %v1413, %v1685
      %v1844 = vadd.f32 %v1414, %v1690
      %v1845 = vadd.f32 %v1415, %v1695
      %v1846 = vadd.f32 %v1416, %v1700
      %v1847 = vadd.f32 %v1417, %v1705
      %v1848 = vadd.f32 %v1418, %v1710
      %v1849 = vadd.f32 %v1419, %v1715
      %v1850 = vadd.f32 %v1420, %v1720
      %v1851 = vadd.f32 %v1421, %v1725
      %v1852 = vadd.f32 %v1422, %v1730
      %v1853 = vadd.f32 %v1423, %v1735
      %v1854 = vadd.f32 %v1424, %v1740
      %v1855 = vadd.f32 %v1425, %v1745
      %v1856 = vadd.f32 %v1426, %v1750
      %v1857 = vadd.f32 %v1427, %v1755
      %v1858 = vadd.f32 %v1428, %v1760
      %v1859 = vadd.f32 %v1429, %v1765
      %v1860 = vadd.f32 %v1430, %v1770
      %v1861 = vadd.f32 %v1431, %v1775
      %v1862 = vadd.f32 %v1432, %v1780
      %v1863 = vadd.f32 %v1433, %v1785
      %v1864 = vadd.f32 %v1434, %v1790
      %v1865 = vadd.f32 %v1435, %v1795
      %v1866 = vadd.f32 %v1436, %v1800
      %v1867 = vadd.f32 %v1437, %v1805
      %v1868 = vadd.f32 %v1438, %v1810
      %v1869 = vadd.f32 %v1439, %v1815
      %v1870 = vadd.f32 %v1440, %v1820
      %v1871 = vadd.f32 %v1441, %v1825
      %v1872 = vadd.f32 %v1442, %v1830
      %v1873 = vadd.f32 %v1443, %v1835
      %v1874 = vld [vmem:[%s219 + $0x13] sm:$0xff]
      %v1875 = vld [vmem:[%s219 + $0x1b] sm:$0xff]
      %v1876 = vld [vmem:[%s219 + $0x23] sm:$0xff]
      %v1877 = vld [vmem:[%s219 + $0x2b] sm:$0xff]
      %v1878 = vld [vmem:[%s219 + $0x33] sm:$0xff]
      %v1879 = vld [vmem:[%s219 + $0x3b] sm:$0xff]
      %v1880 = vld [vmem:[%s219 + $0x43] sm:$0xff]
      %v1881 = vld [vmem:[%s219 + $0x4b] sm:$0xff]
      %v1882 = vld [vmem:[%s219 + $0x53] sm:$0xff]
      %v1883 = vld [vmem:[%s219 + $0x5b] sm:$0xff]
      %v1884 = vld [vmem:[%s219 + $0x63] sm:$0xff]
      %v1885 = vld [vmem:[%s219 + $0x6b] sm:$0xff]
      %v1886 = vld [vmem:[%s219 + $0x73] sm:$0xff]
      %v1887 = vld [vmem:[%s219 + $0x7b] sm:$0xff]
      %v1888 = vld [vmem:[%s219 + $0x83] sm:$0xff]
      %v1889 = vld [vmem:[%s219 + $0x8b] sm:$0xff]
      %v1890 = vld [vmem:[%s219 + $0x93] sm:$0xff]
      %v1891 = vld [vmem:[%s219 + $0x9b] sm:$0xff]
      %v1892 = vld [vmem:[%s219 + $0xa3] sm:$0xff]
      %v1893 = vld [vmem:[%s219 + $0xab] sm:$0xff]
      %v1894 = vld [vmem:[%s219 + $0xb3] sm:$0xff]
      %v1895 = vld [vmem:[%s219 + $0xbb] sm:$0xff]
      %v1896 = vld [vmem:[%s219 + $0xc3] sm:$0xff]
      %v1897 = vld [vmem:[%s219 + $0xcb] sm:$0xff]
      %v1898 = vld [vmem:[%s219 + $0xd3] sm:$0xff]
      %v1899 = vld [vmem:[%s219 + $0xdb] sm:$0xff]
      %v1900 = vld [vmem:[%s219 + $0xe3] sm:$0xff]
      %v1901 = vld [vmem:[%s219 + $0xeb] sm:$0xff]
      %v1902 = vld [vmem:[%s219 + $0xf3] sm:$0xff]
      %v1903 = vld [vmem:[%s219 + $0xfb] sm:$0xff]
      %v1904 = vld [vmem:[%s219 + $0x103] sm:$0xff]
      %v1905 = vld [vmem:[%s219 + $0x10b] sm:$0xff]
      %v1906 = vld [vmem:[%s219 + $0x113] sm:$0xff]
      %v1907 = vld [vmem:[%s219 + $0x11b] sm:$0xff]
      %v1908 = vld [vmem:[%s219 + $0x123] sm:$0xff]
      %v1909 = vld [vmem:[%s219 + $0x12b] sm:$0xff]
      %s1910 = scalar_lea.vmem %s1, 16
      %v1911 = vld [vmem:[%s1910] sm:$0xf]
      %v1913 = vsel %vm300, %v1874, 0
      %v1916 = vsel %vm300, %v1875, 0
      %v1919 = vsel %vm300, %v1876, 0
      %v1922 = vsel %vm300, %v1877, 0
      %v1925 = vsel %vm300, %v1878, 0
      %v1928 = vsel %vm300, %v1879, 0
      %v1931 = vsel %vm300, %v1880, 0
      %v1934 = vsel %vm300, %v1881, 0
      %v1937 = vsel %vm300, %v1882, 0
      %v1940 = vsel %vm300, %v1883, 0
      %v1943 = vsel %vm300, %v1884, 0
      %v1946 = vsel %vm300, %v1885, 0
      %v1949 = vsel %vm300, %v1886, 0
      %v1952 = vsel %vm300, %v1887, 0
      %v1955 = vsel %vm300, %v1888, 0
      %v1958 = vsel %vm300, %v1889, 0
      %v1961 = vsel %vm300, %v1890, 0
      %v1964 = vsel %vm300, %v1891, 0
      %v1967 = vsel %vm300, %v1892, 0
      %v1970 = vsel %vm300, %v1893, 0
      %v1973 = vsel %vm300, %v1894, 0
      %v1976 = vsel %vm300, %v1895, 0
      %v1979 = vsel %vm300, %v1896, 0
      %v1982 = vsel %vm300, %v1897, 0
      %v1985 = vsel %vm300, %v1898, 0
      %v1988 = vsel %vm300, %v1899, 0
      %v1991 = vsel %vm300, %v1900, 0
      %v1994 = vsel %vm300, %v1901, 0
      %v1997 = vsel %vm300, %v1902, 0
      %v2000 = vsel %vm300, %v1903, 0
      %v2003 = vsel %vm300, %v1904, 0
      %v2006 = vsel %vm300, %v1905, 0
      %v2009 = vsel %vm300, %v1906, 0
      %v2012 = vsel %vm300, %v1907, 0
      %v2015 = vsel %vm300, %v1908, 0
      %v2018 = vsel %vm300, %v1909, 0
      %v2021 = vsel %vm409, %v1911, 0
      %2023 = vmatprep.subr.mxu0 0.0
      %2024 = vmatpush1.msra.mxu0 0.0
      %2025 = vmatprep.subr.mxu0 0.0
      %2026 = vmatpush1.msra.mxu0 0.0
      %2027 = vmatprep.subr.mxu0 0.0
      %2028 = vmatpush1.msra.mxu0 0.0
      %2029 = vmatprep.subr.mxu0 0.0
      %2030 = vmatpush1.msra.mxu0 0.0
      %2031 = vmatprep.subr.mxu0 0.0
      %2032 = vmatpush1.msra.mxu0 0.0
      %2033 = vmatprep.subr.mxu0 0.0
      %2034 = vmatpush1.msra.mxu0 0.0
      %2035 = vmatprep.subr.mxu0 0.0
      %2036 = vmatpush1.msra.mxu0 0.0
      %2037 = vmatprep.subr.mxu0 0.0
      %2038 = vmatpush1.msra.mxu0 0.0
      %2039 = vmatprep.subr.mxu0 0.0
      %2040 = vmatpush1.msra.mxu0 0.0
      %2041 = vmatprep.subr.mxu0 0.0
      %2042 = vmatpush1.msra.mxu0 0.0
      %2043 = vmatprep.subr.mxu0 0.0
      %2044 = vmatpush1.msra.mxu0 0.0
      %2045 = vmatprep.subr.mxu0 0.0
      %2046 = vmatpush1.msra.mxu0 0.0
      %2047 = vmatprep.subr.mxu0 0.0
      %2048 = vmatpush1.msra.mxu0 0.0
      %2049 = vmatprep.subr.mxu0 0.0
      %2050 = vmatpush1.msra.mxu0 0.0
      %2051 = vmatprep.subr.mxu0 0.0
      %2052 = vmatpush1.msra.mxu0 0.0
      %2053 = vmatprep.subr.mxu0 0.0
      %2054 = vmatpush1.msra.mxu0 %v2021
      %2055 = vmatprep.subr.mxu0 0.0
      %2056 = vmatpush2.msra.mxu0 0.0
      %2057 = vmatprep.subr.mxu0 0.0
      %2058 = vmatpush2.msra.mxu0 0.0
      %2059 = vmatprep.subr.mxu0 0.0
      %2060 = vmatpush2.msra.mxu0 0.0
      %2061 = vmatprep.subr.mxu0 0.0
      %2062 = vmatpush2.msra.mxu0 0.0
      %2063 = vmatprep.subr.mxu0 0.0
      %2064 = vmatpush2.msra.mxu0 0.0
      %2065 = vmatprep.subr.mxu0 0.0
      %2066 = vmatpush2.msra.mxu0 0.0
      %2067 = vmatprep.subr.mxu0 0.0
      %2068 = vmatpush2.msra.mxu0 0.0
      %2069 = vmatprep.subr.mxu0 0.0
      %2070 = vmatpush2.msra.mxu0 0.0
      %2071 = vmatprep.subr.mxu0 0.0
      %2072 = vmatpush2.msra.mxu0 0.0
      %2073 = vmatprep.subr.mxu0 0.0
      %2074 = vmatpush2.msra.mxu0 0.0
      %2075 = vmatprep.subr.mxu0 0.0
      %2076 = vmatpush2.msra.mxu0 0.0
      %2077 = vmatprep.subr.mxu0 0.0
      %2078 = vmatpush2.msra.mxu0 0.0
      %2079 = vmatprep.subr.mxu0 0.0
      %2080 = vmatpush2.msra.mxu0 0.0
      %2081 = vmatprep.subr.mxu0 0.0
      %2082 = vmatpush2.msra.mxu0 0.0
      %2083 = vmatprep.subr.mxu0 0.0
      %2084 = vmatpush2.msra.mxu0 0.0
      %2085 = vmatprep.subr.mxu0 0.0
      %2086 = vmatpush2.msra.mxu0 0.0
      %2087 = vmatprep.mubr.f32.mxu0 0.0
      %2088 = vmatmul.mubr.f32.gmra.mxu0 %v1913
      %v2089 = vpop.f32.mrf.mxu0
      %v2090 = vadd.f32 0.0, %v2089
      %v2091 = vpop.f32.mrf.mxu0
      %2092 = vmatprep.mubr.f32.mxu0 0.0
      %2093 = vmatmul.mubr.f32.gmra.mxu0 %v1916
      %v2094 = vpop.f32.mrf.mxu0
      %v2095 = vadd.f32 0.0, %v2094
      %v2096 = vpop.f32.mrf.mxu0
      %2097 = vmatprep.mubr.f32.mxu0 0.0
      %2098 = vmatmul.mubr.f32.gmra.mxu0 %v1919
      %v2099 = vpop.f32.mrf.mxu0
      %v2100 = vadd.f32 0.0, %v2099
      %v2101 = vpop.f32.mrf.mxu0
      %2102 = vmatprep.mubr.f32.mxu0 0.0
      %2103 = vmatmul.mubr.f32.gmra.mxu0 %v1922
      %v2104 = vpop.f32.mrf.mxu0
      %v2105 = vadd.f32 0.0, %v2104
      %v2106 = vpop.f32.mrf.mxu0
      %2107 = vmatprep.mubr.f32.mxu0 0.0
      %2108 = vmatmul.mubr.f32.gmra.mxu0 %v1925
      %v2109 = vpop.f32.mrf.mxu0
      %v2110 = vadd.f32 0.0, %v2109
      %v2111 = vpop.f32.mrf.mxu0
      %2112 = vmatprep.mubr.f32.mxu0 0.0
      %2113 = vmatmul.mubr.f32.gmra.mxu0 %v1928
      %v2114 = vpop.f32.mrf.mxu0
      %v2115 = vadd.f32 0.0, %v2114
      %v2116 = vpop.f32.mrf.mxu0
      %2117 = vmatprep.mubr.f32.mxu0 0.0
      %2118 = vmatmul.mubr.f32.gmra.mxu0 %v1931
      %v2119 = vpop.f32.mrf.mxu0
      %v2120 = vadd.f32 0.0, %v2119
      %v2121 = vpop.f32.mrf.mxu0
      %2122 = vmatprep.mubr.f32.mxu0 0.0
      %2123 = vmatmul.mubr.f32.gmra.mxu0 %v1934
      %v2124 = vpop.f32.mrf.mxu0
      %v2125 = vadd.f32 0.0, %v2124
      %v2126 = vpop.f32.mrf.mxu0
      %2127 = vmatprep.mubr.f32.mxu0 0.0
      %2128 = vmatmul.mubr.f32.gmra.mxu0 %v1937
      %v2129 = vpop.f32.mrf.mxu0
      %v2130 = vadd.f32 0.0, %v2129
      %v2131 = vpop.f32.mrf.mxu0
      %2132 = vmatprep.mubr.f32.mxu0 0.0
      %2133 = vmatmul.mubr.f32.gmra.mxu0 %v1940
      %v2134 = vpop.f32.mrf.mxu0
      %v2135 = vadd.f32 0.0, %v2134
      %v2136 = vpop.f32.mrf.mxu0
      %2137 = vmatprep.mubr.f32.mxu0 0.0
      %2138 = vmatmul.mubr.f32.gmra.mxu0 %v1943
      %v2139 = vpop.f32.mrf.mxu0
      %v2140 = vadd.f32 0.0, %v2139
      %v2141 = vpop.f32.mrf.mxu0
      %2142 = vmatprep.mubr.f32.mxu0 0.0
      %2143 = vmatmul.mubr.f32.gmra.mxu0 %v1946
      %v2144 = vpop.f32.mrf.mxu0
      %v2145 = vadd.f32 0.0, %v2144
      %v2146 = vpop.f32.mrf.mxu0
      %2147 = vmatprep.mubr.f32.mxu0 0.0
      %2148 = vmatmul.mubr.f32.gmra.mxu0 %v1949
      %v2149 = vpop.f32.mrf.mxu0
      %v2150 = vadd.f32 0.0, %v2149
      %v2151 = vpop.f32.mrf.mxu0
      %2152 = vmatprep.mubr.f32.mxu0 0.0
      %2153 = vmatmul.mubr.f32.gmra.mxu0 %v1952
      %v2154 = vpop.f32.mrf.mxu0
      %v2155 = vadd.f32 0.0, %v2154
      %v2156 = vpop.f32.mrf.mxu0
      %2157 = vmatprep.mubr.f32.mxu0 0.0
      %2158 = vmatmul.mubr.f32.gmra.mxu0 %v1955
      %v2159 = vpop.f32.mrf.mxu0
      %v2160 = vadd.f32 0.0, %v2159
      %v2161 = vpop.f32.mrf.mxu0
      %2162 = vmatprep.mubr.f32.mxu0 0.0
      %2163 = vmatmul.mubr.f32.gmra.mxu0 %v1958
      %v2164 = vpop.f32.mrf.mxu0
      %v2165 = vadd.f32 0.0, %v2164
      %v2166 = vpop.f32.mrf.mxu0
      %2167 = vmatprep.mubr.f32.mxu0 0.0
      %2168 = vmatmul.mubr.f32.gmra.mxu0 %v1961
      %v2169 = vpop.f32.mrf.mxu0
      %v2170 = vadd.f32 0.0, %v2169
      %v2171 = vpop.f32.mrf.mxu0
      %2172 = vmatprep.mubr.f32.mxu0 0.0
      %2173 = vmatmul.mubr.f32.gmra.mxu0 %v1964
      %v2174 = vpop.f32.mrf.mxu0
      %v2175 = vadd.f32 0.0, %v2174
      %v2176 = vpop.f32.mrf.mxu0
      %2177 = vmatprep.mubr.f32.mxu0 0.0
      %2178 = vmatmul.mubr.f32.gmra.mxu0 %v1967
      %v2179 = vpop.f32.mrf.mxu0
      %v2180 = vadd.f32 0.0, %v2179
      %v2181 = vpop.f32.mrf.mxu0
      %2182 = vmatprep.mubr.f32.mxu0 0.0
      %2183 = vmatmul.mubr.f32.gmra.mxu0 %v1970
      %v2184 = vpop.f32.mrf.mxu0
      %v2185 = vadd.f32 0.0, %v2184
      %v2186 = vpop.f32.mrf.mxu0
      %2187 = vmatprep.mubr.f32.mxu0 0.0
      %2188 = vmatmul.mubr.f32.gmra.mxu0 %v1973
      %v2189 = vpop.f32.mrf.mxu0
      %v2190 = vadd.f32 0.0, %v2189
      %v2191 = vpop.f32.mrf.mxu0
      %2192 = vmatprep.mubr.f32.mxu0 0.0
      %2193 = vmatmul.mubr.f32.gmra.mxu0 %v1976
      %v2194 = vpop.f32.mrf.mxu0
      %v2195 = vadd.f32 0.0, %v2194
      %v2196 = vpop.f32.mrf.mxu0
      %2197 = vmatprep.mubr.f32.mxu0 0.0
      %2198 = vmatmul.mubr.f32.gmra.mxu0 %v1979
      %v2199 = vpop.f32.mrf.mxu0
      %v2200 = vadd.f32 0.0, %v2199
      %v2201 = vpop.f32.mrf.mxu0
      %2202 = vmatprep.mubr.f32.mxu0 0.0
      %2203 = vmatmul.mubr.f32.gmra.mxu0 %v1982
      %v2204 = vpop.f32.mrf.mxu0
      %v2205 = vadd.f32 0.0, %v2204
      %v2206 = vpop.f32.mrf.mxu0
      %2207 = vmatprep.mubr.f32.mxu0 0.0
      %2208 = vmatmul.mubr.f32.gmra.mxu0 %v1985
      %v2209 = vpop.f32.mrf.mxu0
      %v2210 = vadd.f32 0.0, %v2209
      %v2211 = vpop.f32.mrf.mxu0
      %2212 = vmatprep.mubr.f32.mxu0 0.0
      %2213 = vmatmul.mubr.f32.gmra.mxu0 %v1988
      %v2214 = vpop.f32.mrf.mxu0
      %v2215 = vadd.f32 0.0, %v2214
      %v2216 = vpop.f32.mrf.mxu0
      %2217 = vmatprep.mubr.f32.mxu0 0.0
      %2218 = vmatmul.mubr.f32.gmra.mxu0 %v1991
      %v2219 = vpop.f32.mrf.mxu0
      %v2220 = vadd.f32 0.0, %v2219
      %v2221 = vpop.f32.mrf.mxu0
      %2222 = vmatprep.mubr.f32.mxu0 0.0
      %2223 = vmatmul.mubr.f32.gmra.mxu0 %v1994
      %v2224 = vpop.f32.mrf.mxu0
      %v2225 = vadd.f32 0.0, %v2224
      %v2226 = vpop.f32.mrf.mxu0
      %2227 = vmatprep.mubr.f32.mxu0 0.0
      %2228 = vmatmul.mubr.f32.gmra.mxu0 %v1997
      %v2229 = vpop.f32.mrf.mxu0
      %v2230 = vadd.f32 0.0, %v2229
      %v2231 = vpop.f32.mrf.mxu0
      %2232 = vmatprep.mubr.f32.mxu0 0.0
      %2233 = vmatmul.mubr.f32.gmra.mxu0 %v2000
      %v2234 = vpop.f32.mrf.mxu0
      %v2235 = vadd.f32 0.0, %v2234
      %v2236 = vpop.f32.mrf.mxu0
      %2237 = vmatprep.mubr.f32.mxu0 0.0
      %2238 = vmatmul.mubr.f32.gmra.mxu0 %v2003
      %v2239 = vpop.f32.mrf.mxu0
      %v2240 = vadd.f32 0.0, %v2239
      %v2241 = vpop.f32.mrf.mxu0
      %2242 = vmatprep.mubr.f32.mxu0 0.0
      %2243 = vmatmul.mubr.f32.gmra.mxu0 %v2006
      %v2244 = vpop.f32.mrf.mxu0
      %v2245 = vadd.f32 0.0, %v2244
      %v2246 = vpop.f32.mrf.mxu0
      %2247 = vmatprep.mubr.f32.mxu0 0.0
      %2248 = vmatmul.mubr.f32.gmra.mxu0 %v2009
      %v2249 = vpop.f32.mrf.mxu0
      %v2250 = vadd.f32 0.0, %v2249
      %v2251 = vpop.f32.mrf.mxu0
      %2252 = vmatprep.mubr.f32.mxu0 0.0
      %2253 = vmatmul.mubr.f32.gmra.mxu0 %v2012
      %v2254 = vpop.f32.mrf.mxu0
      %v2255 = vadd.f32 0.0, %v2254
      %v2256 = vpop.f32.mrf.mxu0
      %2257 = vmatprep.mubr.f32.mxu0 0.0
      %2258 = vmatmul.mubr.f32.gmra.mxu0 %v2015
      %v2259 = vpop.f32.mrf.mxu0
      %v2260 = vadd.f32 0.0, %v2259
      %v2261 = vpop.f32.mrf.mxu0
      %2262 = vmatprep.mubr.f32.mxu0 0.0
      %2263 = vmatmul.mubr.f32.gmra.mxu0 %v2018
      %v2264 = vpop.f32.mrf.mxu0
      %v2265 = vadd.f32 0.0, %v2264
      %v2266 = vpop.f32.mrf.mxu0
      %2267 = vdwg.mxu0
      %v2268 = vadd.f32 %v1838, %v2090
      %v2269 = vadd.f32 %v1839, %v2095
      %v2270 = vadd.f32 %v1840, %v2100
      %v2271 = vadd.f32 %v1841, %v2105
      %v2272 = vadd.f32 %v1842, %v2110
      %v2273 = vadd.f32 %v1843, %v2115
      %v2274 = vadd.f32 %v1844, %v2120
      %v2275 = vadd.f32 %v1845, %v2125
      %v2276 = vadd.f32 %v1846, %v2130
      %v2277 = vadd.f32 %v1847, %v2135
      %v2278 = vadd.f32 %v1848, %v2140
      %v2279 = vadd.f32 %v1849, %v2145
      %v2280 = vadd.f32 %v1850, %v2150
      %v2281 = vadd.f32 %v1851, %v2155
      %v2282 = vadd.f32 %v1852, %v2160
      %v2283 = vadd.f32 %v1853, %v2165
      %v2284 = vadd.f32 %v1854, %v2170
      %v2285 = vadd.f32 %v1855, %v2175
      %v2286 = vadd.f32 %v1856, %v2180
      %v2287 = vadd.f32 %v1857, %v2185
      %v2288 = vadd.f32 %v1858, %v2190
      %v2289 = vadd.f32 %v1859, %v2195
      %v2290 = vadd.f32 %v1860, %v2200
      %v2291 = vadd.f32 %v1861, %v2205
      %v2292 = vadd.f32 %v1862, %v2210
      %v2293 = vadd.f32 %v1863, %v2215
      %v2294 = vadd.f32 %v1864, %v2220
      %v2295 = vadd.f32 %v1865, %v2225
      %v2296 = vadd.f32 %v1866, %v2230
      %v2297 = vadd.f32 %v1867, %v2235
      %v2298 = vadd.f32 %v1868, %v2240
      %v2299 = vadd.f32 %v1869, %v2245
      %v2300 = vadd.f32 %v1870, %v2250
      %v2301 = vadd.f32 %v1871, %v2255
      %v2302 = vadd.f32 %v1872, %v2260
      %v2303 = vadd.f32 %v1873, %v2265
      %v2304 = vld [vmem:[%s219 + $0x14] sm:$0xff]
      %v2305 = vld [vmem:[%s219 + $0x1c] sm:$0xff]
      %v2306 = vld [vmem:[%s219 + $0x24] sm:$0xff]
      %v2307 = vld [vmem:[%s219 + $0x2c] sm:$0xff]
      %v2308 = vld [vmem:[%s219 + $0x34] sm:$0xff]
      %v2309 = vld [vmem:[%s219 + $0x3c] sm:$0xff]
      %v2310 = vld [vmem:[%s219 + $0x44] sm:$0xff]
      %v2311 = vld [vmem:[%s219 + $0x4c] sm:$0xff]
      %v2312 = vld [vmem:[%s219 + $0x54] sm:$0xff]
      %v2313 = vld [vmem:[%s219 + $0x5c] sm:$0xff]
      %v2314 = vld [vmem:[%s219 + $0x64] sm:$0xff]
      %v2315 = vld [vmem:[%s219 + $0x6c] sm:$0xff]
      %v2316 = vld [vmem:[%s219 + $0x74] sm:$0xff]
      %v2317 = vld [vmem:[%s219 + $0x7c] sm:$0xff]
      %v2318 = vld [vmem:[%s219 + $0x84] sm:$0xff]
      %v2319 = vld [vmem:[%s219 + $0x8c] sm:$0xff]
      %v2320 = vld [vmem:[%s219 + $0x94] sm:$0xff]
      %v2321 = vld [vmem:[%s219 + $0x9c] sm:$0xff]
      %v2322 = vld [vmem:[%s219 + $0xa4] sm:$0xff]
      %v2323 = vld [vmem:[%s219 + $0xac] sm:$0xff]
      %v2324 = vld [vmem:[%s219 + $0xb4] sm:$0xff]
      %v2325 = vld [vmem:[%s219 + $0xbc] sm:$0xff]
      %v2326 = vld [vmem:[%s219 + $0xc4] sm:$0xff]
      %v2327 = vld [vmem:[%s219 + $0xcc] sm:$0xff]
      %v2328 = vld [vmem:[%s219 + $0xd4] sm:$0xff]
      %v2329 = vld [vmem:[%s219 + $0xdc] sm:$0xff]
      %v2330 = vld [vmem:[%s219 + $0xe4] sm:$0xff]
      %v2331 = vld [vmem:[%s219 + $0xec] sm:$0xff]
      %v2332 = vld [vmem:[%s219 + $0xf4] sm:$0xff]
      %v2333 = vld [vmem:[%s219 + $0xfc] sm:$0xff]
      %v2334 = vld [vmem:[%s219 + $0x104] sm:$0xff]
      %v2335 = vld [vmem:[%s219 + $0x10c] sm:$0xff]
      %v2336 = vld [vmem:[%s219 + $0x114] sm:$0xff]
      %v2337 = vld [vmem:[%s219 + $0x11c] sm:$0xff]
      %v2338 = vld [vmem:[%s219 + $0x124] sm:$0xff]
      %v2339 = vld [vmem:[%s219 + $0x12c] sm:$0xff]
      %s2340 = scalar_lea.vmem %s1, 20
      %v2341 = vld [vmem:[%s2340] sm:$0xf]
      %v2343 = vsel %vm300, %v2304, 0
      %v2346 = vsel %vm300, %v2305, 0
      %v2349 = vsel %vm300, %v2306, 0
      %v2352 = vsel %vm300, %v2307, 0
      %v2355 = vsel %vm300, %v2308, 0
      %v2358 = vsel %vm300, %v2309, 0
      %v2361 = vsel %vm300, %v2310, 0
      %v2364 = vsel %vm300, %v2311, 0
      %v2367 = vsel %vm300, %v2312, 0
      %v2370 = vsel %vm300, %v2313, 0
      %v2373 = vsel %vm300, %v2314, 0
      %v2376 = vsel %vm300, %v2315, 0
      %v2379 = vsel %vm300, %v2316, 0
      %v2382 = vsel %vm300, %v2317, 0
      %v2385 = vsel %vm300, %v2318, 0
      %v2388 = vsel %vm300, %v2319, 0
      %v2391 = vsel %vm300, %v2320, 0
      %v2394 = vsel %vm300, %v2321, 0
      %v2397 = vsel %vm300, %v2322, 0
      %v2400 = vsel %vm300, %v2323, 0
      %v2403 = vsel %vm300, %v2324, 0
      %v2406 = vsel %vm300, %v2325, 0
      %v2409 = vsel %vm300, %v2326, 0
      %v2412 = vsel %vm300, %v2327, 0
      %v2415 = vsel %vm300, %v2328, 0
      %v2418 = vsel %vm300, %v2329, 0
      %v2421 = vsel %vm300, %v2330, 0
      %v2424 = vsel %vm300, %v2331, 0
      %v2427 = vsel %vm300, %v2332, 0
      %v2430 = vsel %vm300, %v2333, 0
      %v2433 = vsel %vm300, %v2334, 0
      %v2436 = vsel %vm300, %v2335, 0
      %v2439 = vsel %vm300, %v2336, 0
      %v2442 = vsel %vm300, %v2337, 0
      %v2445 = vsel %vm300, %v2338, 0
      %v2448 = vsel %vm300, %v2339, 0
      %v2451 = vsel %vm409, %v2341, 0
      %2453 = vmatprep.subr.mxu0 0.0
      %2454 = vmatpush1.msra.mxu0 0.0
      %2455 = vmatprep.subr.mxu0 0.0
      %2456 = vmatpush1.msra.mxu0 0.0
      %2457 = vmatprep.subr.mxu0 0.0
      %2458 = vmatpush1.msra.mxu0 0.0
      %2459 = vmatprep.subr.mxu0 0.0
      %2460 = vmatpush1.msra.mxu0 0.0
      %2461 = vmatprep.subr.mxu0 0.0
      %2462 = vmatpush1.msra.mxu0 0.0
      %2463 = vmatprep.subr.mxu0 0.0
      %2464 = vmatpush1.msra.mxu0 0.0
      %2465 = vmatprep.subr.mxu0 0.0
      %2466 = vmatpush1.msra.mxu0 0.0
      %2467 = vmatprep.subr.mxu0 0.0
      %2468 = vmatpush1.msra.mxu0 0.0
      %2469 = vmatprep.subr.mxu0 0.0
      %2470 = vmatpush1.msra.mxu0 0.0
      %2471 = vmatprep.subr.mxu0 0.0
      %2472 = vmatpush1.msra.mxu0 0.0
      %2473 = vmatprep.subr.mxu0 0.0
      %2474 = vmatpush1.msra.mxu0 0.0
      %2475 = vmatprep.subr.mxu0 0.0
      %2476 = vmatpush1.msra.mxu0 0.0
      %2477 = vmatprep.subr.mxu0 0.0
      %2478 = vmatpush1.msra.mxu0 0.0
      %2479 = vmatprep.subr.mxu0 0.0
      %2480 = vmatpush1.msra.mxu0 0.0
      %2481 = vmatprep.subr.mxu0 0.0
      %2482 = vmatpush1.msra.mxu0 0.0
      %2483 = vmatprep.subr.mxu0 0.0
      %2484 = vmatpush1.msra.mxu0 %v2451
      %2485 = vmatprep.subr.mxu0 0.0
      %2486 = vmatpush2.msra.mxu0 0.0
      %2487 = vmatprep.subr.mxu0 0.0
      %2488 = vmatpush2.msra.mxu0 0.0
      %2489 = vmatprep.subr.mxu0 0.0
      %2490 = vmatpush2.msra.mxu0 0.0
      %2491 = vmatprep.subr.mxu0 0.0
      %2492 = vmatpush2.msra.mxu0 0.0
      %2493 = vmatprep.subr.mxu0 0.0
      %2494 = vmatpush2.msra.mxu0 0.0
      %2495 = vmatprep.subr.mxu0 0.0
      %2496 = vmatpush2.msra.mxu0 0.0
      %2497 = vmatprep.subr.mxu0 0.0
      %2498 = vmatpush2.msra.mxu0 0.0
      %2499 = vmatprep.subr.mxu0 0.0
      %2500 = vmatpush2.msra.mxu0 0.0
      %2501 = vmatprep.subr.mxu0 0.0
      %2502 = vmatpush2.msra.mxu0 0.0
      %2503 = vmatprep.subr.mxu0 0.0
      %2504 = vmatpush2.msra.mxu0 0.0
      %2505 = vmatprep.subr.mxu0 0.0
      %2506 = vmatpush2.msra.mxu0 0.0
      %2507 = vmatprep.subr.mxu0 0.0
      %2508 = vmatpush2.msra.mxu0 0.0
      %2509 = vmatprep.subr.mxu0 0.0
      %2510 = vmatpush2.msra.mxu0 0.0
      %2511 = vmatprep.subr.mxu0 0.0
      %2512 = vmatpush2.msra.mxu0 0.0
      %2513 = vmatprep.subr.mxu0 0.0
      %2514 = vmatpush2.msra.mxu0 0.0
      %2515 = vmatprep.subr.mxu0 0.0
      %2516 = vmatpush2.msra.mxu0 0.0
      %2517 = vmatprep.mubr.f32.mxu0 0.0
      %2518 = vmatmul.mubr.f32.gmra.mxu0 %v2343
      %v2519 = vpop.f32.mrf.mxu0
      %v2520 = vadd.f32 0.0, %v2519
      %v2521 = vpop.f32.mrf.mxu0
      %2522 = vmatprep.mubr.f32.mxu0 0.0
      %2523 = vmatmul.mubr.f32.gmra.mxu0 %v2346
      %v2524 = vpop.f32.mrf.mxu0
      %v2525 = vadd.f32 0.0, %v2524
      %v2526 = vpop.f32.mrf.mxu0
      %2527 = vmatprep.mubr.f32.mxu0 0.0
      %2528 = vmatmul.mubr.f32.gmra.mxu0 %v2349
      %v2529 = vpop.f32.mrf.mxu0
      %v2530 = vadd.f32 0.0, %v2529
      %v2531 = vpop.f32.mrf.mxu0
      %2532 = vmatprep.mubr.f32.mxu0 0.0
      %2533 = vmatmul.mubr.f32.gmra.mxu0 %v2352
      %v2534 = vpop.f32.mrf.mxu0
      %v2535 = vadd.f32 0.0, %v2534
      %v2536 = vpop.f32.mrf.mxu0
      %2537 = vmatprep.mubr.f32.mxu0 0.0
      %2538 = vmatmul.mubr.f32.gmra.mxu0 %v2355
      %v2539 = vpop.f32.mrf.mxu0
      %v2540 = vadd.f32 0.0, %v2539
      %v2541 = vpop.f32.mrf.mxu0
      %2542 = vmatprep.mubr.f32.mxu0 0.0
      %2543 = vmatmul.mubr.f32.gmra.mxu0 %v2358
      %v2544 = vpop.f32.mrf.mxu0
      %v2545 = vadd.f32 0.0, %v2544
      %v2546 = vpop.f32.mrf.mxu0
      %2547 = vmatprep.mubr.f32.mxu0 0.0
      %2548 = vmatmul.mubr.f32.gmra.mxu0 %v2361
      %v2549 = vpop.f32.mrf.mxu0
      %v2550 = vadd.f32 0.0, %v2549
      %v2551 = vpop.f32.mrf.mxu0
      %2552 = vmatprep.mubr.f32.mxu0 0.0
      %2553 = vmatmul.mubr.f32.gmra.mxu0 %v2364
      %v2554 = vpop.f32.mrf.mxu0
      %v2555 = vadd.f32 0.0, %v2554
      %v2556 = vpop.f32.mrf.mxu0
      %2557 = vmatprep.mubr.f32.mxu0 0.0
      %2558 = vmatmul.mubr.f32.gmra.mxu0 %v2367
      %v2559 = vpop.f32.mrf.mxu0
      %v2560 = vadd.f32 0.0, %v2559
      %v2561 = vpop.f32.mrf.mxu0
      %2562 = vmatprep.mubr.f32.mxu0 0.0
      %2563 = vmatmul.mubr.f32.gmra.mxu0 %v2370
      %v2564 = vpop.f32.mrf.mxu0
      %v2565 = vadd.f32 0.0, %v2564
      %v2566 = vpop.f32.mrf.mxu0
      %2567 = vmatprep.mubr.f32.mxu0 0.0
      %2568 = vmatmul.mubr.f32.gmra.mxu0 %v2373
      %v2569 = vpop.f32.mrf.mxu0
      %v2570 = vadd.f32 0.0, %v2569
      %v2571 = vpop.f32.mrf.mxu0
      %2572 = vmatprep.mubr.f32.mxu0 0.0
      %2573 = vmatmul.mubr.f32.gmra.mxu0 %v2376
      %v2574 = vpop.f32.mrf.mxu0
      %v2575 = vadd.f32 0.0, %v2574
      %v2576 = vpop.f32.mrf.mxu0
      %2577 = vmatprep.mubr.f32.mxu0 0.0
      %2578 = vmatmul.mubr.f32.gmra.mxu0 %v2379
      %v2579 = vpop.f32.mrf.mxu0
      %v2580 = vadd.f32 0.0, %v2579
      %v2581 = vpop.f32.mrf.mxu0
      %2582 = vmatprep.mubr.f32.mxu0 0.0
      %2583 = vmatmul.mubr.f32.gmra.mxu0 %v2382
      %v2584 = vpop.f32.mrf.mxu0
      %v2585 = vadd.f32 0.0, %v2584
      %v2586 = vpop.f32.mrf.mxu0
      %2587 = vmatprep.mubr.f32.mxu0 0.0
      %2588 = vmatmul.mubr.f32.gmra.mxu0 %v2385
      %v2589 = vpop.f32.mrf.mxu0
      %v2590 = vadd.f32 0.0, %v2589
      %v2591 = vpop.f32.mrf.mxu0
      %2592 = vmatprep.mubr.f32.mxu0 0.0
      %2593 = vmatmul.mubr.f32.gmra.mxu0 %v2388
      %v2594 = vpop.f32.mrf.mxu0
      %v2595 = vadd.f32 0.0, %v2594
      %v2596 = vpop.f32.mrf.mxu0
      %2597 = vmatprep.mubr.f32.mxu0 0.0
      %2598 = vmatmul.mubr.f32.gmra.mxu0 %v2391
      %v2599 = vpop.f32.mrf.mxu0
      %v2600 = vadd.f32 0.0, %v2599
      %v2601 = vpop.f32.mrf.mxu0
      %2602 = vmatprep.mubr.f32.mxu0 0.0
      %2603 = vmatmul.mubr.f32.gmra.mxu0 %v2394
      %v2604 = vpop.f32.mrf.mxu0
      %v2605 = vadd.f32 0.0, %v2604
      %v2606 = vpop.f32.mrf.mxu0
      %2607 = vmatprep.mubr.f32.mxu0 0.0
      %2608 = vmatmul.mubr.f32.gmra.mxu0 %v2397
      %v2609 = vpop.f32.mrf.mxu0
      %v2610 = vadd.f32 0.0, %v2609
      %v2611 = vpop.f32.mrf.mxu0
      %2612 = vmatprep.mubr.f32.mxu0 0.0
      %2613 = vmatmul.mubr.f32.gmra.mxu0 %v2400
      %v2614 = vpop.f32.mrf.mxu0
      %v2615 = vadd.f32 0.0, %v2614
      %v2616 = vpop.f32.mrf.mxu0
      %2617 = vmatprep.mubr.f32.mxu0 0.0
      %2618 = vmatmul.mubr.f32.gmra.mxu0 %v2403
      %v2619 = vpop.f32.mrf.mxu0
      %v2620 = vadd.f32 0.0, %v2619
      %v2621 = vpop.f32.mrf.mxu0
      %2622 = vmatprep.mubr.f32.mxu0 0.0
      %2623 = vmatmul.mubr.f32.gmra.mxu0 %v2406
      %v2624 = vpop.f32.mrf.mxu0
      %v2625 = vadd.f32 0.0, %v2624
      %v2626 = vpop.f32.mrf.mxu0
      %2627 = vmatprep.mubr.f32.mxu0 0.0
      %2628 = vmatmul.mubr.f32.gmra.mxu0 %v2409
      %v2629 = vpop.f32.mrf.mxu0
      %v2630 = vadd.f32 0.0, %v2629
      %v2631 = vpop.f32.mrf.mxu0
      %2632 = vmatprep.mubr.f32.mxu0 0.0
      %2633 = vmatmul.mubr.f32.gmra.mxu0 %v2412
      %v2634 = vpop.f32.mrf.mxu0
      %v2635 = vadd.f32 0.0, %v2634
      %v2636 = vpop.f32.mrf.mxu0
      %2637 = vmatprep.mubr.f32.mxu0 0.0
      %2638 = vmatmul.mubr.f32.gmra.mxu0 %v2415
      %v2639 = vpop.f32.mrf.mxu0
      %v2640 = vadd.f32 0.0, %v2639
      %v2641 = vpop.f32.mrf.mxu0
      %2642 = vmatprep.mubr.f32.mxu0 0.0
      %2643 = vmatmul.mubr.f32.gmra.mxu0 %v2418
      %v2644 = vpop.f32.mrf.mxu0
      %v2645 = vadd.f32 0.0, %v2644
      %v2646 = vpop.f32.mrf.mxu0
      %2647 = vmatprep.mubr.f32.mxu0 0.0
      %2648 = vmatmul.mubr.f32.gmra.mxu0 %v2421
      %v2649 = vpop.f32.mrf.mxu0
      %v2650 = vadd.f32 0.0, %v2649
      %v2651 = vpop.f32.mrf.mxu0
      %2652 = vmatprep.mubr.f32.mxu0 0.0
      %2653 = vmatmul.mubr.f32.gmra.mxu0 %v2424
      %v2654 = vpop.f32.mrf.mxu0
      %v2655 = vadd.f32 0.0, %v2654
      %v2656 = vpop.f32.mrf.mxu0
      %2657 = vmatprep.mubr.f32.mxu0 0.0
      %2658 = vmatmul.mubr.f32.gmra.mxu0 %v2427
      %v2659 = vpop.f32.mrf.mxu0
      %v2660 = vadd.f32 0.0, %v2659
      %v2661 = vpop.f32.mrf.mxu0
      %2662 = vmatprep.mubr.f32.mxu0 0.0
      %2663 = vmatmul.mubr.f32.gmra.mxu0 %v2430
      %v2664 = vpop.f32.mrf.mxu0
      %v2665 = vadd.f32 0.0, %v2664
      %v2666 = vpop.f32.mrf.mxu0
      %2667 = vmatprep.mubr.f32.mxu0 0.0
      %2668 = vmatmul.mubr.f32.gmra.mxu0 %v2433
      %v2669 = vpop.f32.mrf.mxu0
      %v2670 = vadd.f32 0.0, %v2669
      %v2671 = vpop.f32.mrf.mxu0
      %2672 = vmatprep.mubr.f32.mxu0 0.0
      %2673 = vmatmul.mubr.f32.gmra.mxu0 %v2436
      %v2674 = vpop.f32.mrf.mxu0
      %v2675 = vadd.f32 0.0, %v2674
      %v2676 = vpop.f32.mrf.mxu0
      %2677 = vmatprep.mubr.f32.mxu0 0.0
      %2678 = vmatmul.mubr.f32.gmra.mxu0 %v2439
      %v2679 = vpop.f32.mrf.mxu0
      %v2680 = vadd.f32 0.0, %v2679
      %v2681 = vpop.f32.mrf.mxu0
      %2682 = vmatprep.mubr.f32.mxu0 0.0
      %2683 = vmatmul.mubr.f32.gmra.mxu0 %v2442
      %v2684 = vpop.f32.mrf.mxu0
      %v2685 = vadd.f32 0.0, %v2684
      %v2686 = vpop.f32.mrf.mxu0
      %2687 = vmatprep.mubr.f32.mxu0 0.0
      %2688 = vmatmul.mubr.f32.gmra.mxu0 %v2445
      %v2689 = vpop.f32.mrf.mxu0
      %v2690 = vadd.f32 0.0, %v2689
      %v2691 = vpop.f32.mrf.mxu0
      %2692 = vmatprep.mubr.f32.mxu0 0.0
      %2693 = vmatmul.mubr.f32.gmra.mxu0 %v2448
      %v2694 = vpop.f32.mrf.mxu0
      %v2695 = vadd.f32 0.0, %v2694
      %v2696 = vpop.f32.mrf.mxu0
      %2697 = vdwg.mxu0
      %v2698 = vadd.f32 %v2268, %v2520
      %v2699 = vadd.f32 %v2269, %v2525
      %v2700 = vadd.f32 %v2270, %v2530
      %v2701 = vadd.f32 %v2271, %v2535
      %v2702 = vadd.f32 %v2272, %v2540
      %v2703 = vadd.f32 %v2273, %v2545
      %v2704 = vadd.f32 %v2274, %v2550
      %v2705 = vadd.f32 %v2275, %v2555
      %v2706 = vadd.f32 %v2276, %v2560
      %v2707 = vadd.f32 %v2277, %v2565
      %v2708 = vadd.f32 %v2278, %v2570
      %v2709 = vadd.f32 %v2279, %v2575
      %v2710 = vadd.f32 %v2280, %v2580
      %v2711 = vadd.f32 %v2281, %v2585
      %v2712 = vadd.f32 %v2282, %v2590
      %v2713 = vadd.f32 %v2283, %v2595
      %v2714 = vadd.f32 %v2284, %v2600
      %v2715 = vadd.f32 %v2285, %v2605
      %v2716 = vadd.f32 %v2286, %v2610
      %v2717 = vadd.f32 %v2287, %v2615
      %v2718 = vadd.f32 %v2288, %v2620
      %v2719 = vadd.f32 %v2289, %v2625
      %v2720 = vadd.f32 %v2290, %v2630
      %v2721 = vadd.f32 %v2291, %v2635
      %v2722 = vadd.f32 %v2292, %v2640
      %v2723 = vadd.f32 %v2293, %v2645
      %v2724 = vadd.f32 %v2294, %v2650
      %v2725 = vadd.f32 %v2295, %v2655
      %v2726 = vadd.f32 %v2296, %v2660
      %v2727 = vadd.f32 %v2297, %v2665
      %v2728 = vadd.f32 %v2298, %v2670
      %v2729 = vadd.f32 %v2299, %v2675
      %v2730 = vadd.f32 %v2300, %v2680
      %v2731 = vadd.f32 %v2301, %v2685
      %v2732 = vadd.f32 %v2302, %v2690
      %v2733 = vadd.f32 %v2303, %v2695
      %v2734 = vld [vmem:[%s219 + $0x24] sm:$0xff]
      %v2735 = vld [vmem:[%s219 + $0x2c] sm:$0xff]
      %v2736 = vld [vmem:[%s219 + $0x34] sm:$0xff]
      %v2737 = vld [vmem:[%s219 + $0x3c] sm:$0xff]
      %v2738 = vld [vmem:[%s219 + $0x44] sm:$0xff]
      %v2739 = vld [vmem:[%s219 + $0x4c] sm:$0xff]
      %v2740 = vld [vmem:[%s219 + $0x54] sm:$0xff]
      %v2741 = vld [vmem:[%s219 + $0x5c] sm:$0xff]
      %v2742 = vld [vmem:[%s219 + $0x64] sm:$0xff]
      %v2743 = vld [vmem:[%s219 + $0x6c] sm:$0xff]
      %v2744 = vld [vmem:[%s219 + $0x74] sm:$0xff]
      %v2745 = vld [vmem:[%s219 + $0x7c] sm:$0xff]
      %v2746 = vld [vmem:[%s219 + $0x84] sm:$0xff]
      %v2747 = vld [vmem:[%s219 + $0x8c] sm:$0xff]
      %v2748 = vld [vmem:[%s219 + $0x94] sm:$0xff]
      %v2749 = vld [vmem:[%s219 + $0x9c] sm:$0xff]
      %v2750 = vld [vmem:[%s219 + $0xa4] sm:$0xff]
      %v2751 = vld [vmem:[%s219 + $0xac] sm:$0xff]
      %v2752 = vld [vmem:[%s219 + $0xb4] sm:$0xff]
      %v2753 = vld [vmem:[%s219 + $0xbc] sm:$0xff]
      %v2754 = vld [vmem:[%s219 + $0xc4] sm:$0xff]
      %v2755 = vld [vmem:[%s219 + $0xcc] sm:$0xff]
      %v2756 = vld [vmem:[%s219 + $0xd4] sm:$0xff]
      %v2757 = vld [vmem:[%s219 + $0xdc] sm:$0xff]
      %v2758 = vld [vmem:[%s219 + $0xe4] sm:$0xff]
      %v2759 = vld [vmem:[%s219 + $0xec] sm:$0xff]
      %v2760 = vld [vmem:[%s219 + $0xf4] sm:$0xff]
      %v2761 = vld [vmem:[%s219 + $0xfc] sm:$0xff]
      %v2762 = vld [vmem:[%s219 + $0x104] sm:$0xff]
      %v2763 = vld [vmem:[%s219 + $0x10c] sm:$0xff]
      %v2764 = vld [vmem:[%s219 + $0x114] sm:$0xff]
      %v2765 = vld [vmem:[%s219 + $0x11c] sm:$0xff]
      %v2766 = vld [vmem:[%s219 + $0x124] sm:$0xff]
      %v2767 = vld [vmem:[%s219 + $0x12c] sm:$0xff]
      %v2768 = vld [vmem:[%s219 + $0x134] sm:$0xff]
      %v2769 = vld [vmem:[%s219 + $0x13c] sm:$0xff]
      %s2770 = scalar_lea.vmem %s1, 24
      %v2771 = vld [vmem:[%s2770] sm:$0xf]
      %v2773 = vsel %vm300, %v2734, 0
      %v2776 = vsel %vm300, %v2735, 0
      %v2779 = vsel %vm300, %v2736, 0
      %v2782 = vsel %vm300, %v2737, 0
      %v2785 = vsel %vm300, %v2738, 0
      %v2788 = vsel %vm300, %v2739, 0
      %v2791 = vsel %vm300, %v2740, 0
      %v2794 = vsel %vm300, %v2741, 0
      %v2797 = vsel %vm300, %v2742, 0
      %v2800 = vsel %vm300, %v2743, 0
      %v2803 = vsel %vm300, %v2744, 0
      %v2806 = vsel %vm300, %v2745, 0
      %v2809 = vsel %vm300, %v2746, 0
      %v2812 = vsel %vm300, %v2747, 0
      %v2815 = vsel %vm300, %v2748, 0
      %v2818 = vsel %vm300, %v2749, 0
      %v2821 = vsel %vm300, %v2750, 0
      %v2824 = vsel %vm300, %v2751, 0
      %v2827 = vsel %vm300, %v2752, 0
      %v2830 = vsel %vm300, %v2753, 0
      %v2833 = vsel %vm300, %v2754, 0
      %v2836 = vsel %vm300, %v2755, 0
      %v2839 = vsel %vm300, %v2756, 0
      %v2842 = vsel %vm300, %v2757, 0
      %v2845 = vsel %vm300, %v2758, 0
      %v2848 = vsel %vm300, %v2759, 0
      %v2851 = vsel %vm300, %v2760, 0
      %v2854 = vsel %vm300, %v2761, 0
      %v2857 = vsel %vm300, %v2762, 0
      %v2860 = vsel %vm300, %v2763, 0
      %v2863 = vsel %vm300, %v2764, 0
      %v2866 = vsel %vm300, %v2765, 0
      %v2869 = vsel %vm300, %v2766, 0
      %v2872 = vsel %vm300, %v2767, 0
      %v2875 = vsel %vm300, %v2768, 0
      %v2878 = vsel %vm300, %v2769, 0
      %v2881 = vsel %vm409, %v2771, 0
      %2883 = vmatprep.subr.mxu0 0.0
      %2884 = vmatpush1.msra.mxu0 0.0
      %2885 = vmatprep.subr.mxu0 0.0
      %2886 = vmatpush1.msra.mxu0 0.0
      %2887 = vmatprep.subr.mxu0 0.0
      %2888 = vmatpush1.msra.mxu0 0.0
      %2889 = vmatprep.subr.mxu0 0.0
      %2890 = vmatpush1.msra.mxu0 0.0
      %2891 = vmatprep.subr.mxu0 0.0
      %2892 = vmatpush1.msra.mxu0 0.0
      %2893 = vmatprep.subr.mxu0 0.0
      %2894 = vmatpush1.msra.mxu0 0.0
      %2895 = vmatprep.subr.mxu0 0.0
      %2896 = vmatpush1.msra.mxu0 0.0
      %2897 = vmatprep.subr.mxu0 0.0
      %2898 = vmatpush1.msra.mxu0 0.0
      %2899 = vmatprep.subr.mxu0 0.0
      %2900 = vmatpush1.msra.mxu0 0.0
      %2901 = vmatprep.subr.mxu0 0.0
      %2902 = vmatpush1.msra.mxu0 0.0
      %2903 = vmatprep.subr.mxu0 0.0
      %2904 = vmatpush1.msra.mxu0 0.0
      %2905 = vmatprep.subr.mxu0 0.0
      %2906 = vmatpush1.msra.mxu0 0.0
      %2907 = vmatprep.subr.mxu0 0.0
      %2908 = vmatpush1.msra.mxu0 0.0
      %2909 = vmatprep.subr.mxu0 0.0
      %2910 = vmatpush1.msra.mxu0 0.0
      %2911 = vmatprep.subr.mxu0 0.0
      %2912 = vmatpush1.msra.mxu0 0.0
      %2913 = vmatprep.subr.mxu0 0.0
      %2914 = vmatpush1.msra.mxu0 %v2881
      %2915 = vmatprep.subr.mxu0 0.0
      %2916 = vmatpush2.msra.mxu0 0.0
      %2917 = vmatprep.subr.mxu0 0.0
      %2918 = vmatpush2.msra.mxu0 0.0
      %2919 = vmatprep.subr.mxu0 0.0
      %2920 = vmatpush2.msra.mxu0 0.0
      %2921 = vmatprep.subr.mxu0 0.0
      %2922 = vmatpush2.msra.mxu0 0.0
      %2923 = vmatprep.subr.mxu0 0.0
      %2924 = vmatpush2.msra.mxu0 0.0
      %2925 = vmatprep.subr.mxu0 0.0
      %2926 = vmatpush2.msra.mxu0 0.0
      %2927 = vmatprep.subr.mxu0 0.0
      %2928 = vmatpush2.msra.mxu0 0.0
      %2929 = vmatprep.subr.mxu0 0.0
      %2930 = vmatpush2.msra.mxu0 0.0
      %2931 = vmatprep.subr.mxu0 0.0
      %2932 = vmatpush2.msra.mxu0 0.0
      %2933 = vmatprep.subr.mxu0 0.0
      %2934 = vmatpush2.msra.mxu0 0.0
      %2935 = vmatprep.subr.mxu0 0.0
      %2936 = vmatpush2.msra.mxu0 0.0
      %2937 = vmatprep.subr.mxu0 0.0
      %2938 = vmatpush2.msra.mxu0 0.0
      %2939 = vmatprep.subr.mxu0 0.0
      %2940 = vmatpush2.msra.mxu0 0.0
      %2941 = vmatprep.subr.mxu0 0.0
      %2942 = vmatpush2.msra.mxu0 0.0
      %2943 = vmatprep.subr.mxu0 0.0
      %2944 = vmatpush2.msra.mxu0 0.0
      %2945 = vmatprep.subr.mxu0 0.0
      %2946 = vmatpush2.msra.mxu0 0.0
      %2947 = vmatprep.mubr.f32.mxu0 0.0
      %2948 = vmatmul.mubr.f32.gmra.mxu0 %v2773
      %v2949 = vpop.f32.mrf.mxu0
      %v2950 = vadd.f32 0.0, %v2949
      %v2951 = vpop.f32.mrf.mxu0
      %2952 = vmatprep.mubr.f32.mxu0 0.0
      %2953 = vmatmul.mubr.f32.gmra.mxu0 %v2776
      %v2954 = vpop.f32.mrf.mxu0
      %v2955 = vadd.f32 0.0, %v2954
      %v2956 = vpop.f32.mrf.mxu0
      %2957 = vmatprep.mubr.f32.mxu0 0.0
      %2958 = vmatmul.mubr.f32.gmra.mxu0 %v2779
      %v2959 = vpop.f32.mrf.mxu0
      %v2960 = vadd.f32 0.0, %v2959
      %v2961 = vpop.f32.mrf.mxu0
      %2962 = vmatprep.mubr.f32.mxu0 0.0
      %2963 = vmatmul.mubr.f32.gmra.mxu0 %v2782
      %v2964 = vpop.f32.mrf.mxu0
      %v2965 = vadd.f32 0.0, %v2964
      %v2966 = vpop.f32.mrf.mxu0
      %2967 = vmatprep.mubr.f32.mxu0 0.0
      %2968 = vmatmul.mubr.f32.gmra.mxu0 %v2785
      %v2969 = vpop.f32.mrf.mxu0
      %v2970 = vadd.f32 0.0, %v2969
      %v2971 = vpop.f32.mrf.mxu0
      %2972 = vmatprep.mubr.f32.mxu0 0.0
      %2973 = vmatmul.mubr.f32.gmra.mxu0 %v2788
      %v2974 = vpop.f32.mrf.mxu0
      %v2975 = vadd.f32 0.0, %v2974
      %v2976 = vpop.f32.mrf.mxu0
      %2977 = vmatprep.mubr.f32.mxu0 0.0
      %2978 = vmatmul.mubr.f32.gmra.mxu0 %v2791
      %v2979 = vpop.f32.mrf.mxu0
      %v2980 = vadd.f32 0.0, %v2979
      %v2981 = vpop.f32.mrf.mxu0
      %2982 = vmatprep.mubr.f32.mxu0 0.0
      %2983 = vmatmul.mubr.f32.gmra.mxu0 %v2794
      %v2984 = vpop.f32.mrf.mxu0
      %v2985 = vadd.f32 0.0, %v2984
      %v2986 = vpop.f32.mrf.mxu0
      %2987 = vmatprep.mubr.f32.mxu0 0.0
      %2988 = vmatmul.mubr.f32.gmra.mxu0 %v2797
      %v2989 = vpop.f32.mrf.mxu0
      %v2990 = vadd.f32 0.0, %v2989
      %v2991 = vpop.f32.mrf.mxu0
      %2992 = vmatprep.mubr.f32.mxu0 0.0
      %2993 = vmatmul.mubr.f32.gmra.mxu0 %v2800
      %v2994 = vpop.f32.mrf.mxu0
      %v2995 = vadd.f32 0.0, %v2994
      %v2996 = vpop.f32.mrf.mxu0
      %2997 = vmatprep.mubr.f32.mxu0 0.0
      %2998 = vmatmul.mubr.f32.gmra.mxu0 %v2803
      %v2999 = vpop.f32.mrf.mxu0
      %v3000 = vadd.f32 0.0, %v2999
      %v3001 = vpop.f32.mrf.mxu0
      %3002 = vmatprep.mubr.f32.mxu0 0.0
      %3003 = vmatmul.mubr.f32.gmra.mxu0 %v2806
      %v3004 = vpop.f32.mrf.mxu0
      %v3005 = vadd.f32 0.0, %v3004
      %v3006 = vpop.f32.mrf.mxu0
      %3007 = vmatprep.mubr.f32.mxu0 0.0
      %3008 = vmatmul.mubr.f32.gmra.mxu0 %v2809
      %v3009 = vpop.f32.mrf.mxu0
      %v3010 = vadd.f32 0.0, %v3009
      %v3011 = vpop.f32.mrf.mxu0
      %3012 = vmatprep.mubr.f32.mxu0 0.0
      %3013 = vmatmul.mubr.f32.gmra.mxu0 %v2812
      %v3014 = vpop.f32.mrf.mxu0
      %v3015 = vadd.f32 0.0, %v3014
      %v3016 = vpop.f32.mrf.mxu0
      %3017 = vmatprep.mubr.f32.mxu0 0.0
      %3018 = vmatmul.mubr.f32.gmra.mxu0 %v2815
      %v3019 = vpop.f32.mrf.mxu0
      %v3020 = vadd.f32 0.0, %v3019
      %v3021 = vpop.f32.mrf.mxu0
      %3022 = vmatprep.mubr.f32.mxu0 0.0
      %3023 = vmatmul.mubr.f32.gmra.mxu0 %v2818
      %v3024 = vpop.f32.mrf.mxu0
      %v3025 = vadd.f32 0.0, %v3024
      %v3026 = vpop.f32.mrf.mxu0
      %3027 = vmatprep.mubr.f32.mxu0 0.0
      %3028 = vmatmul.mubr.f32.gmra.mxu0 %v2821
      %v3029 = vpop.f32.mrf.mxu0
      %v3030 = vadd.f32 0.0, %v3029
      %v3031 = vpop.f32.mrf.mxu0
      %3032 = vmatprep.mubr.f32.mxu0 0.0
      %3033 = vmatmul.mubr.f32.gmra.mxu0 %v2824
      %v3034 = vpop.f32.mrf.mxu0
      %v3035 = vadd.f32 0.0, %v3034
      %v3036 = vpop.f32.mrf.mxu0
      %3037 = vmatprep.mubr.f32.mxu0 0.0
      %3038 = vmatmul.mubr.f32.gmra.mxu0 %v2827
      %v3039 = vpop.f32.mrf.mxu0
      %v3040 = vadd.f32 0.0, %v3039
      %v3041 = vpop.f32.mrf.mxu0
      %3042 = vmatprep.mubr.f32.mxu0 0.0
      %3043 = vmatmul.mubr.f32.gmra.mxu0 %v2830
      %v3044 = vpop.f32.mrf.mxu0
      %v3045 = vadd.f32 0.0, %v3044
      %v3046 = vpop.f32.mrf.mxu0
      %3047 = vmatprep.mubr.f32.mxu0 0.0
      %3048 = vmatmul.mubr.f32.gmra.mxu0 %v2833
      %v3049 = vpop.f32.mrf.mxu0
      %v3050 = vadd.f32 0.0, %v3049
      %v3051 = vpop.f32.mrf.mxu0
      %3052 = vmatprep.mubr.f32.mxu0 0.0
      %3053 = vmatmul.mubr.f32.gmra.mxu0 %v2836
      %v3054 = vpop.f32.mrf.mxu0
      %v3055 = vadd.f32 0.0, %v3054
      %v3056 = vpop.f32.mrf.mxu0
      %3057 = vmatprep.mubr.f32.mxu0 0.0
      %3058 = vmatmul.mubr.f32.gmra.mxu0 %v2839
      %v3059 = vpop.f32.mrf.mxu0
      %v3060 = vadd.f32 0.0, %v3059
      %v3061 = vpop.f32.mrf.mxu0
      %3062 = vmatprep.mubr.f32.mxu0 0.0
      %3063 = vmatmul.mubr.f32.gmra.mxu0 %v2842
      %v3064 = vpop.f32.mrf.mxu0
      %v3065 = vadd.f32 0.0, %v3064
      %v3066 = vpop.f32.mrf.mxu0
      %3067 = vmatprep.mubr.f32.mxu0 0.0
      %3068 = vmatmul.mubr.f32.gmra.mxu0 %v2845
      %v3069 = vpop.f32.mrf.mxu0
      %v3070 = vadd.f32 0.0, %v3069
      %v3071 = vpop.f32.mrf.mxu0
      %3072 = vmatprep.mubr.f32.mxu0 0.0
      %3073 = vmatmul.mubr.f32.gmra.mxu0 %v2848
      %v3074 = vpop.f32.mrf.mxu0
      %v3075 = vadd.f32 0.0, %v3074
      %v3076 = vpop.f32.mrf.mxu0
      %3077 = vmatprep.mubr.f32.mxu0 0.0
      %3078 = vmatmul.mubr.f32.gmra.mxu0 %v2851
      %v3079 = vpop.f32.mrf.mxu0
      %v3080 = vadd.f32 0.0, %v3079
      %v3081 = vpop.f32.mrf.mxu0
      %3082 = vmatprep.mubr.f32.mxu0 0.0
      %3083 = vmatmul.mubr.f32.gmra.mxu0 %v2854
      %v3084 = vpop.f32.mrf.mxu0
      %v3085 = vadd.f32 0.0, %v3084
      %v3086 = vpop.f32.mrf.mxu0
      %3087 = vmatprep.mubr.f32.mxu0 0.0
      %3088 = vmatmul.mubr.f32.gmra.mxu0 %v2857
      %v3089 = vpop.f32.mrf.mxu0
      %v3090 = vadd.f32 0.0, %v3089
      %v3091 = vpop.f32.mrf.mxu0
      %3092 = vmatprep.mubr.f32.mxu0 0.0
      %3093 = vmatmul.mubr.f32.gmra.mxu0 %v2860
      %v3094 = vpop.f32.mrf.mxu0
      %v3095 = vadd.f32 0.0, %v3094
      %v3096 = vpop.f32.mrf.mxu0
      %3097 = vmatprep.mubr.f32.mxu0 0.0
      %3098 = vmatmul.mubr.f32.gmra.mxu0 %v2863
      %v3099 = vpop.f32.mrf.mxu0
      %v3100 = vadd.f32 0.0, %v3099
      %v3101 = vpop.f32.mrf.mxu0
      %3102 = vmatprep.mubr.f32.mxu0 0.0
      %3103 = vmatmul.mubr.f32.gmra.mxu0 %v2866
      %v3104 = vpop.f32.mrf.mxu0
      %v3105 = vadd.f32 0.0, %v3104
      %v3106 = vpop.f32.mrf.mxu0
      %3107 = vmatprep.mubr.f32.mxu0 0.0
      %3108 = vmatmul.mubr.f32.gmra.mxu0 %v2869
      %v3109 = vpop.f32.mrf.mxu0
      %v3110 = vadd.f32 0.0, %v3109
      %v3111 = vpop.f32.mrf.mxu0
      %3112 = vmatprep.mubr.f32.mxu0 0.0
      %3113 = vmatmul.mubr.f32.gmra.mxu0 %v2872
      %v3114 = vpop.f32.mrf.mxu0
      %v3115 = vadd.f32 0.0, %v3114
      %v3116 = vpop.f32.mrf.mxu0
      %3117 = vmatprep.mubr.f32.mxu0 0.0
      %3118 = vmatmul.mubr.f32.gmra.mxu0 %v2875
      %v3119 = vpop.f32.mrf.mxu0
      %v3120 = vadd.f32 0.0, %v3119
      %v3121 = vpop.f32.mrf.mxu0
      %3122 = vmatprep.mubr.f32.mxu0 0.0
      %3123 = vmatmul.mubr.f32.gmra.mxu0 %v2878
      %v3124 = vpop.f32.mrf.mxu0
      %v3125 = vadd.f32 0.0, %v3124
      %v3126 = vpop.f32.mrf.mxu0
      %3127 = vdwg.mxu0
      %v3128 = vadd.f32 %v2698, %v2950
      %v3129 = vadd.f32 %v2699, %v2955
      %v3130 = vadd.f32 %v2700, %v2960
      %v3131 = vadd.f32 %v2701, %v2965
      %v3132 = vadd.f32 %v2702, %v2970
      %v3133 = vadd.f32 %v2703, %v2975
      %v3134 = vadd.f32 %v2704, %v2980
      %v3135 = vadd.f32 %v2705, %v2985
      %v3136 = vadd.f32 %v2706, %v2990
      %v3137 = vadd.f32 %v2707, %v2995
      %v3138 = vadd.f32 %v2708, %v3000
      %v3139 = vadd.f32 %v2709, %v3005
      %v3140 = vadd.f32 %v2710, %v3010
      %v3141 = vadd.f32 %v2711, %v3015
      %v3142 = vadd.f32 %v2712, %v3020
      %v3143 = vadd.f32 %v2713, %v3025
      %v3144 = vadd.f32 %v2714, %v3030
      %v3145 = vadd.f32 %v2715, %v3035
      %v3146 = vadd.f32 %v2716, %v3040
      %v3147 = vadd.f32 %v2717, %v3045
      %v3148 = vadd.f32 %v2718, %v3050
      %v3149 = vadd.f32 %v2719, %v3055
      %v3150 = vadd.f32 %v2720, %v3060
      %v3151 = vadd.f32 %v2721, %v3065
      %v3152 = vadd.f32 %v2722, %v3070
      %v3153 = vadd.f32 %v2723, %v3075
      %v3154 = vadd.f32 %v2724, %v3080
      %v3155 = vadd.f32 %v2725, %v3085
      %v3156 = vadd.f32 %v2726, %v3090
      %v3157 = vadd.f32 %v2727, %v3095
      %v3158 = vadd.f32 %v2728, %v3100
      %v3159 = vadd.f32 %v2729, %v3105
      %v3160 = vadd.f32 %v2730, %v3110
      %v3161 = vadd.f32 %v2731, %v3115
      %v3162 = vadd.f32 %v2732, %v3120
      %v3163 = vadd.f32 %v2733, %v3125
      %v3164 = vld [vmem:[%s219 + $0x25] sm:$0xff]
      %v3165 = vld [vmem:[%s219 + $0x2d] sm:$0xff]
      %v3166 = vld [vmem:[%s219 + $0x35] sm:$0xff]
      %v3167 = vld [vmem:[%s219 + $0x3d] sm:$0xff]
      %v3168 = vld [vmem:[%s219 + $0x45] sm:$0xff]
      %v3169 = vld [vmem:[%s219 + $0x4d] sm:$0xff]
      %v3170 = vld [vmem:[%s219 + $0x55] sm:$0xff]
      %v3171 = vld [vmem:[%s219 + $0x5d] sm:$0xff]
      %v3172 = vld [vmem:[%s219 + $0x65] sm:$0xff]
      %v3173 = vld [vmem:[%s219 + $0x6d] sm:$0xff]
      %v3174 = vld [vmem:[%s219 + $0x75] sm:$0xff]
      %v3175 = vld [vmem:[%s219 + $0x7d] sm:$0xff]
      %v3176 = vld [vmem:[%s219 + $0x85] sm:$0xff]
      %v3177 = vld [vmem:[%s219 + $0x8d] sm:$0xff]
      %v3178 = vld [vmem:[%s219 + $0x95] sm:$0xff]
      %v3179 = vld [vmem:[%s219 + $0x9d] sm:$0xff]
      %v3180 = vld [vmem:[%s219 + $0xa5] sm:$0xff]
      %v3181 = vld [vmem:[%s219 + $0xad] sm:$0xff]
      %v3182 = vld [vmem:[%s219 + $0xb5] sm:$0xff]
      %v3183 = vld [vmem:[%s219 + $0xbd] sm:$0xff]
      %v3184 = vld [vmem:[%s219 + $0xc5] sm:$0xff]
      %v3185 = vld [vmem:[%s219 + $0xcd] sm:$0xff]
      %v3186 = vld [vmem:[%s219 + $0xd5] sm:$0xff]
      %v3187 = vld [vmem:[%s219 + $0xdd] sm:$0xff]
      %v3188 = vld [vmem:[%s219 + $0xe5] sm:$0xff]
      %v3189 = vld [vmem:[%s219 + $0xed] sm:$0xff]
      %v3190 = vld [vmem:[%s219 + $0xf5] sm:$0xff]
      %v3191 = vld [vmem:[%s219 + $0xfd] sm:$0xff]
      %v3192 = vld [vmem:[%s219 + $0x105] sm:$0xff]
      %v3193 = vld [vmem:[%s219 + $0x10d] sm:$0xff]
      %v3194 = vld [vmem:[%s219 + $0x115] sm:$0xff]
      %v3195 = vld [vmem:[%s219 + $0x11d] sm:$0xff]
      %v3196 = vld [vmem:[%s219 + $0x125] sm:$0xff]
      %v3197 = vld [vmem:[%s219 + $0x12d] sm:$0xff]
      %v3198 = vld [vmem:[%s219 + $0x135] sm:$0xff]
      %v3199 = vld [vmem:[%s219 + $0x13d] sm:$0xff]
      %s3200 = scalar_lea.vmem %s1, 28
      %v3201 = vld [vmem:[%s3200] sm:$0xf]
      %v3203 = vsel %vm300, %v3164, 0
      %v3206 = vsel %vm300, %v3165, 0
      %v3209 = vsel %vm300, %v3166, 0
      %v3212 = vsel %vm300, %v3167, 0
      %v3215 = vsel %vm300, %v3168, 0
      %v3218 = vsel %vm300, %v3169, 0
      %v3221 = vsel %vm300, %v3170, 0
      %v3224 = vsel %vm300, %v3171, 0
      %v3227 = vsel %vm300, %v3172, 0
      %v3230 = vsel %vm300, %v3173, 0
      %v3233 = vsel %vm300, %v3174, 0
      %v3236 = vsel %vm300, %v3175, 0
      %v3239 = vsel %vm300, %v3176, 0
      %v3242 = vsel %vm300, %v3177, 0
      %v3245 = vsel %vm300, %v3178, 0
      %v3248 = vsel %vm300, %v3179, 0
      %v3251 = vsel %vm300, %v3180, 0
      %v3254 = vsel %vm300, %v3181, 0
      %v3257 = vsel %vm300, %v3182, 0
      %v3260 = vsel %vm300, %v3183, 0
      %v3263 = vsel %vm300, %v3184, 0
      %v3266 = vsel %vm300, %v3185, 0
      %v3269 = vsel %vm300, %v3186, 0
      %v3272 = vsel %vm300, %v3187, 0
      %v3275 = vsel %vm300, %v3188, 0
      %v3278 = vsel %vm300, %v3189, 0
      %v3281 = vsel %vm300, %v3190, 0
      %v3284 = vsel %vm300, %v3191, 0
      %v3287 = vsel %vm300, %v3192, 0
      %v3290 = vsel %vm300, %v3193, 0
      %v3293 = vsel %vm300, %v3194, 0
      %v3296 = vsel %vm300, %v3195, 0
      %v3299 = vsel %vm300, %v3196, 0
      %v3302 = vsel %vm300, %v3197, 0
      %v3305 = vsel %vm300, %v3198, 0
      %v3308 = vsel %vm300, %v3199, 0
      %v3311 = vsel %vm409, %v3201, 0
      %3313 = vmatprep.subr.mxu0 0.0
      %3314 = vmatpush1.msra.mxu0 0.0
      %3315 = vmatprep.subr.mxu0 0.0
      %3316 = vmatpush1.msra.mxu0 0.0
      %3317 = vmatprep.subr.mxu0 0.0
      %3318 = vmatpush1.msra.mxu0 0.0
      %3319 = vmatprep.subr.mxu0 0.0
      %3320 = vmatpush1.msra.mxu0 0.0
      %3321 = vmatprep.subr.mxu0 0.0
      %3322 = vmatpush1.msra.mxu0 0.0
      %3323 = vmatprep.subr.mxu0 0.0
      %3324 = vmatpush1.msra.mxu0 0.0
      %3325 = vmatprep.subr.mxu0 0.0
      %3326 = vmatpush1.msra.mxu0 0.0
      %3327 = vmatprep.subr.mxu0 0.0
      %3328 = vmatpush1.msra.mxu0 0.0
      %3329 = vmatprep.subr.mxu0 0.0
      %3330 = vmatpush1.msra.mxu0 0.0
      %3331 = vmatprep.subr.mxu0 0.0
      %3332 = vmatpush1.msra.mxu0 0.0
      %3333 = vmatprep.subr.mxu0 0.0
      %3334 = vmatpush1.msra.mxu0 0.0
      %3335 = vmatprep.subr.mxu0 0.0
      %3336 = vmatpush1.msra.mxu0 0.0
      %3337 = vmatprep.subr.mxu0 0.0
      %3338 = vmatpush1.msra.mxu0 0.0
      %3339 = vmatprep.subr.mxu0 0.0
      %3340 = vmatpush1.msra.mxu0 0.0
      %3341 = vmatprep.subr.mxu0 0.0
      %3342 = vmatpush1.msra.mxu0 0.0
      %3343 = vmatprep.subr.mxu0 0.0
      %3344 = vmatpush1.msra.mxu0 %v3311
      %3345 = vmatprep.subr.mxu0 0.0
      %3346 = vmatpush2.msra.mxu0 0.0
      %3347 = vmatprep.subr.mxu0 0.0
      %3348 = vmatpush2.msra.mxu0 0.0
      %3349 = vmatprep.subr.mxu0 0.0
      %3350 = vmatpush2.msra.mxu0 0.0
      %3351 = vmatprep.subr.mxu0 0.0
      %3352 = vmatpush2.msra.mxu0 0.0
      %3353 = vmatprep.subr.mxu0 0.0
      %3354 = vmatpush2.msra.mxu0 0.0
      %3355 = vmatprep.subr.mxu0 0.0
      %3356 = vmatpush2.msra.mxu0 0.0
      %3357 = vmatprep.subr.mxu0 0.0
      %3358 = vmatpush2.msra.mxu0 0.0
      %3359 = vmatprep.subr.mxu0 0.0
      %3360 = vmatpush2.msra.mxu0 0.0
      %3361 = vmatprep.subr.mxu0 0.0
      %3362 = vmatpush2.msra.mxu0 0.0
      %3363 = vmatprep.subr.mxu0 0.0
      %3364 = vmatpush2.msra.mxu0 0.0
      %3365 = vmatprep.subr.mxu0 0.0
      %3366 = vmatpush2.msra.mxu0 0.0
      %3367 = vmatprep.subr.mxu0 0.0
      %3368 = vmatpush2.msra.mxu0 0.0
      %3369 = vmatprep.subr.mxu0 0.0
      %3370 = vmatpush2.msra.mxu0 0.0
      %3371 = vmatprep.subr.mxu0 0.0
      %3372 = vmatpush2.msra.mxu0 0.0
      %3373 = vmatprep.subr.mxu0 0.0
      %3374 = vmatpush2.msra.mxu0 0.0
      %3375 = vmatprep.subr.mxu0 0.0
      %3376 = vmatpush2.msra.mxu0 0.0
      %3377 = vmatprep.mubr.f32.mxu0 0.0
      %3378 = vmatmul.mubr.f32.gmra.mxu0 %v3203
      %v3379 = vpop.f32.mrf.mxu0
      %v3380 = vadd.f32 0.0, %v3379
      %v3381 = vpop.f32.mrf.mxu0
      %3382 = vmatprep.mubr.f32.mxu0 0.0
      %3383 = vmatmul.mubr.f32.gmra.mxu0 %v3206
      %v3384 = vpop.f32.mrf.mxu0
      %v3385 = vadd.f32 0.0, %v3384
      %v3386 = vpop.f32.mrf.mxu0
      %3387 = vmatprep.mubr.f32.mxu0 0.0
      %3388 = vmatmul.mubr.f32.gmra.mxu0 %v3209
      %v3389 = vpop.f32.mrf.mxu0
      %v3390 = vadd.f32 0.0, %v3389
      %v3391 = vpop.f32.mrf.mxu0
      %3392 = vmatprep.mubr.f32.mxu0 0.0
      %3393 = vmatmul.mubr.f32.gmra.mxu0 %v3212
      %v3394 = vpop.f32.mrf.mxu0
      %v3395 = vadd.f32 0.0, %v3394
      %v3396 = vpop.f32.mrf.mxu0
      %3397 = vmatprep.mubr.f32.mxu0 0.0
      %3398 = vmatmul.mubr.f32.gmra.mxu0 %v3215
      %v3399 = vpop.f32.mrf.mxu0
      %v3400 = vadd.f32 0.0, %v3399
      %v3401 = vpop.f32.mrf.mxu0
      %3402 = vmatprep.mubr.f32.mxu0 0.0
      %3403 = vmatmul.mubr.f32.gmra.mxu0 %v3218
      %v3404 = vpop.f32.mrf.mxu0
      %v3405 = vadd.f32 0.0, %v3404
      %v3406 = vpop.f32.mrf.mxu0
      %3407 = vmatprep.mubr.f32.mxu0 0.0
      %3408 = vmatmul.mubr.f32.gmra.mxu0 %v3221
      %v3409 = vpop.f32.mrf.mxu0
      %v3410 = vadd.f32 0.0, %v3409
      %v3411 = vpop.f32.mrf.mxu0
      %3412 = vmatprep.mubr.f32.mxu0 0.0
      %3413 = vmatmul.mubr.f32.gmra.mxu0 %v3224
      %v3414 = vpop.f32.mrf.mxu0
      %v3415 = vadd.f32 0.0, %v3414
      %v3416 = vpop.f32.mrf.mxu0
      %3417 = vmatprep.mubr.f32.mxu0 0.0
      %3418 = vmatmul.mubr.f32.gmra.mxu0 %v3227
      %v3419 = vpop.f32.mrf.mxu0
      %v3420 = vadd.f32 0.0, %v3419
      %v3421 = vpop.f32.mrf.mxu0
      %3422 = vmatprep.mubr.f32.mxu0 0.0
      %3423 = vmatmul.mubr.f32.gmra.mxu0 %v3230
      %v3424 = vpop.f32.mrf.mxu0
      %v3425 = vadd.f32 0.0, %v3424
      %v3426 = vpop.f32.mrf.mxu0
      %3427 = vmatprep.mubr.f32.mxu0 0.0
      %3428 = vmatmul.mubr.f32.gmra.mxu0 %v3233
      %v3429 = vpop.f32.mrf.mxu0
      %v3430 = vadd.f32 0.0, %v3429
      %v3431 = vpop.f32.mrf.mxu0
      %3432 = vmatprep.mubr.f32.mxu0 0.0
      %3433 = vmatmul.mubr.f32.gmra.mxu0 %v3236
      %v3434 = vpop.f32.mrf.mxu0
      %v3435 = vadd.f32 0.0, %v3434
      %v3436 = vpop.f32.mrf.mxu0
      %3437 = vmatprep.mubr.f32.mxu0 0.0
      %3438 = vmatmul.mubr.f32.gmra.mxu0 %v3239
      %v3439 = vpop.f32.mrf.mxu0
      %v3440 = vadd.f32 0.0, %v3439
      %v3441 = vpop.f32.mrf.mxu0
      %3442 = vmatprep.mubr.f32.mxu0 0.0
      %3443 = vmatmul.mubr.f32.gmra.mxu0 %v3242
      %v3444 = vpop.f32.mrf.mxu0
      %v3445 = vadd.f32 0.0, %v3444
      %v3446 = vpop.f32.mrf.mxu0
      %3447 = vmatprep.mubr.f32.mxu0 0.0
      %3448 = vmatmul.mubr.f32.gmra.mxu0 %v3245
      %v3449 = vpop.f32.mrf.mxu0
      %v3450 = vadd.f32 0.0, %v3449
      %v3451 = vpop.f32.mrf.mxu0
      %3452 = vmatprep.mubr.f32.mxu0 0.0
      %3453 = vmatmul.mubr.f32.gmra.mxu0 %v3248
      %v3454 = vpop.f32.mrf.mxu0
      %v3455 = vadd.f32 0.0, %v3454
      %v3456 = vpop.f32.mrf.mxu0
      %3457 = vmatprep.mubr.f32.mxu0 0.0
      %3458 = vmatmul.mubr.f32.gmra.mxu0 %v3251
      %v3459 = vpop.f32.mrf.mxu0
      %v3460 = vadd.f32 0.0, %v3459
      %v3461 = vpop.f32.mrf.mxu0
      %3462 = vmatprep.mubr.f32.mxu0 0.0
      %3463 = vmatmul.mubr.f32.gmra.mxu0 %v3254
      %v3464 = vpop.f32.mrf.mxu0
      %v3465 = vadd.f32 0.0, %v3464
      %v3466 = vpop.f32.mrf.mxu0
      %3467 = vmatprep.mubr.f32.mxu0 0.0
      %3468 = vmatmul.mubr.f32.gmra.mxu0 %v3257
      %v3469 = vpop.f32.mrf.mxu0
      %v3470 = vadd.f32 0.0, %v3469
      %v3471 = vpop.f32.mrf.mxu0
      %3472 = vmatprep.mubr.f32.mxu0 0.0
      %3473 = vmatmul.mubr.f32.gmra.mxu0 %v3260
      %v3474 = vpop.f32.mrf.mxu0
      %v3475 = vadd.f32 0.0, %v3474
      %v3476 = vpop.f32.mrf.mxu0
      %3477 = vmatprep.mubr.f32.mxu0 0.0
      %3478 = vmatmul.mubr.f32.gmra.mxu0 %v3263
      %v3479 = vpop.f32.mrf.mxu0
      %v3480 = vadd.f32 0.0, %v3479
      %v3481 = vpop.f32.mrf.mxu0
      %3482 = vmatprep.mubr.f32.mxu0 0.0
      %3483 = vmatmul.mubr.f32.gmra.mxu0 %v3266
      %v3484 = vpop.f32.mrf.mxu0
      %v3485 = vadd.f32 0.0, %v3484
      %v3486 = vpop.f32.mrf.mxu0
      %3487 = vmatprep.mubr.f32.mxu0 0.0
      %3488 = vmatmul.mubr.f32.gmra.mxu0 %v3269
      %v3489 = vpop.f32.mrf.mxu0
      %v3490 = vadd.f32 0.0, %v3489
      %v3491 = vpop.f32.mrf.mxu0
      %3492 = vmatprep.mubr.f32.mxu0 0.0
      %3493 = vmatmul.mubr.f32.gmra.mxu0 %v3272
      %v3494 = vpop.f32.mrf.mxu0
      %v3495 = vadd.f32 0.0, %v3494
      %v3496 = vpop.f32.mrf.mxu0
      %3497 = vmatprep.mubr.f32.mxu0 0.0
      %3498 = vmatmul.mubr.f32.gmra.mxu0 %v3275
      %v3499 = vpop.f32.mrf.mxu0
      %v3500 = vadd.f32 0.0, %v3499
      %v3501 = vpop.f32.mrf.mxu0
      %3502 = vmatprep.mubr.f32.mxu0 0.0
      %3503 = vmatmul.mubr.f32.gmra.mxu0 %v3278
      %v3504 = vpop.f32.mrf.mxu0
      %v3505 = vadd.f32 0.0, %v3504
      %v3506 = vpop.f32.mrf.mxu0
      %3507 = vmatprep.mubr.f32.mxu0 0.0
      %3508 = vmatmul.mubr.f32.gmra.mxu0 %v3281
      %v3509 = vpop.f32.mrf.mxu0
      %v3510 = vadd.f32 0.0, %v3509
      %v3511 = vpop.f32.mrf.mxu0
      %3512 = vmatprep.mubr.f32.mxu0 0.0
      %3513 = vmatmul.mubr.f32.gmra.mxu0 %v3284
      %v3514 = vpop.f32.mrf.mxu0
      %v3515 = vadd.f32 0.0, %v3514
      %v3516 = vpop.f32.mrf.mxu0
      %3517 = vmatprep.mubr.f32.mxu0 0.0
      %3518 = vmatmul.mubr.f32.gmra.mxu0 %v3287
      %v3519 = vpop.f32.mrf.mxu0
      %v3520 = vadd.f32 0.0, %v3519
      %v3521 = vpop.f32.mrf.mxu0
      %3522 = vmatprep.mubr.f32.mxu0 0.0
      %3523 = vmatmul.mubr.f32.gmra.mxu0 %v3290
      %v3524 = vpop.f32.mrf.mxu0
      %v3525 = vadd.f32 0.0, %v3524
      %v3526 = vpop.f32.mrf.mxu0
      %3527 = vmatprep.mubr.f32.mxu0 0.0
      %3528 = vmatmul.mubr.f32.gmra.mxu0 %v3293
      %v3529 = vpop.f32.mrf.mxu0
      %v3530 = vadd.f32 0.0, %v3529
      %v3531 = vpop.f32.mrf.mxu0
      %3532 = vmatprep.mubr.f32.mxu0 0.0
      %3533 = vmatmul.mubr.f32.gmra.mxu0 %v3296
      %v3534 = vpop.f32.mrf.mxu0
      %v3535 = vadd.f32 0.0, %v3534
      %v3536 = vpop.f32.mrf.mxu0
      %3537 = vmatprep.mubr.f32.mxu0 0.0
      %3538 = vmatmul.mubr.f32.gmra.mxu0 %v3299
      %v3539 = vpop.f32.mrf.mxu0
      %v3540 = vadd.f32 0.0, %v3539
      %v3541 = vpop.f32.mrf.mxu0
      %3542 = vmatprep.mubr.f32.mxu0 0.0
      %3543 = vmatmul.mubr.f32.gmra.mxu0 %v3302
      %v3544 = vpop.f32.mrf.mxu0
      %v3545 = vadd.f32 0.0, %v3544
      %v3546 = vpop.f32.mrf.mxu0
      %3547 = vmatprep.mubr.f32.mxu0 0.0
      %3548 = vmatmul.mubr.f32.gmra.mxu0 %v3305
      %v3549 = vpop.f32.mrf.mxu0
      %v3550 = vadd.f32 0.0, %v3549
      %v3551 = vpop.f32.mrf.mxu0
      %3552 = vmatprep.mubr.f32.mxu0 0.0
      %3553 = vmatmul.mubr.f32.gmra.mxu0 %v3308
      %v3554 = vpop.f32.mrf.mxu0
      %v3555 = vadd.f32 0.0, %v3554
      %v3556 = vpop.f32.mrf.mxu0
      %3557 = vdwg.mxu0
      %v3558 = vadd.f32 %v3128, %v3380
      %v3559 = vadd.f32 %v3129, %v3385
      %v3560 = vadd.f32 %v3130, %v3390
      %v3561 = vadd.f32 %v3131, %v3395
      %v3562 = vadd.f32 %v3132, %v3400
      %v3563 = vadd.f32 %v3133, %v3405
      %v3564 = vadd.f32 %v3134, %v3410
      %v3565 = vadd.f32 %v3135, %v3415
      %v3566 = vadd.f32 %v3136, %v3420
      %v3567 = vadd.f32 %v3137, %v3425
      %v3568 = vadd.f32 %v3138, %v3430
      %v3569 = vadd.f32 %v3139, %v3435
      %v3570 = vadd.f32 %v3140, %v3440
      %v3571 = vadd.f32 %v3141, %v3445
      %v3572 = vadd.f32 %v3142, %v3450
      %v3573 = vadd.f32 %v3143, %v3455
      %v3574 = vadd.f32 %v3144, %v3460
      %v3575 = vadd.f32 %v3145, %v3465
      %v3576 = vadd.f32 %v3146, %v3470
      %v3577 = vadd.f32 %v3147, %v3475
      %v3578 = vadd.f32 %v3148, %v3480
      %v3579 = vadd.f32 %v3149, %v3485
      %v3580 = vadd.f32 %v3150, %v3490
      %v3581 = vadd.f32 %v3151, %v3495
      %v3582 = vadd.f32 %v3152, %v3500
      %v3583 = vadd.f32 %v3153, %v3505
      %v3584 = vadd.f32 %v3154, %v3510
      %v3585 = vadd.f32 %v3155, %v3515
      %v3586 = vadd.f32 %v3156, %v3520
      %v3587 = vadd.f32 %v3157, %v3525
      %v3588 = vadd.f32 %v3158, %v3530
      %v3589 = vadd.f32 %v3159, %v3535
      %v3590 = vadd.f32 %v3160, %v3540
      %v3591 = vadd.f32 %v3161, %v3545
      %v3592 = vadd.f32 %v3162, %v3550
      %v3593 = vadd.f32 %v3163, %v3555
      %v3594 = vld [vmem:[%s219 + $0x26] sm:$0xff]
      %v3595 = vld [vmem:[%s219 + $0x2e] sm:$0xff]
      %v3596 = vld [vmem:[%s219 + $0x36] sm:$0xff]
      %v3597 = vld [vmem:[%s219 + $0x3e] sm:$0xff]
      %v3598 = vld [vmem:[%s219 + $0x46] sm:$0xff]
      %v3599 = vld [vmem:[%s219 + $0x4e] sm:$0xff]
      %v3600 = vld [vmem:[%s219 + $0x56] sm:$0xff]
      %v3601 = vld [vmem:[%s219 + $0x5e] sm:$0xff]
      %v3602 = vld [vmem:[%s219 + $0x66] sm:$0xff]
      %v3603 = vld [vmem:[%s219 + $0x6e] sm:$0xff]
      %v3604 = vld [vmem:[%s219 + $0x76] sm:$0xff]
      %v3605 = vld [vmem:[%s219 + $0x7e] sm:$0xff]
      %v3606 = vld [vmem:[%s219 + $0x86] sm:$0xff]
      %v3607 = vld [vmem:[%s219 + $0x8e] sm:$0xff]
      %v3608 = vld [vmem:[%s219 + $0x96] sm:$0xff]
      %v3609 = vld [vmem:[%s219 + $0x9e] sm:$0xff]
      %v3610 = vld [vmem:[%s219 + $0xa6] sm:$0xff]
      %v3611 = vld [vmem:[%s219 + $0xae] sm:$0xff]
      %v3612 = vld [vmem:[%s219 + $0xb6] sm:$0xff]
      %v3613 = vld [vmem:[%s219 + $0xbe] sm:$0xff]
      %v3614 = vld [vmem:[%s219 + $0xc6] sm:$0xff]
      %v3615 = vld [vmem:[%s219 + $0xce] sm:$0xff]
      %v3616 = vld [vmem:[%s219 + $0xd6] sm:$0xff]
      %v3617 = vld [vmem:[%s219 + $0xde] sm:$0xff]
      %v3618 = vld [vmem:[%s219 + $0xe6] sm:$0xff]
      %v3619 = vld [vmem:[%s219 + $0xee] sm:$0xff]
      %v3620 = vld [vmem:[%s219 + $0xf6] sm:$0xff]
      %v3621 = vld [vmem:[%s219 + $0xfe] sm:$0xff]
      %v3622 = vld [vmem:[%s219 + $0x106] sm:$0xff]
      %v3623 = vld [vmem:[%s219 + $0x10e] sm:$0xff]
      %v3624 = vld [vmem:[%s219 + $0x116] sm:$0xff]
      %v3625 = vld [vmem:[%s219 + $0x11e] sm:$0xff]
      %v3626 = vld [vmem:[%s219 + $0x126] sm:$0xff]
      %v3627 = vld [vmem:[%s219 + $0x12e] sm:$0xff]
      %v3628 = vld [vmem:[%s219 + $0x136] sm:$0xff]
      %v3629 = vld [vmem:[%s219 + $0x13e] sm:$0xff]
      %s3630 = scalar_lea.vmem %s1, 32
      %v3631 = vld [vmem:[%s3630] sm:$0xf]
      %v3633 = vsel %vm300, %v3594, 0
      %v3636 = vsel %vm300, %v3595, 0
      %v3639 = vsel %vm300, %v3596, 0
      %v3642 = vsel %vm300, %v3597, 0
      %v3645 = vsel %vm300, %v3598, 0
      %v3648 = vsel %vm300, %v3599, 0
      %v3651 = vsel %vm300, %v3600, 0
      %v3654 = vsel %vm300, %v3601, 0
      %v3657 = vsel %vm300, %v3602, 0
      %v3660 = vsel %vm300, %v3603, 0
      %v3663 = vsel %vm300, %v3604, 0
      %v3666 = vsel %vm300, %v3605, 0
      %v3669 = vsel %vm300, %v3606, 0
      %v3672 = vsel %vm300, %v3607, 0
      %v3675 = vsel %vm300, %v3608, 0
      %v3678 = vsel %vm300, %v3609, 0
      %v3681 = vsel %vm300, %v3610, 0
      %v3684 = vsel %vm300, %v3611, 0
      %v3687 = vsel %vm300, %v3612, 0
      %v3690 = vsel %vm300, %v3613, 0
      %v3693 = vsel %vm300, %v3614, 0
      %v3696 = vsel %vm300, %v3615, 0
      %v3699 = vsel %vm300, %v3616, 0
      %v3702 = vsel %vm300, %v3617, 0
      %v3705 = vsel %vm300, %v3618, 0
      %v3708 = vsel %vm300, %v3619, 0
      %v3711 = vsel %vm300, %v3620, 0
      %v3714 = vsel %vm300, %v3621, 0
      %v3717 = vsel %vm300, %v3622, 0
      %v3720 = vsel %vm300, %v3623, 0
      %v3723 = vsel %vm300, %v3624, 0
      %v3726 = vsel %vm300, %v3625, 0
      %v3729 = vsel %vm300, %v3626, 0
      %v3732 = vsel %vm300, %v3627, 0
      %v3735 = vsel %vm300, %v3628, 0
      %v3738 = vsel %vm300, %v3629, 0
      %v3741 = vsel %vm409, %v3631, 0
      %3743 = vmatprep.subr.mxu0 0.0
      %3744 = vmatpush1.msra.mxu0 0.0
      %3745 = vmatprep.subr.mxu0 0.0
      %3746 = vmatpush1.msra.mxu0 0.0
      %3747 = vmatprep.subr.mxu0 0.0
      %3748 = vmatpush1.msra.mxu0 0.0
      %3749 = vmatprep.subr.mxu0 0.0
      %3750 = vmatpush1.msra.mxu0 0.0
      %3751 = vmatprep.subr.mxu0 0.0
      %3752 = vmatpush1.msra.mxu0 0.0
      %3753 = vmatprep.subr.mxu0 0.0
      %3754 = vmatpush1.msra.mxu0 0.0
      %3755 = vmatprep.subr.mxu0 0.0
      %3756 = vmatpush1.msra.mxu0 0.0
      %3757 = vmatprep.subr.mxu0 0.0
      %3758 = vmatpush1.msra.mxu0 0.0
      %3759 = vmatprep.subr.mxu0 0.0
      %3760 = vmatpush1.msra.mxu0 0.0
      %3761 = vmatprep.subr.mxu0 0.0
      %3762 = vmatpush1.msra.mxu0 0.0
      %3763 = vmatprep.subr.mxu0 0.0
      %3764 = vmatpush1.msra.mxu0 0.0
      %3765 = vmatprep.subr.mxu0 0.0
      %3766 = vmatpush1.msra.mxu0 0.0
      %3767 = vmatprep.subr.mxu0 0.0
      %3768 = vmatpush1.msra.mxu0 0.0
      %3769 = vmatprep.subr.mxu0 0.0
      %3770 = vmatpush1.msra.mxu0 0.0
      %3771 = vmatprep.subr.mxu0 0.0
      %3772 = vmatpush1.msra.mxu0 0.0
      %3773 = vmatprep.subr.mxu0 0.0
      %3774 = vmatpush1.msra.mxu0 %v3741
      %3775 = vmatprep.subr.mxu0 0.0
      %3776 = vmatpush2.msra.mxu0 0.0
      %3777 = vmatprep.subr.mxu0 0.0
      %3778 = vmatpush2.msra.mxu0 0.0
      %3779 = vmatprep.subr.mxu0 0.0
      %3780 = vmatpush2.msra.mxu0 0.0
      %3781 = vmatprep.subr.mxu0 0.0
      %3782 = vmatpush2.msra.mxu0 0.0
      %3783 = vmatprep.subr.mxu0 0.0
      %3784 = vmatpush2.msra.mxu0 0.0
      %3785 = vmatprep.subr.mxu0 0.0
      %3786 = vmatpush2.msra.mxu0 0.0
      %3787 = vmatprep.subr.mxu0 0.0
      %3788 = vmatpush2.msra.mxu0 0.0
      %3789 = vmatprep.subr.mxu0 0.0
      %3790 = vmatpush2.msra.mxu0 0.0
      %3791 = vmatprep.subr.mxu0 0.0
      %3792 = vmatpush2.msra.mxu0 0.0
      %3793 = vmatprep.subr.mxu0 0.0
      %3794 = vmatpush2.msra.mxu0 0.0
      %3795 = vmatprep.subr.mxu0 0.0
      %3796 = vmatpush2.msra.mxu0 0.0
      %3797 = vmatprep.subr.mxu0 0.0
      %3798 = vmatpush2.msra.mxu0 0.0
      %3799 = vmatprep.subr.mxu0 0.0
      %3800 = vmatpush2.msra.mxu0 0.0
      %3801 = vmatprep.subr.mxu0 0.0
      %3802 = vmatpush2.msra.mxu0 0.0
      %3803 = vmatprep.subr.mxu0 0.0
      %3804 = vmatpush2.msra.mxu0 0.0
      %3805 = vmatprep.subr.mxu0 0.0
      %3806 = vmatpush2.msra.mxu0 0.0
      %3807 = vmatprep.mubr.f32.mxu0 0.0
      %3808 = vmatmul.mubr.f32.gmra.mxu0 %v3633
      %v3809 = vpop.f32.mrf.mxu0
      %v3810 = vadd.f32 0.0, %v3809
      %v3811 = vpop.f32.mrf.mxu0
      %3812 = vmatprep.mubr.f32.mxu0 0.0
      %3813 = vmatmul.mubr.f32.gmra.mxu0 %v3636
      %v3814 = vpop.f32.mrf.mxu0
      %v3815 = vadd.f32 0.0, %v3814
      %v3816 = vpop.f32.mrf.mxu0
      %3817 = vmatprep.mubr.f32.mxu0 0.0
      %3818 = vmatmul.mubr.f32.gmra.mxu0 %v3639
      %v3819 = vpop.f32.mrf.mxu0
      %v3820 = vadd.f32 0.0, %v3819
      %v3821 = vpop.f32.mrf.mxu0
      %3822 = vmatprep.mubr.f32.mxu0 0.0
      %3823 = vmatmul.mubr.f32.gmra.mxu0 %v3642
      %v3824 = vpop.f32.mrf.mxu0
      %v3825 = vadd.f32 0.0, %v3824
      %v3826 = vpop.f32.mrf.mxu0
      %3827 = vmatprep.mubr.f32.mxu0 0.0
      %3828 = vmatmul.mubr.f32.gmra.mxu0 %v3645
      %v3829 = vpop.f32.mrf.mxu0
      %v3830 = vadd.f32 0.0, %v3829
      %v3831 = vpop.f32.mrf.mxu0
      %3832 = vmatprep.mubr.f32.mxu0 0.0
      %3833 = vmatmul.mubr.f32.gmra.mxu0 %v3648
      %v3834 = vpop.f32.mrf.mxu0
      %v3835 = vadd.f32 0.0, %v3834
      %v3836 = vpop.f32.mrf.mxu0
      %3837 = vmatprep.mubr.f32.mxu0 0.0
      %3838 = vmatmul.mubr.f32.gmra.mxu0 %v3651
      %v3839 = vpop.f32.mrf.mxu0
      %v3840 = vadd.f32 0.0, %v3839
      %v3841 = vpop.f32.mrf.mxu0
      %3842 = vmatprep.mubr.f32.mxu0 0.0
      %3843 = vmatmul.mubr.f32.gmra.mxu0 %v3654
      %v3844 = vpop.f32.mrf.mxu0
      %v3845 = vadd.f32 0.0, %v3844
      %v3846 = vpop.f32.mrf.mxu0
      %3847 = vmatprep.mubr.f32.mxu0 0.0
      %3848 = vmatmul.mubr.f32.gmra.mxu0 %v3657
      %v3849 = vpop.f32.mrf.mxu0
      %v3850 = vadd.f32 0.0, %v3849
      %v3851 = vpop.f32.mrf.mxu0
      %3852 = vmatprep.mubr.f32.mxu0 0.0
      %3853 = vmatmul.mubr.f32.gmra.mxu0 %v3660
      %v3854 = vpop.f32.mrf.mxu0
      %v3855 = vadd.f32 0.0, %v3854
      %v3856 = vpop.f32.mrf.mxu0
      %3857 = vmatprep.mubr.f32.mxu0 0.0
      %3858 = vmatmul.mubr.f32.gmra.mxu0 %v3663
      %v3859 = vpop.f32.mrf.mxu0
      %v3860 = vadd.f32 0.0, %v3859
      %v3861 = vpop.f32.mrf.mxu0
      %3862 = vmatprep.mubr.f32.mxu0 0.0
      %3863 = vmatmul.mubr.f32.gmra.mxu0 %v3666
      %v3864 = vpop.f32.mrf.mxu0
      %v3865 = vadd.f32 0.0, %v3864
      %v3866 = vpop.f32.mrf.mxu0
      %3867 = vmatprep.mubr.f32.mxu0 0.0
      %3868 = vmatmul.mubr.f32.gmra.mxu0 %v3669
      %v3869 = vpop.f32.mrf.mxu0
      %v3870 = vadd.f32 0.0, %v3869
      %v3871 = vpop.f32.mrf.mxu0
      %3872 = vmatprep.mubr.f32.mxu0 0.0
      %3873 = vmatmul.mubr.f32.gmra.mxu0 %v3672
      %v3874 = vpop.f32.mrf.mxu0
      %v3875 = vadd.f32 0.0, %v3874
      %v3876 = vpop.f32.mrf.mxu0
      %3877 = vmatprep.mubr.f32.mxu0 0.0
      %3878 = vmatmul.mubr.f32.gmra.mxu0 %v3675
      %v3879 = vpop.f32.mrf.mxu0
      %v3880 = vadd.f32 0.0, %v3879
      %v3881 = vpop.f32.mrf.mxu0
      %3882 = vmatprep.mubr.f32.mxu0 0.0
      %3883 = vmatmul.mubr.f32.gmra.mxu0 %v3678
      %v3884 = vpop.f32.mrf.mxu0
      %v3885 = vadd.f32 0.0, %v3884
      %v3886 = vpop.f32.mrf.mxu0
      %3887 = vmatprep.mubr.f32.mxu0 0.0
      %3888 = vmatmul.mubr.f32.gmra.mxu0 %v3681
      %v3889 = vpop.f32.mrf.mxu0
      %v3890 = vadd.f32 0.0, %v3889
      %v3891 = vpop.f32.mrf.mxu0
      %3892 = vmatprep.mubr.f32.mxu0 0.0
      %3893 = vmatmul.mubr.f32.gmra.mxu0 %v3684
      %v3894 = vpop.f32.mrf.mxu0
      %v3895 = vadd.f32 0.0, %v3894
      %v3896 = vpop.f32.mrf.mxu0
      %3897 = vmatprep.mubr.f32.mxu0 0.0
      %3898 = vmatmul.mubr.f32.gmra.mxu0 %v3687
      %v3899 = vpop.f32.mrf.mxu0
      %v3900 = vadd.f32 0.0, %v3899
      %v3901 = vpop.f32.mrf.mxu0
      %3902 = vmatprep.mubr.f32.mxu0 0.0
      %3903 = vmatmul.mubr.f32.gmra.mxu0 %v3690
      %v3904 = vpop.f32.mrf.mxu0
      %v3905 = vadd.f32 0.0, %v3904
      %v3906 = vpop.f32.mrf.mxu0
      %3907 = vmatprep.mubr.f32.mxu0 0.0
      %3908 = vmatmul.mubr.f32.gmra.mxu0 %v3693
      %v3909 = vpop.f32.mrf.mxu0
      %v3910 = vadd.f32 0.0, %v3909
      %v3911 = vpop.f32.mrf.mxu0
      %3912 = vmatprep.mubr.f32.mxu0 0.0
      %3913 = vmatmul.mubr.f32.gmra.mxu0 %v3696
      %v3914 = vpop.f32.mrf.mxu0
      %v3915 = vadd.f32 0.0, %v3914
      %v3916 = vpop.f32.mrf.mxu0
      %3917 = vmatprep.mubr.f32.mxu0 0.0
      %3918 = vmatmul.mubr.f32.gmra.mxu0 %v3699
      %v3919 = vpop.f32.mrf.mxu0
      %v3920 = vadd.f32 0.0, %v3919
      %v3921 = vpop.f32.mrf.mxu0
      %3922 = vmatprep.mubr.f32.mxu0 0.0
      %3923 = vmatmul.mubr.f32.gmra.mxu0 %v3702
      %v3924 = vpop.f32.mrf.mxu0
      %v3925 = vadd.f32 0.0, %v3924
      %v3926 = vpop.f32.mrf.mxu0
      %3927 = vmatprep.mubr.f32.mxu0 0.0
      %3928 = vmatmul.mubr.f32.gmra.mxu0 %v3705
      %v3929 = vpop.f32.mrf.mxu0
      %v3930 = vadd.f32 0.0, %v3929
      %v3931 = vpop.f32.mrf.mxu0
      %3932 = vmatprep.mubr.f32.mxu0 0.0
      %3933 = vmatmul.mubr.f32.gmra.mxu0 %v3708
      %v3934 = vpop.f32.mrf.mxu0
      %v3935 = vadd.f32 0.0, %v3934
      %v3936 = vpop.f32.mrf.mxu0
      %3937 = vmatprep.mubr.f32.mxu0 0.0
      %3938 = vmatmul.mubr.f32.gmra.mxu0 %v3711
      %v3939 = vpop.f32.mrf.mxu0
      %v3940 = vadd.f32 0.0, %v3939
      %v3941 = vpop.f32.mrf.mxu0
      %3942 = vmatprep.mubr.f32.mxu0 0.0
      %3943 = vmatmul.mubr.f32.gmra.mxu0 %v3714
      %v3944 = vpop.f32.mrf.mxu0
      %v3945 = vadd.f32 0.0, %v3944
      %v3946 = vpop.f32.mrf.mxu0
      %3947 = vmatprep.mubr.f32.mxu0 0.0
      %3948 = vmatmul.mubr.f32.gmra.mxu0 %v3717
      %v3949 = vpop.f32.mrf.mxu0
      %v3950 = vadd.f32 0.0, %v3949
      %v3951 = vpop.f32.mrf.mxu0
      %3952 = vmatprep.mubr.f32.mxu0 0.0
      %3953 = vmatmul.mubr.f32.gmra.mxu0 %v3720
      %v3954 = vpop.f32.mrf.mxu0
      %v3955 = vadd.f32 0.0, %v3954
      %v3956 = vpop.f32.mrf.mxu0
      %3957 = vmatprep.mubr.f32.mxu0 0.0
      %3958 = vmatmul.mubr.f32.gmra.mxu0 %v3723
      %v3959 = vpop.f32.mrf.mxu0
      %v3960 = vadd.f32 0.0, %v3959
      %v3961 = vpop.f32.mrf.mxu0
      %3962 = vmatprep.mubr.f32.mxu0 0.0
      %3963 = vmatmul.mubr.f32.gmra.mxu0 %v3726
      %v3964 = vpop.f32.mrf.mxu0
      %v3965 = vadd.f32 0.0, %v3964
      %v3966 = vpop.f32.mrf.mxu0
      %3967 = vmatprep.mubr.f32.mxu0 0.0
      %3968 = vmatmul.mubr.f32.gmra.mxu0 %v3729
      %v3969 = vpop.f32.mrf.mxu0
      %v3970 = vadd.f32 0.0, %v3969
      %v3971 = vpop.f32.mrf.mxu0
      %3972 = vmatprep.mubr.f32.mxu0 0.0
      %3973 = vmatmul.mubr.f32.gmra.mxu0 %v3732
      %v3974 = vpop.f32.mrf.mxu0
      %v3975 = vadd.f32 0.0, %v3974
      %v3976 = vpop.f32.mrf.mxu0
      %3977 = vmatprep.mubr.f32.mxu0 0.0
      %3978 = vmatmul.mubr.f32.gmra.mxu0 %v3735
      %v3979 = vpop.f32.mrf.mxu0
      %v3980 = vadd.f32 0.0, %v3979
      %v3981 = vpop.f32.mrf.mxu0
      %3982 = vmatprep.mubr.f32.mxu0 0.0
      %3983 = vmatmul.mubr.f32.gmra.mxu0 %v3738
      %v3984 = vpop.f32.mrf.mxu0
      %v3985 = vadd.f32 0.0, %v3984
      %v3986 = vpop.f32.mrf.mxu0
      %3987 = vdwg.mxu0
      %v3988 = vadd.f32 %v3558, %v3810
      %v3989 = vadd.f32 %v3559, %v3815
      %v3990 = vadd.f32 %v3560, %v3820
      %v3991 = vadd.f32 %v3561, %v3825
      %v3992 = vadd.f32 %v3562, %v3830
      %v3993 = vadd.f32 %v3563, %v3835
      %v3994 = vadd.f32 %v3564, %v3840
      %v3995 = vadd.f32 %v3565, %v3845
      %v3996 = vadd.f32 %v3566, %v3850
      %v3997 = vadd.f32 %v3567, %v3855
      %v3998 = vadd.f32 %v3568, %v3860
      %v3999 = vadd.f32 %v3569, %v3865
      %v4000 = vadd.f32 %v3570, %v3870
      %v4001 = vadd.f32 %v3571, %v3875
      %v4002 = vadd.f32 %v3572, %v3880
      %v4003 = vadd.f32 %v3573, %v3885
      %v4004 = vadd.f32 %v3574, %v3890
      %v4005 = vadd.f32 %v3575, %v3895
      %v4006 = vadd.f32 %v3576, %v3900
      %v4007 = vadd.f32 %v3577, %v3905
      %v4008 = vadd.f32 %v3578, %v3910
      %v4009 = vadd.f32 %v3579, %v3915
      %v4010 = vadd.f32 %v3580, %v3920
      %v4011 = vadd.f32 %v3581, %v3925
      %v4012 = vadd.f32 %v3582, %v3930
      %v4013 = vadd.f32 %v3583, %v3935
      %v4014 = vadd.f32 %v3584, %v3940
      %v4015 = vadd.f32 %v3585, %v3945
      %v4016 = vadd.f32 %v3586, %v3950
      %v4017 = vadd.f32 %v3587, %v3955
      %v4018 = vadd.f32 %v3588, %v3960
      %v4019 = vadd.f32 %v3589, %v3965
      %v4020 = vadd.f32 %v3590, %v3970
      %v4021 = vadd.f32 %v3591, %v3975
      %v4022 = vadd.f32 %v3592, %v3980
      %v4023 = vadd.f32 %v3593, %v3985
      %v4024 = vld [vmem:[%s2] sm:$0x1]
      %v4026 = vlaneseq
      %v4027 = vshrl.u32 %v4026, 7
      %v4028 = vsub.s32 0, %v4027
      %v4029 = vrot.slane %v4024, %v4028
      %v4031 = vadd.f32 %v3988, %v4029
      %v4032 = vadd.f32 %v3989, %v4029
      %v4033 = vadd.f32 %v3990, %v4029
      %v4034 = vadd.f32 %v3991, %v4029
      %v4035 = vadd.f32 %v3992, %v4029
      %v4036 = vadd.f32 %v3993, %v4029
      %v4037 = vadd.f32 %v3994, %v4029
      %v4038 = vadd.f32 %v3995, %v4029
      %v4039 = vadd.f32 %v3996, %v4029
      %v4040 = vadd.f32 %v3997, %v4029
      %v4041 = vadd.f32 %v3998, %v4029
      %v4042 = vadd.f32 %v3999, %v4029
      %v4043 = vadd.f32 %v4000, %v4029
      %v4044 = vadd.f32 %v4001, %v4029
      %v4045 = vadd.f32 %v4002, %v4029
      %v4046 = vadd.f32 %v4003, %v4029
      %v4047 = vadd.f32 %v4004, %v4029
      %v4048 = vadd.f32 %v4005, %v4029
      %v4049 = vadd.f32 %v4006, %v4029
      %v4050 = vadd.f32 %v4007, %v4029
      %v4051 = vadd.f32 %v4008, %v4029
      %v4052 = vadd.f32 %v4009, %v4029
      %v4053 = vadd.f32 %v4010, %v4029
      %v4054 = vadd.f32 %v4011, %v4029
      %v4055 = vadd.f32 %v4012, %v4029
      %v4056 = vadd.f32 %v4013, %v4029
      %v4057 = vadd.f32 %v4014, %v4029
      %v4058 = vadd.f32 %v4015, %v4029
      %v4059 = vadd.f32 %v4016, %v4029
      %v4060 = vadd.f32 %v4017, %v4029
      %v4061 = vadd.f32 %v4018, %v4029
      %v4062 = vadd.f32 %v4019, %v4029
      %v4063 = vadd.f32 %v4020, %v4029
      %v4064 = vadd.f32 %v4021, %v4029
      %v4065 = vadd.f32 %v4022, %v4029
      %v4066 = vadd.f32 %v4023, %v4029
      %vm4067 = vcmp.ge.f32.partialorder %v4031, 0.0
      %vm4068 = vcmp.ge.f32.partialorder %v4032, 0.0
      %vm4069 = vcmp.ge.f32.partialorder %v4033, 0.0
      %vm4070 = vcmp.ge.f32.partialorder %v4034, 0.0
      %vm4071 = vcmp.ge.f32.partialorder %v4035, 0.0
      %vm4072 = vcmp.ge.f32.partialorder %v4036, 0.0
      %vm4073 = vcmp.ge.f32.partialorder %v4037, 0.0
      %vm4074 = vcmp.ge.f32.partialorder %v4038, 0.0
      %vm4075 = vcmp.ge.f32.partialorder %v4039, 0.0
      %vm4076 = vcmp.ge.f32.partialorder %v4040, 0.0
      %vm4077 = vcmp.ge.f32.partialorder %v4041, 0.0
      %vm4078 = vcmp.ge.f32.partialorder %v4042, 0.0
      %vm4079 = vcmp.ge.f32.partialorder %v4043, 0.0
      %vm4080 = vcmp.ge.f32.partialorder %v4044, 0.0
      %vm4081 = vcmp.ge.f32.partialorder %v4045, 0.0
      %vm4082 = vcmp.ge.f32.partialorder %v4046, 0.0
      %vm4083 = vcmp.ge.f32.partialorder %v4047, 0.0
      %vm4084 = vcmp.ge.f32.partialorder %v4048, 0.0
      %vm4085 = vcmp.ge.f32.partialorder %v4049, 0.0
      %vm4086 = vcmp.ge.f32.partialorder %v4050, 0.0
      %vm4087 = vcmp.ge.f32.partialorder %v4051, 0.0
      %vm4088 = vcmp.ge.f32.partialorder %v4052, 0.0
      %vm4089 = vcmp.ge.f32.partialorder %v4053, 0.0
      %vm4090 = vcmp.ge.f32.partialorder %v4054, 0.0
      %vm4091 = vcmp.ge.f32.partialorder %v4055, 0.0
      %vm4092 = vcmp.ge.f32.partialorder %v4056, 0.0
      %vm4093 = vcmp.ge.f32.partialorder %v4057, 0.0
      %vm4094 = vcmp.ge.f32.partialorder %v4058, 0.0
      %vm4095 = vcmp.ge.f32.partialorder %v4059, 0.0
      %vm4096 = vcmp.ge.f32.partialorder %v4060, 0.0
      %vm4097 = vcmp.ge.f32.partialorder %v4061, 0.0
      %vm4098 = vcmp.ge.f32.partialorder %v4062, 0.0
      %vm4099 = vcmp.ge.f32.partialorder %v4063, 0.0
      %vm4100 = vcmp.ge.f32.partialorder %v4064, 0.0
      %vm4101 = vcmp.ge.f32.partialorder %v4065, 0.0
      %vm4102 = vcmp.ge.f32.partialorder %v4066, 0.0
      %v4103 = vmul.f32 %v4031, 0.01
      %v4104 = vmul.f32 %v4032, 0.01
      %v4105 = vmul.f32 %v4033, 0.01
      %v4106 = vmul.f32 %v4034, 0.01
      %v4107 = vmul.f32 %v4035, 0.01
      %v4108 = vmul.f32 %v4036, 0.01
      %v4109 = vmul.f32 %v4037, 0.01
      %v4110 = vmul.f32 %v4038, 0.01
      %v4111 = vmul.f32 %v4039, 0.01
      %v4112 = vmul.f32 %v4040, 0.01
      %v4113 = vmul.f32 %v4041, 0.01
      %v4114 = vmul.f32 %v4042, 0.01
      %v4115 = vmul.f32 %v4043, 0.01
      %v4116 = vmul.f32 %v4044, 0.01
      %v4117 = vmul.f32 %v4045, 0.01
      %v4118 = vmul.f32 %v4046, 0.01
      %v4119 = vmul.f32 %v4047, 0.01
      %v4120 = vmul.f32 %v4048, 0.01
      %v4121 = vmul.f32 %v4049, 0.01
      %v4122 = vmul.f32 %v4050, 0.01
      %v4123 = vmul.f32 %v4051, 0.01
      %v4124 = vmul.f32 %v4052, 0.01
      %v4125 = vmul.f32 %v4053, 0.01
      %v4126 = vmul.f32 %v4054, 0.01
      %v4127 = vmul.f32 %v4055, 0.01
      %v4128 = vmul.f32 %v4056, 0.01
      %v4129 = vmul.f32 %v4057, 0.01
      %v4130 = vmul.f32 %v4058, 0.01
      %v4131 = vmul.f32 %v4059, 0.01
      %v4132 = vmul.f32 %v4060, 0.01
      %v4133 = vmul.f32 %v4061, 0.01
      %v4134 = vmul.f32 %v4062, 0.01
      %v4135 = vmul.f32 %v4063, 0.01
      %v4136 = vmul.f32 %v4064, 0.01
      %v4137 = vmul.f32 %v4065, 0.01
      %v4138 = vmul.f32 %v4066, 0.01
      %v4139 = vsel %vm4067, %v4031, %v4103
      %v4140 = vsel %vm4068, %v4032, %v4104
      %v4141 = vsel %vm4069, %v4033, %v4105
      %v4142 = vsel %vm4070, %v4034, %v4106
      %v4143 = vsel %vm4071, %v4035, %v4107
      %v4144 = vsel %vm4072, %v4036, %v4108
      %v4145 = vsel %vm4073, %v4037, %v4109
      %v4146 = vsel %vm4074, %v4038, %v4110
      %v4147 = vsel %vm4075, %v4039, %v4111
      %v4148 = vsel %vm4076, %v4040, %v4112
      %v4149 = vsel %vm4077, %v4041, %v4113
      %v4150 = vsel %vm4078, %v4042, %v4114
      %v4151 = vsel %vm4079, %v4043, %v4115
      %v4152 = vsel %vm4080, %v4044, %v4116
      %v4153 = vsel %vm4081, %v4045, %v4117
      %v4154 = vsel %vm4082, %v4046, %v4118
      %v4155 = vsel %vm4083, %v4047, %v4119
      %v4156 = vsel %vm4084, %v4048, %v4120
      %v4157 = vsel %vm4085, %v4049, %v4121
      %v4158 = vsel %vm4086, %v4050, %v4122
      %v4159 = vsel %vm4087, %v4051, %v4123
      %v4160 = vsel %vm4088, %v4052, %v4124
      %v4161 = vsel %vm4089, %v4053, %v4125
      %v4162 = vsel %vm4090, %v4054, %v4126
      %v4163 = vsel %vm4091, %v4055, %v4127
      %v4164 = vsel %vm4092, %v4056, %v4128
      %v4165 = vsel %vm4093, %v4057, %v4129
      %v4166 = vsel %vm4094, %v4058, %v4130
      %v4167 = vsel %vm4095, %v4059, %v4131
      %v4168 = vsel %vm4096, %v4060, %v4132
      %v4169 = vsel %vm4097, %v4061, %v4133
      %v4170 = vsel %vm4098, %v4062, %v4134
      %v4171 = vsel %vm4099, %v4063, %v4135
      %v4172 = vsel %vm4100, %v4064, %v4136
      %v4173 = vsel %vm4101, %v4065, %v4137
      %v4174 = vsel %vm4102, %v4066, %v4138
      %v4175 = vlaneseq
      %v4176 = vshrl.u32 %v4175, 7
      %v4177 = vadd.s32 %v4176, 8
      %v4178 = vadd.s32 %v4176, 16
      %v4179 = vadd.s32 %v4176, 24
      %v4180 = vadd.s32 %v4176, 32
      %v4181 = vadd.s32 %v4176, 40
      %v4182 = vadd.s32 %v4176, 48
      %v4183 = vadd.s32 %v4176, 56
      %v4184 = vadd.s32 %v4176, 64
      %v4185 = vadd.s32 %v4176, 72
      %v4186 = vadd.s32 %v4176, 80
      %v4187 = vadd.s32 %v4176, 88
      %v4188 = vadd.s32 %v4176, 96
      %v4189 = vadd.s32 %v4176, 104
      %v4190 = vadd.s32 %v4176, 112
      %v4191 = vadd.s32 %v4176, 120
      %v4192 = vadd.s32 %v4176, 128
      %v4193 = vadd.s32 %v4176, 136
      %v4194 = vadd.s32 %v4176, 144
      %v4195 = vadd.s32 %v4176, 152
      %v4196 = vadd.s32 %v4176, 160
      %v4197 = vadd.s32 %v4176, 168
      %v4198 = vadd.s32 %v4176, 176
      %v4199 = vadd.s32 %v4176, 184
      %v4200 = vadd.s32 %v4176, 192
      %v4201 = vadd.s32 %v4176, 200
      %v4202 = vadd.s32 %v4176, 208
      %v4203 = vadd.s32 %v4176, 216
      %v4204 = vadd.s32 %v4176, 224
      %v4205 = vadd.s32 %v4176, 232
      %v4206 = vadd.s32 %v4176, 240
      %v4207 = vadd.s32 %v4176, 248
      %v4208 = vadd.s32 %v4176, 256
      %v4209 = vadd.s32 %v4176, 264
      %v4210 = vadd.s32 %v4176, 272
      %v4211 = vadd.s32 %v4176, 280
      %vm4212 = vcmp.lt.s32.totalorder %v4176, 0
      %v4213 = vsub.s32 0, %v4176
      %v4214 = vsel %vm4212, %v4213, %v4176
      %v4215 = vmul.u32.u64.compose %v4214, 3817748708
      %v4216 = vextract.low.u32 %v4215
      %v4217 = vextract.high.u32 %v4215
      %v4218 = vshrl.u32 %v4217, 4
      %v4219 = vmul.u32 %v4218, 18
      %v4220 = vsub.s32 %v4214, %v4219
      %v4221 = vsub.s32 0, %v4220
      %v4222 = vsel %vm4212, %v4221, %v4220
      %vm4223 = vcmp.lt.s32.totalorder %v4177, 0
      %v4224 = vsub.s32 0, %v4177
      %v4225 = vsel %vm4223, %v4224, %v4177
      %v4226 = vmul.u32.u64.compose %v4225, 3817748708
      %v4227 = vextract.low.u32 %v4226
      %v4228 = vextract.high.u32 %v4226
      %v4229 = vshrl.u32 %v4228, 4
      %v4230 = vmul.u32 %v4229, 18
      %v4231 = vsub.s32 %v4225, %v4230
      %v4232 = vsub.s32 0, %v4231
      %v4233 = vsel %vm4223, %v4232, %v4231
      %vm4234 = vcmp.lt.s32.totalorder %v4178, 0
      %v4235 = vsub.s32 0, %v4178
      %v4236 = vsel %vm4234, %v4235, %v4178
      %v4237 = vmul.u32.u64.compose %v4236, 3817748708
      %v4238 = vextract.low.u32 %v4237
      %v4239 = vextract.high.u32 %v4237
      %v4240 = vshrl.u32 %v4239, 4
      %v4241 = vmul.u32 %v4240, 18
      %v4242 = vsub.s32 %v4236, %v4241
      %v4243 = vsub.s32 0, %v4242
      %v4244 = vsel %vm4234, %v4243, %v4242
      %vm4245 = vcmp.lt.s32.totalorder %v4179, 0
      %v4246 = vsub.s32 0, %v4179
      %v4247 = vsel %vm4245, %v4246, %v4179
      %v4248 = vmul.u32.u64.compose %v4247, 3817748708
      %v4249 = vextract.low.u32 %v4248
      %v4250 = vextract.high.u32 %v4248
      %v4251 = vshrl.u32 %v4250, 4
      %v4252 = vmul.u32 %v4251, 18
      %v4253 = vsub.s32 %v4247, %v4252
      %v4254 = vsub.s32 0, %v4253
      %v4255 = vsel %vm4245, %v4254, %v4253
      %vm4256 = vcmp.lt.s32.totalorder %v4180, 0
      %v4257 = vsub.s32 0, %v4180
      %v4258 = vsel %vm4256, %v4257, %v4180
      %v4259 = vmul.u32.u64.compose %v4258, 3817748708
      %v4260 = vextract.low.u32 %v4259
      %v4261 = vextract.high.u32 %v4259
      %v4262 = vshrl.u32 %v4261, 4
      %v4263 = vmul.u32 %v4262, 18
      %v4264 = vsub.s32 %v4258, %v4263
      %v4265 = vsub.s32 0, %v4264
      %v4266 = vsel %vm4256, %v4265, %v4264
      %vm4267 = vcmp.lt.s32.totalorder %v4181, 0
      %v4268 = vsub.s32 0, %v4181
      %v4269 = vsel %vm4267, %v4268, %v4181
      %v4270 = vmul.u32.u64.compose %v4269, 3817748708
      %v4271 = vextract.low.u32 %v4270
      %v4272 = vextract.high.u32 %v4270
      %v4273 = vshrl.u32 %v4272, 4
      %v4274 = vmul.u32 %v4273, 18
      %v4275 = vsub.s32 %v4269, %v4274
      %v4276 = vsub.s32 0, %v4275
      %v4277 = vsel %vm4267, %v4276, %v4275
      %vm4278 = vcmp.lt.s32.totalorder %v4182, 0
      %v4279 = vsub.s32 0, %v4182
      %v4280 = vsel %vm4278, %v4279, %v4182
      %v4281 = vmul.u32.u64.compose %v4280, 3817748708
      %v4282 = vextract.low.u32 %v4281
      %v4283 = vextract.high.u32 %v4281
      %v4284 = vshrl.u32 %v4283, 4
      %v4285 = vmul.u32 %v4284, 18
      %v4286 = vsub.s32 %v4280, %v4285
      %v4287 = vsub.s32 0, %v4286
      %v4288 = vsel %vm4278, %v4287, %v4286
      %vm4289 = vcmp.lt.s32.totalorder %v4183, 0
      %v4290 = vsub.s32 0, %v4183
      %v4291 = vsel %vm4289, %v4290, %v4183
      %v4292 = vmul.u32.u64.compose %v4291, 3817748708
      %v4293 = vextract.low.u32 %v4292
      %v4294 = vextract.high.u32 %v4292
      %v4295 = vshrl.u32 %v4294, 4
      %v4296 = vmul.u32 %v4295, 18
      %v4297 = vsub.s32 %v4291, %v4296
      %v4298 = vsub.s32 0, %v4297
      %v4299 = vsel %vm4289, %v4298, %v4297
      %vm4300 = vcmp.lt.s32.totalorder %v4184, 0
      %v4301 = vsub.s32 0, %v4184
      %v4302 = vsel %vm4300, %v4301, %v4184
      %v4303 = vmul.u32.u64.compose %v4302, 3817748708
      %v4304 = vextract.low.u32 %v4303
      %v4305 = vextract.high.u32 %v4303
      %v4306 = vshrl.u32 %v4305, 4
      %v4307 = vmul.u32 %v4306, 18
      %v4308 = vsub.s32 %v4302, %v4307
      %v4309 = vsub.s32 0, %v4308
      %v4310 = vsel %vm4300, %v4309, %v4308
      %vm4311 = vcmp.lt.s32.totalorder %v4185, 0
      %v4312 = vsub.s32 0, %v4185
      %v4313 = vsel %vm4311, %v4312, %v4185
      %v4314 = vmul.u32.u64.compose %v4313, 3817748708
      %v4315 = vextract.low.u32 %v4314
      %v4316 = vextract.high.u32 %v4314
      %v4317 = vshrl.u32 %v4316, 4
      %v4318 = vmul.u32 %v4317, 18
      %v4319 = vsub.s32 %v4313, %v4318
      %v4320 = vsub.s32 0, %v4319
      %v4321 = vsel %vm4311, %v4320, %v4319
      %vm4322 = vcmp.lt.s32.totalorder %v4186, 0
      %v4323 = vsub.s32 0, %v4186
      %v4324 = vsel %vm4322, %v4323, %v4186
      %v4325 = vmul.u32.u64.compose %v4324, 3817748708
      %v4326 = vextract.low.u32 %v4325
      %v4327 = vextract.high.u32 %v4325
      %v4328 = vshrl.u32 %v4327, 4
      %v4329 = vmul.u32 %v4328, 18
      %v4330 = vsub.s32 %v4324, %v4329
      %v4331 = vsub.s32 0, %v4330
      %v4332 = vsel %vm4322, %v4331, %v4330
      %vm4333 = vcmp.lt.s32.totalorder %v4187, 0
      %v4334 = vsub.s32 0, %v4187
      %v4335 = vsel %vm4333, %v4334, %v4187
      %v4336 = vmul.u32.u64.compose %v4335, 3817748708
      %v4337 = vextract.low.u32 %v4336
      %v4338 = vextract.high.u32 %v4336
      %v4339 = vshrl.u32 %v4338, 4
      %v4340 = vmul.u32 %v4339, 18
      %v4341 = vsub.s32 %v4335, %v4340
      %v4342 = vsub.s32 0, %v4341
      %v4343 = vsel %vm4333, %v4342, %v4341
      %vm4344 = vcmp.lt.s32.totalorder %v4188, 0
      %v4345 = vsub.s32 0, %v4188
      %v4346 = vsel %vm4344, %v4345, %v4188
      %v4347 = vmul.u32.u64.compose %v4346, 3817748708
      %v4348 = vextract.low.u32 %v4347
      %v4349 = vextract.high.u32 %v4347
      %v4350 = vshrl.u32 %v4349, 4
      %v4351 = vmul.u32 %v4350, 18
      %v4352 = vsub.s32 %v4346, %v4351
      %v4353 = vsub.s32 0, %v4352
      %v4354 = vsel %vm4344, %v4353, %v4352
      %vm4355 = vcmp.lt.s32.totalorder %v4189, 0
      %v4356 = vsub.s32 0, %v4189
      %v4357 = vsel %vm4355, %v4356, %v4189
      %v4358 = vmul.u32.u64.compose %v4357, 3817748708
      %v4359 = vextract.low.u32 %v4358
      %v4360 = vextract.high.u32 %v4358
      %v4361 = vshrl.u32 %v4360, 4
      %v4362 = vmul.u32 %v4361, 18
      %v4363 = vsub.s32 %v4357, %v4362
      %v4364 = vsub.s32 0, %v4363
      %v4365 = vsel %vm4355, %v4364, %v4363
      %vm4366 = vcmp.lt.s32.totalorder %v4190, 0
      %v4367 = vsub.s32 0, %v4190
      %v4368 = vsel %vm4366, %v4367, %v4190
      %v4369 = vmul.u32.u64.compose %v4368, 3817748708
      %v4370 = vextract.low.u32 %v4369
      %v4371 = vextract.high.u32 %v4369
      %v4372 = vshrl.u32 %v4371, 4
      %v4373 = vmul.u32 %v4372, 18
      %v4374 = vsub.s32 %v4368, %v4373
      %v4375 = vsub.s32 0, %v4374
      %v4376 = vsel %vm4366, %v4375, %v4374
      %vm4377 = vcmp.lt.s32.totalorder %v4191, 0
      %v4378 = vsub.s32 0, %v4191
      %v4379 = vsel %vm4377, %v4378, %v4191
      %v4380 = vmul.u32.u64.compose %v4379, 3817748708
      %v4381 = vextract.low.u32 %v4380
      %v4382 = vextract.high.u32 %v4380
      %v4383 = vshrl.u32 %v4382, 4
      %v4384 = vmul.u32 %v4383, 18
      %v4385 = vsub.s32 %v4379, %v4384
      %v4386 = vsub.s32 0, %v4385
      %v4387 = vsel %vm4377, %v4386, %v4385
      %vm4388 = vcmp.lt.s32.totalorder %v4192, 0
      %v4389 = vsub.s32 0, %v4192
      %v4390 = vsel %vm4388, %v4389, %v4192
      %v4391 = vmul.u32.u64.compose %v4390, 3817748708
      %v4392 = vextract.low.u32 %v4391
      %v4393 = vextract.high.u32 %v4391
      %v4394 = vshrl.u32 %v4393, 4
      %v4395 = vmul.u32 %v4394, 18
      %v4396 = vsub.s32 %v4390, %v4395
      %v4397 = vsub.s32 0, %v4396
      %v4398 = vsel %vm4388, %v4397, %v4396
      %vm4399 = vcmp.lt.s32.totalorder %v4193, 0
      %v4400 = vsub.s32 0, %v4193
      %v4401 = vsel %vm4399, %v4400, %v4193
      %v4402 = vmul.u32.u64.compose %v4401, 3817748708
      %v4403 = vextract.low.u32 %v4402
      %v4404 = vextract.high.u32 %v4402
      %v4405 = vshrl.u32 %v4404, 4
      %v4406 = vmul.u32 %v4405, 18
      %v4407 = vsub.s32 %v4401, %v4406
      %v4408 = vsub.s32 0, %v4407
      %v4409 = vsel %vm4399, %v4408, %v4407
      %vm4410 = vcmp.lt.s32.totalorder %v4194, 0
      %v4411 = vsub.s32 0, %v4194
      %v4412 = vsel %vm4410, %v4411, %v4194
      %v4413 = vmul.u32.u64.compose %v4412, 3817748708
      %v4414 = vextract.low.u32 %v4413
      %v4415 = vextract.high.u32 %v4413
      %v4416 = vshrl.u32 %v4415, 4
      %v4417 = vmul.u32 %v4416, 18
      %v4418 = vsub.s32 %v4412, %v4417
      %v4419 = vsub.s32 0, %v4418
      %v4420 = vsel %vm4410, %v4419, %v4418
      %vm4421 = vcmp.lt.s32.totalorder %v4195, 0
      %v4422 = vsub.s32 0, %v4195
      %v4423 = vsel %vm4421, %v4422, %v4195
      %v4424 = vmul.u32.u64.compose %v4423, 3817748708
      %v4425 = vextract.low.u32 %v4424
      %v4426 = vextract.high.u32 %v4424
      %v4427 = vshrl.u32 %v4426, 4
      %v4428 = vmul.u32 %v4427, 18
      %v4429 = vsub.s32 %v4423, %v4428
      %v4430 = vsub.s32 0, %v4429
      %v4431 = vsel %vm4421, %v4430, %v4429
      %vm4432 = vcmp.lt.s32.totalorder %v4196, 0
      %v4433 = vsub.s32 0, %v4196
      %v4434 = vsel %vm4432, %v4433, %v4196
      %v4435 = vmul.u32.u64.compose %v4434, 3817748708
      %v4436 = vextract.low.u32 %v4435
      %v4437 = vextract.high.u32 %v4435
      %v4438 = vshrl.u32 %v4437, 4
      %v4439 = vmul.u32 %v4438, 18
      %v4440 = vsub.s32 %v4434, %v4439
      %v4441 = vsub.s32 0, %v4440
      %v4442 = vsel %vm4432, %v4441, %v4440
      %vm4443 = vcmp.lt.s32.totalorder %v4197, 0
      %v4444 = vsub.s32 0, %v4197
      %v4445 = vsel %vm4443, %v4444, %v4197
      %v4446 = vmul.u32.u64.compose %v4445, 3817748708
      %v4447 = vextract.low.u32 %v4446
      %v4448 = vextract.high.u32 %v4446
      %v4449 = vshrl.u32 %v4448, 4
      %v4450 = vmul.u32 %v4449, 18
      %v4451 = vsub.s32 %v4445, %v4450
      %v4452 = vsub.s32 0, %v4451
      %v4453 = vsel %vm4443, %v4452, %v4451
      %vm4454 = vcmp.lt.s32.totalorder %v4198, 0
      %v4455 = vsub.s32 0, %v4198
      %v4456 = vsel %vm4454, %v4455, %v4198
      %v4457 = vmul.u32.u64.compose %v4456, 3817748708
      %v4458 = vextract.low.u32 %v4457
      %v4459 = vextract.high.u32 %v4457
      %v4460 = vshrl.u32 %v4459, 4
      %v4461 = vmul.u32 %v4460, 18
      %v4462 = vsub.s32 %v4456, %v4461
      %v4463 = vsub.s32 0, %v4462
      %v4464 = vsel %vm4454, %v4463, %v4462
      %vm4465 = vcmp.lt.s32.totalorder %v4199, 0
      %v4466 = vsub.s32 0, %v4199
      %v4467 = vsel %vm4465, %v4466, %v4199
      %v4468 = vmul.u32.u64.compose %v4467, 3817748708
      %v4469 = vextract.low.u32 %v4468
      %v4470 = vextract.high.u32 %v4468
      %v4471 = vshrl.u32 %v4470, 4
      %v4472 = vmul.u32 %v4471, 18
      %v4473 = vsub.s32 %v4467, %v4472
      %v4474 = vsub.s32 0, %v4473
      %v4475 = vsel %vm4465, %v4474, %v4473
      %vm4476 = vcmp.lt.s32.totalorder %v4200, 0
      %v4477 = vsub.s32 0, %v4200
      %v4478 = vsel %vm4476, %v4477, %v4200
      %v4479 = vmul.u32.u64.compose %v4478, 3817748708
      %v4480 = vextract.low.u32 %v4479
      %v4481 = vextract.high.u32 %v4479
      %v4482 = vshrl.u32 %v4481, 4
      %v4483 = vmul.u32 %v4482, 18
      %v4484 = vsub.s32 %v4478, %v4483
      %v4485 = vsub.s32 0, %v4484
      %v4486 = vsel %vm4476, %v4485, %v4484
      %vm4487 = vcmp.lt.s32.totalorder %v4201, 0
      %v4488 = vsub.s32 0, %v4201
      %v4489 = vsel %vm4487, %v4488, %v4201
      %v4490 = vmul.u32.u64.compose %v4489, 3817748708
      %v4491 = vextract.low.u32 %v4490
      %v4492 = vextract.high.u32 %v4490
      %v4493 = vshrl.u32 %v4492, 4
      %v4494 = vmul.u32 %v4493, 18
      %v4495 = vsub.s32 %v4489, %v4494
      %v4496 = vsub.s32 0, %v4495
      %v4497 = vsel %vm4487, %v4496, %v4495
      %vm4498 = vcmp.lt.s32.totalorder %v4202, 0
      %v4499 = vsub.s32 0, %v4202
      %v4500 = vsel %vm4498, %v4499, %v4202
      %v4501 = vmul.u32.u64.compose %v4500, 3817748708
      %v4502 = vextract.low.u32 %v4501
      %v4503 = vextract.high.u32 %v4501
      %v4504 = vshrl.u32 %v4503, 4
      %v4505 = vmul.u32 %v4504, 18
      %v4506 = vsub.s32 %v4500, %v4505
      %v4507 = vsub.s32 0, %v4506
      %v4508 = vsel %vm4498, %v4507, %v4506
      %vm4509 = vcmp.lt.s32.totalorder %v4203, 0
      %v4510 = vsub.s32 0, %v4203
      %v4511 = vsel %vm4509, %v4510, %v4203
      %v4512 = vmul.u32.u64.compose %v4511, 3817748708
      %v4513 = vextract.low.u32 %v4512
      %v4514 = vextract.high.u32 %v4512
      %v4515 = vshrl.u32 %v4514, 4
      %v4516 = vmul.u32 %v4515, 18
      %v4517 = vsub.s32 %v4511, %v4516
      %v4518 = vsub.s32 0, %v4517
      %v4519 = vsel %vm4509, %v4518, %v4517
      %vm4520 = vcmp.lt.s32.totalorder %v4204, 0
      %v4521 = vsub.s32 0, %v4204
      %v4522 = vsel %vm4520, %v4521, %v4204
      %v4523 = vmul.u32.u64.compose %v4522, 3817748708
      %v4524 = vextract.low.u32 %v4523
      %v4525 = vextract.high.u32 %v4523
      %v4526 = vshrl.u32 %v4525, 4
      %v4527 = vmul.u32 %v4526, 18
      %v4528 = vsub.s32 %v4522, %v4527
      %v4529 = vsub.s32 0, %v4528
      %v4530 = vsel %vm4520, %v4529, %v4528
      %vm4531 = vcmp.lt.s32.totalorder %v4205, 0
      %v4532 = vsub.s32 0, %v4205
      %v4533 = vsel %vm4531, %v4532, %v4205
      %v4534 = vmul.u32.u64.compose %v4533, 3817748708
      %v4535 = vextract.low.u32 %v4534
      %v4536 = vextract.high.u32 %v4534
      %v4537 = vshrl.u32 %v4536, 4
      %v4538 = vmul.u32 %v4537, 18
      %v4539 = vsub.s32 %v4533, %v4538
      %v4540 = vsub.s32 0, %v4539
      %v4541 = vsel %vm4531, %v4540, %v4539
      %vm4542 = vcmp.lt.s32.totalorder %v4206, 0
      %v4543 = vsub.s32 0, %v4206
      %v4544 = vsel %vm4542, %v4543, %v4206
      %v4545 = vmul.u32.u64.compose %v4544, 3817748708
      %v4546 = vextract.low.u32 %v4545
      %v4547 = vextract.high.u32 %v4545
      %v4548 = vshrl.u32 %v4547, 4
      %v4549 = vmul.u32 %v4548, 18
      %v4550 = vsub.s32 %v4544, %v4549
      %v4551 = vsub.s32 0, %v4550
      %v4552 = vsel %vm4542, %v4551, %v4550
      %vm4553 = vcmp.lt.s32.totalorder %v4207, 0
      %v4554 = vsub.s32 0, %v4207
      %v4555 = vsel %vm4553, %v4554, %v4207
      %v4556 = vmul.u32.u64.compose %v4555, 3817748708
      %v4557 = vextract.low.u32 %v4556
      %v4558 = vextract.high.u32 %v4556
      %v4559 = vshrl.u32 %v4558, 4
      %v4560 = vmul.u32 %v4559, 18
      %v4561 = vsub.s32 %v4555, %v4560
      %v4562 = vsub.s32 0, %v4561
      %v4563 = vsel %vm4553, %v4562, %v4561
      %vm4564 = vcmp.lt.s32.totalorder %v4208, 0
      %v4565 = vsub.s32 0, %v4208
      %v4566 = vsel %vm4564, %v4565, %v4208
      %v4567 = vmul.u32.u64.compose %v4566, 3817748708
      %v4568 = vextract.low.u32 %v4567
      %v4569 = vextract.high.u32 %v4567
      %v4570 = vshrl.u32 %v4569, 4
      %v4571 = vmul.u32 %v4570, 18
      %v4572 = vsub.s32 %v4566, %v4571
      %v4573 = vsub.s32 0, %v4572
      %v4574 = vsel %vm4564, %v4573, %v4572
      %vm4575 = vcmp.lt.s32.totalorder %v4209, 0
      %v4576 = vsub.s32 0, %v4209
      %v4577 = vsel %vm4575, %v4576, %v4209
      %v4578 = vmul.u32.u64.compose %v4577, 3817748708
      %v4579 = vextract.low.u32 %v4578
      %v4580 = vextract.high.u32 %v4578
      %v4581 = vshrl.u32 %v4580, 4
      %v4582 = vmul.u32 %v4581, 18
      %v4583 = vsub.s32 %v4577, %v4582
      %v4584 = vsub.s32 0, %v4583
      %v4585 = vsel %vm4575, %v4584, %v4583
      %vm4586 = vcmp.lt.s32.totalorder %v4210, 0
      %v4587 = vsub.s32 0, %v4210
      %v4588 = vsel %vm4586, %v4587, %v4210
      %v4589 = vmul.u32.u64.compose %v4588, 3817748708
      %v4590 = vextract.low.u32 %v4589
      %v4591 = vextract.high.u32 %v4589
      %v4592 = vshrl.u32 %v4591, 4
      %v4593 = vmul.u32 %v4592, 18
      %v4594 = vsub.s32 %v4588, %v4593
      %v4595 = vsub.s32 0, %v4594
      %v4596 = vsel %vm4586, %v4595, %v4594
      %vm4597 = vcmp.lt.s32.totalorder %v4211, 0
      %v4598 = vsub.s32 0, %v4211
      %v4599 = vsel %vm4597, %v4598, %v4211
      %v4600 = vmul.u32.u64.compose %v4599, 3817748708
      %v4601 = vextract.low.u32 %v4600
      %v4602 = vextract.high.u32 %v4600
      %v4603 = vshrl.u32 %v4602, 4
      %v4604 = vmul.u32 %v4603, 18
      %v4605 = vsub.s32 %v4599, %v4604
      %v4606 = vsub.s32 0, %v4605
      %v4607 = vsel %vm4597, %v4606, %v4605
      %vm4608 = vcmp.ne.s32.totalorder %v4222, 0
      %vm4609 = vcmp.ne.s32.totalorder %v4233, 0
      %vm4610 = vcmp.ne.s32.totalorder %v4244, 0
      %vm4611 = vcmp.ne.s32.totalorder %v4255, 0
      %vm4612 = vcmp.ne.s32.totalorder %v4266, 0
      %vm4613 = vcmp.ne.s32.totalorder %v4277, 0
      %vm4614 = vcmp.ne.s32.totalorder %v4288, 0
      %vm4615 = vcmp.ne.s32.totalorder %v4299, 0
      %vm4616 = vcmp.ne.s32.totalorder %v4310, 0
      %vm4617 = vcmp.ne.s32.totalorder %v4321, 0
      %vm4618 = vcmp.ne.s32.totalorder %v4332, 0
      %vm4619 = vcmp.ne.s32.totalorder %v4343, 0
      %vm4620 = vcmp.ne.s32.totalorder %v4354, 0
      %vm4621 = vcmp.ne.s32.totalorder %v4365, 0
      %vm4622 = vcmp.ne.s32.totalorder %v4376, 0
      %vm4623 = vcmp.ne.s32.totalorder %v4387, 0
      %vm4624 = vcmp.ne.s32.totalorder %v4398, 0
      %vm4625 = vcmp.ne.s32.totalorder %v4409, 0
      %vm4626 = vcmp.ne.s32.totalorder %v4420, 0
      %vm4627 = vcmp.ne.s32.totalorder %v4431, 0
      %vm4628 = vcmp.ne.s32.totalorder %v4442, 0
      %vm4629 = vcmp.ne.s32.totalorder %v4453, 0
      %vm4630 = vcmp.ne.s32.totalorder %v4464, 0
      %vm4631 = vcmp.ne.s32.totalorder %v4475, 0
      %vm4632 = vcmp.ne.s32.totalorder %v4486, 0
      %vm4633 = vcmp.ne.s32.totalorder %v4497, 0
      %vm4634 = vcmp.ne.s32.totalorder %v4508, 0
      %vm4635 = vcmp.ne.s32.totalorder %v4519, 0
      %vm4636 = vcmp.ne.s32.totalorder %v4530, 0
      %vm4637 = vcmp.ne.s32.totalorder %v4541, 0
      %vm4638 = vcmp.ne.s32.totalorder %v4552, 0
      %vm4639 = vcmp.ne.s32.totalorder %v4563, 0
      %vm4640 = vcmp.ne.s32.totalorder %v4574, 0
      %vm4641 = vcmp.ne.s32.totalorder %v4585, 0
      %vm4642 = vcmp.ne.s32.totalorder %v4596, 0
      %vm4643 = vcmp.ne.s32.totalorder %v4607, 0
      %vm4644 = vcmp.lt.s32.totalorder %v4222, 0
      %vm4645 = vcmp.lt.s32.totalorder %v4233, 0
      %vm4646 = vcmp.lt.s32.totalorder %v4244, 0
      %vm4647 = vcmp.lt.s32.totalorder %v4255, 0
      %vm4648 = vcmp.lt.s32.totalorder %v4266, 0
      %vm4649 = vcmp.lt.s32.totalorder %v4277, 0
      %vm4650 = vcmp.lt.s32.totalorder %v4288, 0
      %vm4651 = vcmp.lt.s32.totalorder %v4299, 0
      %vm4652 = vcmp.lt.s32.totalorder %v4310, 0
      %vm4653 = vcmp.lt.s32.totalorder %v4321, 0
      %vm4654 = vcmp.lt.s32.totalorder %v4332, 0
      %vm4655 = vcmp.lt.s32.totalorder %v4343, 0
      %vm4656 = vcmp.lt.s32.totalorder %v4354, 0
      %vm4657 = vcmp.lt.s32.totalorder %v4365, 0
      %vm4658 = vcmp.lt.s32.totalorder %v4376, 0
      %vm4659 = vcmp.lt.s32.totalorder %v4387, 0
      %vm4660 = vcmp.lt.s32.totalorder %v4398, 0
      %vm4661 = vcmp.lt.s32.totalorder %v4409, 0
      %vm4662 = vcmp.lt.s32.totalorder %v4420, 0
      %vm4663 = vcmp.lt.s32.totalorder %v4431, 0
      %vm4664 = vcmp.lt.s32.totalorder %v4442, 0
      %vm4665 = vcmp.lt.s32.totalorder %v4453, 0
      %vm4666 = vcmp.lt.s32.totalorder %v4464, 0
      %vm4667 = vcmp.lt.s32.totalorder %v4475, 0
      %vm4668 = vcmp.lt.s32.totalorder %v4486, 0
      %vm4669 = vcmp.lt.s32.totalorder %v4497, 0
      %vm4670 = vcmp.lt.s32.totalorder %v4508, 0
      %vm4671 = vcmp.lt.s32.totalorder %v4519, 0
      %vm4672 = vcmp.lt.s32.totalorder %v4530, 0
      %vm4673 = vcmp.lt.s32.totalorder %v4541, 0
      %vm4674 = vcmp.lt.s32.totalorder %v4552, 0
      %vm4675 = vcmp.lt.s32.totalorder %v4563, 0
      %vm4676 = vcmp.lt.s32.totalorder %v4574, 0
      %vm4677 = vcmp.lt.s32.totalorder %v4585, 0
      %vm4678 = vcmp.lt.s32.totalorder %v4596, 0
      %vm4679 = vcmp.lt.s32.totalorder %v4607, 0
      %vm4680 = vmand %vm4644, %vm4608
      %vm4681 = vmand %vm4645, %vm4609
      %vm4682 = vmand %vm4646, %vm4610
      %vm4683 = vmand %vm4647, %vm4611
      %vm4684 = vmand %vm4648, %vm4612
      %vm4685 = vmand %vm4649, %vm4613
      %vm4686 = vmand %vm4650, %vm4614
      %vm4687 = vmand %vm4651, %vm4615
      %vm4688 = vmand %vm4652, %vm4616
      %vm4689 = vmand %vm4653, %vm4617
      %vm4690 = vmand %vm4654, %vm4618
      %vm4691 = vmand %vm4655, %vm4619
      %vm4692 = vmand %vm4656, %vm4620
      %vm4693 = vmand %vm4657, %vm4621
      %vm4694 = vmand %vm4658, %vm4622
      %vm4695 = vmand %vm4659, %vm4623
      %vm4696 = vmand %vm4660, %vm4624
      %vm4697 = vmand %vm4661, %vm4625
      %vm4698 = vmand %vm4662, %vm4626
      %vm4699 = vmand %vm4663, %vm4627
      %vm4700 = vmand %vm4664, %vm4628
      %vm4701 = vmand %vm4665, %vm4629
      %vm4702 = vmand %vm4666, %vm4630
      %vm4703 = vmand %vm4667, %vm4631
      %vm4704 = vmand %vm4668, %vm4632
      %vm4705 = vmand %vm4669, %vm4633
      %vm4706 = vmand %vm4670, %vm4634
      %vm4707 = vmand %vm4671, %vm4635
      %vm4708 = vmand %vm4672, %vm4636
      %vm4709 = vmand %vm4673, %vm4637
      %vm4710 = vmand %vm4674, %vm4638
      %vm4711 = vmand %vm4675, %vm4639
      %vm4712 = vmand %vm4676, %vm4640
      %vm4713 = vmand %vm4677, %vm4641
      %vm4714 = vmand %vm4678, %vm4642
      %vm4715 = vmand %vm4679, %vm4643
      %v4716 = vadd.s32 %v4222, 18
      %v4717 = vadd.s32 %v4233, 18
      %v4718 = vadd.s32 %v4244, 18
      %v4719 = vadd.s32 %v4255, 18
      %v4720 = vadd.s32 %v4266, 18
      %v4721 = vadd.s32 %v4277, 18
      %v4722 = vadd.s32 %v4288, 18
      %v4723 = vadd.s32 %v4299, 18
      %v4724 = vadd.s32 %v4310, 18
      %v4725 = vadd.s32 %v4321, 18
      %v4726 = vadd.s32 %v4332, 18
      %v4727 = vadd.s32 %v4343, 18
      %v4728 = vadd.s32 %v4354, 18
      %v4729 = vadd.s32 %v4365, 18
      %v4730 = vadd.s32 %v4376, 18
      %v4731 = vadd.s32 %v4387, 18
      %v4732 = vadd.s32 %v4398, 18
      %v4733 = vadd.s32 %v4409, 18
      %v4734 = vadd.s32 %v4420, 18
      %v4735 = vadd.s32 %v4431, 18
      %v4736 = vadd.s32 %v4442, 18
      %v4737 = vadd.s32 %v4453, 18
      %v4738 = vadd.s32 %v4464, 18
      %v4739 = vadd.s32 %v4475, 18
      %v4740 = vadd.s32 %v4486, 18
      %v4741 = vadd.s32 %v4497, 18
      %v4742 = vadd.s32 %v4508, 18
      %v4743 = vadd.s32 %v4519, 18
      %v4744 = vadd.s32 %v4530, 18
      %v4745 = vadd.s32 %v4541, 18
      %v4746 = vadd.s32 %v4552, 18
      %v4747 = vadd.s32 %v4563, 18
      %v4748 = vadd.s32 %v4574, 18
      %v4749 = vadd.s32 %v4585, 18
      %v4750 = vadd.s32 %v4596, 18
      %v4751 = vadd.s32 %v4607, 18
      %v4752 = vsel %vm4680, %v4716, %v4222
      %v4753 = vsel %vm4681, %v4717, %v4233
      %v4754 = vsel %vm4682, %v4718, %v4244
      %v4755 = vsel %vm4683, %v4719, %v4255
      %v4756 = vsel %vm4684, %v4720, %v4266
      %v4757 = vsel %vm4685, %v4721, %v4277
      %v4758 = vsel %vm4686, %v4722, %v4288
      %v4759 = vsel %vm4687, %v4723, %v4299
      %v4760 = vsel %vm4688, %v4724, %v4310
      %v4761 = vsel %vm4689, %v4725, %v4321
      %v4762 = vsel %vm4690, %v4726, %v4332
      %v4763 = vsel %vm4691, %v4727, %v4343
      %v4764 = vsel %vm4692, %v4728, %v4354
      %v4765 = vsel %vm4693, %v4729, %v4365
      %v4766 = vsel %vm4694, %v4730, %v4376
      %v4767 = vsel %vm4695, %v4731, %v4387
      %v4768 = vsel %vm4696, %v4732, %v4398
      %v4769 = vsel %vm4697, %v4733, %v4409
      %v4770 = vsel %vm4698, %v4734, %v4420
      %v4771 = vsel %vm4699, %v4735, %v4431
      %v4772 = vsel %vm4700, %v4736, %v4442
      %v4773 = vsel %vm4701, %v4737, %v4453
      %v4774 = vsel %vm4702, %v4738, %v4464
      %v4775 = vsel %vm4703, %v4739, %v4475
      %v4776 = vsel %vm4704, %v4740, %v4486
      %v4777 = vsel %vm4705, %v4741, %v4497
      %v4778 = vsel %vm4706, %v4742, %v4508
      %v4779 = vsel %vm4707, %v4743, %v4519
      %v4780 = vsel %vm4708, %v4744, %v4530
      %v4781 = vsel %vm4709, %v4745, %v4541
      %v4782 = vsel %vm4710, %v4746, %v4552
      %v4783 = vsel %vm4711, %v4747, %v4563
      %v4784 = vsel %vm4712, %v4748, %v4574
      %v4785 = vsel %vm4713, %v4749, %v4585
      %v4786 = vsel %vm4714, %v4750, %v4596
      %v4787 = vsel %vm4715, %v4751, %v4607
      %vm4788 = vcmp.lt.s32.totalorder %v4752, 16
      %vm4789 = vcmp.lt.s32.totalorder %v4753, 16
      %vm4790 = vcmp.lt.s32.totalorder %v4754, 16
      %vm4791 = vcmp.lt.s32.totalorder %v4755, 16
      %vm4792 = vcmp.lt.s32.totalorder %v4756, 16
      %vm4793 = vcmp.lt.s32.totalorder %v4757, 16
      %vm4794 = vcmp.lt.s32.totalorder %v4758, 16
      %vm4795 = vcmp.lt.s32.totalorder %v4759, 16
      %vm4796 = vcmp.lt.s32.totalorder %v4760, 16
      %vm4797 = vcmp.lt.s32.totalorder %v4761, 16
      %vm4798 = vcmp.lt.s32.totalorder %v4762, 16
      %vm4799 = vcmp.lt.s32.totalorder %v4763, 16
      %vm4800 = vcmp.lt.s32.totalorder %v4764, 16
      %vm4801 = vcmp.lt.s32.totalorder %v4765, 16
      %vm4802 = vcmp.lt.s32.totalorder %v4766, 16
      %vm4803 = vcmp.lt.s32.totalorder %v4767, 16
      %vm4804 = vcmp.lt.s32.totalorder %v4768, 16
      %vm4805 = vcmp.lt.s32.totalorder %v4769, 16
      %vm4806 = vcmp.lt.s32.totalorder %v4770, 16
      %vm4807 = vcmp.lt.s32.totalorder %v4771, 16
      %vm4808 = vcmp.lt.s32.totalorder %v4772, 16
      %vm4809 = vcmp.lt.s32.totalorder %v4773, 16
      %vm4810 = vcmp.lt.s32.totalorder %v4774, 16
      %vm4811 = vcmp.lt.s32.totalorder %v4775, 16
      %vm4812 = vcmp.lt.s32.totalorder %v4776, 16
      %vm4813 = vcmp.lt.s32.totalorder %v4777, 16
      %vm4814 = vcmp.lt.s32.totalorder %v4778, 16
      %vm4815 = vcmp.lt.s32.totalorder %v4779, 16
      %vm4816 = vcmp.lt.s32.totalorder %v4780, 16
      %vm4817 = vcmp.lt.s32.totalorder %v4781, 16
      %vm4818 = vcmp.lt.s32.totalorder %v4782, 16
      %vm4819 = vcmp.lt.s32.totalorder %v4783, 16
      %vm4820 = vcmp.lt.s32.totalorder %v4784, 16
      %vm4821 = vcmp.lt.s32.totalorder %v4785, 16
      %vm4822 = vcmp.lt.s32.totalorder %v4786, 16
      %vm4823 = vcmp.lt.s32.totalorder %v4787, 16
      %v4824 = vsel %vm4788, 1, 0
      %v4825 = vsel %vm4789, 1, 0
      %v4826 = vsel %vm4790, 1, 0
      %v4827 = vsel %vm4791, 1, 0
      %v4828 = vsel %vm4792, 1, 0
      %v4829 = vsel %vm4793, 1, 0
      %v4830 = vsel %vm4794, 1, 0
      %v4831 = vsel %vm4795, 1, 0
      %v4832 = vsel %vm4796, 1, 0
      %v4833 = vsel %vm4797, 1, 0
      %v4834 = vsel %vm4798, 1, 0
      %v4835 = vsel %vm4799, 1, 0
      %v4836 = vsel %vm4800, 1, 0
      %v4837 = vsel %vm4801, 1, 0
      %v4838 = vsel %vm4802, 1, 0
      %v4839 = vsel %vm4803, 1, 0
      %v4840 = vsel %vm4804, 1, 0
      %v4841 = vsel %vm4805, 1, 0
      %v4842 = vsel %vm4806, 1, 0
      %v4843 = vsel %vm4807, 1, 0
      %v4844 = vsel %vm4808, 1, 0
      %v4845 = vsel %vm4809, 1, 0
      %v4846 = vsel %vm4810, 1, 0
      %v4847 = vsel %vm4811, 1, 0
      %v4848 = vsel %vm4812, 1, 0
      %v4849 = vsel %vm4813, 1, 0
      %v4850 = vsel %vm4814, 1, 0
      %v4851 = vsel %vm4815, 1, 0
      %v4852 = vsel %vm4816, 1, 0
      %v4853 = vsel %vm4817, 1, 0
      %v4854 = vsel %vm4818, 1, 0
      %v4855 = vsel %vm4819, 1, 0
      %v4856 = vsel %vm4820, 1, 0
      %v4857 = vsel %vm4821, 1, 0
      %v4858 = vsel %vm4822, 1, 0
      %v4859 = vsel %vm4823, 1, 0
      %vm4860 = vcmp.eq.s32.totalorder %v4824, 1
      %vm4861 = vcmp.eq.s32.totalorder %v4825, 1
      %vm4862 = vcmp.eq.s32.totalorder %v4826, 1
      %vm4863 = vcmp.eq.s32.totalorder %v4827, 1
      %vm4864 = vcmp.eq.s32.totalorder %v4828, 1
      %vm4865 = vcmp.eq.s32.totalorder %v4829, 1
      %vm4866 = vcmp.eq.s32.totalorder %v4830, 1
      %vm4867 = vcmp.eq.s32.totalorder %v4831, 1
      %vm4868 = vcmp.eq.s32.totalorder %v4832, 1
      %vm4869 = vcmp.eq.s32.totalorder %v4833, 1
      %vm4870 = vcmp.eq.s32.totalorder %v4834, 1
      %vm4871 = vcmp.eq.s32.totalorder %v4835, 1
      %vm4872 = vcmp.eq.s32.totalorder %v4836, 1
      %vm4873 = vcmp.eq.s32.totalorder %v4837, 1
      %vm4874 = vcmp.eq.s32.totalorder %v4838, 1
      %vm4875 = vcmp.eq.s32.totalorder %v4839, 1
      %vm4876 = vcmp.eq.s32.totalorder %v4840, 1
      %vm4877 = vcmp.eq.s32.totalorder %v4841, 1
      %vm4878 = vcmp.eq.s32.totalorder %v4842, 1
      %vm4879 = vcmp.eq.s32.totalorder %v4843, 1
      %vm4880 = vcmp.eq.s32.totalorder %v4844, 1
      %vm4881 = vcmp.eq.s32.totalorder %v4845, 1
      %vm4882 = vcmp.eq.s32.totalorder %v4846, 1
      %vm4883 = vcmp.eq.s32.totalorder %v4847, 1
      %vm4884 = vcmp.eq.s32.totalorder %v4848, 1
      %vm4885 = vcmp.eq.s32.totalorder %v4849, 1
      %vm4886 = vcmp.eq.s32.totalorder %v4850, 1
      %vm4887 = vcmp.eq.s32.totalorder %v4851, 1
      %vm4888 = vcmp.eq.s32.totalorder %v4852, 1
      %vm4889 = vcmp.eq.s32.totalorder %v4853, 1
      %vm4890 = vcmp.eq.s32.totalorder %v4854, 1
      %vm4891 = vcmp.eq.s32.totalorder %v4855, 1
      %vm4892 = vcmp.eq.s32.totalorder %v4856, 1
      %vm4893 = vcmp.eq.s32.totalorder %v4857, 1
      %vm4894 = vcmp.eq.s32.totalorder %v4858, 1
      %vm4895 = vcmp.eq.s32.totalorder %v4859, 1
      %v4896 = vsel %vm4860, %v4139, 0.0
      %v4897 = vsel %vm4861, %v4140, 0.0
      %v4898 = vsel %vm4862, %v4141, 0.0
      %v4899 = vsel %vm4863, %v4142, 0.0
      %v4900 = vsel %vm4864, %v4143, 0.0
      %v4901 = vsel %vm4865, %v4144, 0.0
      %v4902 = vsel %vm4866, %v4145, 0.0
      %v4903 = vsel %vm4867, %v4146, 0.0
      %v4904 = vsel %vm4868, %v4147, 0.0
      %v4905 = vsel %vm4869, %v4148, 0.0
      %v4906 = vsel %vm4870, %v4149, 0.0
      %v4907 = vsel %vm4871, %v4150, 0.0
      %v4908 = vsel %vm4872, %v4151, 0.0
      %v4909 = vsel %vm4873, %v4152, 0.0
      %v4910 = vsel %vm4874, %v4153, 0.0
      %v4911 = vsel %vm4875, %v4154, 0.0
      %v4912 = vsel %vm4876, %v4155, 0.0
      %v4913 = vsel %vm4877, %v4156, 0.0
      %v4914 = vsel %vm4878, %v4157, 0.0
      %v4915 = vsel %vm4879, %v4158, 0.0
      %v4916 = vsel %vm4880, %v4159, 0.0
      %v4917 = vsel %vm4881, %v4160, 0.0
      %v4918 = vsel %vm4882, %v4161, 0.0
      %v4919 = vsel %vm4883, %v4162, 0.0
      %v4920 = vsel %vm4884, %v4163, 0.0
      %v4921 = vsel %vm4885, %v4164, 0.0
      %v4922 = vsel %vm4886, %v4165, 0.0
      %v4923 = vsel %vm4887, %v4166, 0.0
      %v4924 = vsel %vm4888, %v4167, 0.0
      %v4925 = vsel %vm4889, %v4168, 0.0
      %v4926 = vsel %vm4890, %v4169, 0.0
      %v4927 = vsel %vm4891, %v4170, 0.0
      %v4928 = vsel %vm4892, %v4171, 0.0
      %v4929 = vsel %vm4893, %v4172, 0.0
      %v4930 = vsel %vm4894, %v4173, 0.0
      %v4931 = vsel %vm4895, %v4174, 0.0
      %vm4932 = vcmask 48128
      %4933 = vst.msk [vmem:[#allocation2] sm:$0xff] %vm4932, 0.0
      %4934 = vst.msk [vmem:[#allocation2 + $0x8] sm:$0xff] %vm4932, 0.0
      %4935 = vst.msk [vmem:[#allocation2 + $0x10] sm:$0xff] %vm4932, 0.0
      %4936 = vst.msk [vmem:[#allocation2 + $0x18] sm:$0xff] %vm4932, 0.0
      %4937 = vst.msk [vmem:[#allocation2 + $0x20] sm:$0xff] %vm4932, 0.0
      %4938 = vst.msk [vmem:[#allocation2 + $0x28] sm:$0xff] %vm4932, 0.0
      %4939 = vst.msk [vmem:[#allocation2 + $0x30] sm:$0xff] %vm4932, 0.0
      %4940 = vst.msk [vmem:[#allocation2 + $0x38] sm:$0xff] %vm4932, 0.0
      %4941 = vst.msk [vmem:[#allocation2 + $0x40] sm:$0xff] %vm4932, 0.0
      %4942 = vst.msk [vmem:[#allocation2 + $0x48] sm:$0xff] %vm4932, 0.0
      %4943 = vst.msk [vmem:[#allocation2 + $0x50] sm:$0xff] %vm4932, 0.0
      %4944 = vst.msk [vmem:[#allocation2 + $0x58] sm:$0xff] %vm4932, 0.0
      %4945 = vst.msk [vmem:[#allocation2 + $0x60] sm:$0xff] %vm4932, 0.0
      %4946 = vst.msk [vmem:[#allocation2 + $0x68] sm:$0xff] %vm4932, 0.0
      %4947 = vst.msk [vmem:[#allocation2 + $0x70] sm:$0xff] %vm4932, 0.0
      %4948 = vst.msk [vmem:[#allocation2 + $0x78] sm:$0xff] %vm4932, 0.0
      %4949 = vst.msk [vmem:[#allocation2 + $0x80] sm:$0xff] %vm4932, 0.0
      %4950 = vst.msk [vmem:[#allocation2 + $0x88] sm:$0xff] %vm4932, 0.0
      %4951 = vst.msk [vmem:[#allocation2 + $0x90] sm:$0xff] %vm4932, 0.0
      %4952 = vst.msk [vmem:[#allocation2 + $0x98] sm:$0xff] %vm4932, 0.0
      %4953 = vst.msk [vmem:[#allocation2 + $0xa0] sm:$0xff] %vm4932, 0.0
      %4954 = vst.msk [vmem:[#allocation2 + $0xa8] sm:$0xff] %vm4932, 0.0
      %4955 = vst.msk [vmem:[#allocation2 + $0xb0] sm:$0xff] %vm4932, 0.0
      %4956 = vst.msk [vmem:[#allocation2 + $0xb8] sm:$0xff] %vm4932, 0.0
      %4957 = vst.msk [vmem:[#allocation2 + $0xc0] sm:$0xff] %vm4932, 0.0
      %4958 = vst.msk [vmem:[#allocation2 + $0xc8] sm:$0xff] %vm4932, 0.0
      %4959 = vst.msk [vmem:[#allocation2 + $0xd0] sm:$0xff] %vm4932, 0.0
      %4960 = vst.msk [vmem:[#allocation2 + $0xd8] sm:$0xff] %vm4932, 0.0
      %4961 = vst.msk [vmem:[#allocation2 + $0xe0] sm:$0xff] %vm4932, 0.0
      %4962 = vst.msk [vmem:[#allocation2 + $0xe8] sm:$0xff] %vm4932, 0.0
      %4963 = vst.msk [vmem:[#allocation2 + $0xf0] sm:$0xff] %vm4932, 0.0
      %4964 = vst.msk [vmem:[#allocation2 + $0xf8] sm:$0xff] %vm4932, 0.0
      %4965 = vst.msk [vmem:[#allocation2 + $0x100] sm:$0xff] %vm4932, 0.0
      %4966 = vst.msk [vmem:[#allocation2 + $0x108] sm:$0xff] %vm4932, 0.0
      %4967 = vst.msk [vmem:[#allocation2 + $0x110] sm:$0xff] %vm4932, 0.0
      %4968 = vst.msk [vmem:[#allocation2 + $0x118] sm:$0xff] %vm4932, 0.0
      %4969 = vst.msk [vmem:[#allocation2 + $0x120] sm:$0xff] %vm4932, 0.0
      %4970 = vst.msk [vmem:[#allocation2 + $0x128] sm:$0xff] %vm4932, 0.0
      %4971 = vst.msk [vmem:[#allocation2 + $0x130] sm:$0xff] %vm4932, 0.0
      %4972 = vst.msk [vmem:[#allocation2 + $0x138] sm:$0xff] %vm4932, 0.0
      %vm4973 = vcmask 46080
      %4974 = vst.msk [vmem:[#allocation2 + $0x140] sm:$0x3f] %vm4973, 0.0
      %4975 = vst.msk [vmem:[#allocation2 + $0x13] sm:$0xff] %vm4932, %v4896
      %4976 = vst.msk [vmem:[#allocation2 + $0x1b] sm:$0xff] %vm4932, %v4897
      %4977 = vst.msk [vmem:[#allocation2 + $0x23] sm:$0xff] %vm4932, %v4898
      %4978 = vst.msk [vmem:[#allocation2 + $0x2b] sm:$0xff] %vm4932, %v4899
      %4979 = vst.msk [vmem:[#allocation2 + $0x33] sm:$0xff] %vm4932, %v4900
      %4980 = vst.msk [vmem:[#allocation2 + $0x3b] sm:$0xff] %vm4932, %v4901
      %4981 = vst.msk [vmem:[#allocation2 + $0x43] sm:$0xff] %vm4932, %v4902
      %4982 = vst.msk [vmem:[#allocation2 + $0x4b] sm:$0xff] %vm4932, %v4903
      %4983 = vst.msk [vmem:[#allocation2 + $0x53] sm:$0xff] %vm4932, %v4904
      %4984 = vst.msk [vmem:[#allocation2 + $0x5b] sm:$0xff] %vm4932, %v4905
      %4985 = vst.msk [vmem:[#allocation2 + $0x63] sm:$0xff] %vm4932, %v4906
      %4986 = vst.msk [vmem:[#allocation2 + $0x6b] sm:$0xff] %vm4932, %v4907
      %4987 = vst.msk [vmem:[#allocation2 + $0x73] sm:$0xff] %vm4932, %v4908
      %4988 = vst.msk [vmem:[#allocation2 + $0x7b] sm:$0xff] %vm4932, %v4909
      %4989 = vst.msk [vmem:[#allocation2 + $0x83] sm:$0xff] %vm4932, %v4910
      %4990 = vst.msk [vmem:[#allocation2 + $0x8b] sm:$0xff] %vm4932, %v4911
      %4991 = vst.msk [vmem:[#allocation2 + $0x93] sm:$0xff] %vm4932, %v4912
      %4992 = vst.msk [vmem:[#allocation2 + $0x9b] sm:$0xff] %vm4932, %v4913
      %4993 = vst.msk [vmem:[#allocation2 + $0xa3] sm:$0xff] %vm4932, %v4914
      %4994 = vst.msk [vmem:[#allocation2 + $0xab] sm:$0xff] %vm4932, %v4915
      %4995 = vst.msk [vmem:[#allocation2 + $0xb3] sm:$0xff] %vm4932, %v4916
      %4996 = vst.msk [vmem:[#allocation2 + $0xbb] sm:$0xff] %vm4932, %v4917
      %4997 = vst.msk [vmem:[#allocation2 + $0xc3] sm:$0xff] %vm4932, %v4918
      %4998 = vst.msk [vmem:[#allocation2 + $0xcb] sm:$0xff] %vm4932, %v4919
      %4999 = vst.msk [vmem:[#allocation2 + $0xd3] sm:$0xff] %vm4932, %v4920
      %5000 = vst.msk [vmem:[#allocation2 + $0xdb] sm:$0xff] %vm4932, %v4921
      %5001 = vst.msk [vmem:[#allocation2 + $0xe3] sm:$0xff] %vm4932, %v4922
      %5002 = vst.msk [vmem:[#allocation2 + $0xeb] sm:$0xff] %vm4932, %v4923
      %5003 = vst.msk [vmem:[#allocation2 + $0xf3] sm:$0xff] %vm4932, %v4924
      %5004 = vst.msk [vmem:[#allocation2 + $0xfb] sm:$0xff] %vm4932, %v4925
      %5005 = vst.msk [vmem:[#allocation2 + $0x103] sm:$0xff] %vm4932, %v4926
      %5006 = vst.msk [vmem:[#allocation2 + $0x10b] sm:$0xff] %vm4932, %v4927
      %5007 = vst.msk [vmem:[#allocation2 + $0x113] sm:$0xff] %vm4932, %v4928
      %5008 = vst.msk [vmem:[#allocation2 + $0x11b] sm:$0xff] %vm4932, %v4929
      %5009 = vst.msk [vmem:[#allocation2 + $0x123] sm:$0xff] %vm4932, %v4930
      %5010 = vst.msk [vmem:[#allocation2 + $0x12b] sm:$0xff] %vm4932, %v4931
      %v5011 = vld [vmem:[#allocation2] sm:$0xff]
      %v5012 = vld [vmem:[#allocation2 + $0x8] sm:$0xff]
      %v5013 = vld [vmem:[#allocation2 + $0x10] sm:$0xff]
      %v5014 = vld [vmem:[#allocation2 + $0x18] sm:$0xff]
      %v5015 = vld [vmem:[#allocation2 + $0x20] sm:$0xff]
      %v5016 = vld [vmem:[#allocation2 + $0x28] sm:$0xff]
      %v5017 = vld [vmem:[#allocation2 + $0x30] sm:$0xff]
      %v5018 = vld [vmem:[#allocation2 + $0x38] sm:$0xff]
      %v5019 = vld [vmem:[#allocation2 + $0x40] sm:$0xff]
      %v5020 = vld [vmem:[#allocation2 + $0x48] sm:$0xff]
      %v5021 = vld [vmem:[#allocation2 + $0x50] sm:$0xff]
      %v5022 = vld [vmem:[#allocation2 + $0x58] sm:$0xff]
      %v5023 = vld [vmem:[#allocation2 + $0x60] sm:$0xff]
      %v5024 = vld [vmem:[#allocation2 + $0x68] sm:$0xff]
      %v5025 = vld [vmem:[#allocation2 + $0x70] sm:$0xff]
      %v5026 = vld [vmem:[#allocation2 + $0x78] sm:$0xff]
      %v5027 = vld [vmem:[#allocation2 + $0x80] sm:$0xff]
      %v5028 = vld [vmem:[#allocation2 + $0x88] sm:$0xff]
      %v5029 = vld [vmem:[#allocation2 + $0x90] sm:$0xff]
      %v5030 = vld [vmem:[#allocation2 + $0x98] sm:$0xff]
      %v5031 = vld [vmem:[#allocation2 + $0xa0] sm:$0xff]
      %v5032 = vld [vmem:[#allocation2 + $0xa8] sm:$0xff]
      %v5033 = vld [vmem:[#allocation2 + $0xb0] sm:$0xff]
      %v5034 = vld [vmem:[#allocation2 + $0xb8] sm:$0xff]
      %v5035 = vld [vmem:[#allocation2 + $0xc0] sm:$0xff]
      %v5036 = vld [vmem:[#allocation2 + $0xc8] sm:$0xff]
      %v5037 = vld [vmem:[#allocation2 + $0xd0] sm:$0xff]
      %v5038 = vld [vmem:[#allocation2 + $0xd8] sm:$0xff]
      %v5039 = vld [vmem:[#allocation2 + $0xe0] sm:$0xff]
      %v5040 = vld [vmem:[#allocation2 + $0xe8] sm:$0xff]
      %v5041 = vld [vmem:[#allocation2 + $0xf0] sm:$0xff]
      %v5042 = vld [vmem:[#allocation2 + $0xf8] sm:$0xff]
      %v5043 = vld [vmem:[#allocation2 + $0x100] sm:$0xff]
      %v5044 = vld [vmem:[#allocation2 + $0x108] sm:$0xff]
      %v5045 = vld [vmem:[#allocation2 + $0x110] sm:$0xff]
      %v5046 = vld [vmem:[#allocation2 + $0x118] sm:$0xff]
      %v5047 = vld [vmem:[%s3] sm:$0x3f]
      %v5048 = vld [vmem:[#allocation2 + $0x1] sm:$0xff]
      %v5049 = vld [vmem:[#allocation2 + $0x9] sm:$0xff]
      %v5050 = vld [vmem:[#allocation2 + $0x11] sm:$0xff]
      %v5051 = vld [vmem:[#allocation2 + $0x19] sm:$0xff]
      %v5052 = vld [vmem:[#allocation2 + $0x21] sm:$0xff]
      %v5053 = vld [vmem:[#allocation2 + $0x29] sm:$0xff]
      %v5054 = vld [vmem:[#allocation2 + $0x31] sm:$0xff]
      %v5055 = vld [vmem:[#allocation2 + $0x39] sm:$0xff]
      %v5056 = vld [vmem:[#allocation2 + $0x41] sm:$0xff]
      %v5057 = vld [vmem:[#allocation2 + $0x49] sm:$0xff]
      %v5058 = vld [vmem:[#allocation2 + $0x51] sm:$0xff]
      %v5059 = vld [vmem:[#allocation2 + $0x59] sm:$0xff]
      %v5060 = vld [vmem:[#allocation2 + $0x61] sm:$0xff]
      %v5061 = vld [vmem:[#allocation2 + $0x69] sm:$0xff]
      %v5062 = vld [vmem:[#allocation2 + $0x71] sm:$0xff]
      %v5063 = vld [vmem:[#allocation2 + $0x79] sm:$0xff]
      %v5064 = vld [vmem:[#allocation2 + $0x81] sm:$0xff]
      %v5065 = vld [vmem:[#allocation2 + $0x89] sm:$0xff]
      %v5066 = vld [vmem:[#allocation2 + $0x91] sm:$0xff]
      %v5067 = vld [vmem:[#allocation2 + $0x99] sm:$0xff]
      %v5068 = vld [vmem:[#allocation2 + $0xa1] sm:$0xff]
      %v5069 = vld [vmem:[#allocation2 + $0xa9] sm:$0xff]
      %v5070 = vld [vmem:[#allocation2 + $0xb1] sm:$0xff]
      %v5071 = vld [vmem:[#allocation2 + $0xb9] sm:$0xff]
      %v5072 = vld [vmem:[#allocation2 + $0xc1] sm:$0xff]
      %v5073 = vld [vmem:[#allocation2 + $0xc9] sm:$0xff]
      %v5074 = vld [vmem:[#allocation2 + $0xd1] sm:$0xff]
      %v5075 = vld [vmem:[#allocation2 + $0xd9] sm:$0xff]
      %v5076 = vld [vmem:[#allocation2 + $0xe1] sm:$0xff]
      %v5077 = vld [vmem:[#allocation2 + $0xe9] sm:$0xff]
      %v5078 = vld [vmem:[#allocation2 + $0xf1] sm:$0xff]
      %v5079 = vld [vmem:[#allocation2 + $0xf9] sm:$0xff]
      %v5080 = vld [vmem:[#allocation2 + $0x101] sm:$0xff]
      %v5081 = vld [vmem:[#allocation2 + $0x109] sm:$0xff]
      %v5082 = vld [vmem:[#allocation2 + $0x111] sm:$0xff]
      %v5083 = vld [vmem:[#allocation2 + $0x119] sm:$0xff]
      %s5084 = scalar_lea.vmem %s3, 8
      %v5085 = vld [vmem:[%s5084] sm:$0x3f]
      %v5087 = vsel %vm4932, %v5048, 0
      %v5090 = vsel %vm4932, %v5049, 0
      %v5093 = vsel %vm4932, %v5050, 0
      %v5096 = vsel %vm4932, %v5051, 0
      %v5099 = vsel %vm4932, %v5052, 0
      %v5102 = vsel %vm4932, %v5053, 0
      %v5105 = vsel %vm4932, %v5054, 0
      %v5108 = vsel %vm4932, %v5055, 0
      %v5111 = vsel %vm4932, %v5056, 0
      %v5114 = vsel %vm4932, %v5057, 0
      %v5117 = vsel %vm4932, %v5058, 0
      %v5120 = vsel %vm4932, %v5059, 0
      %v5123 = vsel %vm4932, %v5060, 0
      %v5126 = vsel %vm4932, %v5061, 0
      %v5129 = vsel %vm4932, %v5062, 0
      %v5132 = vsel %vm4932, %v5063, 0
      %v5135 = vsel %vm4932, %v5064, 0
      %v5138 = vsel %vm4932, %v5065, 0
      %v5141 = vsel %vm4932, %v5066, 0
      %v5144 = vsel %vm4932, %v5067, 0
      %v5147 = vsel %vm4932, %v5068, 0
      %v5150 = vsel %vm4932, %v5069, 0
      %v5153 = vsel %vm4932, %v5070, 0
      %v5156 = vsel %vm4932, %v5071, 0
      %v5159 = vsel %vm4932, %v5072, 0
      %v5162 = vsel %vm4932, %v5073, 0
      %v5165 = vsel %vm4932, %v5074, 0
      %v5168 = vsel %vm4932, %v5075, 0
      %v5171 = vsel %vm4932, %v5076, 0
      %v5174 = vsel %vm4932, %v5077, 0
      %v5177 = vsel %vm4932, %v5078, 0
      %v5180 = vsel %vm4932, %v5079, 0
      %v5183 = vsel %vm4932, %v5080, 0
      %v5186 = vsel %vm4932, %v5081, 0
      %v5189 = vsel %vm4932, %v5082, 0
      %v5192 = vsel %vm4932, %v5083, 0
      %vm5194 = vcmask 1045504
      %v5196 = vsel %vm5194, %v5085, 0
      %5198 = vmatprep.subr.mxu0 0.0
      %5199 = vmatpush1.msra.mxu0 0.0
      %5200 = vmatprep.subr.mxu0 0.0
      %5201 = vmatpush1.msra.mxu0 0.0
      %5202 = vmatprep.subr.mxu0 0.0
      %5203 = vmatpush1.msra.mxu0 0.0
      %5204 = vmatprep.subr.mxu0 0.0
      %5205 = vmatpush1.msra.mxu0 0.0
      %5206 = vmatprep.subr.mxu0 0.0
      %5207 = vmatpush1.msra.mxu0 0.0
      %5208 = vmatprep.subr.mxu0 0.0
      %5209 = vmatpush1.msra.mxu0 0.0
      %5210 = vmatprep.subr.mxu0 0.0
      %5211 = vmatpush1.msra.mxu0 0.0
      %5212 = vmatprep.subr.mxu0 0.0
      %5213 = vmatpush1.msra.mxu0 0.0
      %5214 = vmatprep.subr.mxu0 0.0
      %5215 = vmatpush1.msra.mxu0 0.0
      %5216 = vmatprep.subr.mxu0 0.0
      %5217 = vmatpush1.msra.mxu0 0.0
      %5218 = vmatprep.subr.mxu0 0.0
      %5219 = vmatpush1.msra.mxu0 0.0
      %5220 = vmatprep.subr.mxu0 0.0
      %5221 = vmatpush1.msra.mxu0 0.0
      %5222 = vmatprep.subr.mxu0 0.0
      %5223 = vmatpush1.msra.mxu0 0.0
      %5224 = vmatprep.subr.mxu0 0.0
      %5225 = vmatpush1.msra.mxu0 0.0
      %5226 = vmatprep.subr.mxu0 0.0
      %5227 = vmatpush1.msra.mxu0 0.0
      %5228 = vmatprep.subr.mxu0 0.0
      %5229 = vmatpush1.msra.mxu0 %v5196
      %5230 = vmatprep.subr.mxu0 0.0
      %5231 = vmatpush2.msra.mxu0 0.0
      %5232 = vmatprep.subr.mxu0 0.0
      %5233 = vmatpush2.msra.mxu0 0.0
      %5234 = vmatprep.subr.mxu0 0.0
      %5235 = vmatpush2.msra.mxu0 0.0
      %5236 = vmatprep.subr.mxu0 0.0
      %5237 = vmatpush2.msra.mxu0 0.0
      %5238 = vmatprep.subr.mxu0 0.0
      %5239 = vmatpush2.msra.mxu0 0.0
      %5240 = vmatprep.subr.mxu0 0.0
      %5241 = vmatpush2.msra.mxu0 0.0
      %5242 = vmatprep.subr.mxu0 0.0
      %5243 = vmatpush2.msra.mxu0 0.0
      %5244 = vmatprep.subr.mxu0 0.0
      %5245 = vmatpush2.msra.mxu0 0.0
      %5246 = vmatprep.subr.mxu0 0.0
      %5247 = vmatpush2.msra.mxu0 0.0
      %5248 = vmatprep.subr.mxu0 0.0
      %5249 = vmatpush2.msra.mxu0 0.0
      %5250 = vmatprep.subr.mxu0 0.0
      %5251 = vmatpush2.msra.mxu0 0.0
      %5252 = vmatprep.subr.mxu0 0.0
      %5253 = vmatpush2.msra.mxu0 0.0
      %5254 = vmatprep.subr.mxu0 0.0
      %5255 = vmatpush2.msra.mxu0 0.0
      %5256 = vmatprep.subr.mxu0 0.0
      %5257 = vmatpush2.msra.mxu0 0.0
      %5258 = vmatprep.subr.mxu0 0.0
      %5259 = vmatpush2.msra.mxu0 0.0
      %5260 = vmatprep.subr.mxu0 0.0
      %5261 = vmatpush2.msra.mxu0 0.0
      %5262 = vmatprep.mubr.f32.mxu0 0.0
      %5263 = vmatmul.mubr.f32.gmra.mxu0 %v5087
      %v5264 = vpop.f32.mrf.mxu0
      %v5265 = vadd.f32 0.0, %v5264
      %v5266 = vpop.f32.mrf.mxu0
      %5267 = vmatprep.mubr.f32.mxu0 0.0
      %5268 = vmatmul.mubr.f32.gmra.mxu0 %v5090
      %v5269 = vpop.f32.mrf.mxu0
      %v5270 = vadd.f32 0.0, %v5269
      %v5271 = vpop.f32.mrf.mxu0
      %5272 = vmatprep.mubr.f32.mxu0 0.0
      %5273 = vmatmul.mubr.f32.gmra.mxu0 %v5093
      %v5274 = vpop.f32.mrf.mxu0
      %v5275 = vadd.f32 0.0, %v5274
      %v5276 = vpop.f32.mrf.mxu0
      %5277 = vmatprep.mubr.f32.mxu0 0.0
      %5278 = vmatmul.mubr.f32.gmra.mxu0 %v5096
      %v5279 = vpop.f32.mrf.mxu0
      %v5280 = vadd.f32 0.0, %v5279
      %v5281 = vpop.f32.mrf.mxu0
      %5282 = vmatprep.mubr.f32.mxu0 0.0
      %5283 = vmatmul.mubr.f32.gmra.mxu0 %v5099
      %v5284 = vpop.f32.mrf.mxu0
      %v5285 = vadd.f32 0.0, %v5284
      %v5286 = vpop.f32.mrf.mxu0
      %5287 = vmatprep.mubr.f32.mxu0 0.0
      %5288 = vmatmul.mubr.f32.gmra.mxu0 %v5102
      %v5289 = vpop.f32.mrf.mxu0
      %v5290 = vadd.f32 0.0, %v5289
      %v5291 = vpop.f32.mrf.mxu0
      %5292 = vmatprep.mubr.f32.mxu0 0.0
      %5293 = vmatmul.mubr.f32.gmra.mxu0 %v5105
      %v5294 = vpop.f32.mrf.mxu0
      %v5295 = vadd.f32 0.0, %v5294
      %v5296 = vpop.f32.mrf.mxu0
      %5297 = vmatprep.mubr.f32.mxu0 0.0
      %5298 = vmatmul.mubr.f32.gmra.mxu0 %v5108
      %v5299 = vpop.f32.mrf.mxu0
      %v5300 = vadd.f32 0.0, %v5299
      %v5301 = vpop.f32.mrf.mxu0
      %5302 = vmatprep.mubr.f32.mxu0 0.0
      %5303 = vmatmul.mubr.f32.gmra.mxu0 %v5111
      %v5304 = vpop.f32.mrf.mxu0
      %v5305 = vadd.f32 0.0, %v5304
      %v5306 = vpop.f32.mrf.mxu0
      %5307 = vmatprep.mubr.f32.mxu0 0.0
      %5308 = vmatmul.mubr.f32.gmra.mxu0 %v5114
      %v5309 = vpop.f32.mrf.mxu0
      %v5310 = vadd.f32 0.0, %v5309
      %v5311 = vpop.f32.mrf.mxu0
      %5312 = vmatprep.mubr.f32.mxu0 0.0
      %5313 = vmatmul.mubr.f32.gmra.mxu0 %v5117
      %v5314 = vpop.f32.mrf.mxu0
      %v5315 = vadd.f32 0.0, %v5314
      %v5316 = vpop.f32.mrf.mxu0
      %5317 = vmatprep.mubr.f32.mxu0 0.0
      %5318 = vmatmul.mubr.f32.gmra.mxu0 %v5120
      %v5319 = vpop.f32.mrf.mxu0
      %v5320 = vadd.f32 0.0, %v5319
      %v5321 = vpop.f32.mrf.mxu0
      %5322 = vmatprep.mubr.f32.mxu0 0.0
      %5323 = vmatmul.mubr.f32.gmra.mxu0 %v5123
      %v5324 = vpop.f32.mrf.mxu0
      %v5325 = vadd.f32 0.0, %v5324
      %v5326 = vpop.f32.mrf.mxu0
      %5327 = vmatprep.mubr.f32.mxu0 0.0
      %5328 = vmatmul.mubr.f32.gmra.mxu0 %v5126
      %v5329 = vpop.f32.mrf.mxu0
      %v5330 = vadd.f32 0.0, %v5329
      %v5331 = vpop.f32.mrf.mxu0
      %5332 = vmatprep.mubr.f32.mxu0 0.0
      %5333 = vmatmul.mubr.f32.gmra.mxu0 %v5129
      %v5334 = vpop.f32.mrf.mxu0
      %v5335 = vadd.f32 0.0, %v5334
      %v5336 = vpop.f32.mrf.mxu0
      %5337 = vmatprep.mubr.f32.mxu0 0.0
      %5338 = vmatmul.mubr.f32.gmra.mxu0 %v5132
      %v5339 = vpop.f32.mrf.mxu0
      %v5340 = vadd.f32 0.0, %v5339
      %v5341 = vpop.f32.mrf.mxu0
      %5342 = vmatprep.mubr.f32.mxu0 0.0
      %5343 = vmatmul.mubr.f32.gmra.mxu0 %v5135
      %v5344 = vpop.f32.mrf.mxu0
      %v5345 = vadd.f32 0.0, %v5344
      %v5346 = vpop.f32.mrf.mxu0
      %5347 = vmatprep.mubr.f32.mxu0 0.0
      %5348 = vmatmul.mubr.f32.gmra.mxu0 %v5138
      %v5349 = vpop.f32.mrf.mxu0
      %v5350 = vadd.f32 0.0, %v5349
      %v5351 = vpop.f32.mrf.mxu0
      %5352 = vmatprep.mubr.f32.mxu0 0.0
      %5353 = vmatmul.mubr.f32.gmra.mxu0 %v5141
      %v5354 = vpop.f32.mrf.mxu0
      %v5355 = vadd.f32 0.0, %v5354
      %v5356 = vpop.f32.mrf.mxu0
      %5357 = vmatprep.mubr.f32.mxu0 0.0
      %5358 = vmatmul.mubr.f32.gmra.mxu0 %v5144
      %v5359 = vpop.f32.mrf.mxu0
      %v5360 = vadd.f32 0.0, %v5359
      %v5361 = vpop.f32.mrf.mxu0
      %5362 = vmatprep.mubr.f32.mxu0 0.0
      %5363 = vmatmul.mubr.f32.gmra.mxu0 %v5147
      %v5364 = vpop.f32.mrf.mxu0
      %v5365 = vadd.f32 0.0, %v5364
      %v5366 = vpop.f32.mrf.mxu0
      %5367 = vmatprep.mubr.f32.mxu0 0.0
      %5368 = vmatmul.mubr.f32.gmra.mxu0 %v5150
      %v5369 = vpop.f32.mrf.mxu0
      %v5370 = vadd.f32 0.0, %v5369
      %v5371 = vpop.f32.mrf.mxu0
      %5372 = vmatprep.mubr.f32.mxu0 0.0
      %5373 = vmatmul.mubr.f32.gmra.mxu0 %v5153
      %v5374 = vpop.f32.mrf.mxu0
      %v5375 = vadd.f32 0.0, %v5374
      %v5376 = vpop.f32.mrf.mxu0
      %5377 = vmatprep.mubr.f32.mxu0 0.0
      %5378 = vmatmul.mubr.f32.gmra.mxu0 %v5156
      %v5379 = vpop.f32.mrf.mxu0
      %v5380 = vadd.f32 0.0, %v5379
      %v5381 = vpop.f32.mrf.mxu0
      %5382 = vmatprep.mubr.f32.mxu0 0.0
      %5383 = vmatmul.mubr.f32.gmra.mxu0 %v5159
      %v5384 = vpop.f32.mrf.mxu0
      %v5385 = vadd.f32 0.0, %v5384
      %v5386 = vpop.f32.mrf.mxu0
      %5387 = vmatprep.mubr.f32.mxu0 0.0
      %5388 = vmatmul.mubr.f32.gmra.mxu0 %v5162
      %v5389 = vpop.f32.mrf.mxu0
      %v5390 = vadd.f32 0.0, %v5389
      %v5391 = vpop.f32.mrf.mxu0
      %5392 = vmatprep.mubr.f32.mxu0 0.0
      %5393 = vmatmul.mubr.f32.gmra.mxu0 %v5165
      %v5394 = vpop.f32.mrf.mxu0
      %v5395 = vadd.f32 0.0, %v5394
      %v5396 = vpop.f32.mrf.mxu0
      %5397 = vmatprep.mubr.f32.mxu0 0.0
      %5398 = vmatmul.mubr.f32.gmra.mxu0 %v5168
      %v5399 = vpop.f32.mrf.mxu0
      %v5400 = vadd.f32 0.0, %v5399
      %v5401 = vpop.f32.mrf.mxu0
      %5402 = vmatprep.mubr.f32.mxu0 0.0
      %5403 = vmatmul.mubr.f32.gmra.mxu0 %v5171
      %v5404 = vpop.f32.mrf.mxu0
      %v5405 = vadd.f32 0.0, %v5404
      %v5406 = vpop.f32.mrf.mxu0
      %5407 = vmatprep.mubr.f32.mxu0 0.0
      %5408 = vmatmul.mubr.f32.gmra.mxu0 %v5174
      %v5409 = vpop.f32.mrf.mxu0
      %v5410 = vadd.f32 0.0, %v5409
      %v5411 = vpop.f32.mrf.mxu0
      %5412 = vmatprep.mubr.f32.mxu0 0.0
      %5413 = vmatmul.mubr.f32.gmra.mxu0 %v5177
      %v5414 = vpop.f32.mrf.mxu0
      %v5415 = vadd.f32 0.0, %v5414
      %v5416 = vpop.f32.mrf.mxu0
      %5417 = vmatprep.mubr.f32.mxu0 0.0
      %5418 = vmatmul.mubr.f32.gmra.mxu0 %v5180
      %v5419 = vpop.f32.mrf.mxu0
      %v5420 = vadd.f32 0.0, %v5419
      %v5421 = vpop.f32.mrf.mxu0
      %5422 = vmatprep.mubr.f32.mxu0 0.0
      %5423 = vmatmul.mubr.f32.gmra.mxu0 %v5183
      %v5424 = vpop.f32.mrf.mxu0
      %v5425 = vadd.f32 0.0, %v5424
      %v5426 = vpop.f32.mrf.mxu0
      %5427 = vmatprep.mubr.f32.mxu0 0.0
      %5428 = vmatmul.mubr.f32.gmra.mxu0 %v5186
      %v5429 = vpop.f32.mrf.mxu0
      %v5430 = vadd.f32 0.0, %v5429
      %v5431 = vpop.f32.mrf.mxu0
      %5432 = vmatprep.mubr.f32.mxu0 0.0
      %5433 = vmatmul.mubr.f32.gmra.mxu0 %v5189
      %v5434 = vpop.f32.mrf.mxu0
      %v5435 = vadd.f32 0.0, %v5434
      %v5436 = vpop.f32.mrf.mxu0
      %5437 = vmatprep.mubr.f32.mxu0 0.0
      %5438 = vmatmul.mubr.f32.gmra.mxu0 %v5192
      %v5439 = vpop.f32.mrf.mxu0
      %v5440 = vadd.f32 0.0, %v5439
      %v5441 = vpop.f32.mrf.mxu0
      %5442 = vdwg.mxu0
      %v5444 = vsel %vm4932, %v5011, 0
      %v5447 = vsel %vm4932, %v5012, 0
      %v5450 = vsel %vm4932, %v5013, 0
      %v5453 = vsel %vm4932, %v5014, 0
      %v5456 = vsel %vm4932, %v5015, 0
      %v5459 = vsel %vm4932, %v5016, 0
      %v5462 = vsel %vm4932, %v5017, 0
      %v5465 = vsel %vm4932, %v5018, 0
      %v5468 = vsel %vm4932, %v5019, 0
      %v5471 = vsel %vm4932, %v5020, 0
      %v5474 = vsel %vm4932, %v5021, 0
      %v5477 = vsel %vm4932, %v5022, 0
      %v5480 = vsel %vm4932, %v5023, 0
      %v5483 = vsel %vm4932, %v5024, 0
      %v5486 = vsel %vm4932, %v5025, 0
      %v5489 = vsel %vm4932, %v5026, 0
      %v5492 = vsel %vm4932, %v5027, 0
      %v5495 = vsel %vm4932, %v5028, 0
      %v5498 = vsel %vm4932, %v5029, 0
      %v5501 = vsel %vm4932, %v5030, 0
      %v5504 = vsel %vm4932, %v5031, 0
      %v5507 = vsel %vm4932, %v5032, 0
      %v5510 = vsel %vm4932, %v5033, 0
      %v5513 = vsel %vm4932, %v5034, 0
      %v5516 = vsel %vm4932, %v5035, 0
      %v5519 = vsel %vm4932, %v5036, 0
      %v5522 = vsel %vm4932, %v5037, 0
      %v5525 = vsel %vm4932, %v5038, 0
      %v5528 = vsel %vm4932, %v5039, 0
      %v5531 = vsel %vm4932, %v5040, 0
      %v5534 = vsel %vm4932, %v5041, 0
      %v5537 = vsel %vm4932, %v5042, 0
      %v5540 = vsel %vm4932, %v5043, 0
      %v5543 = vsel %vm4932, %v5044, 0
      %v5546 = vsel %vm4932, %v5045, 0
      %v5549 = vsel %vm4932, %v5046, 0
      %v5552 = vsel %vm5194, %v5047, 0
      %5554 = vmatprep.subr.mxu0 0.0
      %5555 = vmatpush1.msra.mxu0 0.0
      %5556 = vmatprep.subr.mxu0 0.0
      %5557 = vmatpush1.msra.mxu0 0.0
      %5558 = vmatprep.subr.mxu0 0.0
      %5559 = vmatpush1.msra.mxu0 0.0
      %5560 = vmatprep.subr.mxu0 0.0
      %5561 = vmatpush1.msra.mxu0 0.0
      %5562 = vmatprep.subr.mxu0 0.0
      %5563 = vmatpush1.msra.mxu0 0.0
      %5564 = vmatprep.subr.mxu0 0.0
      %5565 = vmatpush1.msra.mxu0 0.0
      %5566 = vmatprep.subr.mxu0 0.0
      %5567 = vmatpush1.msra.mxu0 0.0
      %5568 = vmatprep.subr.mxu0 0.0
      %5569 = vmatpush1.msra.mxu0 0.0
      %5570 = vmatprep.subr.mxu0 0.0
      %5571 = vmatpush1.msra.mxu0 0.0
      %5572 = vmatprep.subr.mxu0 0.0
      %5573 = vmatpush1.msra.mxu0 0.0
      %5574 = vmatprep.subr.mxu0 0.0
      %5575 = vmatpush1.msra.mxu0 0.0
      %5576 = vmatprep.subr.mxu0 0.0
      %5577 = vmatpush1.msra.mxu0 0.0
      %5578 = vmatprep.subr.mxu0 0.0
      %5579 = vmatpush1.msra.mxu0 0.0
      %5580 = vmatprep.subr.mxu0 0.0
      %5581 = vmatpush1.msra.mxu0 0.0
      %5582 = vmatprep.subr.mxu0 0.0
      %5583 = vmatpush1.msra.mxu0 0.0
      %5584 = vmatprep.subr.mxu0 0.0
      %5585 = vmatpush1.msra.mxu0 %v5552
      %5586 = vmatprep.subr.mxu0 0.0
      %5587 = vmatpush2.msra.mxu0 0.0
      %5588 = vmatprep.subr.mxu0 0.0
      %5589 = vmatpush2.msra.mxu0 0.0
      %5590 = vmatprep.subr.mxu0 0.0
      %5591 = vmatpush2.msra.mxu0 0.0
      %5592 = vmatprep.subr.mxu0 0.0
      %5593 = vmatpush2.msra.mxu0 0.0
      %5594 = vmatprep.subr.mxu0 0.0
      %5595 = vmatpush2.msra.mxu0 0.0
      %5596 = vmatprep.subr.mxu0 0.0
      %5597 = vmatpush2.msra.mxu0 0.0
      %5598 = vmatprep.subr.mxu0 0.0
      %5599 = vmatpush2.msra.mxu0 0.0
      %5600 = vmatprep.subr.mxu0 0.0
      %5601 = vmatpush2.msra.mxu0 0.0
      %5602 = vmatprep.subr.mxu0 0.0
      %5603 = vmatpush2.msra.mxu0 0.0
      %5604 = vmatprep.subr.mxu0 0.0
      %5605 = vmatpush2.msra.mxu0 0.0
      %5606 = vmatprep.subr.mxu0 0.0
      %5607 = vmatpush2.msra.mxu0 0.0
      %5608 = vmatprep.subr.mxu0 0.0
      %5609 = vmatpush2.msra.mxu0 0.0
      %5610 = vmatprep.subr.mxu0 0.0
      %5611 = vmatpush2.msra.mxu0 0.0
      %5612 = vmatprep.subr.mxu0 0.0
      %5613 = vmatpush2.msra.mxu0 0.0
      %5614 = vmatprep.subr.mxu0 0.0
      %5615 = vmatpush2.msra.mxu0 0.0
      %5616 = vmatprep.subr.mxu0 0.0
      %5617 = vmatpush2.msra.mxu0 0.0
      %5618 = vmatprep.mubr.f32.mxu0 0.0
      %5619 = vmatmul.mubr.f32.gmra.mxu0 %v5444
      %v5620 = vpop.f32.mrf.mxu0
      %v5621 = vadd.f32 %v5265, %v5620
      %v5622 = vpop.f32.mrf.mxu0
      %5623 = vmatprep.mubr.f32.mxu0 0.0
      %5624 = vmatmul.mubr.f32.gmra.mxu0 %v5447
      %v5625 = vpop.f32.mrf.mxu0
      %v5626 = vadd.f32 %v5270, %v5625
      %v5627 = vpop.f32.mrf.mxu0
      %5628 = vmatprep.mubr.f32.mxu0 0.0
      %5629 = vmatmul.mubr.f32.gmra.mxu0 %v5450
      %v5630 = vpop.f32.mrf.mxu0
      %v5631 = vadd.f32 %v5275, %v5630
      %v5632 = vpop.f32.mrf.mxu0
      %5633 = vmatprep.mubr.f32.mxu0 0.0
      %5634 = vmatmul.mubr.f32.gmra.mxu0 %v5453
      %v5635 = vpop.f32.mrf.mxu0
      %v5636 = vadd.f32 %v5280, %v5635
      %v5637 = vpop.f32.mrf.mxu0
      %5638 = vmatprep.mubr.f32.mxu0 0.0
      %5639 = vmatmul.mubr.f32.gmra.mxu0 %v5456
      %v5640 = vpop.f32.mrf.mxu0
      %v5641 = vadd.f32 %v5285, %v5640
      %v5642 = vpop.f32.mrf.mxu0
      %5643 = vmatprep.mubr.f32.mxu0 0.0
      %5644 = vmatmul.mubr.f32.gmra.mxu0 %v5459
      %v5645 = vpop.f32.mrf.mxu0
      %v5646 = vadd.f32 %v5290, %v5645
      %v5647 = vpop.f32.mrf.mxu0
      %5648 = vmatprep.mubr.f32.mxu0 0.0
      %5649 = vmatmul.mubr.f32.gmra.mxu0 %v5462
      %v5650 = vpop.f32.mrf.mxu0
      %v5651 = vadd.f32 %v5295, %v5650
      %v5652 = vpop.f32.mrf.mxu0
      %5653 = vmatprep.mubr.f32.mxu0 0.0
      %5654 = vmatmul.mubr.f32.gmra.mxu0 %v5465
      %v5655 = vpop.f32.mrf.mxu0
      %v5656 = vadd.f32 %v5300, %v5655
      %v5657 = vpop.f32.mrf.mxu0
      %5658 = vmatprep.mubr.f32.mxu0 0.0
      %5659 = vmatmul.mubr.f32.gmra.mxu0 %v5468
      %v5660 = vpop.f32.mrf.mxu0
      %v5661 = vadd.f32 %v5305, %v5660
      %v5662 = vpop.f32.mrf.mxu0
      %5663 = vmatprep.mubr.f32.mxu0 0.0
      %5664 = vmatmul.mubr.f32.gmra.mxu0 %v5471
      %v5665 = vpop.f32.mrf.mxu0
      %v5666 = vadd.f32 %v5310, %v5665
      %v5667 = vpop.f32.mrf.mxu0
      %5668 = vmatprep.mubr.f32.mxu0 0.0
      %5669 = vmatmul.mubr.f32.gmra.mxu0 %v5474
      %v5670 = vpop.f32.mrf.mxu0
      %v5671 = vadd.f32 %v5315, %v5670
      %v5672 = vpop.f32.mrf.mxu0
      %5673 = vmatprep.mubr.f32.mxu0 0.0
      %5674 = vmatmul.mubr.f32.gmra.mxu0 %v5477
      %v5675 = vpop.f32.mrf.mxu0
      %v5676 = vadd.f32 %v5320, %v5675
      %v5677 = vpop.f32.mrf.mxu0
      %5678 = vmatprep.mubr.f32.mxu0 0.0
      %5679 = vmatmul.mubr.f32.gmra.mxu0 %v5480
      %v5680 = vpop.f32.mrf.mxu0
      %v5681 = vadd.f32 %v5325, %v5680
      %v5682 = vpop.f32.mrf.mxu0
      %5683 = vmatprep.mubr.f32.mxu0 0.0
      %5684 = vmatmul.mubr.f32.gmra.mxu0 %v5483
      %v5685 = vpop.f32.mrf.mxu0
      %v5686 = vadd.f32 %v5330, %v5685
      %v5687 = vpop.f32.mrf.mxu0
      %5688 = vmatprep.mubr.f32.mxu0 0.0
      %5689 = vmatmul.mubr.f32.gmra.mxu0 %v5486
      %v5690 = vpop.f32.mrf.mxu0
      %v5691 = vadd.f32 %v5335, %v5690
      %v5692 = vpop.f32.mrf.mxu0
      %5693 = vmatprep.mubr.f32.mxu0 0.0
      %5694 = vmatmul.mubr.f32.gmra.mxu0 %v5489
      %v5695 = vpop.f32.mrf.mxu0
      %v5696 = vadd.f32 %v5340, %v5695
      %v5697 = vpop.f32.mrf.mxu0
      %5698 = vmatprep.mubr.f32.mxu0 0.0
      %5699 = vmatmul.mubr.f32.gmra.mxu0 %v5492
      %v5700 = vpop.f32.mrf.mxu0
      %v5701 = vadd.f32 %v5345, %v5700
      %v5702 = vpop.f32.mrf.mxu0
      %5703 = vmatprep.mubr.f32.mxu0 0.0
      %5704 = vmatmul.mubr.f32.gmra.mxu0 %v5495
      %v5705 = vpop.f32.mrf.mxu0
      %v5706 = vadd.f32 %v5350, %v5705
      %v5707 = vpop.f32.mrf.mxu0
      %5708 = vmatprep.mubr.f32.mxu0 0.0
      %5709 = vmatmul.mubr.f32.gmra.mxu0 %v5498
      %v5710 = vpop.f32.mrf.mxu0
      %v5711 = vadd.f32 %v5355, %v5710
      %v5712 = vpop.f32.mrf.mxu0
      %5713 = vmatprep.mubr.f32.mxu0 0.0
      %5714 = vmatmul.mubr.f32.gmra.mxu0 %v5501
      %v5715 = vpop.f32.mrf.mxu0
      %v5716 = vadd.f32 %v5360, %v5715
      %v5717 = vpop.f32.mrf.mxu0
      %5718 = vmatprep.mubr.f32.mxu0 0.0
      %5719 = vmatmul.mubr.f32.gmra.mxu0 %v5504
      %v5720 = vpop.f32.mrf.mxu0
      %v5721 = vadd.f32 %v5365, %v5720
      %v5722 = vpop.f32.mrf.mxu0
      %5723 = vmatprep.mubr.f32.mxu0 0.0
      %5724 = vmatmul.mubr.f32.gmra.mxu0 %v5507
      %v5725 = vpop.f32.mrf.mxu0
      %v5726 = vadd.f32 %v5370, %v5725
      %v5727 = vpop.f32.mrf.mxu0
      %5728 = vmatprep.mubr.f32.mxu0 0.0
      %5729 = vmatmul.mubr.f32.gmra.mxu0 %v5510
      %v5730 = vpop.f32.mrf.mxu0
      %v5731 = vadd.f32 %v5375, %v5730
      %v5732 = vpop.f32.mrf.mxu0
      %5733 = vmatprep.mubr.f32.mxu0 0.0
      %5734 = vmatmul.mubr.f32.gmra.mxu0 %v5513
      %v5735 = vpop.f32.mrf.mxu0
      %v5736 = vadd.f32 %v5380, %v5735
      %v5737 = vpop.f32.mrf.mxu0
      %5738 = vmatprep.mubr.f32.mxu0 0.0
      %5739 = vmatmul.mubr.f32.gmra.mxu0 %v5516
      %v5740 = vpop.f32.mrf.mxu0
      %v5741 = vadd.f32 %v5385, %v5740
      %v5742 = vpop.f32.mrf.mxu0
      %5743 = vmatprep.mubr.f32.mxu0 0.0
      %5744 = vmatmul.mubr.f32.gmra.mxu0 %v5519
      %v5745 = vpop.f32.mrf.mxu0
      %v5746 = vadd.f32 %v5390, %v5745
      %v5747 = vpop.f32.mrf.mxu0
      %5748 = vmatprep.mubr.f32.mxu0 0.0
      %5749 = vmatmul.mubr.f32.gmra.mxu0 %v5522
      %v5750 = vpop.f32.mrf.mxu0
      %v5751 = vadd.f32 %v5395, %v5750
      %v5752 = vpop.f32.mrf.mxu0
      %5753 = vmatprep.mubr.f32.mxu0 0.0
      %5754 = vmatmul.mubr.f32.gmra.mxu0 %v5525
      %v5755 = vpop.f32.mrf.mxu0
      %v5756 = vadd.f32 %v5400, %v5755
      %v5757 = vpop.f32.mrf.mxu0
      %5758 = vmatprep.mubr.f32.mxu0 0.0
      %5759 = vmatmul.mubr.f32.gmra.mxu0 %v5528
      %v5760 = vpop.f32.mrf.mxu0
      %v5761 = vadd.f32 %v5405, %v5760
      %v5762 = vpop.f32.mrf.mxu0
      %5763 = vmatprep.mubr.f32.mxu0 0.0
      %5764 = vmatmul.mubr.f32.gmra.mxu0 %v5531
      %v5765 = vpop.f32.mrf.mxu0
      %v5766 = vadd.f32 %v5410, %v5765
      %v5767 = vpop.f32.mrf.mxu0
      %5768 = vmatprep.mubr.f32.mxu0 0.0
      %5769 = vmatmul.mubr.f32.gmra.mxu0 %v5534
      %v5770 = vpop.f32.mrf.mxu0
      %v5771 = vadd.f32 %v5415, %v5770
      %v5772 = vpop.f32.mrf.mxu0
      %5773 = vmatprep.mubr.f32.mxu0 0.0
      %5774 = vmatmul.mubr.f32.gmra.mxu0 %v5537
      %v5775 = vpop.f32.mrf.mxu0
      %v5776 = vadd.f32 %v5420, %v5775
      %v5777 = vpop.f32.mrf.mxu0
      %5778 = vmatprep.mubr.f32.mxu0 0.0
      %5779 = vmatmul.mubr.f32.gmra.mxu0 %v5540
      %v5780 = vpop.f32.mrf.mxu0
      %v5781 = vadd.f32 %v5425, %v5780
      %v5782 = vpop.f32.mrf.mxu0
      %5783 = vmatprep.mubr.f32.mxu0 0.0
      %5784 = vmatmul.mubr.f32.gmra.mxu0 %v5543
      %v5785 = vpop.f32.mrf.mxu0
      %v5786 = vadd.f32 %v5430, %v5785
      %v5787 = vpop.f32.mrf.mxu0
      %5788 = vmatprep.mubr.f32.mxu0 0.0
      %5789 = vmatmul.mubr.f32.gmra.mxu0 %v5546
      %v5790 = vpop.f32.mrf.mxu0
      %v5791 = vadd.f32 %v5435, %v5790
      %v5792 = vpop.f32.mrf.mxu0
      %5793 = vmatprep.mubr.f32.mxu0 0.0
      %5794 = vmatmul.mubr.f32.gmra.mxu0 %v5549
      %v5795 = vpop.f32.mrf.mxu0
      %v5796 = vadd.f32 %v5440, %v5795
      %v5797 = vpop.f32.mrf.mxu0
      %5798 = vdwg.mxu0
      %v5799 = vld [vmem:[#allocation2 + $0x2] sm:$0xff]
      %v5800 = vld [vmem:[#allocation2 + $0xa] sm:$0xff]
      %v5801 = vld [vmem:[#allocation2 + $0x12] sm:$0xff]
      %v5802 = vld [vmem:[#allocation2 + $0x1a] sm:$0xff]
      %v5803 = vld [vmem:[#allocation2 + $0x22] sm:$0xff]
      %v5804 = vld [vmem:[#allocation2 + $0x2a] sm:$0xff]
      %v5805 = vld [vmem:[#allocation2 + $0x32] sm:$0xff]
      %v5806 = vld [vmem:[#allocation2 + $0x3a] sm:$0xff]
      %v5807 = vld [vmem:[#allocation2 + $0x42] sm:$0xff]
      %v5808 = vld [vmem:[#allocation2 + $0x4a] sm:$0xff]
      %v5809 = vld [vmem:[#allocation2 + $0x52] sm:$0xff]
      %v5810 = vld [vmem:[#allocation2 + $0x5a] sm:$0xff]
      %v5811 = vld [vmem:[#allocation2 + $0x62] sm:$0xff]
      %v5812 = vld [vmem:[#allocation2 + $0x6a] sm:$0xff]
      %v5813 = vld [vmem:[#allocation2 + $0x72] sm:$0xff]
      %v5814 = vld [vmem:[#allocation2 + $0x7a] sm:$0xff]
      %v5815 = vld [vmem:[#allocation2 + $0x82] sm:$0xff]
      %v5816 = vld [vmem:[#allocation2 + $0x8a] sm:$0xff]
      %v5817 = vld [vmem:[#allocation2 + $0x92] sm:$0xff]
      %v5818 = vld [vmem:[#allocation2 + $0x9a] sm:$0xff]
      %v5819 = vld [vmem:[#allocation2 + $0xa2] sm:$0xff]
      %v5820 = vld [vmem:[#allocation2 + $0xaa] sm:$0xff]
      %v5821 = vld [vmem:[#allocation2 + $0xb2] sm:$0xff]
      %v5822 = vld [vmem:[#allocation2 + $0xba] sm:$0xff]
      %v5823 = vld [vmem:[#allocation2 + $0xc2] sm:$0xff]
      %v5824 = vld [vmem:[#allocation2 + $0xca] sm:$0xff]
      %v5825 = vld [vmem:[#allocation2 + $0xd2] sm:$0xff]
      %v5826 = vld [vmem:[#allocation2 + $0xda] sm:$0xff]
      %v5827 = vld [vmem:[#allocation2 + $0xe2] sm:$0xff]
      %v5828 = vld [vmem:[#allocation2 + $0xea] sm:$0xff]
      %v5829 = vld [vmem:[#allocation2 + $0xf2] sm:$0xff]
      %v5830 = vld [vmem:[#allocation2 + $0xfa] sm:$0xff]
      %v5831 = vld [vmem:[#allocation2 + $0x102] sm:$0xff]
      %v5832 = vld [vmem:[#allocation2 + $0x10a] sm:$0xff]
      %v5833 = vld [vmem:[#allocation2 + $0x112] sm:$0xff]
      %v5834 = vld [vmem:[#allocation2 + $0x11a] sm:$0xff]
      %s5835 = scalar_lea.vmem %s3, 16
      %v5836 = vld [vmem:[%s5835] sm:$0x3f]
      %v5838 = vsel %vm4932, %v5799, 0
      %v5841 = vsel %vm4932, %v5800, 0
      %v5844 = vsel %vm4932, %v5801, 0
      %v5847 = vsel %vm4932, %v5802, 0
      %v5850 = vsel %vm4932, %v5803, 0
      %v5853 = vsel %vm4932, %v5804, 0
      %v5856 = vsel %vm4932, %v5805, 0
      %v5859 = vsel %vm4932, %v5806, 0
      %v5862 = vsel %vm4932, %v5807, 0
      %v5865 = vsel %vm4932, %v5808, 0
      %v5868 = vsel %vm4932, %v5809, 0
      %v5871 = vsel %vm4932, %v5810, 0
      %v5874 = vsel %vm4932, %v5811, 0
      %v5877 = vsel %vm4932, %v5812, 0
      %v5880 = vsel %vm4932, %v5813, 0
      %v5883 = vsel %vm4932, %v5814, 0
      %v5886 = vsel %vm4932, %v5815, 0
      %v5889 = vsel %vm4932, %v5816, 0
      %v5892 = vsel %vm4932, %v5817, 0
      %v5895 = vsel %vm4932, %v5818, 0
      %v5898 = vsel %vm4932, %v5819, 0
      %v5901 = vsel %vm4932, %v5820, 0
      %v5904 = vsel %vm4932, %v5821, 0
      %v5907 = vsel %vm4932, %v5822, 0
      %v5910 = vsel %vm4932, %v5823, 0
      %v5913 = vsel %vm4932, %v5824, 0
      %v5916 = vsel %vm4932, %v5825, 0
      %v5919 = vsel %vm4932, %v5826, 0
      %v5922 = vsel %vm4932, %v5827, 0
      %v5925 = vsel %vm4932, %v5828, 0
      %v5928 = vsel %vm4932, %v5829, 0
      %v5931 = vsel %vm4932, %v5830, 0
      %v5934 = vsel %vm4932, %v5831, 0
      %v5937 = vsel %vm4932, %v5832, 0
      %v5940 = vsel %vm4932, %v5833, 0
      %v5943 = vsel %vm4932, %v5834, 0
      %v5946 = vsel %vm5194, %v5836, 0
      %5948 = vmatprep.subr.mxu0 0.0
      %5949 = vmatpush1.msra.mxu0 0.0
      %5950 = vmatprep.subr.mxu0 0.0
      %5951 = vmatpush1.msra.mxu0 0.0
      %5952 = vmatprep.subr.mxu0 0.0
      %5953 = vmatpush1.msra.mxu0 0.0
      %5954 = vmatprep.subr.mxu0 0.0
      %5955 = vmatpush1.msra.mxu0 0.0
      %5956 = vmatprep.subr.mxu0 0.0
      %5957 = vmatpush1.msra.mxu0 0.0
      %5958 = vmatprep.subr.mxu0 0.0
      %5959 = vmatpush1.msra.mxu0 0.0
      %5960 = vmatprep.subr.mxu0 0.0
      %5961 = vmatpush1.msra.mxu0 0.0
      %5962 = vmatprep.subr.mxu0 0.0
      %5963 = vmatpush1.msra.mxu0 0.0
      %5964 = vmatprep.subr.mxu0 0.0
      %5965 = vmatpush1.msra.mxu0 0.0
      %5966 = vmatprep.subr.mxu0 0.0
      %5967 = vmatpush1.msra.mxu0 0.0
      %5968 = vmatprep.subr.mxu0 0.0
      %5969 = vmatpush1.msra.mxu0 0.0
      %5970 = vmatprep.subr.mxu0 0.0
      %5971 = vmatpush1.msra.mxu0 0.0
      %5972 = vmatprep.subr.mxu0 0.0
      %5973 = vmatpush1.msra.mxu0 0.0
      %5974 = vmatprep.subr.mxu0 0.0
      %5975 = vmatpush1.msra.mxu0 0.0
      %5976 = vmatprep.subr.mxu0 0.0
      %5977 = vmatpush1.msra.mxu0 0.0
      %5978 = vmatprep.subr.mxu0 0.0
      %5979 = vmatpush1.msra.mxu0 %v5946
      %5980 = vmatprep.subr.mxu0 0.0
      %5981 = vmatpush2.msra.mxu0 0.0
      %5982 = vmatprep.subr.mxu0 0.0
      %5983 = vmatpush2.msra.mxu0 0.0
      %5984 = vmatprep.subr.mxu0 0.0
      %5985 = vmatpush2.msra.mxu0 0.0
      %5986 = vmatprep.subr.mxu0 0.0
      %5987 = vmatpush2.msra.mxu0 0.0
      %5988 = vmatprep.subr.mxu0 0.0
      %5989 = vmatpush2.msra.mxu0 0.0
      %5990 = vmatprep.subr.mxu0 0.0
      %5991 = vmatpush2.msra.mxu0 0.0
      %5992 = vmatprep.subr.mxu0 0.0
      %5993 = vmatpush2.msra.mxu0 0.0
      %5994 = vmatprep.subr.mxu0 0.0
      %5995 = vmatpush2.msra.mxu0 0.0
      %5996 = vmatprep.subr.mxu0 0.0
      %5997 = vmatpush2.msra.mxu0 0.0
      %5998 = vmatprep.subr.mxu0 0.0
      %5999 = vmatpush2.msra.mxu0 0.0
      %6000 = vmatprep.subr.mxu0 0.0
      %6001 = vmatpush2.msra.mxu0 0.0
      %6002 = vmatprep.subr.mxu0 0.0
      %6003 = vmatpush2.msra.mxu0 0.0
      %6004 = vmatprep.subr.mxu0 0.0
      %6005 = vmatpush2.msra.mxu0 0.0
      %6006 = vmatprep.subr.mxu0 0.0
      %6007 = vmatpush2.msra.mxu0 0.0
      %6008 = vmatprep.subr.mxu0 0.0
      %6009 = vmatpush2.msra.mxu0 0.0
      %6010 = vmatprep.subr.mxu0 0.0
      %6011 = vmatpush2.msra.mxu0 0.0
      %6012 = vmatprep.mubr.f32.mxu0 0.0
      %6013 = vmatmul.mubr.f32.gmra.mxu0 %v5838
      %v6014 = vpop.f32.mrf.mxu0
      %v6015 = vadd.f32 0.0, %v6014
      %v6016 = vpop.f32.mrf.mxu0
      %6017 = vmatprep.mubr.f32.mxu0 0.0
      %6018 = vmatmul.mubr.f32.gmra.mxu0 %v5841
      %v6019 = vpop.f32.mrf.mxu0
      %v6020 = vadd.f32 0.0, %v6019
      %v6021 = vpop.f32.mrf.mxu0
      %6022 = vmatprep.mubr.f32.mxu0 0.0
      %6023 = vmatmul.mubr.f32.gmra.mxu0 %v5844
      %v6024 = vpop.f32.mrf.mxu0
      %v6025 = vadd.f32 0.0, %v6024
      %v6026 = vpop.f32.mrf.mxu0
      %6027 = vmatprep.mubr.f32.mxu0 0.0
      %6028 = vmatmul.mubr.f32.gmra.mxu0 %v5847
      %v6029 = vpop.f32.mrf.mxu0
      %v6030 = vadd.f32 0.0, %v6029
      %v6031 = vpop.f32.mrf.mxu0
      %6032 = vmatprep.mubr.f32.mxu0 0.0
      %6033 = vmatmul.mubr.f32.gmra.mxu0 %v5850
      %v6034 = vpop.f32.mrf.mxu0
      %v6035 = vadd.f32 0.0, %v6034
      %v6036 = vpop.f32.mrf.mxu0
      %6037 = vmatprep.mubr.f32.mxu0 0.0
      %6038 = vmatmul.mubr.f32.gmra.mxu0 %v5853
      %v6039 = vpop.f32.mrf.mxu0
      %v6040 = vadd.f32 0.0, %v6039
      %v6041 = vpop.f32.mrf.mxu0
      %6042 = vmatprep.mubr.f32.mxu0 0.0
      %6043 = vmatmul.mubr.f32.gmra.mxu0 %v5856
      %v6044 = vpop.f32.mrf.mxu0
      %v6045 = vadd.f32 0.0, %v6044
      %v6046 = vpop.f32.mrf.mxu0
      %6047 = vmatprep.mubr.f32.mxu0 0.0
      %6048 = vmatmul.mubr.f32.gmra.mxu0 %v5859
      %v6049 = vpop.f32.mrf.mxu0
      %v6050 = vadd.f32 0.0, %v6049
      %v6051 = vpop.f32.mrf.mxu0
      %6052 = vmatprep.mubr.f32.mxu0 0.0
      %6053 = vmatmul.mubr.f32.gmra.mxu0 %v5862
      %v6054 = vpop.f32.mrf.mxu0
      %v6055 = vadd.f32 0.0, %v6054
      %v6056 = vpop.f32.mrf.mxu0
      %6057 = vmatprep.mubr.f32.mxu0 0.0
      %6058 = vmatmul.mubr.f32.gmra.mxu0 %v5865
      %v6059 = vpop.f32.mrf.mxu0
      %v6060 = vadd.f32 0.0, %v6059
      %v6061 = vpop.f32.mrf.mxu0
      %6062 = vmatprep.mubr.f32.mxu0 0.0
      %6063 = vmatmul.mubr.f32.gmra.mxu0 %v5868
      %v6064 = vpop.f32.mrf.mxu0
      %v6065 = vadd.f32 0.0, %v6064
      %v6066 = vpop.f32.mrf.mxu0
      %6067 = vmatprep.mubr.f32.mxu0 0.0
      %6068 = vmatmul.mubr.f32.gmra.mxu0 %v5871
      %v6069 = vpop.f32.mrf.mxu0
      %v6070 = vadd.f32 0.0, %v6069
      %v6071 = vpop.f32.mrf.mxu0
      %6072 = vmatprep.mubr.f32.mxu0 0.0
      %6073 = vmatmul.mubr.f32.gmra.mxu0 %v5874
      %v6074 = vpop.f32.mrf.mxu0
      %v6075 = vadd.f32 0.0, %v6074
      %v6076 = vpop.f32.mrf.mxu0
      %6077 = vmatprep.mubr.f32.mxu0 0.0
      %6078 = vmatmul.mubr.f32.gmra.mxu0 %v5877
      %v6079 = vpop.f32.mrf.mxu0
      %v6080 = vadd.f32 0.0, %v6079
      %v6081 = vpop.f32.mrf.mxu0
      %6082 = vmatprep.mubr.f32.mxu0 0.0
      %6083 = vmatmul.mubr.f32.gmra.mxu0 %v5880
      %v6084 = vpop.f32.mrf.mxu0
      %v6085 = vadd.f32 0.0, %v6084
      %v6086 = vpop.f32.mrf.mxu0
      %6087 = vmatprep.mubr.f32.mxu0 0.0
      %6088 = vmatmul.mubr.f32.gmra.mxu0 %v5883
      %v6089 = vpop.f32.mrf.mxu0
      %v6090 = vadd.f32 0.0, %v6089
      %v6091 = vpop.f32.mrf.mxu0
      %6092 = vmatprep.mubr.f32.mxu0 0.0
      %6093 = vmatmul.mubr.f32.gmra.mxu0 %v5886
      %v6094 = vpop.f32.mrf.mxu0
      %v6095 = vadd.f32 0.0, %v6094
      %v6096 = vpop.f32.mrf.mxu0
      %6097 = vmatprep.mubr.f32.mxu0 0.0
      %6098 = vmatmul.mubr.f32.gmra.mxu0 %v5889
      %v6099 = vpop.f32.mrf.mxu0
      %v6100 = vadd.f32 0.0, %v6099
      %v6101 = vpop.f32.mrf.mxu0
      %6102 = vmatprep.mubr.f32.mxu0 0.0
      %6103 = vmatmul.mubr.f32.gmra.mxu0 %v5892
      %v6104 = vpop.f32.mrf.mxu0
      %v6105 = vadd.f32 0.0, %v6104
      %v6106 = vpop.f32.mrf.mxu0
      %6107 = vmatprep.mubr.f32.mxu0 0.0
      %6108 = vmatmul.mubr.f32.gmra.mxu0 %v5895
      %v6109 = vpop.f32.mrf.mxu0
      %v6110 = vadd.f32 0.0, %v6109
      %v6111 = vpop.f32.mrf.mxu0
      %6112 = vmatprep.mubr.f32.mxu0 0.0
      %6113 = vmatmul.mubr.f32.gmra.mxu0 %v5898
      %v6114 = vpop.f32.mrf.mxu0
      %v6115 = vadd.f32 0.0, %v6114
      %v6116 = vpop.f32.mrf.mxu0
      %6117 = vmatprep.mubr.f32.mxu0 0.0
      %6118 = vmatmul.mubr.f32.gmra.mxu0 %v5901
      %v6119 = vpop.f32.mrf.mxu0
      %v6120 = vadd.f32 0.0, %v6119
      %v6121 = vpop.f32.mrf.mxu0
      %6122 = vmatprep.mubr.f32.mxu0 0.0
      %6123 = vmatmul.mubr.f32.gmra.mxu0 %v5904
      %v6124 = vpop.f32.mrf.mxu0
      %v6125 = vadd.f32 0.0, %v6124
      %v6126 = vpop.f32.mrf.mxu0
      %6127 = vmatprep.mubr.f32.mxu0 0.0
      %6128 = vmatmul.mubr.f32.gmra.mxu0 %v5907
      %v6129 = vpop.f32.mrf.mxu0
      %v6130 = vadd.f32 0.0, %v6129
      %v6131 = vpop.f32.mrf.mxu0
      %6132 = vmatprep.mubr.f32.mxu0 0.0
      %6133 = vmatmul.mubr.f32.gmra.mxu0 %v5910
      %v6134 = vpop.f32.mrf.mxu0
      %v6135 = vadd.f32 0.0, %v6134
      %v6136 = vpop.f32.mrf.mxu0
      %6137 = vmatprep.mubr.f32.mxu0 0.0
      %6138 = vmatmul.mubr.f32.gmra.mxu0 %v5913
      %v6139 = vpop.f32.mrf.mxu0
      %v6140 = vadd.f32 0.0, %v6139
      %v6141 = vpop.f32.mrf.mxu0
      %6142 = vmatprep.mubr.f32.mxu0 0.0
      %6143 = vmatmul.mubr.f32.gmra.mxu0 %v5916
      %v6144 = vpop.f32.mrf.mxu0
      %v6145 = vadd.f32 0.0, %v6144
      %v6146 = vpop.f32.mrf.mxu0
      %6147 = vmatprep.mubr.f32.mxu0 0.0
      %6148 = vmatmul.mubr.f32.gmra.mxu0 %v5919
      %v6149 = vpop.f32.mrf.mxu0
      %v6150 = vadd.f32 0.0, %v6149
      %v6151 = vpop.f32.mrf.mxu0
      %6152 = vmatprep.mubr.f32.mxu0 0.0
      %6153 = vmatmul.mubr.f32.gmra.mxu0 %v5922
      %v6154 = vpop.f32.mrf.mxu0
      %v6155 = vadd.f32 0.0, %v6154
      %v6156 = vpop.f32.mrf.mxu0
      %6157 = vmatprep.mubr.f32.mxu0 0.0
      %6158 = vmatmul.mubr.f32.gmra.mxu0 %v5925
      %v6159 = vpop.f32.mrf.mxu0
      %v6160 = vadd.f32 0.0, %v6159
      %v6161 = vpop.f32.mrf.mxu0
      %6162 = vmatprep.mubr.f32.mxu0 0.0
      %6163 = vmatmul.mubr.f32.gmra.mxu0 %v5928
      %v6164 = vpop.f32.mrf.mxu0
      %v6165 = vadd.f32 0.0, %v6164
      %v6166 = vpop.f32.mrf.mxu0
      %6167 = vmatprep.mubr.f32.mxu0 0.0
      %6168 = vmatmul.mubr.f32.gmra.mxu0 %v5931
      %v6169 = vpop.f32.mrf.mxu0
      %v6170 = vadd.f32 0.0, %v6169
      %v6171 = vpop.f32.mrf.mxu0
      %6172 = vmatprep.mubr.f32.mxu0 0.0
      %6173 = vmatmul.mubr.f32.gmra.mxu0 %v5934
      %v6174 = vpop.f32.mrf.mxu0
      %v6175 = vadd.f32 0.0, %v6174
      %v6176 = vpop.f32.mrf.mxu0
      %6177 = vmatprep.mubr.f32.mxu0 0.0
      %6178 = vmatmul.mubr.f32.gmra.mxu0 %v5937
      %v6179 = vpop.f32.mrf.mxu0
      %v6180 = vadd.f32 0.0, %v6179
      %v6181 = vpop.f32.mrf.mxu0
      %6182 = vmatprep.mubr.f32.mxu0 0.0
      %6183 = vmatmul.mubr.f32.gmra.mxu0 %v5940
      %v6184 = vpop.f32.mrf.mxu0
      %v6185 = vadd.f32 0.0, %v6184
      %v6186 = vpop.f32.mrf.mxu0
      %6187 = vmatprep.mubr.f32.mxu0 0.0
      %6188 = vmatmul.mubr.f32.gmra.mxu0 %v5943
      %v6189 = vpop.f32.mrf.mxu0
      %v6190 = vadd.f32 0.0, %v6189
      %v6191 = vpop.f32.mrf.mxu0
      %6192 = vdwg.mxu0
      %v6193 = vadd.f32 %v5621, %v6015
      %v6194 = vadd.f32 %v5626, %v6020
      %v6195 = vadd.f32 %v5631, %v6025
      %v6196 = vadd.f32 %v5636, %v6030
      %v6197 = vadd.f32 %v5641, %v6035
      %v6198 = vadd.f32 %v5646, %v6040
      %v6199 = vadd.f32 %v5651, %v6045
      %v6200 = vadd.f32 %v5656, %v6050
      %v6201 = vadd.f32 %v5661, %v6055
      %v6202 = vadd.f32 %v5666, %v6060
      %v6203 = vadd.f32 %v5671, %v6065
      %v6204 = vadd.f32 %v5676, %v6070
      %v6205 = vadd.f32 %v5681, %v6075
      %v6206 = vadd.f32 %v5686, %v6080
      %v6207 = vadd.f32 %v5691, %v6085
      %v6208 = vadd.f32 %v5696, %v6090
      %v6209 = vadd.f32 %v5701, %v6095
      %v6210 = vadd.f32 %v5706, %v6100
      %v6211 = vadd.f32 %v5711, %v6105
      %v6212 = vadd.f32 %v5716, %v6110
      %v6213 = vadd.f32 %v5721, %v6115
      %v6214 = vadd.f32 %v5726, %v6120
      %v6215 = vadd.f32 %v5731, %v6125
      %v6216 = vadd.f32 %v5736, %v6130
      %v6217 = vadd.f32 %v5741, %v6135
      %v6218 = vadd.f32 %v5746, %v6140
      %v6219 = vadd.f32 %v5751, %v6145
      %v6220 = vadd.f32 %v5756, %v6150
      %v6221 = vadd.f32 %v5761, %v6155
      %v6222 = vadd.f32 %v5766, %v6160
      %v6223 = vadd.f32 %v5771, %v6165
      %v6224 = vadd.f32 %v5776, %v6170
      %v6225 = vadd.f32 %v5781, %v6175
      %v6226 = vadd.f32 %v5786, %v6180
      %v6227 = vadd.f32 %v5791, %v6185
      %v6228 = vadd.f32 %v5796, %v6190
      %v6229 = vld [vmem:[#allocation2 + $0x12] sm:$0xff]
      %v6230 = vld [vmem:[#allocation2 + $0x1a] sm:$0xff]
      %v6231 = vld [vmem:[#allocation2 + $0x22] sm:$0xff]
      %v6232 = vld [vmem:[#allocation2 + $0x2a] sm:$0xff]
      %v6233 = vld [vmem:[#allocation2 + $0x32] sm:$0xff]
      %v6234 = vld [vmem:[#allocation2 + $0x3a] sm:$0xff]
      %v6235 = vld [vmem:[#allocation2 + $0x42] sm:$0xff]
      %v6236 = vld [vmem:[#allocation2 + $0x4a] sm:$0xff]
      %v6237 = vld [vmem:[#allocation2 + $0x52] sm:$0xff]
      %v6238 = vld [vmem:[#allocation2 + $0x5a] sm:$0xff]
      %v6239 = vld [vmem:[#allocation2 + $0x62] sm:$0xff]
      %v6240 = vld [vmem:[#allocation2 + $0x6a] sm:$0xff]
      %v6241 = vld [vmem:[#allocation2 + $0x72] sm:$0xff]
      %v6242 = vld [vmem:[#allocation2 + $0x7a] sm:$0xff]
      %v6243 = vld [vmem:[#allocation2 + $0x82] sm:$0xff]
      %v6244 = vld [vmem:[#allocation2 + $0x8a] sm:$0xff]
      %v6245 = vld [vmem:[#allocation2 + $0x92] sm:$0xff]
      %v6246 = vld [vmem:[#allocation2 + $0x9a] sm:$0xff]
      %v6247 = vld [vmem:[#allocation2 + $0xa2] sm:$0xff]
      %v6248 = vld [vmem:[#allocation2 + $0xaa] sm:$0xff]
      %v6249 = vld [vmem:[#allocation2 + $0xb2] sm:$0xff]
      %v6250 = vld [vmem:[#allocation2 + $0xba] sm:$0xff]
      %v6251 = vld [vmem:[#allocation2 + $0xc2] sm:$0xff]
      %v6252 = vld [vmem:[#allocation2 + $0xca] sm:$0xff]
      %v6253 = vld [vmem:[#allocation2 + $0xd2] sm:$0xff]
      %v6254 = vld [vmem:[#allocation2 + $0xda] sm:$0xff]
      %v6255 = vld [vmem:[#allocation2 + $0xe2] sm:$0xff]
      %v6256 = vld [vmem:[#allocation2 + $0xea] sm:$0xff]
      %v6257 = vld [vmem:[#allocation2 + $0xf2] sm:$0xff]
      %v6258 = vld [vmem:[#allocation2 + $0xfa] sm:$0xff]
      %v6259 = vld [vmem:[#allocation2 + $0x102] sm:$0xff]
      %v6260 = vld [vmem:[#allocation2 + $0x10a] sm:$0xff]
      %v6261 = vld [vmem:[#allocation2 + $0x112] sm:$0xff]
      %v6262 = vld [vmem:[#allocation2 + $0x11a] sm:$0xff]
      %v6263 = vld [vmem:[#allocation2 + $0x122] sm:$0xff]
      %v6264 = vld [vmem:[#allocation2 + $0x12a] sm:$0xff]
      %s6265 = scalar_lea.vmem %s3, 24
      %v6266 = vld [vmem:[%s6265] sm:$0x3f]
      %v6268 = vsel %vm4932, %v6229, 0
      %v6271 = vsel %vm4932, %v6230, 0
      %v6274 = vsel %vm4932, %v6231, 0
      %v6277 = vsel %vm4932, %v6232, 0
      %v6280 = vsel %vm4932, %v6233, 0
      %v6283 = vsel %vm4932, %v6234, 0
      %v6286 = vsel %vm4932, %v6235, 0
      %v6289 = vsel %vm4932, %v6236, 0
      %v6292 = vsel %vm4932, %v6237, 0
      %v6295 = vsel %vm4932, %v6238, 0
      %v6298 = vsel %vm4932, %v6239, 0
      %v6301 = vsel %vm4932, %v6240, 0
      %v6304 = vsel %vm4932, %v6241, 0
      %v6307 = vsel %vm4932, %v6242, 0
      %v6310 = vsel %vm4932, %v6243, 0
      %v6313 = vsel %vm4932, %v6244, 0
      %v6316 = vsel %vm4932, %v6245, 0
      %v6319 = vsel %vm4932, %v6246, 0
      %v6322 = vsel %vm4932, %v6247, 0
      %v6325 = vsel %vm4932, %v6248, 0
      %v6328 = vsel %vm4932, %v6249, 0
      %v6331 = vsel %vm4932, %v6250, 0
      %v6334 = vsel %vm4932, %v6251, 0
      %v6337 = vsel %vm4932, %v6252, 0
      %v6340 = vsel %vm4932, %v6253, 0
      %v6343 = vsel %vm4932, %v6254, 0
      %v6346 = vsel %vm4932, %v6255, 0
      %v6349 = vsel %vm4932, %v6256, 0
      %v6352 = vsel %vm4932, %v6257, 0
      %v6355 = vsel %vm4932, %v6258, 0
      %v6358 = vsel %vm4932, %v6259, 0
      %v6361 = vsel %vm4932, %v6260, 0
      %v6364 = vsel %vm4932, %v6261, 0
      %v6367 = vsel %vm4932, %v6262, 0
      %v6370 = vsel %vm4932, %v6263, 0
      %v6373 = vsel %vm4932, %v6264, 0
      %v6376 = vsel %vm5194, %v6266, 0
      %6378 = vmatprep.subr.mxu0 0.0
      %6379 = vmatpush1.msra.mxu0 0.0
      %6380 = vmatprep.subr.mxu0 0.0
      %6381 = vmatpush1.msra.mxu0 0.0
      %6382 = vmatprep.subr.mxu0 0.0
      %6383 = vmatpush1.msra.mxu0 0.0
      %6384 = vmatprep.subr.mxu0 0.0
      %6385 = vmatpush1.msra.mxu0 0.0
      %6386 = vmatprep.subr.mxu0 0.0
      %6387 = vmatpush1.msra.mxu0 0.0
      %6388 = vmatprep.subr.mxu0 0.0
      %6389 = vmatpush1.msra.mxu0 0.0
      %6390 = vmatprep.subr.mxu0 0.0
      %6391 = vmatpush1.msra.mxu0 0.0
      %6392 = vmatprep.subr.mxu0 0.0
      %6393 = vmatpush1.msra.mxu0 0.0
      %6394 = vmatprep.subr.mxu0 0.0
      %6395 = vmatpush1.msra.mxu0 0.0
      %6396 = vmatprep.subr.mxu0 0.0
      %6397 = vmatpush1.msra.mxu0 0.0
      %6398 = vmatprep.subr.mxu0 0.0
      %6399 = vmatpush1.msra.mxu0 0.0
      %6400 = vmatprep.subr.mxu0 0.0
      %6401 = vmatpush1.msra.mxu0 0.0
      %6402 = vmatprep.subr.mxu0 0.0
      %6403 = vmatpush1.msra.mxu0 0.0
      %6404 = vmatprep.subr.mxu0 0.0
      %6405 = vmatpush1.msra.mxu0 0.0
      %6406 = vmatprep.subr.mxu0 0.0
      %6407 = vmatpush1.msra.mxu0 0.0
      %6408 = vmatprep.subr.mxu0 0.0
      %6409 = vmatpush1.msra.mxu0 %v6376
      %6410 = vmatprep.subr.mxu0 0.0
      %6411 = vmatpush2.msra.mxu0 0.0
      %6412 = vmatprep.subr.mxu0 0.0
      %6413 = vmatpush2.msra.mxu0 0.0
      %6414 = vmatprep.subr.mxu0 0.0
      %6415 = vmatpush2.msra.mxu0 0.0
      %6416 = vmatprep.subr.mxu0 0.0
      %6417 = vmatpush2.msra.mxu0 0.0
      %6418 = vmatprep.subr.mxu0 0.0
      %6419 = vmatpush2.msra.mxu0 0.0
      %6420 = vmatprep.subr.mxu0 0.0
      %6421 = vmatpush2.msra.mxu0 0.0
      %6422 = vmatprep.subr.mxu0 0.0
      %6423 = vmatpush2.msra.mxu0 0.0
      %6424 = vmatprep.subr.mxu0 0.0
      %6425 = vmatpush2.msra.mxu0 0.0
      %6426 = vmatprep.subr.mxu0 0.0
      %6427 = vmatpush2.msra.mxu0 0.0
      %6428 = vmatprep.subr.mxu0 0.0
      %6429 = vmatpush2.msra.mxu0 0.0
      %6430 = vmatprep.subr.mxu0 0.0
      %6431 = vmatpush2.msra.mxu0 0.0
      %6432 = vmatprep.subr.mxu0 0.0
      %6433 = vmatpush2.msra.mxu0 0.0
      %6434 = vmatprep.subr.mxu0 0.0
      %6435 = vmatpush2.msra.mxu0 0.0
      %6436 = vmatprep.subr.mxu0 0.0
      %6437 = vmatpush2.msra.mxu0 0.0
      %6438 = vmatprep.subr.mxu0 0.0
      %6439 = vmatpush2.msra.mxu0 0.0
      %6440 = vmatprep.subr.mxu0 0.0
      %6441 = vmatpush2.msra.mxu0 0.0
      %6442 = vmatprep.mubr.f32.mxu0 0.0
      %6443 = vmatmul.mubr.f32.gmra.mxu0 %v6268
      %v6444 = vpop.f32.mrf.mxu0
      %v6445 = vadd.f32 0.0, %v6444
      %v6446 = vpop.f32.mrf.mxu0
      %6447 = vmatprep.mubr.f32.mxu0 0.0
      %6448 = vmatmul.mubr.f32.gmra.mxu0 %v6271
      %v6449 = vpop.f32.mrf.mxu0
      %v6450 = vadd.f32 0.0, %v6449
      %v6451 = vpop.f32.mrf.mxu0
      %6452 = vmatprep.mubr.f32.mxu0 0.0
      %6453 = vmatmul.mubr.f32.gmra.mxu0 %v6274
      %v6454 = vpop.f32.mrf.mxu0
      %v6455 = vadd.f32 0.0, %v6454
      %v6456 = vpop.f32.mrf.mxu0
      %6457 = vmatprep.mubr.f32.mxu0 0.0
      %6458 = vmatmul.mubr.f32.gmra.mxu0 %v6277
      %v6459 = vpop.f32.mrf.mxu0
      %v6460 = vadd.f32 0.0, %v6459
      %v6461 = vpop.f32.mrf.mxu0
      %6462 = vmatprep.mubr.f32.mxu0 0.0
      %6463 = vmatmul.mubr.f32.gmra.mxu0 %v6280
      %v6464 = vpop.f32.mrf.mxu0
      %v6465 = vadd.f32 0.0, %v6464
      %v6466 = vpop.f32.mrf.mxu0
      %6467 = vmatprep.mubr.f32.mxu0 0.0
      %6468 = vmatmul.mubr.f32.gmra.mxu0 %v6283
      %v6469 = vpop.f32.mrf.mxu0
      %v6470 = vadd.f32 0.0, %v6469
      %v6471 = vpop.f32.mrf.mxu0
      %6472 = vmatprep.mubr.f32.mxu0 0.0
      %6473 = vmatmul.mubr.f32.gmra.mxu0 %v6286
      %v6474 = vpop.f32.mrf.mxu0
      %v6475 = vadd.f32 0.0, %v6474
      %v6476 = vpop.f32.mrf.mxu0
      %6477 = vmatprep.mubr.f32.mxu0 0.0
      %6478 = vmatmul.mubr.f32.gmra.mxu0 %v6289
      %v6479 = vpop.f32.mrf.mxu0
      %v6480 = vadd.f32 0.0, %v6479
      %v6481 = vpop.f32.mrf.mxu0
      %6482 = vmatprep.mubr.f32.mxu0 0.0
      %6483 = vmatmul.mubr.f32.gmra.mxu0 %v6292
      %v6484 = vpop.f32.mrf.mxu0
      %v6485 = vadd.f32 0.0, %v6484
      %v6486 = vpop.f32.mrf.mxu0
      %6487 = vmatprep.mubr.f32.mxu0 0.0
      %6488 = vmatmul.mubr.f32.gmra.mxu0 %v6295
      %v6489 = vpop.f32.mrf.mxu0
      %v6490 = vadd.f32 0.0, %v6489
      %v6491 = vpop.f32.mrf.mxu0
      %6492 = vmatprep.mubr.f32.mxu0 0.0
      %6493 = vmatmul.mubr.f32.gmra.mxu0 %v6298
      %v6494 = vpop.f32.mrf.mxu0
      %v6495 = vadd.f32 0.0, %v6494
      %v6496 = vpop.f32.mrf.mxu0
      %6497 = vmatprep.mubr.f32.mxu0 0.0
      %6498 = vmatmul.mubr.f32.gmra.mxu0 %v6301
      %v6499 = vpop.f32.mrf.mxu0
      %v6500 = vadd.f32 0.0, %v6499
      %v6501 = vpop.f32.mrf.mxu0
      %6502 = vmatprep.mubr.f32.mxu0 0.0
      %6503 = vmatmul.mubr.f32.gmra.mxu0 %v6304
      %v6504 = vpop.f32.mrf.mxu0
      %v6505 = vadd.f32 0.0, %v6504
      %v6506 = vpop.f32.mrf.mxu0
      %6507 = vmatprep.mubr.f32.mxu0 0.0
      %6508 = vmatmul.mubr.f32.gmra.mxu0 %v6307
      %v6509 = vpop.f32.mrf.mxu0
      %v6510 = vadd.f32 0.0, %v6509
      %v6511 = vpop.f32.mrf.mxu0
      %6512 = vmatprep.mubr.f32.mxu0 0.0
      %6513 = vmatmul.mubr.f32.gmra.mxu0 %v6310
      %v6514 = vpop.f32.mrf.mxu0
      %v6515 = vadd.f32 0.0, %v6514
      %v6516 = vpop.f32.mrf.mxu0
      %6517 = vmatprep.mubr.f32.mxu0 0.0
      %6518 = vmatmul.mubr.f32.gmra.mxu0 %v6313
      %v6519 = vpop.f32.mrf.mxu0
      %v6520 = vadd.f32 0.0, %v6519
      %v6521 = vpop.f32.mrf.mxu0
      %6522 = vmatprep.mubr.f32.mxu0 0.0
      %6523 = vmatmul.mubr.f32.gmra.mxu0 %v6316
      %v6524 = vpop.f32.mrf.mxu0
      %v6525 = vadd.f32 0.0, %v6524
      %v6526 = vpop.f32.mrf.mxu0
      %6527 = vmatprep.mubr.f32.mxu0 0.0
      %6528 = vmatmul.mubr.f32.gmra.mxu0 %v6319
      %v6529 = vpop.f32.mrf.mxu0
      %v6530 = vadd.f32 0.0, %v6529
      %v6531 = vpop.f32.mrf.mxu0
      %6532 = vmatprep.mubr.f32.mxu0 0.0
      %6533 = vmatmul.mubr.f32.gmra.mxu0 %v6322
      %v6534 = vpop.f32.mrf.mxu0
      %v6535 = vadd.f32 0.0, %v6534
      %v6536 = vpop.f32.mrf.mxu0
      %6537 = vmatprep.mubr.f32.mxu0 0.0
      %6538 = vmatmul.mubr.f32.gmra.mxu0 %v6325
      %v6539 = vpop.f32.mrf.mxu0
      %v6540 = vadd.f32 0.0, %v6539
      %v6541 = vpop.f32.mrf.mxu0
      %6542 = vmatprep.mubr.f32.mxu0 0.0
      %6543 = vmatmul.mubr.f32.gmra.mxu0 %v6328
      %v6544 = vpop.f32.mrf.mxu0
      %v6545 = vadd.f32 0.0, %v6544
      %v6546 = vpop.f32.mrf.mxu0
      %6547 = vmatprep.mubr.f32.mxu0 0.0
      %6548 = vmatmul.mubr.f32.gmra.mxu0 %v6331
      %v6549 = vpop.f32.mrf.mxu0
      %v6550 = vadd.f32 0.0, %v6549
      %v6551 = vpop.f32.mrf.mxu0
      %6552 = vmatprep.mubr.f32.mxu0 0.0
      %6553 = vmatmul.mubr.f32.gmra.mxu0 %v6334
      %v6554 = vpop.f32.mrf.mxu0
      %v6555 = vadd.f32 0.0, %v6554
      %v6556 = vpop.f32.mrf.mxu0
      %6557 = vmatprep.mubr.f32.mxu0 0.0
      %6558 = vmatmul.mubr.f32.gmra.mxu0 %v6337
      %v6559 = vpop.f32.mrf.mxu0
      %v6560 = vadd.f32 0.0, %v6559
      %v6561 = vpop.f32.mrf.mxu0
      %6562 = vmatprep.mubr.f32.mxu0 0.0
      %6563 = vmatmul.mubr.f32.gmra.mxu0 %v6340
      %v6564 = vpop.f32.mrf.mxu0
      %v6565 = vadd.f32 0.0, %v6564
      %v6566 = vpop.f32.mrf.mxu0
      %6567 = vmatprep.mubr.f32.mxu0 0.0
      %6568 = vmatmul.mubr.f32.gmra.mxu0 %v6343
      %v6569 = vpop.f32.mrf.mxu0
      %v6570 = vadd.f32 0.0, %v6569
      %v6571 = vpop.f32.mrf.mxu0
      %6572 = vmatprep.mubr.f32.mxu0 0.0
      %6573 = vmatmul.mubr.f32.gmra.mxu0 %v6346
      %v6574 = vpop.f32.mrf.mxu0
      %v6575 = vadd.f32 0.0, %v6574
      %v6576 = vpop.f32.mrf.mxu0
      %6577 = vmatprep.mubr.f32.mxu0 0.0
      %6578 = vmatmul.mubr.f32.gmra.mxu0 %v6349
      %v6579 = vpop.f32.mrf.mxu0
      %v6580 = vadd.f32 0.0, %v6579
      %v6581 = vpop.f32.mrf.mxu0
      %6582 = vmatprep.mubr.f32.mxu0 0.0
      %6583 = vmatmul.mubr.f32.gmra.mxu0 %v6352
      %v6584 = vpop.f32.mrf.mxu0
      %v6585 = vadd.f32 0.0, %v6584
      %v6586 = vpop.f32.mrf.mxu0
      %6587 = vmatprep.mubr.f32.mxu0 0.0
      %6588 = vmatmul.mubr.f32.gmra.mxu0 %v6355
      %v6589 = vpop.f32.mrf.mxu0
      %v6590 = vadd.f32 0.0, %v6589
      %v6591 = vpop.f32.mrf.mxu0
      %6592 = vmatprep.mubr.f32.mxu0 0.0
      %6593 = vmatmul.mubr.f32.gmra.mxu0 %v6358
      %v6594 = vpop.f32.mrf.mxu0
      %v6595 = vadd.f32 0.0, %v6594
      %v6596 = vpop.f32.mrf.mxu0
      %6597 = vmatprep.mubr.f32.mxu0 0.0
      %6598 = vmatmul.mubr.f32.gmra.mxu0 %v6361
      %v6599 = vpop.f32.mrf.mxu0
      %v6600 = vadd.f32 0.0, %v6599
      %v6601 = vpop.f32.mrf.mxu0
      %6602 = vmatprep.mubr.f32.mxu0 0.0
      %6603 = vmatmul.mubr.f32.gmra.mxu0 %v6364
      %v6604 = vpop.f32.mrf.mxu0
      %v6605 = vadd.f32 0.0, %v6604
      %v6606 = vpop.f32.mrf.mxu0
      %6607 = vmatprep.mubr.f32.mxu0 0.0
      %6608 = vmatmul.mubr.f32.gmra.mxu0 %v6367
      %v6609 = vpop.f32.mrf.mxu0
      %v6610 = vadd.f32 0.0, %v6609
      %v6611 = vpop.f32.mrf.mxu0
      %6612 = vmatprep.mubr.f32.mxu0 0.0
      %6613 = vmatmul.mubr.f32.gmra.mxu0 %v6370
      %v6614 = vpop.f32.mrf.mxu0
      %v6615 = vadd.f32 0.0, %v6614
      %v6616 = vpop.f32.mrf.mxu0
      %6617 = vmatprep.mubr.f32.mxu0 0.0
      %6618 = vmatmul.mubr.f32.gmra.mxu0 %v6373
      %v6619 = vpop.f32.mrf.mxu0
      %v6620 = vadd.f32 0.0, %v6619
      %v6621 = vpop.f32.mrf.mxu0
      %6622 = vdwg.mxu0
      %v6623 = vadd.f32 %v6193, %v6445
      %v6624 = vadd.f32 %v6194, %v6450
      %v6625 = vadd.f32 %v6195, %v6455
      %v6626 = vadd.f32 %v6196, %v6460
      %v6627 = vadd.f32 %v6197, %v6465
      %v6628 = vadd.f32 %v6198, %v6470
      %v6629 = vadd.f32 %v6199, %v6475
      %v6630 = vadd.f32 %v6200, %v6480
      %v6631 = vadd.f32 %v6201, %v6485
      %v6632 = vadd.f32 %v6202, %v6490
      %v6633 = vadd.f32 %v6203, %v6495
      %v6634 = vadd.f32 %v6204, %v6500
      %v6635 = vadd.f32 %v6205, %v6505
      %v6636 = vadd.f32 %v6206, %v6510
      %v6637 = vadd.f32 %v6207, %v6515
      %v6638 = vadd.f32 %v6208, %v6520
      %v6639 = vadd.f32 %v6209, %v6525
      %v6640 = vadd.f32 %v6210, %v6530
      %v6641 = vadd.f32 %v6211, %v6535
      %v6642 = vadd.f32 %v6212, %v6540
      %v6643 = vadd.f32 %v6213, %v6545
      %v6644 = vadd.f32 %v6214, %v6550
      %v6645 = vadd.f32 %v6215, %v6555
      %v6646 = vadd.f32 %v6216, %v6560
      %v6647 = vadd.f32 %v6217, %v6565
      %v6648 = vadd.f32 %v6218, %v6570
      %v6649 = vadd.f32 %v6219, %v6575
      %v6650 = vadd.f32 %v6220, %v6580
      %v6651 = vadd.f32 %v6221, %v6585
      %v6652 = vadd.f32 %v6222, %v6590
      %v6653 = vadd.f32 %v6223, %v6595
      %v6654 = vadd.f32 %v6224, %v6600
      %v6655 = vadd.f32 %v6225, %v6605
      %v6656 = vadd.f32 %v6226, %v6610
      %v6657 = vadd.f32 %v6227, %v6615
      %v6658 = vadd.f32 %v6228, %v6620
      %v6659 = vld [vmem:[#allocation2 + $0x13] sm:$0xff]
      %v6660 = vld [vmem:[#allocation2 + $0x1b] sm:$0xff]
      %v6661 = vld [vmem:[#allocation2 + $0x23] sm:$0xff]
      %v6662 = vld [vmem:[#allocation2 + $0x2b] sm:$0xff]
      %v6663 = vld [vmem:[#allocation2 + $0x33] sm:$0xff]
      %v6664 = vld [vmem:[#allocation2 + $0x3b] sm:$0xff]
      %v6665 = vld [vmem:[#allocation2 + $0x43] sm:$0xff]
      %v6666 = vld [vmem:[#allocation2 + $0x4b] sm:$0xff]
      %v6667 = vld [vmem:[#allocation2 + $0x53] sm:$0xff]
      %v6668 = vld [vmem:[#allocation2 + $0x5b] sm:$0xff]
      %v6669 = vld [vmem:[#allocation2 + $0x63] sm:$0xff]
      %v6670 = vld [vmem:[#allocation2 + $0x6b] sm:$0xff]
      %v6671 = vld [vmem:[#allocation2 + $0x73] sm:$0xff]
      %v6672 = vld [vmem:[#allocation2 + $0x7b] sm:$0xff]
      %v6673 = vld [vmem:[#allocation2 + $0x83] sm:$0xff]
      %v6674 = vld [vmem:[#allocation2 + $0x8b] sm:$0xff]
      %v6675 = vld [vmem:[#allocation2 + $0x93] sm:$0xff]
      %v6676 = vld [vmem:[#allocation2 + $0x9b] sm:$0xff]
      %v6677 = vld [vmem:[#allocation2 + $0xa3] sm:$0xff]
      %v6678 = vld [vmem:[#allocation2 + $0xab] sm:$0xff]
      %v6679 = vld [vmem:[#allocation2 + $0xb3] sm:$0xff]
      %v6680 = vld [vmem:[#allocation2 + $0xbb] sm:$0xff]
      %v6681 = vld [vmem:[#allocation2 + $0xc3] sm:$0xff]
      %v6682 = vld [vmem:[#allocation2 + $0xcb] sm:$0xff]
      %v6683 = vld [vmem:[#allocation2 + $0xd3] sm:$0xff]
      %v6684 = vld [vmem:[#allocation2 + $0xdb] sm:$0xff]
      %v6685 = vld [vmem:[#allocation2 + $0xe3] sm:$0xff]
      %v6686 = vld [vmem:[#allocation2 + $0xeb] sm:$0xff]
      %v6687 = vld [vmem:[#allocation2 + $0xf3] sm:$0xff]
      %v6688 = vld [vmem:[#allocation2 + $0xfb] sm:$0xff]
      %v6689 = vld [vmem:[#allocation2 + $0x103] sm:$0xff]
      %v6690 = vld [vmem:[#allocation2 + $0x10b] sm:$0xff]
      %v6691 = vld [vmem:[#allocation2 + $0x113] sm:$0xff]
      %v6692 = vld [vmem:[#allocation2 + $0x11b] sm:$0xff]
      %v6693 = vld [vmem:[#allocation2 + $0x123] sm:$0xff]
      %v6694 = vld [vmem:[#allocation2 + $0x12b] sm:$0xff]
      %s6695 = scalar_lea.vmem %s3, 32
      %v6696 = vld [vmem:[%s6695] sm:$0x3f]
      %v6698 = vsel %vm4932, %v6659, 0
      %v6701 = vsel %vm4932, %v6660, 0
      %v6704 = vsel %vm4932, %v6661, 0
      %v6707 = vsel %vm4932, %v6662, 0
      %v6710 = vsel %vm4932, %v6663, 0
      %v6713 = vsel %vm4932, %v6664, 0
      %v6716 = vsel %vm4932, %v6665, 0
      %v6719 = vsel %vm4932, %v6666, 0
      %v6722 = vsel %vm4932, %v6667, 0
      %v6725 = vsel %vm4932, %v6668, 0
      %v6728 = vsel %vm4932, %v6669, 0
      %v6731 = vsel %vm4932, %v6670, 0
      %v6734 = vsel %vm4932, %v6671, 0
      %v6737 = vsel %vm4932, %v6672, 0
      %v6740 = vsel %vm4932, %v6673, 0
      %v6743 = vsel %vm4932, %v6674, 0
      %v6746 = vsel %vm4932, %v6675, 0
      %v6749 = vsel %vm4932, %v6676, 0
      %v6752 = vsel %vm4932, %v6677, 0
      %v6755 = vsel %vm4932, %v6678, 0
      %v6758 = vsel %vm4932, %v6679, 0
      %v6761 = vsel %vm4932, %v6680, 0
      %v6764 = vsel %vm4932, %v6681, 0
      %v6767 = vsel %vm4932, %v6682, 0
      %v6770 = vsel %vm4932, %v6683, 0
      %v6773 = vsel %vm4932, %v6684, 0
      %v6776 = vsel %vm4932, %v6685, 0
      %v6779 = vsel %vm4932, %v6686, 0
      %v6782 = vsel %vm4932, %v6687, 0
      %v6785 = vsel %vm4932, %v6688, 0
      %v6788 = vsel %vm4932, %v6689, 0
      %v6791 = vsel %vm4932, %v6690, 0
      %v6794 = vsel %vm4932, %v6691, 0
      %v6797 = vsel %vm4932, %v6692, 0
      %v6800 = vsel %vm4932, %v6693, 0
      %v6803 = vsel %vm4932, %v6694, 0
      %v6806 = vsel %vm5194, %v6696, 0
      %6808 = vmatprep.subr.mxu0 0.0
      %6809 = vmatpush1.msra.mxu0 0.0
      %6810 = vmatprep.subr.mxu0 0.0
      %6811 = vmatpush1.msra.mxu0 0.0
      %6812 = vmatprep.subr.mxu0 0.0
      %6813 = vmatpush1.msra.mxu0 0.0
      %6814 = vmatprep.subr.mxu0 0.0
      %6815 = vmatpush1.msra.mxu0 0.0
      %6816 = vmatprep.subr.mxu0 0.0
      %6817 = vmatpush1.msra.mxu0 0.0
      %6818 = vmatprep.subr.mxu0 0.0
      %6819 = vmatpush1.msra.mxu0 0.0
      %6820 = vmatprep.subr.mxu0 0.0
      %6821 = vmatpush1.msra.mxu0 0.0
      %6822 = vmatprep.subr.mxu0 0.0
      %6823 = vmatpush1.msra.mxu0 0.0
      %6824 = vmatprep.subr.mxu0 0.0
      %6825 = vmatpush1.msra.mxu0 0.0
      %6826 = vmatprep.subr.mxu0 0.0
      %6827 = vmatpush1.msra.mxu0 0.0
      %6828 = vmatprep.subr.mxu0 0.0
      %6829 = vmatpush1.msra.mxu0 0.0
      %6830 = vmatprep.subr.mxu0 0.0
      %6831 = vmatpush1.msra.mxu0 0.0
      %6832 = vmatprep.subr.mxu0 0.0
      %6833 = vmatpush1.msra.mxu0 0.0
      %6834 = vmatprep.subr.mxu0 0.0
      %6835 = vmatpush1.msra.mxu0 0.0
      %6836 = vmatprep.subr.mxu0 0.0
      %6837 = vmatpush1.msra.mxu0 0.0
      %6838 = vmatprep.subr.mxu0 0.0
      %6839 = vmatpush1.msra.mxu0 %v6806
      %6840 = vmatprep.subr.mxu0 0.0
      %6841 = vmatpush2.msra.mxu0 0.0
      %6842 = vmatprep.subr.mxu0 0.0
      %6843 = vmatpush2.msra.mxu0 0.0
      %6844 = vmatprep.subr.mxu0 0.0
      %6845 = vmatpush2.msra.mxu0 0.0
      %6846 = vmatprep.subr.mxu0 0.0
      %6847 = vmatpush2.msra.mxu0 0.0
      %6848 = vmatprep.subr.mxu0 0.0
      %6849 = vmatpush2.msra.mxu0 0.0
      %6850 = vmatprep.subr.mxu0 0.0
      %6851 = vmatpush2.msra.mxu0 0.0
      %6852 = vmatprep.subr.mxu0 0.0
      %6853 = vmatpush2.msra.mxu0 0.0
      %6854 = vmatprep.subr.mxu0 0.0
      %6855 = vmatpush2.msra.mxu0 0.0
      %6856 = vmatprep.subr.mxu0 0.0
      %6857 = vmatpush2.msra.mxu0 0.0
      %6858 = vmatprep.subr.mxu0 0.0
      %6859 = vmatpush2.msra.mxu0 0.0
      %6860 = vmatprep.subr.mxu0 0.0
      %6861 = vmatpush2.msra.mxu0 0.0
      %6862 = vmatprep.subr.mxu0 0.0
      %6863 = vmatpush2.msra.mxu0 0.0
      %6864 = vmatprep.subr.mxu0 0.0
      %6865 = vmatpush2.msra.mxu0 0.0
      %6866 = vmatprep.subr.mxu0 0.0
      %6867 = vmatpush2.msra.mxu0 0.0
      %6868 = vmatprep.subr.mxu0 0.0
      %6869 = vmatpush2.msra.mxu0 0.0
      %6870 = vmatprep.subr.mxu0 0.0
      %6871 = vmatpush2.msra.mxu0 0.0
      %6872 = vmatprep.mubr.f32.mxu0 0.0
      %6873 = vmatmul.mubr.f32.gmra.mxu0 %v6698
      %v6874 = vpop.f32.mrf.mxu0
      %v6875 = vadd.f32 0.0, %v6874
      %v6876 = vpop.f32.mrf.mxu0
      %6877 = vmatprep.mubr.f32.mxu0 0.0
      %6878 = vmatmul.mubr.f32.gmra.mxu0 %v6701
      %v6879 = vpop.f32.mrf.mxu0
      %v6880 = vadd.f32 0.0, %v6879
      %v6881 = vpop.f32.mrf.mxu0
      %6882 = vmatprep.mubr.f32.mxu0 0.0
      %6883 = vmatmul.mubr.f32.gmra.mxu0 %v6704
      %v6884 = vpop.f32.mrf.mxu0
      %v6885 = vadd.f32 0.0, %v6884
      %v6886 = vpop.f32.mrf.mxu0
      %6887 = vmatprep.mubr.f32.mxu0 0.0
      %6888 = vmatmul.mubr.f32.gmra.mxu0 %v6707
      %v6889 = vpop.f32.mrf.mxu0
      %v6890 = vadd.f32 0.0, %v6889
      %v6891 = vpop.f32.mrf.mxu0
      %6892 = vmatprep.mubr.f32.mxu0 0.0
      %6893 = vmatmul.mubr.f32.gmra.mxu0 %v6710
      %v6894 = vpop.f32.mrf.mxu0
      %v6895 = vadd.f32 0.0, %v6894
      %v6896 = vpop.f32.mrf.mxu0
      %6897 = vmatprep.mubr.f32.mxu0 0.0
      %6898 = vmatmul.mubr.f32.gmra.mxu0 %v6713
      %v6899 = vpop.f32.mrf.mxu0
      %v6900 = vadd.f32 0.0, %v6899
      %v6901 = vpop.f32.mrf.mxu0
      %6902 = vmatprep.mubr.f32.mxu0 0.0
      %6903 = vmatmul.mubr.f32.gmra.mxu0 %v6716
      %v6904 = vpop.f32.mrf.mxu0
      %v6905 = vadd.f32 0.0, %v6904
      %v6906 = vpop.f32.mrf.mxu0
      %6907 = vmatprep.mubr.f32.mxu0 0.0
      %6908 = vmatmul.mubr.f32.gmra.mxu0 %v6719
      %v6909 = vpop.f32.mrf.mxu0
      %v6910 = vadd.f32 0.0, %v6909
      %v6911 = vpop.f32.mrf.mxu0
      %6912 = vmatprep.mubr.f32.mxu0 0.0
      %6913 = vmatmul.mubr.f32.gmra.mxu0 %v6722
      %v6914 = vpop.f32.mrf.mxu0
      %v6915 = vadd.f32 0.0, %v6914
      %v6916 = vpop.f32.mrf.mxu0
      %6917 = vmatprep.mubr.f32.mxu0 0.0
      %6918 = vmatmul.mubr.f32.gmra.mxu0 %v6725
      %v6919 = vpop.f32.mrf.mxu0
      %v6920 = vadd.f32 0.0, %v6919
      %v6921 = vpop.f32.mrf.mxu0
      %6922 = vmatprep.mubr.f32.mxu0 0.0
      %6923 = vmatmul.mubr.f32.gmra.mxu0 %v6728
      %v6924 = vpop.f32.mrf.mxu0
      %v6925 = vadd.f32 0.0, %v6924
      %v6926 = vpop.f32.mrf.mxu0
      %6927 = vmatprep.mubr.f32.mxu0 0.0
      %6928 = vmatmul.mubr.f32.gmra.mxu0 %v6731
      %v6929 = vpop.f32.mrf.mxu0
      %v6930 = vadd.f32 0.0, %v6929
      %v6931 = vpop.f32.mrf.mxu0
      %6932 = vmatprep.mubr.f32.mxu0 0.0
      %6933 = vmatmul.mubr.f32.gmra.mxu0 %v6734
      %v6934 = vpop.f32.mrf.mxu0
      %v6935 = vadd.f32 0.0, %v6934
      %v6936 = vpop.f32.mrf.mxu0
      %6937 = vmatprep.mubr.f32.mxu0 0.0
      %6938 = vmatmul.mubr.f32.gmra.mxu0 %v6737
      %v6939 = vpop.f32.mrf.mxu0
      %v6940 = vadd.f32 0.0, %v6939
      %v6941 = vpop.f32.mrf.mxu0
      %6942 = vmatprep.mubr.f32.mxu0 0.0
      %6943 = vmatmul.mubr.f32.gmra.mxu0 %v6740
      %v6944 = vpop.f32.mrf.mxu0
      %v6945 = vadd.f32 0.0, %v6944
      %v6946 = vpop.f32.mrf.mxu0
      %6947 = vmatprep.mubr.f32.mxu0 0.0
      %6948 = vmatmul.mubr.f32.gmra.mxu0 %v6743
      %v6949 = vpop.f32.mrf.mxu0
      %v6950 = vadd.f32 0.0, %v6949
      %v6951 = vpop.f32.mrf.mxu0
      %6952 = vmatprep.mubr.f32.mxu0 0.0
      %6953 = vmatmul.mubr.f32.gmra.mxu0 %v6746
      %v6954 = vpop.f32.mrf.mxu0
      %v6955 = vadd.f32 0.0, %v6954
      %v6956 = vpop.f32.mrf.mxu0
      %6957 = vmatprep.mubr.f32.mxu0 0.0
      %6958 = vmatmul.mubr.f32.gmra.mxu0 %v6749
      %v6959 = vpop.f32.mrf.mxu0
      %v6960 = vadd.f32 0.0, %v6959
      %v6961 = vpop.f32.mrf.mxu0
      %6962 = vmatprep.mubr.f32.mxu0 0.0
      %6963 = vmatmul.mubr.f32.gmra.mxu0 %v6752
      %v6964 = vpop.f32.mrf.mxu0
      %v6965 = vadd.f32 0.0, %v6964
      %v6966 = vpop.f32.mrf.mxu0
      %6967 = vmatprep.mubr.f32.mxu0 0.0
      %6968 = vmatmul.mubr.f32.gmra.mxu0 %v6755
      %v6969 = vpop.f32.mrf.mxu0
      %v6970 = vadd.f32 0.0, %v6969
      %v6971 = vpop.f32.mrf.mxu0
      %6972 = vmatprep.mubr.f32.mxu0 0.0
      %6973 = vmatmul.mubr.f32.gmra.mxu0 %v6758
      %v6974 = vpop.f32.mrf.mxu0
      %v6975 = vadd.f32 0.0, %v6974
      %v6976 = vpop.f32.mrf.mxu0
      %6977 = vmatprep.mubr.f32.mxu0 0.0
      %6978 = vmatmul.mubr.f32.gmra.mxu0 %v6761
      %v6979 = vpop.f32.mrf.mxu0
      %v6980 = vadd.f32 0.0, %v6979
      %v6981 = vpop.f32.mrf.mxu0
      %6982 = vmatprep.mubr.f32.mxu0 0.0
      %6983 = vmatmul.mubr.f32.gmra.mxu0 %v6764
      %v6984 = vpop.f32.mrf.mxu0
      %v6985 = vadd.f32 0.0, %v6984
      %v6986 = vpop.f32.mrf.mxu0
      %6987 = vmatprep.mubr.f32.mxu0 0.0
      %6988 = vmatmul.mubr.f32.gmra.mxu0 %v6767
      %v6989 = vpop.f32.mrf.mxu0
      %v6990 = vadd.f32 0.0, %v6989
      %v6991 = vpop.f32.mrf.mxu0
      %6992 = vmatprep.mubr.f32.mxu0 0.0
      %6993 = vmatmul.mubr.f32.gmra.mxu0 %v6770
      %v6994 = vpop.f32.mrf.mxu0
      %v6995 = vadd.f32 0.0, %v6994
      %v6996 = vpop.f32.mrf.mxu0
      %6997 = vmatprep.mubr.f32.mxu0 0.0
      %6998 = vmatmul.mubr.f32.gmra.mxu0 %v6773
      %v6999 = vpop.f32.mrf.mxu0
      %v7000 = vadd.f32 0.0, %v6999
      %v7001 = vpop.f32.mrf.mxu0
      %7002 = vmatprep.mubr.f32.mxu0 0.0
      %7003 = vmatmul.mubr.f32.gmra.mxu0 %v6776
      %v7004 = vpop.f32.mrf.mxu0
      %v7005 = vadd.f32 0.0, %v7004
      %v7006 = vpop.f32.mrf.mxu0
      %7007 = vmatprep.mubr.f32.mxu0 0.0
      %7008 = vmatmul.mubr.f32.gmra.mxu0 %v6779
      %v7009 = vpop.f32.mrf.mxu0
      %v7010 = vadd.f32 0.0, %v7009
      %v7011 = vpop.f32.mrf.mxu0
      %7012 = vmatprep.mubr.f32.mxu0 0.0
      %7013 = vmatmul.mubr.f32.gmra.mxu0 %v6782
      %v7014 = vpop.f32.mrf.mxu0
      %v7015 = vadd.f32 0.0, %v7014
      %v7016 = vpop.f32.mrf.mxu0
      %7017 = vmatprep.mubr.f32.mxu0 0.0
      %7018 = vmatmul.mubr.f32.gmra.mxu0 %v6785
      %v7019 = vpop.f32.mrf.mxu0
      %v7020 = vadd.f32 0.0, %v7019
      %v7021 = vpop.f32.mrf.mxu0
      %7022 = vmatprep.mubr.f32.mxu0 0.0
      %7023 = vmatmul.mubr.f32.gmra.mxu0 %v6788
      %v7024 = vpop.f32.mrf.mxu0
      %v7025 = vadd.f32 0.0, %v7024
      %v7026 = vpop.f32.mrf.mxu0
      %7027 = vmatprep.mubr.f32.mxu0 0.0
      %7028 = vmatmul.mubr.f32.gmra.mxu0 %v6791
      %v7029 = vpop.f32.mrf.mxu0
      %v7030 = vadd.f32 0.0, %v7029
      %v7031 = vpop.f32.mrf.mxu0
      %7032 = vmatprep.mubr.f32.mxu0 0.0
      %7033 = vmatmul.mubr.f32.gmra.mxu0 %v6794
      %v7034 = vpop.f32.mrf.mxu0
      %v7035 = vadd.f32 0.0, %v7034
      %v7036 = vpop.f32.mrf.mxu0
      %7037 = vmatprep.mubr.f32.mxu0 0.0
      %7038 = vmatmul.mubr.f32.gmra.mxu0 %v6797
      %v7039 = vpop.f32.mrf.mxu0
      %v7040 = vadd.f32 0.0, %v7039
      %v7041 = vpop.f32.mrf.mxu0
      %7042 = vmatprep.mubr.f32.mxu0 0.0
      %7043 = vmatmul.mubr.f32.gmra.mxu0 %v6800
      %v7044 = vpop.f32.mrf.mxu0
      %v7045 = vadd.f32 0.0, %v7044
      %v7046 = vpop.f32.mrf.mxu0
      %7047 = vmatprep.mubr.f32.mxu0 0.0
      %7048 = vmatmul.mubr.f32.gmra.mxu0 %v6803
      %v7049 = vpop.f32.mrf.mxu0
      %v7050 = vadd.f32 0.0, %v7049
      %v7051 = vpop.f32.mrf.mxu0
      %7052 = vdwg.mxu0
      %v7053 = vadd.f32 %v6623, %v6875
      %v7054 = vadd.f32 %v6624, %v6880
      %v7055 = vadd.f32 %v6625, %v6885
      %v7056 = vadd.f32 %v6626, %v6890
      %v7057 = vadd.f32 %v6627, %v6895
      %v7058 = vadd.f32 %v6628, %v6900
      %v7059 = vadd.f32 %v6629, %v6905
      %v7060 = vadd.f32 %v6630, %v6910
      %v7061 = vadd.f32 %v6631, %v6915
      %v7062 = vadd.f32 %v6632, %v6920
      %v7063 = vadd.f32 %v6633, %v6925
      %v7064 = vadd.f32 %v6634, %v6930
      %v7065 = vadd.f32 %v6635, %v6935
      %v7066 = vadd.f32 %v6636, %v6940
      %v7067 = vadd.f32 %v6637, %v6945
      %v7068 = vadd.f32 %v6638, %v6950
      %v7069 = vadd.f32 %v6639, %v6955
      %v7070 = vadd.f32 %v6640, %v6960
      %v7071 = vadd.f32 %v6641, %v6965
      %v7072 = vadd.f32 %v6642, %v6970
      %v7073 = vadd.f32 %v6643, %v6975
      %v7074 = vadd.f32 %v6644, %v6980
      %v7075 = vadd.f32 %v6645, %v6985
      %v7076 = vadd.f32 %v6646, %v6990
      %v7077 = vadd.f32 %v6647, %v6995
      %v7078 = vadd.f32 %v6648, %v7000
      %v7079 = vadd.f32 %v6649, %v7005
      %v7080 = vadd.f32 %v6650, %v7010
      %v7081 = vadd.f32 %v6651, %v7015
      %v7082 = vadd.f32 %v6652, %v7020
      %v7083 = vadd.f32 %v6653, %v7025
      %v7084 = vadd.f32 %v6654, %v7030
      %v7085 = vadd.f32 %v6655, %v7035
      %v7086 = vadd.f32 %v6656, %v7040
      %v7087 = vadd.f32 %v6657, %v7045
      %v7088 = vadd.f32 %v6658, %v7050
      %v7089 = vld [vmem:[#allocation2 + $0x14] sm:$0xff]
      %v7090 = vld [vmem:[#allocation2 + $0x1c] sm:$0xff]
      %v7091 = vld [vmem:[#allocation2 + $0x24] sm:$0xff]
      %v7092 = vld [vmem:[#allocation2 + $0x2c] sm:$0xff]
      %v7093 = vld [vmem:[#allocation2 + $0x34] sm:$0xff]
      %v7094 = vld [vmem:[#allocation2 + $0x3c] sm:$0xff]
      %v7095 = vld [vmem:[#allocation2 + $0x44] sm:$0xff]
      %v7096 = vld [vmem:[#allocation2 + $0x4c] sm:$0xff]
      %v7097 = vld [vmem:[#allocation2 + $0x54] sm:$0xff]
      %v7098 = vld [vmem:[#allocation2 + $0x5c] sm:$0xff]
      %v7099 = vld [vmem:[#allocation2 + $0x64] sm:$0xff]
      %v7100 = vld [vmem:[#allocation2 + $0x6c] sm:$0xff]
      %v7101 = vld [vmem:[#allocation2 + $0x74] sm:$0xff]
      %v7102 = vld [vmem:[#allocation2 + $0x7c] sm:$0xff]
      %v7103 = vld [vmem:[#allocation2 + $0x84] sm:$0xff]
      %v7104 = vld [vmem:[#allocation2 + $0x8c] sm:$0xff]
      %v7105 = vld [vmem:[#allocation2 + $0x94] sm:$0xff]
      %v7106 = vld [vmem:[#allocation2 + $0x9c] sm:$0xff]
      %v7107 = vld [vmem:[#allocation2 + $0xa4] sm:$0xff]
      %v7108 = vld [vmem:[#allocation2 + $0xac] sm:$0xff]
      %v7109 = vld [vmem:[#allocation2 + $0xb4] sm:$0xff]
      %v7110 = vld [vmem:[#allocation2 + $0xbc] sm:$0xff]
      %v7111 = vld [vmem:[#allocation2 + $0xc4] sm:$0xff]
      %v7112 = vld [vmem:[#allocation2 + $0xcc] sm:$0xff]
      %v7113 = vld [vmem:[#allocation2 + $0xd4] sm:$0xff]
      %v7114 = vld [vmem:[#allocation2 + $0xdc] sm:$0xff]
      %v7115 = vld [vmem:[#allocation2 + $0xe4] sm:$0xff]
      %v7116 = vld [vmem:[#allocation2 + $0xec] sm:$0xff]
      %v7117 = vld [vmem:[#allocation2 + $0xf4] sm:$0xff]
      %v7118 = vld [vmem:[#allocation2 + $0xfc] sm:$0xff]
      %v7119 = vld [vmem:[#allocation2 + $0x104] sm:$0xff]
      %v7120 = vld [vmem:[#allocation2 + $0x10c] sm:$0xff]
      %v7121 = vld [vmem:[#allocation2 + $0x114] sm:$0xff]
      %v7122 = vld [vmem:[#allocation2 + $0x11c] sm:$0xff]
      %v7123 = vld [vmem:[#allocation2 + $0x124] sm:$0xff]
      %v7124 = vld [vmem:[#allocation2 + $0x12c] sm:$0xff]
      %s7125 = scalar_lea.vmem %s3, 40
      %v7126 = vld [vmem:[%s7125] sm:$0x3f]
      %v7128 = vsel %vm4932, %v7089, 0
      %v7131 = vsel %vm4932, %v7090, 0
      %v7134 = vsel %vm4932, %v7091, 0
      %v7137 = vsel %vm4932, %v7092, 0
      %v7140 = vsel %vm4932, %v7093, 0
      %v7143 = vsel %vm4932, %v7094, 0
      %v7146 = vsel %vm4932, %v7095, 0
      %v7149 = vsel %vm4932, %v7096, 0
      %v7152 = vsel %vm4932, %v7097, 0
      %v7155 = vsel %vm4932, %v7098, 0
      %v7158 = vsel %vm4932, %v7099, 0
      %v7161 = vsel %vm4932, %v7100, 0
      %v7164 = vsel %vm4932, %v7101, 0
      %v7167 = vsel %vm4932, %v7102, 0
      %v7170 = vsel %vm4932, %v7103, 0
      %v7173 = vsel %vm4932, %v7104, 0
      %v7176 = vsel %vm4932, %v7105, 0
      %v7179 = vsel %vm4932, %v7106, 0
      %v7182 = vsel %vm4932, %v7107, 0
      %v7185 = vsel %vm4932, %v7108, 0
      %v7188 = vsel %vm4932, %v7109, 0
      %v7191 = vsel %vm4932, %v7110, 0
      %v7194 = vsel %vm4932, %v7111, 0
      %v7197 = vsel %vm4932, %v7112, 0
      %v7200 = vsel %vm4932, %v7113, 0
      %v7203 = vsel %vm4932, %v7114, 0
      %v7206 = vsel %vm4932, %v7115, 0
      %v7209 = vsel %vm4932, %v7116, 0
      %v7212 = vsel %vm4932, %v7117, 0
      %v7215 = vsel %vm4932, %v7118, 0
      %v7218 = vsel %vm4932, %v7119, 0
      %v7221 = vsel %vm4932, %v7120, 0
      %v7224 = vsel %vm4932, %v7121, 0
      %v7227 = vsel %vm4932, %v7122, 0
      %v7230 = vsel %vm4932, %v7123, 0
      %v7233 = vsel %vm4932, %v7124, 0
      %v7236 = vsel %vm5194, %v7126, 0
      %7238 = vmatprep.subr.mxu0 0.0
      %7239 = vmatpush1.msra.mxu0 0.0
      %7240 = vmatprep.subr.mxu0 0.0
      %7241 = vmatpush1.msra.mxu0 0.0
      %7242 = vmatprep.subr.mxu0 0.0
      %7243 = vmatpush1.msra.mxu0 0.0
      %7244 = vmatprep.subr.mxu0 0.0
      %7245 = vmatpush1.msra.mxu0 0.0
      %7246 = vmatprep.subr.mxu0 0.0
      %7247 = vmatpush1.msra.mxu0 0.0
      %7248 = vmatprep.subr.mxu0 0.0
      %7249 = vmatpush1.msra.mxu0 0.0
      %7250 = vmatprep.subr.mxu0 0.0
      %7251 = vmatpush1.msra.mxu0 0.0
      %7252 = vmatprep.subr.mxu0 0.0
      %7253 = vmatpush1.msra.mxu0 0.0
      %7254 = vmatprep.subr.mxu0 0.0
      %7255 = vmatpush1.msra.mxu0 0.0
      %7256 = vmatprep.subr.mxu0 0.0
      %7257 = vmatpush1.msra.mxu0 0.0
      %7258 = vmatprep.subr.mxu0 0.0
      %7259 = vmatpush1.msra.mxu0 0.0
      %7260 = vmatprep.subr.mxu0 0.0
      %7261 = vmatpush1.msra.mxu0 0.0
      %7262 = vmatprep.subr.mxu0 0.0
      %7263 = vmatpush1.msra.mxu0 0.0
      %7264 = vmatprep.subr.mxu0 0.0
      %7265 = vmatpush1.msra.mxu0 0.0
      %7266 = vmatprep.subr.mxu0 0.0
      %7267 = vmatpush1.msra.mxu0 0.0
      %7268 = vmatprep.subr.mxu0 0.0
      %7269 = vmatpush1.msra.mxu0 %v7236
      %7270 = vmatprep.subr.mxu0 0.0
      %7271 = vmatpush2.msra.mxu0 0.0
      %7272 = vmatprep.subr.mxu0 0.0
      %7273 = vmatpush2.msra.mxu0 0.0
      %7274 = vmatprep.subr.mxu0 0.0
      %7275 = vmatpush2.msra.mxu0 0.0
      %7276 = vmatprep.subr.mxu0 0.0
      %7277 = vmatpush2.msra.mxu0 0.0
      %7278 = vmatprep.subr.mxu0 0.0
      %7279 = vmatpush2.msra.mxu0 0.0
      %7280 = vmatprep.subr.mxu0 0.0
      %7281 = vmatpush2.msra.mxu0 0.0
      %7282 = vmatprep.subr.mxu0 0.0
      %7283 = vmatpush2.msra.mxu0 0.0
      %7284 = vmatprep.subr.mxu0 0.0
      %7285 = vmatpush2.msra.mxu0 0.0
      %7286 = vmatprep.subr.mxu0 0.0
      %7287 = vmatpush2.msra.mxu0 0.0
      %7288 = vmatprep.subr.mxu0 0.0
      %7289 = vmatpush2.msra.mxu0 0.0
      %7290 = vmatprep.subr.mxu0 0.0
      %7291 = vmatpush2.msra.mxu0 0.0
      %7292 = vmatprep.subr.mxu0 0.0
      %7293 = vmatpush2.msra.mxu0 0.0
      %7294 = vmatprep.subr.mxu0 0.0
      %7295 = vmatpush2.msra.mxu0 0.0
      %7296 = vmatprep.subr.mxu0 0.0
      %7297 = vmatpush2.msra.mxu0 0.0
      %7298 = vmatprep.subr.mxu0 0.0
      %7299 = vmatpush2.msra.mxu0 0.0
      %7300 = vmatprep.subr.mxu0 0.0
      %7301 = vmatpush2.msra.mxu0 0.0
      %7302 = vmatprep.mubr.f32.mxu0 0.0
      %7303 = vmatmul.mubr.f32.gmra.mxu0 %v7128
      %v7304 = vpop.f32.mrf.mxu0
      %v7305 = vadd.f32 0.0, %v7304
      %v7306 = vpop.f32.mrf.mxu0
      %7307 = vmatprep.mubr.f32.mxu0 0.0
      %7308 = vmatmul.mubr.f32.gmra.mxu0 %v7131
      %v7309 = vpop.f32.mrf.mxu0
      %v7310 = vadd.f32 0.0, %v7309
      %v7311 = vpop.f32.mrf.mxu0
      %7312 = vmatprep.mubr.f32.mxu0 0.0
      %7313 = vmatmul.mubr.f32.gmra.mxu0 %v7134
      %v7314 = vpop.f32.mrf.mxu0
      %v7315 = vadd.f32 0.0, %v7314
      %v7316 = vpop.f32.mrf.mxu0
      %7317 = vmatprep.mubr.f32.mxu0 0.0
      %7318 = vmatmul.mubr.f32.gmra.mxu0 %v7137
      %v7319 = vpop.f32.mrf.mxu0
      %v7320 = vadd.f32 0.0, %v7319
      %v7321 = vpop.f32.mrf.mxu0
      %7322 = vmatprep.mubr.f32.mxu0 0.0
      %7323 = vmatmul.mubr.f32.gmra.mxu0 %v7140
      %v7324 = vpop.f32.mrf.mxu0
      %v7325 = vadd.f32 0.0, %v7324
      %v7326 = vpop.f32.mrf.mxu0
      %7327 = vmatprep.mubr.f32.mxu0 0.0
      %7328 = vmatmul.mubr.f32.gmra.mxu0 %v7143
      %v7329 = vpop.f32.mrf.mxu0
      %v7330 = vadd.f32 0.0, %v7329
      %v7331 = vpop.f32.mrf.mxu0
      %7332 = vmatprep.mubr.f32.mxu0 0.0
      %7333 = vmatmul.mubr.f32.gmra.mxu0 %v7146
      %v7334 = vpop.f32.mrf.mxu0
      %v7335 = vadd.f32 0.0, %v7334
      %v7336 = vpop.f32.mrf.mxu0
      %7337 = vmatprep.mubr.f32.mxu0 0.0
      %7338 = vmatmul.mubr.f32.gmra.mxu0 %v7149
      %v7339 = vpop.f32.mrf.mxu0
      %v7340 = vadd.f32 0.0, %v7339
      %v7341 = vpop.f32.mrf.mxu0
      %7342 = vmatprep.mubr.f32.mxu0 0.0
      %7343 = vmatmul.mubr.f32.gmra.mxu0 %v7152
      %v7344 = vpop.f32.mrf.mxu0
      %v7345 = vadd.f32 0.0, %v7344
      %v7346 = vpop.f32.mrf.mxu0
      %7347 = vmatprep.mubr.f32.mxu0 0.0
      %7348 = vmatmul.mubr.f32.gmra.mxu0 %v7155
      %v7349 = vpop.f32.mrf.mxu0
      %v7350 = vadd.f32 0.0, %v7349
      %v7351 = vpop.f32.mrf.mxu0
      %7352 = vmatprep.mubr.f32.mxu0 0.0
      %7353 = vmatmul.mubr.f32.gmra.mxu0 %v7158
      %v7354 = vpop.f32.mrf.mxu0
      %v7355 = vadd.f32 0.0, %v7354
      %v7356 = vpop.f32.mrf.mxu0
      %7357 = vmatprep.mubr.f32.mxu0 0.0
      %7358 = vmatmul.mubr.f32.gmra.mxu0 %v7161
      %v7359 = vpop.f32.mrf.mxu0
      %v7360 = vadd.f32 0.0, %v7359
      %v7361 = vpop.f32.mrf.mxu0
      %7362 = vmatprep.mubr.f32.mxu0 0.0
      %7363 = vmatmul.mubr.f32.gmra.mxu0 %v7164
      %v7364 = vpop.f32.mrf.mxu0
      %v7365 = vadd.f32 0.0, %v7364
      %v7366 = vpop.f32.mrf.mxu0
      %7367 = vmatprep.mubr.f32.mxu0 0.0
      %7368 = vmatmul.mubr.f32.gmra.mxu0 %v7167
      %v7369 = vpop.f32.mrf.mxu0
      %v7370 = vadd.f32 0.0, %v7369
      %v7371 = vpop.f32.mrf.mxu0
      %7372 = vmatprep.mubr.f32.mxu0 0.0
      %7373 = vmatmul.mubr.f32.gmra.mxu0 %v7170
      %v7374 = vpop.f32.mrf.mxu0
      %v7375 = vadd.f32 0.0, %v7374
      %v7376 = vpop.f32.mrf.mxu0
      %7377 = vmatprep.mubr.f32.mxu0 0.0
      %7378 = vmatmul.mubr.f32.gmra.mxu0 %v7173
      %v7379 = vpop.f32.mrf.mxu0
      %v7380 = vadd.f32 0.0, %v7379
      %v7381 = vpop.f32.mrf.mxu0
      %7382 = vmatprep.mubr.f32.mxu0 0.0
      %7383 = vmatmul.mubr.f32.gmra.mxu0 %v7176
      %v7384 = vpop.f32.mrf.mxu0
      %v7385 = vadd.f32 0.0, %v7384
      %v7386 = vpop.f32.mrf.mxu0
      %7387 = vmatprep.mubr.f32.mxu0 0.0
      %7388 = vmatmul.mubr.f32.gmra.mxu0 %v7179
      %v7389 = vpop.f32.mrf.mxu0
      %v7390 = vadd.f32 0.0, %v7389
      %v7391 = vpop.f32.mrf.mxu0
      %7392 = vmatprep.mubr.f32.mxu0 0.0
      %7393 = vmatmul.mubr.f32.gmra.mxu0 %v7182
      %v7394 = vpop.f32.mrf.mxu0
      %v7395 = vadd.f32 0.0, %v7394
      %v7396 = vpop.f32.mrf.mxu0
      %7397 = vmatprep.mubr.f32.mxu0 0.0
      %7398 = vmatmul.mubr.f32.gmra.mxu0 %v7185
      %v7399 = vpop.f32.mrf.mxu0
      %v7400 = vadd.f32 0.0, %v7399
      %v7401 = vpop.f32.mrf.mxu0
      %7402 = vmatprep.mubr.f32.mxu0 0.0
      %7403 = vmatmul.mubr.f32.gmra.mxu0 %v7188
      %v7404 = vpop.f32.mrf.mxu0
      %v7405 = vadd.f32 0.0, %v7404
      %v7406 = vpop.f32.mrf.mxu0
      %7407 = vmatprep.mubr.f32.mxu0 0.0
      %7408 = vmatmul.mubr.f32.gmra.mxu0 %v7191
      %v7409 = vpop.f32.mrf.mxu0
      %v7410 = vadd.f32 0.0, %v7409
      %v7411 = vpop.f32.mrf.mxu0
      %7412 = vmatprep.mubr.f32.mxu0 0.0
      %7413 = vmatmul.mubr.f32.gmra.mxu0 %v7194
      %v7414 = vpop.f32.mrf.mxu0
      %v7415 = vadd.f32 0.0, %v7414
      %v7416 = vpop.f32.mrf.mxu0
      %7417 = vmatprep.mubr.f32.mxu0 0.0
      %7418 = vmatmul.mubr.f32.gmra.mxu0 %v7197
      %v7419 = vpop.f32.mrf.mxu0
      %v7420 = vadd.f32 0.0, %v7419
      %v7421 = vpop.f32.mrf.mxu0
      %7422 = vmatprep.mubr.f32.mxu0 0.0
      %7423 = vmatmul.mubr.f32.gmra.mxu0 %v7200
      %v7424 = vpop.f32.mrf.mxu0
      %v7425 = vadd.f32 0.0, %v7424
      %v7426 = vpop.f32.mrf.mxu0
      %7427 = vmatprep.mubr.f32.mxu0 0.0
      %7428 = vmatmul.mubr.f32.gmra.mxu0 %v7203
      %v7429 = vpop.f32.mrf.mxu0
      %v7430 = vadd.f32 0.0, %v7429
      %v7431 = vpop.f32.mrf.mxu0
      %7432 = vmatprep.mubr.f32.mxu0 0.0
      %7433 = vmatmul.mubr.f32.gmra.mxu0 %v7206
      %v7434 = vpop.f32.mrf.mxu0
      %v7435 = vadd.f32 0.0, %v7434
      %v7436 = vpop.f32.mrf.mxu0
      %7437 = vmatprep.mubr.f32.mxu0 0.0
      %7438 = vmatmul.mubr.f32.gmra.mxu0 %v7209
      %v7439 = vpop.f32.mrf.mxu0
      %v7440 = vadd.f32 0.0, %v7439
      %v7441 = vpop.f32.mrf.mxu0
      %7442 = vmatprep.mubr.f32.mxu0 0.0
      %7443 = vmatmul.mubr.f32.gmra.mxu0 %v7212
      %v7444 = vpop.f32.mrf.mxu0
      %v7445 = vadd.f32 0.0, %v7444
      %v7446 = vpop.f32.mrf.mxu0
      %7447 = vmatprep.mubr.f32.mxu0 0.0
      %7448 = vmatmul.mubr.f32.gmra.mxu0 %v7215
      %v7449 = vpop.f32.mrf.mxu0
      %v7450 = vadd.f32 0.0, %v7449
      %v7451 = vpop.f32.mrf.mxu0
      %7452 = vmatprep.mubr.f32.mxu0 0.0
      %7453 = vmatmul.mubr.f32.gmra.mxu0 %v7218
      %v7454 = vpop.f32.mrf.mxu0
      %v7455 = vadd.f32 0.0, %v7454
      %v7456 = vpop.f32.mrf.mxu0
      %7457 = vmatprep.mubr.f32.mxu0 0.0
      %7458 = vmatmul.mubr.f32.gmra.mxu0 %v7221
      %v7459 = vpop.f32.mrf.mxu0
      %v7460 = vadd.f32 0.0, %v7459
      %v7461 = vpop.f32.mrf.mxu0
      %7462 = vmatprep.mubr.f32.mxu0 0.0
      %7463 = vmatmul.mubr.f32.gmra.mxu0 %v7224
      %v7464 = vpop.f32.mrf.mxu0
      %v7465 = vadd.f32 0.0, %v7464
      %v7466 = vpop.f32.mrf.mxu0
      %7467 = vmatprep.mubr.f32.mxu0 0.0
      %7468 = vmatmul.mubr.f32.gmra.mxu0 %v7227
      %v7469 = vpop.f32.mrf.mxu0
      %v7470 = vadd.f32 0.0, %v7469
      %v7471 = vpop.f32.mrf.mxu0
      %7472 = vmatprep.mubr.f32.mxu0 0.0
      %7473 = vmatmul.mubr.f32.gmra.mxu0 %v7230
      %v7474 = vpop.f32.mrf.mxu0
      %v7475 = vadd.f32 0.0, %v7474
      %v7476 = vpop.f32.mrf.mxu0
      %7477 = vmatprep.mubr.f32.mxu0 0.0
      %7478 = vmatmul.mubr.f32.gmra.mxu0 %v7233
      %v7479 = vpop.f32.mrf.mxu0
      %v7480 = vadd.f32 0.0, %v7479
      %v7481 = vpop.f32.mrf.mxu0
      %7482 = vdwg.mxu0
      %v7483 = vadd.f32 %v7053, %v7305
      %v7484 = vadd.f32 %v7054, %v7310
      %v7485 = vadd.f32 %v7055, %v7315
      %v7486 = vadd.f32 %v7056, %v7320
      %v7487 = vadd.f32 %v7057, %v7325
      %v7488 = vadd.f32 %v7058, %v7330
      %v7489 = vadd.f32 %v7059, %v7335
      %v7490 = vadd.f32 %v7060, %v7340
      %v7491 = vadd.f32 %v7061, %v7345
      %v7492 = vadd.f32 %v7062, %v7350
      %v7493 = vadd.f32 %v7063, %v7355
      %v7494 = vadd.f32 %v7064, %v7360
      %v7495 = vadd.f32 %v7065, %v7365
      %v7496 = vadd.f32 %v7066, %v7370
      %v7497 = vadd.f32 %v7067, %v7375
      %v7498 = vadd.f32 %v7068, %v7380
      %v7499 = vadd.f32 %v7069, %v7385
      %v7500 = vadd.f32 %v7070, %v7390
      %v7501 = vadd.f32 %v7071, %v7395
      %v7502 = vadd.f32 %v7072, %v7400
      %v7503 = vadd.f32 %v7073, %v7405
      %v7504 = vadd.f32 %v7074, %v7410
      %v7505 = vadd.f32 %v7075, %v7415
      %v7506 = vadd.f32 %v7076, %v7420
      %v7507 = vadd.f32 %v7077, %v7425
      %v7508 = vadd.f32 %v7078, %v7430
      %v7509 = vadd.f32 %v7079, %v7435
      %v7510 = vadd.f32 %v7080, %v7440
      %v7511 = vadd.f32 %v7081, %v7445
      %v7512 = vadd.f32 %v7082, %v7450
      %v7513 = vadd.f32 %v7083, %v7455
      %v7514 = vadd.f32 %v7084, %v7460
      %v7515 = vadd.f32 %v7085, %v7465
      %v7516 = vadd.f32 %v7086, %v7470
      %v7517 = vadd.f32 %v7087, %v7475
      %v7518 = vadd.f32 %v7088, %v7480
      %v7519 = vld [vmem:[#allocation2 + $0x24] sm:$0xff]
      %v7520 = vld [vmem:[#allocation2 + $0x2c] sm:$0xff]
      %v7521 = vld [vmem:[#allocation2 + $0x34] sm:$0xff]
      %v7522 = vld [vmem:[#allocation2 + $0x3c] sm:$0xff]
      %v7523 = vld [vmem:[#allocation2 + $0x44] sm:$0xff]
      %v7524 = vld [vmem:[#allocation2 + $0x4c] sm:$0xff]
      %v7525 = vld [vmem:[#allocation2 + $0x54] sm:$0xff]
      %v7526 = vld [vmem:[#allocation2 + $0x5c] sm:$0xff]
      %v7527 = vld [vmem:[#allocation2 + $0x64] sm:$0xff]
      %v7528 = vld [vmem:[#allocation2 + $0x6c] sm:$0xff]
      %v7529 = vld [vmem:[#allocation2 + $0x74] sm:$0xff]
      %v7530 = vld [vmem:[#allocation2 + $0x7c] sm:$0xff]
      %v7531 = vld [vmem:[#allocation2 + $0x84] sm:$0xff]
      %v7532 = vld [vmem:[#allocation2 + $0x8c] sm:$0xff]
      %v7533 = vld [vmem:[#allocation2 + $0x94] sm:$0xff]
      %v7534 = vld [vmem:[#allocation2 + $0x9c] sm:$0xff]
      %v7535 = vld [vmem:[#allocation2 + $0xa4] sm:$0xff]
      %v7536 = vld [vmem:[#allocation2 + $0xac] sm:$0xff]
      %v7537 = vld [vmem:[#allocation2 + $0xb4] sm:$0xff]
      %v7538 = vld [vmem:[#allocation2 + $0xbc] sm:$0xff]
      %v7539 = vld [vmem:[#allocation2 + $0xc4] sm:$0xff]
      %v7540 = vld [vmem:[#allocation2 + $0xcc] sm:$0xff]
      %v7541 = vld [vmem:[#allocation2 + $0xd4] sm:$0xff]
      %v7542 = vld [vmem:[#allocation2 + $0xdc] sm:$0xff]
      %v7543 = vld [vmem:[#allocation2 + $0xe4] sm:$0xff]
      %v7544 = vld [vmem:[#allocation2 + $0xec] sm:$0xff]
      %v7545 = vld [vmem:[#allocation2 + $0xf4] sm:$0xff]
      %v7546 = vld [vmem:[#allocation2 + $0xfc] sm:$0xff]
      %v7547 = vld [vmem:[#allocation2 + $0x104] sm:$0xff]
      %v7548 = vld [vmem:[#allocation2 + $0x10c] sm:$0xff]
      %v7549 = vld [vmem:[#allocation2 + $0x114] sm:$0xff]
      %v7550 = vld [vmem:[#allocation2 + $0x11c] sm:$0xff]
      %v7551 = vld [vmem:[#allocation2 + $0x124] sm:$0xff]
      %v7552 = vld [vmem:[#allocation2 + $0x12c] sm:$0xff]
      %v7553 = vld [vmem:[#allocation2 + $0x134] sm:$0xff]
      %v7554 = vld [vmem:[#allocation2 + $0x13c] sm:$0xff]
      %s7555 = scalar_lea.vmem %s3, 48
      %v7556 = vld [vmem:[%s7555] sm:$0x3f]
      %v7558 = vsel %vm4932, %v7519, 0
      %v7561 = vsel %vm4932, %v7520, 0
      %v7564 = vsel %vm4932, %v7521, 0
      %v7567 = vsel %vm4932, %v7522, 0
      %v7570 = vsel %vm4932, %v7523, 0
      %v7573 = vsel %vm4932, %v7524, 0
      %v7576 = vsel %vm4932, %v7525, 0
      %v7579 = vsel %vm4932, %v7526, 0
      %v7582 = vsel %vm4932, %v7527, 0
      %v7585 = vsel %vm4932, %v7528, 0
      %v7588 = vsel %vm4932, %v7529, 0
      %v7591 = vsel %vm4932, %v7530, 0
      %v7594 = vsel %vm4932, %v7531, 0
      %v7597 = vsel %vm4932, %v7532, 0
      %v7600 = vsel %vm4932, %v7533, 0
      %v7603 = vsel %vm4932, %v7534, 0
      %v7606 = vsel %vm4932, %v7535, 0
      %v7609 = vsel %vm4932, %v7536, 0
      %v7612 = vsel %vm4932, %v7537, 0
      %v7615 = vsel %vm4932, %v7538, 0
      %v7618 = vsel %vm4932, %v7539, 0
      %v7621 = vsel %vm4932, %v7540, 0
      %v7624 = vsel %vm4932, %v7541, 0
      %v7627 = vsel %vm4932, %v7542, 0
      %v7630 = vsel %vm4932, %v7543, 0
      %v7633 = vsel %vm4932, %v7544, 0
      %v7636 = vsel %vm4932, %v7545, 0
      %v7639 = vsel %vm4932, %v7546, 0
      %v7642 = vsel %vm4932, %v7547, 0
      %v7645 = vsel %vm4932, %v7548, 0
      %v7648 = vsel %vm4932, %v7549, 0
      %v7651 = vsel %vm4932, %v7550, 0
      %v7654 = vsel %vm4932, %v7551, 0
      %v7657 = vsel %vm4932, %v7552, 0
      %v7660 = vsel %vm4932, %v7553, 0
      %v7663 = vsel %vm4932, %v7554, 0
      %v7666 = vsel %vm5194, %v7556, 0
      %7668 = vmatprep.subr.mxu0 0.0
      %7669 = vmatpush1.msra.mxu0 0.0
      %7670 = vmatprep.subr.mxu0 0.0
      %7671 = vmatpush1.msra.mxu0 0.0
      %7672 = vmatprep.subr.mxu0 0.0
      %7673 = vmatpush1.msra.mxu0 0.0
      %7674 = vmatprep.subr.mxu0 0.0
      %7675 = vmatpush1.msra.mxu0 0.0
      %7676 = vmatprep.subr.mxu0 0.0
      %7677 = vmatpush1.msra.mxu0 0.0
      %7678 = vmatprep.subr.mxu0 0.0
      %7679 = vmatpush1.msra.mxu0 0.0
      %7680 = vmatprep.subr.mxu0 0.0
      %7681 = vmatpush1.msra.mxu0 0.0
      %7682 = vmatprep.subr.mxu0 0.0
      %7683 = vmatpush1.msra.mxu0 0.0
      %7684 = vmatprep.subr.mxu0 0.0
      %7685 = vmatpush1.msra.mxu0 0.0
      %7686 = vmatprep.subr.mxu0 0.0
      %7687 = vmatpush1.msra.mxu0 0.0
      %7688 = vmatprep.subr.mxu0 0.0
      %7689 = vmatpush1.msra.mxu0 0.0
      %7690 = vmatprep.subr.mxu0 0.0
      %7691 = vmatpush1.msra.mxu0 0.0
      %7692 = vmatprep.subr.mxu0 0.0
      %7693 = vmatpush1.msra.mxu0 0.0
      %7694 = vmatprep.subr.mxu0 0.0
      %7695 = vmatpush1.msra.mxu0 0.0
      %7696 = vmatprep.subr.mxu0 0.0
      %7697 = vmatpush1.msra.mxu0 0.0
      %7698 = vmatprep.subr.mxu0 0.0
      %7699 = vmatpush1.msra.mxu0 %v7666
      %7700 = vmatprep.subr.mxu0 0.0
      %7701 = vmatpush2.msra.mxu0 0.0
      %7702 = vmatprep.subr.mxu0 0.0
      %7703 = vmatpush2.msra.mxu0 0.0
      %7704 = vmatprep.subr.mxu0 0.0
      %7705 = vmatpush2.msra.mxu0 0.0
      %7706 = vmatprep.subr.mxu0 0.0
      %7707 = vmatpush2.msra.mxu0 0.0
      %7708 = vmatprep.subr.mxu0 0.0
      %7709 = vmatpush2.msra.mxu0 0.0
      %7710 = vmatprep.subr.mxu0 0.0
      %7711 = vmatpush2.msra.mxu0 0.0
      %7712 = vmatprep.subr.mxu0 0.0
      %7713 = vmatpush2.msra.mxu0 0.0
      %7714 = vmatprep.subr.mxu0 0.0
      %7715 = vmatpush2.msra.mxu0 0.0
      %7716 = vmatprep.subr.mxu0 0.0
      %7717 = vmatpush2.msra.mxu0 0.0
      %7718 = vmatprep.subr.mxu0 0.0
      %7719 = vmatpush2.msra.mxu0 0.0
      %7720 = vmatprep.subr.mxu0 0.0
      %7721 = vmatpush2.msra.mxu0 0.0
      %7722 = vmatprep.subr.mxu0 0.0
      %7723 = vmatpush2.msra.mxu0 0.0
      %7724 = vmatprep.subr.mxu0 0.0
      %7725 = vmatpush2.msra.mxu0 0.0
      %7726 = vmatprep.subr.mxu0 0.0
      %7727 = vmatpush2.msra.mxu0 0.0
      %7728 = vmatprep.subr.mxu0 0.0
      %7729 = vmatpush2.msra.mxu0 0.0
      %7730 = vmatprep.subr.mxu0 0.0
      %7731 = vmatpush2.msra.mxu0 0.0
      %7732 = vmatprep.mubr.f32.mxu0 0.0
      %7733 = vmatmul.mubr.f32.gmra.mxu0 %v7558
      %v7734 = vpop.f32.mrf.mxu0
      %v7735 = vadd.f32 0.0, %v7734
      %v7736 = vpop.f32.mrf.mxu0
      %7737 = vmatprep.mubr.f32.mxu0 0.0
      %7738 = vmatmul.mubr.f32.gmra.mxu0 %v7561
      %v7739 = vpop.f32.mrf.mxu0
      %v7740 = vadd.f32 0.0, %v7739
      %v7741 = vpop.f32.mrf.mxu0
      %7742 = vmatprep.mubr.f32.mxu0 0.0
      %7743 = vmatmul.mubr.f32.gmra.mxu0 %v7564
      %v7744 = vpop.f32.mrf.mxu0
      %v7745 = vadd.f32 0.0, %v7744
      %v7746 = vpop.f32.mrf.mxu0
      %7747 = vmatprep.mubr.f32.mxu0 0.0
      %7748 = vmatmul.mubr.f32.gmra.mxu0 %v7567
      %v7749 = vpop.f32.mrf.mxu0
      %v7750 = vadd.f32 0.0, %v7749
      %v7751 = vpop.f32.mrf.mxu0
      %7752 = vmatprep.mubr.f32.mxu0 0.0
      %7753 = vmatmul.mubr.f32.gmra.mxu0 %v7570
      %v7754 = vpop.f32.mrf.mxu0
      %v7755 = vadd.f32 0.0, %v7754
      %v7756 = vpop.f32.mrf.mxu0
      %7757 = vmatprep.mubr.f32.mxu0 0.0
      %7758 = vmatmul.mubr.f32.gmra.mxu0 %v7573
      %v7759 = vpop.f32.mrf.mxu0
      %v7760 = vadd.f32 0.0, %v7759
      %v7761 = vpop.f32.mrf.mxu0
      %7762 = vmatprep.mubr.f32.mxu0 0.0
      %7763 = vmatmul.mubr.f32.gmra.mxu0 %v7576
      %v7764 = vpop.f32.mrf.mxu0
      %v7765 = vadd.f32 0.0, %v7764
      %v7766 = vpop.f32.mrf.mxu0
      %7767 = vmatprep.mubr.f32.mxu0 0.0
      %7768 = vmatmul.mubr.f32.gmra.mxu0 %v7579
      %v7769 = vpop.f32.mrf.mxu0
      %v7770 = vadd.f32 0.0, %v7769
      %v7771 = vpop.f32.mrf.mxu0
      %7772 = vmatprep.mubr.f32.mxu0 0.0
      %7773 = vmatmul.mubr.f32.gmra.mxu0 %v7582
      %v7774 = vpop.f32.mrf.mxu0
      %v7775 = vadd.f32 0.0, %v7774
      %v7776 = vpop.f32.mrf.mxu0
      %7777 = vmatprep.mubr.f32.mxu0 0.0
      %7778 = vmatmul.mubr.f32.gmra.mxu0 %v7585
      %v7779 = vpop.f32.mrf.mxu0
      %v7780 = vadd.f32 0.0, %v7779
      %v7781 = vpop.f32.mrf.mxu0
      %7782 = vmatprep.mubr.f32.mxu0 0.0
      %7783 = vmatmul.mubr.f32.gmra.mxu0 %v7588
      %v7784 = vpop.f32.mrf.mxu0
      %v7785 = vadd.f32 0.0, %v7784
      %v7786 = vpop.f32.mrf.mxu0
      %7787 = vmatprep.mubr.f32.mxu0 0.0
      %7788 = vmatmul.mubr.f32.gmra.mxu0 %v7591
      %v7789 = vpop.f32.mrf.mxu0
      %v7790 = vadd.f32 0.0, %v7789
      %v7791 = vpop.f32.mrf.mxu0
      %7792 = vmatprep.mubr.f32.mxu0 0.0
      %7793 = vmatmul.mubr.f32.gmra.mxu0 %v7594
      %v7794 = vpop.f32.mrf.mxu0
      %v7795 = vadd.f32 0.0, %v7794
      %v7796 = vpop.f32.mrf.mxu0
      %7797 = vmatprep.mubr.f32.mxu0 0.0
      %7798 = vmatmul.mubr.f32.gmra.mxu0 %v7597
      %v7799 = vpop.f32.mrf.mxu0
      %v7800 = vadd.f32 0.0, %v7799
      %v7801 = vpop.f32.mrf.mxu0
      %7802 = vmatprep.mubr.f32.mxu0 0.0
      %7803 = vmatmul.mubr.f32.gmra.mxu0 %v7600
      %v7804 = vpop.f32.mrf.mxu0
      %v7805 = vadd.f32 0.0, %v7804
      %v7806 = vpop.f32.mrf.mxu0
      %7807 = vmatprep.mubr.f32.mxu0 0.0
      %7808 = vmatmul.mubr.f32.gmra.mxu0 %v7603
      %v7809 = vpop.f32.mrf.mxu0
      %v7810 = vadd.f32 0.0, %v7809
      %v7811 = vpop.f32.mrf.mxu0
      %7812 = vmatprep.mubr.f32.mxu0 0.0
      %7813 = vmatmul.mubr.f32.gmra.mxu0 %v7606
      %v7814 = vpop.f32.mrf.mxu0
      %v7815 = vadd.f32 0.0, %v7814
      %v7816 = vpop.f32.mrf.mxu0
      %7817 = vmatprep.mubr.f32.mxu0 0.0
      %7818 = vmatmul.mubr.f32.gmra.mxu0 %v7609
      %v7819 = vpop.f32.mrf.mxu0
      %v7820 = vadd.f32 0.0, %v7819
      %v7821 = vpop.f32.mrf.mxu0
      %7822 = vmatprep.mubr.f32.mxu0 0.0
      %7823 = vmatmul.mubr.f32.gmra.mxu0 %v7612
      %v7824 = vpop.f32.mrf.mxu0
      %v7825 = vadd.f32 0.0, %v7824
      %v7826 = vpop.f32.mrf.mxu0
      %7827 = vmatprep.mubr.f32.mxu0 0.0
      %7828 = vmatmul.mubr.f32.gmra.mxu0 %v7615
      %v7829 = vpop.f32.mrf.mxu0
      %v7830 = vadd.f32 0.0, %v7829
      %v7831 = vpop.f32.mrf.mxu0
      %7832 = vmatprep.mubr.f32.mxu0 0.0
      %7833 = vmatmul.mubr.f32.gmra.mxu0 %v7618
      %v7834 = vpop.f32.mrf.mxu0
      %v7835 = vadd.f32 0.0, %v7834
      %v7836 = vpop.f32.mrf.mxu0
      %7837 = vmatprep.mubr.f32.mxu0 0.0
      %7838 = vmatmul.mubr.f32.gmra.mxu0 %v7621
      %v7839 = vpop.f32.mrf.mxu0
      %v7840 = vadd.f32 0.0, %v7839
      %v7841 = vpop.f32.mrf.mxu0
      %7842 = vmatprep.mubr.f32.mxu0 0.0
      %7843 = vmatmul.mubr.f32.gmra.mxu0 %v7624
      %v7844 = vpop.f32.mrf.mxu0
      %v7845 = vadd.f32 0.0, %v7844
      %v7846 = vpop.f32.mrf.mxu0
      %7847 = vmatprep.mubr.f32.mxu0 0.0
      %7848 = vmatmul.mubr.f32.gmra.mxu0 %v7627
      %v7849 = vpop.f32.mrf.mxu0
      %v7850 = vadd.f32 0.0, %v7849
      %v7851 = vpop.f32.mrf.mxu0
      %7852 = vmatprep.mubr.f32.mxu0 0.0
      %7853 = vmatmul.mubr.f32.gmra.mxu0 %v7630
      %v7854 = vpop.f32.mrf.mxu0
      %v7855 = vadd.f32 0.0, %v7854
      %v7856 = vpop.f32.mrf.mxu0
      %7857 = vmatprep.mubr.f32.mxu0 0.0
      %7858 = vmatmul.mubr.f32.gmra.mxu0 %v7633
      %v7859 = vpop.f32.mrf.mxu0
      %v7860 = vadd.f32 0.0, %v7859
      %v7861 = vpop.f32.mrf.mxu0
      %7862 = vmatprep.mubr.f32.mxu0 0.0
      %7863 = vmatmul.mubr.f32.gmra.mxu0 %v7636
      %v7864 = vpop.f32.mrf.mxu0
      %v7865 = vadd.f32 0.0, %v7864
      %v7866 = vpop.f32.mrf.mxu0
      %7867 = vmatprep.mubr.f32.mxu0 0.0
      %7868 = vmatmul.mubr.f32.gmra.mxu0 %v7639
      %v7869 = vpop.f32.mrf.mxu0
      %v7870 = vadd.f32 0.0, %v7869
      %v7871 = vpop.f32.mrf.mxu0
      %7872 = vmatprep.mubr.f32.mxu0 0.0
      %7873 = vmatmul.mubr.f32.gmra.mxu0 %v7642
      %v7874 = vpop.f32.mrf.mxu0
      %v7875 = vadd.f32 0.0, %v7874
      %v7876 = vpop.f32.mrf.mxu0
      %7877 = vmatprep.mubr.f32.mxu0 0.0
      %7878 = vmatmul.mubr.f32.gmra.mxu0 %v7645
      %v7879 = vpop.f32.mrf.mxu0
      %v7880 = vadd.f32 0.0, %v7879
      %v7881 = vpop.f32.mrf.mxu0
      %7882 = vmatprep.mubr.f32.mxu0 0.0
      %7883 = vmatmul.mubr.f32.gmra.mxu0 %v7648
      %v7884 = vpop.f32.mrf.mxu0
      %v7885 = vadd.f32 0.0, %v7884
      %v7886 = vpop.f32.mrf.mxu0
      %7887 = vmatprep.mubr.f32.mxu0 0.0
      %7888 = vmatmul.mubr.f32.gmra.mxu0 %v7651
      %v7889 = vpop.f32.mrf.mxu0
      %v7890 = vadd.f32 0.0, %v7889
      %v7891 = vpop.f32.mrf.mxu0
      %7892 = vmatprep.mubr.f32.mxu0 0.0
      %7893 = vmatmul.mubr.f32.gmra.mxu0 %v7654
      %v7894 = vpop.f32.mrf.mxu0
      %v7895 = vadd.f32 0.0, %v7894
      %v7896 = vpop.f32.mrf.mxu0
      %7897 = vmatprep.mubr.f32.mxu0 0.0
      %7898 = vmatmul.mubr.f32.gmra.mxu0 %v7657
      %v7899 = vpop.f32.mrf.mxu0
      %v7900 = vadd.f32 0.0, %v7899
      %v7901 = vpop.f32.mrf.mxu0
      %7902 = vmatprep.mubr.f32.mxu0 0.0
      %7903 = vmatmul.mubr.f32.gmra.mxu0 %v7660
      %v7904 = vpop.f32.mrf.mxu0
      %v7905 = vadd.f32 0.0, %v7904
      %v7906 = vpop.f32.mrf.mxu0
      %7907 = vmatprep.mubr.f32.mxu0 0.0
      %7908 = vmatmul.mubr.f32.gmra.mxu0 %v7663
      %v7909 = vpop.f32.mrf.mxu0
      %v7910 = vadd.f32 0.0, %v7909
      %v7911 = vpop.f32.mrf.mxu0
      %7912 = vdwg.mxu0
      %v7913 = vadd.f32 %v7483, %v7735
      %v7914 = vadd.f32 %v7484, %v7740
      %v7915 = vadd.f32 %v7485, %v7745
      %v7916 = vadd.f32 %v7486, %v7750
      %v7917 = vadd.f32 %v7487, %v7755
      %v7918 = vadd.f32 %v7488, %v7760
      %v7919 = vadd.f32 %v7489, %v7765
      %v7920 = vadd.f32 %v7490, %v7770
      %v7921 = vadd.f32 %v7491, %v7775
      %v7922 = vadd.f32 %v7492, %v7780
      %v7923 = vadd.f32 %v7493, %v7785
      %v7924 = vadd.f32 %v7494, %v7790
      %v7925 = vadd.f32 %v7495, %v7795
      %v7926 = vadd.f32 %v7496, %v7800
      %v7927 = vadd.f32 %v7497, %v7805
      %v7928 = vadd.f32 %v7498, %v7810
      %v7929 = vadd.f32 %v7499, %v7815
      %v7930 = vadd.f32 %v7500, %v7820
      %v7931 = vadd.f32 %v7501, %v7825
      %v7932 = vadd.f32 %v7502, %v7830
      %v7933 = vadd.f32 %v7503, %v7835
      %v7934 = vadd.f32 %v7504, %v7840
      %v7935 = vadd.f32 %v7505, %v7845
      %v7936 = vadd.f32 %v7506, %v7850
      %v7937 = vadd.f32 %v7507, %v7855
      %v7938 = vadd.f32 %v7508, %v7860
      %v7939 = vadd.f32 %v7509, %v7865
      %v7940 = vadd.f32 %v7510, %v7870
      %v7941 = vadd.f32 %v7511, %v7875
      %v7942 = vadd.f32 %v7512, %v7880
      %v7943 = vadd.f32 %v7513, %v7885
      %v7944 = vadd.f32 %v7514, %v7890
      %v7945 = vadd.f32 %v7515, %v7895
      %v7946 = vadd.f32 %v7516, %v7900
      %v7947 = vadd.f32 %v7517, %v7905
      %v7948 = vadd.f32 %v7518, %v7910
      %v7949 = vld [vmem:[#allocation2 + $0x25] sm:$0xff]
      %v7950 = vld [vmem:[#allocation2 + $0x2d] sm:$0xff]
      %v7951 = vld [vmem:[#allocation2 + $0x35] sm:$0xff]
      %v7952 = vld [vmem:[#allocation2 + $0x3d] sm:$0xff]
      %v7953 = vld [vmem:[#allocation2 + $0x45] sm:$0xff]
      %v7954 = vld [vmem:[#allocation2 + $0x4d] sm:$0xff]
      %v7955 = vld [vmem:[#allocation2 + $0x55] sm:$0xff]
      %v7956 = vld [vmem:[#allocation2 + $0x5d] sm:$0xff]
      %v7957 = vld [vmem:[#allocation2 + $0x65] sm:$0xff]
      %v7958 = vld [vmem:[#allocation2 + $0x6d] sm:$0xff]
      %v7959 = vld [vmem:[#allocation2 + $0x75] sm:$0xff]
      %v7960 = vld [vmem:[#allocation2 + $0x7d] sm:$0xff]
      %v7961 = vld [vmem:[#allocation2 + $0x85] sm:$0xff]
      %v7962 = vld [vmem:[#allocation2 + $0x8d] sm:$0xff]
      %v7963 = vld [vmem:[#allocation2 + $0x95] sm:$0xff]
      %v7964 = vld [vmem:[#allocation2 + $0x9d] sm:$0xff]
      %v7965 = vld [vmem:[#allocation2 + $0xa5] sm:$0xff]
      %v7966 = vld [vmem:[#allocation2 + $0xad] sm:$0xff]
      %v7967 = vld [vmem:[#allocation2 + $0xb5] sm:$0xff]
      %v7968 = vld [vmem:[#allocation2 + $0xbd] sm:$0xff]
      %v7969 = vld [vmem:[#allocation2 + $0xc5] sm:$0xff]
      %v7970 = vld [vmem:[#allocation2 + $0xcd] sm:$0xff]
      %v7971 = vld [vmem:[#allocation2 + $0xd5] sm:$0xff]
      %v7972 = vld [vmem:[#allocation2 + $0xdd] sm:$0xff]
      %v7973 = vld [vmem:[#allocation2 + $0xe5] sm:$0xff]
      %v7974 = vld [vmem:[#allocation2 + $0xed] sm:$0xff]
      %v7975 = vld [vmem:[#allocation2 + $0xf5] sm:$0xff]
      %v7976 = vld [vmem:[#allocation2 + $0xfd] sm:$0xff]
      %v7977 = vld [vmem:[#allocation2 + $0x105] sm:$0xff]
      %v7978 = vld [vmem:[#allocation2 + $0x10d] sm:$0xff]
      %v7979 = vld [vmem:[#allocation2 + $0x115] sm:$0xff]
      %v7980 = vld [vmem:[#allocation2 + $0x11d] sm:$0xff]
      %v7981 = vld [vmem:[#allocation2 + $0x125] sm:$0xff]
      %v7982 = vld [vmem:[#allocation2 + $0x12d] sm:$0xff]
      %v7983 = vld [vmem:[#allocation2 + $0x135] sm:$0xff]
      %v7984 = vld [vmem:[#allocation2 + $0x13d] sm:$0xff]
      %s7985 = scalar_lea.vmem %s3, 56
      %v7986 = vld [vmem:[%s7985] sm:$0x3f]
      %v7988 = vsel %vm4932, %v7949, 0
      %v7991 = vsel %vm4932, %v7950, 0
      %v7994 = vsel %vm4932, %v7951, 0
      %v7997 = vsel %vm4932, %v7952, 0
      %v8000 = vsel %vm4932, %v7953, 0
      %v8003 = vsel %vm4932, %v7954, 0
      %v8006 = vsel %vm4932, %v7955, 0
      %v8009 = vsel %vm4932, %v7956, 0
      %v8012 = vsel %vm4932, %v7957, 0
      %v8015 = vsel %vm4932, %v7958, 0
      %v8018 = vsel %vm4932, %v7959, 0
      %v8021 = vsel %vm4932, %v7960, 0
      %v8024 = vsel %vm4932, %v7961, 0
      %v8027 = vsel %vm4932, %v7962, 0
      %v8030 = vsel %vm4932, %v7963, 0
      %v8033 = vsel %vm4932, %v7964, 0
      %v8036 = vsel %vm4932, %v7965, 0
      %v8039 = vsel %vm4932, %v7966, 0
      %v8042 = vsel %vm4932, %v7967, 0
      %v8045 = vsel %vm4932, %v7968, 0
      %v8048 = vsel %vm4932, %v7969, 0
      %v8051 = vsel %vm4932, %v7970, 0
      %v8054 = vsel %vm4932, %v7971, 0
      %v8057 = vsel %vm4932, %v7972, 0
      %v8060 = vsel %vm4932, %v7973, 0
      %v8063 = vsel %vm4932, %v7974, 0
      %v8066 = vsel %vm4932, %v7975, 0
      %v8069 = vsel %vm4932, %v7976, 0
      %v8072 = vsel %vm4932, %v7977, 0
      %v8075 = vsel %vm4932, %v7978, 0
      %v8078 = vsel %vm4932, %v7979, 0
      %v8081 = vsel %vm4932, %v7980, 0
      %v8084 = vsel %vm4932, %v7981, 0
      %v8087 = vsel %vm4932, %v7982, 0
      %v8090 = vsel %vm4932, %v7983, 0
      %v8093 = vsel %vm4932, %v7984, 0
      %v8096 = vsel %vm5194, %v7986, 0
      %8098 = vmatprep.subr.mxu0 0.0
      %8099 = vmatpush1.msra.mxu0 0.0
      %8100 = vmatprep.subr.mxu0 0.0
      %8101 = vmatpush1.msra.mxu0 0.0
      %8102 = vmatprep.subr.mxu0 0.0
      %8103 = vmatpush1.msra.mxu0 0.0
      %8104 = vmatprep.subr.mxu0 0.0
      %8105 = vmatpush1.msra.mxu0 0.0
      %8106 = vmatprep.subr.mxu0 0.0
      %8107 = vmatpush1.msra.mxu0 0.0
      %8108 = vmatprep.subr.mxu0 0.0
      %8109 = vmatpush1.msra.mxu0 0.0
      %8110 = vmatprep.subr.mxu0 0.0
      %8111 = vmatpush1.msra.mxu0 0.0
      %8112 = vmatprep.subr.mxu0 0.0
      %8113 = vmatpush1.msra.mxu0 0.0
      %8114 = vmatprep.subr.mxu0 0.0
      %8115 = vmatpush1.msra.mxu0 0.0
      %8116 = vmatprep.subr.mxu0 0.0
      %8117 = vmatpush1.msra.mxu0 0.0
      %8118 = vmatprep.subr.mxu0 0.0
      %8119 = vmatpush1.msra.mxu0 0.0
      %8120 = vmatprep.subr.mxu0 0.0
      %8121 = vmatpush1.msra.mxu0 0.0
      %8122 = vmatprep.subr.mxu0 0.0
      %8123 = vmatpush1.msra.mxu0 0.0
      %8124 = vmatprep.subr.mxu0 0.0
      %8125 = vmatpush1.msra.mxu0 0.0
      %8126 = vmatprep.subr.mxu0 0.0
      %8127 = vmatpush1.msra.mxu0 0.0
      %8128 = vmatprep.subr.mxu0 0.0
      %8129 = vmatpush1.msra.mxu0 %v8096
      %8130 = vmatprep.subr.mxu0 0.0
      %8131 = vmatpush2.msra.mxu0 0.0
      %8132 = vmatprep.subr.mxu0 0.0
      %8133 = vmatpush2.msra.mxu0 0.0
      %8134 = vmatprep.subr.mxu0 0.0
      %8135 = vmatpush2.msra.mxu0 0.0
      %8136 = vmatprep.subr.mxu0 0.0
      %8137 = vmatpush2.msra.mxu0 0.0
      %8138 = vmatprep.subr.mxu0 0.0
      %8139 = vmatpush2.msra.mxu0 0.0
      %8140 = vmatprep.subr.mxu0 0.0
      %8141 = vmatpush2.msra.mxu0 0.0
      %8142 = vmatprep.subr.mxu0 0.0
      %8143 = vmatpush2.msra.mxu0 0.0
      %8144 = vmatprep.subr.mxu0 0.0
      %8145 = vmatpush2.msra.mxu0 0.0
      %8146 = vmatprep.subr.mxu0 0.0
      %8147 = vmatpush2.msra.mxu0 0.0
      %8148 = vmatprep.subr.mxu0 0.0
      %8149 = vmatpush2.msra.mxu0 0.0
      %8150 = vmatprep.subr.mxu0 0.0
      %8151 = vmatpush2.msra.mxu0 0.0
      %8152 = vmatprep.subr.mxu0 0.0
      %8153 = vmatpush2.msra.mxu0 0.0
      %8154 = vmatprep.subr.mxu0 0.0
      %8155 = vmatpush2.msra.mxu0 0.0
      %8156 = vmatprep.subr.mxu0 0.0
      %8157 = vmatpush2.msra.mxu0 0.0
      %8158 = vmatprep.subr.mxu0 0.0
      %8159 = vmatpush2.msra.mxu0 0.0
      %8160 = vmatprep.subr.mxu0 0.0
      %8161 = vmatpush2.msra.mxu0 0.0
      %8162 = vmatprep.mubr.f32.mxu0 0.0
      %8163 = vmatmul.mubr.f32.gmra.mxu0 %v7988
      %v8164 = vpop.f32.mrf.mxu0
      %v8165 = vadd.f32 0.0, %v8164
      %v8166 = vpop.f32.mrf.mxu0
      %8167 = vmatprep.mubr.f32.mxu0 0.0
      %8168 = vmatmul.mubr.f32.gmra.mxu0 %v7991
      %v8169 = vpop.f32.mrf.mxu0
      %v8170 = vadd.f32 0.0, %v8169
      %v8171 = vpop.f32.mrf.mxu0
      %8172 = vmatprep.mubr.f32.mxu0 0.0
      %8173 = vmatmul.mubr.f32.gmra.mxu0 %v7994
      %v8174 = vpop.f32.mrf.mxu0
      %v8175 = vadd.f32 0.0, %v8174
      %v8176 = vpop.f32.mrf.mxu0
      %8177 = vmatprep.mubr.f32.mxu0 0.0
      %8178 = vmatmul.mubr.f32.gmra.mxu0 %v7997
      %v8179 = vpop.f32.mrf.mxu0
      %v8180 = vadd.f32 0.0, %v8179
      %v8181 = vpop.f32.mrf.mxu0
      %8182 = vmatprep.mubr.f32.mxu0 0.0
      %8183 = vmatmul.mubr.f32.gmra.mxu0 %v8000
      %v8184 = vpop.f32.mrf.mxu0
      %v8185 = vadd.f32 0.0, %v8184
      %v8186 = vpop.f32.mrf.mxu0
      %8187 = vmatprep.mubr.f32.mxu0 0.0
      %8188 = vmatmul.mubr.f32.gmra.mxu0 %v8003
      %v8189 = vpop.f32.mrf.mxu0
      %v8190 = vadd.f32 0.0, %v8189
      %v8191 = vpop.f32.mrf.mxu0
      %8192 = vmatprep.mubr.f32.mxu0 0.0
      %8193 = vmatmul.mubr.f32.gmra.mxu0 %v8006
      %v8194 = vpop.f32.mrf.mxu0
      %v8195 = vadd.f32 0.0, %v8194
      %v8196 = vpop.f32.mrf.mxu0
      %8197 = vmatprep.mubr.f32.mxu0 0.0
      %8198 = vmatmul.mubr.f32.gmra.mxu0 %v8009
      %v8199 = vpop.f32.mrf.mxu0
      %v8200 = vadd.f32 0.0, %v8199
      %v8201 = vpop.f32.mrf.mxu0
      %8202 = vmatprep.mubr.f32.mxu0 0.0
      %8203 = vmatmul.mubr.f32.gmra.mxu0 %v8012
      %v8204 = vpop.f32.mrf.mxu0
      %v8205 = vadd.f32 0.0, %v8204
      %v8206 = vpop.f32.mrf.mxu0
      %8207 = vmatprep.mubr.f32.mxu0 0.0
      %8208 = vmatmul.mubr.f32.gmra.mxu0 %v8015
      %v8209 = vpop.f32.mrf.mxu0
      %v8210 = vadd.f32 0.0, %v8209
      %v8211 = vpop.f32.mrf.mxu0
      %8212 = vmatprep.mubr.f32.mxu0 0.0
      %8213 = vmatmul.mubr.f32.gmra.mxu0 %v8018
      %v8214 = vpop.f32.mrf.mxu0
      %v8215 = vadd.f32 0.0, %v8214
      %v8216 = vpop.f32.mrf.mxu0
      %8217 = vmatprep.mubr.f32.mxu0 0.0
      %8218 = vmatmul.mubr.f32.gmra.mxu0 %v8021
      %v8219 = vpop.f32.mrf.mxu0
      %v8220 = vadd.f32 0.0, %v8219
      %v8221 = vpop.f32.mrf.mxu0
      %8222 = vmatprep.mubr.f32.mxu0 0.0
      %8223 = vmatmul.mubr.f32.gmra.mxu0 %v8024
      %v8224 = vpop.f32.mrf.mxu0
      %v8225 = vadd.f32 0.0, %v8224
      %v8226 = vpop.f32.mrf.mxu0
      %8227 = vmatprep.mubr.f32.mxu0 0.0
      %8228 = vmatmul.mubr.f32.gmra.mxu0 %v8027
      %v8229 = vpop.f32.mrf.mxu0
      %v8230 = vadd.f32 0.0, %v8229
      %v8231 = vpop.f32.mrf.mxu0
      %8232 = vmatprep.mubr.f32.mxu0 0.0
      %8233 = vmatmul.mubr.f32.gmra.mxu0 %v8030
      %v8234 = vpop.f32.mrf.mxu0
      %v8235 = vadd.f32 0.0, %v8234
      %v8236 = vpop.f32.mrf.mxu0
      %8237 = vmatprep.mubr.f32.mxu0 0.0
      %8238 = vmatmul.mubr.f32.gmra.mxu0 %v8033
      %v8239 = vpop.f32.mrf.mxu0
      %v8240 = vadd.f32 0.0, %v8239
      %v8241 = vpop.f32.mrf.mxu0
      %8242 = vmatprep.mubr.f32.mxu0 0.0
      %8243 = vmatmul.mubr.f32.gmra.mxu0 %v8036
      %v8244 = vpop.f32.mrf.mxu0
      %v8245 = vadd.f32 0.0, %v8244
      %v8246 = vpop.f32.mrf.mxu0
      %8247 = vmatprep.mubr.f32.mxu0 0.0
      %8248 = vmatmul.mubr.f32.gmra.mxu0 %v8039
      %v8249 = vpop.f32.mrf.mxu0
      %v8250 = vadd.f32 0.0, %v8249
      %v8251 = vpop.f32.mrf.mxu0
      %8252 = vmatprep.mubr.f32.mxu0 0.0
      %8253 = vmatmul.mubr.f32.gmra.mxu0 %v8042
      %v8254 = vpop.f32.mrf.mxu0
      %v8255 = vadd.f32 0.0, %v8254
      %v8256 = vpop.f32.mrf.mxu0
      %8257 = vmatprep.mubr.f32.mxu0 0.0
      %8258 = vmatmul.mubr.f32.gmra.mxu0 %v8045
      %v8259 = vpop.f32.mrf.mxu0
      %v8260 = vadd.f32 0.0, %v8259
      %v8261 = vpop.f32.mrf.mxu0
      %8262 = vmatprep.mubr.f32.mxu0 0.0
      %8263 = vmatmul.mubr.f32.gmra.mxu0 %v8048
      %v8264 = vpop.f32.mrf.mxu0
      %v8265 = vadd.f32 0.0, %v8264
      %v8266 = vpop.f32.mrf.mxu0
      %8267 = vmatprep.mubr.f32.mxu0 0.0
      %8268 = vmatmul.mubr.f32.gmra.mxu0 %v8051
      %v8269 = vpop.f32.mrf.mxu0
      %v8270 = vadd.f32 0.0, %v8269
      %v8271 = vpop.f32.mrf.mxu0
      %8272 = vmatprep.mubr.f32.mxu0 0.0
      %8273 = vmatmul.mubr.f32.gmra.mxu0 %v8054
      %v8274 = vpop.f32.mrf.mxu0
      %v8275 = vadd.f32 0.0, %v8274
      %v8276 = vpop.f32.mrf.mxu0
      %8277 = vmatprep.mubr.f32.mxu0 0.0
      %8278 = vmatmul.mubr.f32.gmra.mxu0 %v8057
      %v8279 = vpop.f32.mrf.mxu0
      %v8280 = vadd.f32 0.0, %v8279
      %v8281 = vpop.f32.mrf.mxu0
      %8282 = vmatprep.mubr.f32.mxu0 0.0
      %8283 = vmatmul.mubr.f32.gmra.mxu0 %v8060
      %v8284 = vpop.f32.mrf.mxu0
      %v8285 = vadd.f32 0.0, %v8284
      %v8286 = vpop.f32.mrf.mxu0
      %8287 = vmatprep.mubr.f32.mxu0 0.0
      %8288 = vmatmul.mubr.f32.gmra.mxu0 %v8063
      %v8289 = vpop.f32.mrf.mxu0
      %v8290 = vadd.f32 0.0, %v8289
      %v8291 = vpop.f32.mrf.mxu0
      %8292 = vmatprep.mubr.f32.mxu0 0.0
      %8293 = vmatmul.mubr.f32.gmra.mxu0 %v8066
      %v8294 = vpop.f32.mrf.mxu0
      %v8295 = vadd.f32 0.0, %v8294
      %v8296 = vpop.f32.mrf.mxu0
      %8297 = vmatprep.mubr.f32.mxu0 0.0
      %8298 = vmatmul.mubr.f32.gmra.mxu0 %v8069
      %v8299 = vpop.f32.mrf.mxu0
      %v8300 = vadd.f32 0.0, %v8299
      %v8301 = vpop.f32.mrf.mxu0
      %8302 = vmatprep.mubr.f32.mxu0 0.0
      %8303 = vmatmul.mubr.f32.gmra.mxu0 %v8072
      %v8304 = vpop.f32.mrf.mxu0
      %v8305 = vadd.f32 0.0, %v8304
      %v8306 = vpop.f32.mrf.mxu0
      %8307 = vmatprep.mubr.f32.mxu0 0.0
      %8308 = vmatmul.mubr.f32.gmra.mxu0 %v8075
      %v8309 = vpop.f32.mrf.mxu0
      %v8310 = vadd.f32 0.0, %v8309
      %v8311 = vpop.f32.mrf.mxu0
      %8312 = vmatprep.mubr.f32.mxu0 0.0
      %8313 = vmatmul.mubr.f32.gmra.mxu0 %v8078
      %v8314 = vpop.f32.mrf.mxu0
      %v8315 = vadd.f32 0.0, %v8314
      %v8316 = vpop.f32.mrf.mxu0
      %8317 = vmatprep.mubr.f32.mxu0 0.0
      %8318 = vmatmul.mubr.f32.gmra.mxu0 %v8081
      %v8319 = vpop.f32.mrf.mxu0
      %v8320 = vadd.f32 0.0, %v8319
      %v8321 = vpop.f32.mrf.mxu0
      %8322 = vmatprep.mubr.f32.mxu0 0.0
      %8323 = vmatmul.mubr.f32.gmra.mxu0 %v8084
      %v8324 = vpop.f32.mrf.mxu0
      %v8325 = vadd.f32 0.0, %v8324
      %v8326 = vpop.f32.mrf.mxu0
      %8327 = vmatprep.mubr.f32.mxu0 0.0
      %8328 = vmatmul.mubr.f32.gmra.mxu0 %v8087
      %v8329 = vpop.f32.mrf.mxu0
      %v8330 = vadd.f32 0.0, %v8329
      %v8331 = vpop.f32.mrf.mxu0
      %8332 = vmatprep.mubr.f32.mxu0 0.0
      %8333 = vmatmul.mubr.f32.gmra.mxu0 %v8090
      %v8334 = vpop.f32.mrf.mxu0
      %v8335 = vadd.f32 0.0, %v8334
      %v8336 = vpop.f32.mrf.mxu0
      %8337 = vmatprep.mubr.f32.mxu0 0.0
      %8338 = vmatmul.mubr.f32.gmra.mxu0 %v8093
      %v8339 = vpop.f32.mrf.mxu0
      %v8340 = vadd.f32 0.0, %v8339
      %v8341 = vpop.f32.mrf.mxu0
      %8342 = vdwg.mxu0
      %v8343 = vadd.f32 %v7913, %v8165
      %v8344 = vadd.f32 %v7914, %v8170
      %v8345 = vadd.f32 %v7915, %v8175
      %v8346 = vadd.f32 %v7916, %v8180
      %v8347 = vadd.f32 %v7917, %v8185
      %v8348 = vadd.f32 %v7918, %v8190
      %v8349 = vadd.f32 %v7919, %v8195
      %v8350 = vadd.f32 %v7920, %v8200
      %v8351 = vadd.f32 %v7921, %v8205
      %v8352 = vadd.f32 %v7922, %v8210
      %v8353 = vadd.f32 %v7923, %v8215
      %v8354 = vadd.f32 %v7924, %v8220
      %v8355 = vadd.f32 %v7925, %v8225
      %v8356 = vadd.f32 %v7926, %v8230
      %v8357 = vadd.f32 %v7927, %v8235
      %v8358 = vadd.f32 %v7928, %v8240
      %v8359 = vadd.f32 %v7929, %v8245
      %v8360 = vadd.f32 %v7930, %v8250
      %v8361 = vadd.f32 %v7931, %v8255
      %v8362 = vadd.f32 %v7932, %v8260
      %v8363 = vadd.f32 %v7933, %v8265
      %v8364 = vadd.f32 %v7934, %v8270
      %v8365 = vadd.f32 %v7935, %v8275
      %v8366 = vadd.f32 %v7936, %v8280
      %v8367 = vadd.f32 %v7937, %v8285
      %v8368 = vadd.f32 %v7938, %v8290
      %v8369 = vadd.f32 %v7939, %v8295
      %v8370 = vadd.f32 %v7940, %v8300
      %v8371 = vadd.f32 %v7941, %v8305
      %v8372 = vadd.f32 %v7942, %v8310
      %v8373 = vadd.f32 %v7943, %v8315
      %v8374 = vadd.f32 %v7944, %v8320
      %v8375 = vadd.f32 %v7945, %v8325
      %v8376 = vadd.f32 %v7946, %v8330
      %v8377 = vadd.f32 %v7947, %v8335
      %v8378 = vadd.f32 %v7948, %v8340
      %v8379 = vld [vmem:[#allocation2 + $0x26] sm:$0xff]
      %v8380 = vld [vmem:[#allocation2 + $0x2e] sm:$0xff]
      %v8381 = vld [vmem:[#allocation2 + $0x36] sm:$0xff]
      %v8382 = vld [vmem:[#allocation2 + $0x3e] sm:$0xff]
      %v8383 = vld [vmem:[#allocation2 + $0x46] sm:$0xff]
      %v8384 = vld [vmem:[#allocation2 + $0x4e] sm:$0xff]
      %v8385 = vld [vmem:[#allocation2 + $0x56] sm:$0xff]
      %v8386 = vld [vmem:[#allocation2 + $0x5e] sm:$0xff]
      %v8387 = vld [vmem:[#allocation2 + $0x66] sm:$0xff]
      %v8388 = vld [vmem:[#allocation2 + $0x6e] sm:$0xff]
      %v8389 = vld [vmem:[#allocation2 + $0x76] sm:$0xff]
      %v8390 = vld [vmem:[#allocation2 + $0x7e] sm:$0xff]
      %v8391 = vld [vmem:[#allocation2 + $0x86] sm:$0xff]
      %v8392 = vld [vmem:[#allocation2 + $0x8e] sm:$0xff]
      %v8393 = vld [vmem:[#allocation2 + $0x96] sm:$0xff]
      %v8394 = vld [vmem:[#allocation2 + $0x9e] sm:$0xff]
      %v8395 = vld [vmem:[#allocation2 + $0xa6] sm:$0xff]
      %v8396 = vld [vmem:[#allocation2 + $0xae] sm:$0xff]
      %v8397 = vld [vmem:[#allocation2 + $0xb6] sm:$0xff]
      %v8398 = vld [vmem:[#allocation2 + $0xbe] sm:$0xff]
      %v8399 = vld [vmem:[#allocation2 + $0xc6] sm:$0xff]
      %v8400 = vld [vmem:[#allocation2 + $0xce] sm:$0xff]
      %v8401 = vld [vmem:[#allocation2 + $0xd6] sm:$0xff]
      %v8402 = vld [vmem:[#allocation2 + $0xde] sm:$0xff]
      %v8403 = vld [vmem:[#allocation2 + $0xe6] sm:$0xff]
      %v8404 = vld [vmem:[#allocation2 + $0xee] sm:$0xff]
      %v8405 = vld [vmem:[#allocation2 + $0xf6] sm:$0xff]
      %v8406 = vld [vmem:[#allocation2 + $0xfe] sm:$0xff]
      %v8407 = vld [vmem:[#allocation2 + $0x106] sm:$0xff]
      %v8408 = vld [vmem:[#allocation2 + $0x10e] sm:$0xff]
      %v8409 = vld [vmem:[#allocation2 + $0x116] sm:$0xff]
      %v8410 = vld [vmem:[#allocation2 + $0x11e] sm:$0xff]
      %v8411 = vld [vmem:[#allocation2 + $0x126] sm:$0xff]
      %v8412 = vld [vmem:[#allocation2 + $0x12e] sm:$0xff]
      %v8413 = vld [vmem:[#allocation2 + $0x136] sm:$0xff]
      %v8414 = vld [vmem:[#allocation2 + $0x13e] sm:$0xff]
      %s8415 = scalar_lea.vmem %s3, 64
      %v8416 = vld [vmem:[%s8415] sm:$0x3f]
      %v8418 = vsel %vm4932, %v8379, 0
      %v8421 = vsel %vm4932, %v8380, 0
      %v8424 = vsel %vm4932, %v8381, 0
      %v8427 = vsel %vm4932, %v8382, 0
      %v8430 = vsel %vm4932, %v8383, 0
      %v8433 = vsel %vm4932, %v8384, 0
      %v8436 = vsel %vm4932, %v8385, 0
      %v8439 = vsel %vm4932, %v8386, 0
      %v8442 = vsel %vm4932, %v8387, 0
      %v8445 = vsel %vm4932, %v8388, 0
      %v8448 = vsel %vm4932, %v8389, 0
      %v8451 = vsel %vm4932, %v8390, 0
      %v8454 = vsel %vm4932, %v8391, 0
      %v8457 = vsel %vm4932, %v8392, 0
      %v8460 = vsel %vm4932, %v8393, 0
      %v8463 = vsel %vm4932, %v8394, 0
      %v8466 = vsel %vm4932, %v8395, 0
      %v8469 = vsel %vm4932, %v8396, 0
      %v8472 = vsel %vm4932, %v8397, 0
      %v8475 = vsel %vm4932, %v8398, 0
      %v8478 = vsel %vm4932, %v8399, 0
      %v8481 = vsel %vm4932, %v8400, 0
      %v8484 = vsel %vm4932, %v8401, 0
      %v8487 = vsel %vm4932, %v8402, 0
      %v8490 = vsel %vm4932, %v8403, 0
      %v8493 = vsel %vm4932, %v8404, 0
      %v8496 = vsel %vm4932, %v8405, 0
      %v8499 = vsel %vm4932, %v8406, 0
      %v8502 = vsel %vm4932, %v8407, 0
      %v8505 = vsel %vm4932, %v8408, 0
      %v8508 = vsel %vm4932, %v8409, 0
      %v8511 = vsel %vm4932, %v8410, 0
      %v8514 = vsel %vm4932, %v8411, 0
      %v8517 = vsel %vm4932, %v8412, 0
      %v8520 = vsel %vm4932, %v8413, 0
      %v8523 = vsel %vm4932, %v8414, 0
      %v8526 = vsel %vm5194, %v8416, 0
      %8528 = vmatprep.subr.mxu0 0.0
      %8529 = vmatpush1.msra.mxu0 0.0
      %8530 = vmatprep.subr.mxu0 0.0
      %8531 = vmatpush1.msra.mxu0 0.0
      %8532 = vmatprep.subr.mxu0 0.0
      %8533 = vmatpush1.msra.mxu0 0.0
      %8534 = vmatprep.subr.mxu0 0.0
      %8535 = vmatpush1.msra.mxu0 0.0
      %8536 = vmatprep.subr.mxu0 0.0
      %8537 = vmatpush1.msra.mxu0 0.0
      %8538 = vmatprep.subr.mxu0 0.0
      %8539 = vmatpush1.msra.mxu0 0.0
      %8540 = vmatprep.subr.mxu0 0.0
      %8541 = vmatpush1.msra.mxu0 0.0
      %8542 = vmatprep.subr.mxu0 0.0
      %8543 = vmatpush1.msra.mxu0 0.0
      %8544 = vmatprep.subr.mxu0 0.0
      %8545 = vmatpush1.msra.mxu0 0.0
      %8546 = vmatprep.subr.mxu0 0.0
      %8547 = vmatpush1.msra.mxu0 0.0
      %8548 = vmatprep.subr.mxu0 0.0
      %8549 = vmatpush1.msra.mxu0 0.0
      %8550 = vmatprep.subr.mxu0 0.0
      %8551 = vmatpush1.msra.mxu0 0.0
      %8552 = vmatprep.subr.mxu0 0.0
      %8553 = vmatpush1.msra.mxu0 0.0
      %8554 = vmatprep.subr.mxu0 0.0
      %8555 = vmatpush1.msra.mxu0 0.0
      %8556 = vmatprep.subr.mxu0 0.0
      %8557 = vmatpush1.msra.mxu0 0.0
      %8558 = vmatprep.subr.mxu0 0.0
      %8559 = vmatpush1.msra.mxu0 %v8526
      %8560 = vmatprep.subr.mxu0 0.0
      %8561 = vmatpush2.msra.mxu0 0.0
      %8562 = vmatprep.subr.mxu0 0.0
      %8563 = vmatpush2.msra.mxu0 0.0
      %8564 = vmatprep.subr.mxu0 0.0
      %8565 = vmatpush2.msra.mxu0 0.0
      %8566 = vmatprep.subr.mxu0 0.0
      %8567 = vmatpush2.msra.mxu0 0.0
      %8568 = vmatprep.subr.mxu0 0.0
      %8569 = vmatpush2.msra.mxu0 0.0
      %8570 = vmatprep.subr.mxu0 0.0
      %8571 = vmatpush2.msra.mxu0 0.0
      %8572 = vmatprep.subr.mxu0 0.0
      %8573 = vmatpush2.msra.mxu0 0.0
      %8574 = vmatprep.subr.mxu0 0.0
      %8575 = vmatpush2.msra.mxu0 0.0
      %8576 = vmatprep.subr.mxu0 0.0
      %8577 = vmatpush2.msra.mxu0 0.0
      %8578 = vmatprep.subr.mxu0 0.0
      %8579 = vmatpush2.msra.mxu0 0.0
      %8580 = vmatprep.subr.mxu0 0.0
      %8581 = vmatpush2.msra.mxu0 0.0
      %8582 = vmatprep.subr.mxu0 0.0
      %8583 = vmatpush2.msra.mxu0 0.0
      %8584 = vmatprep.subr.mxu0 0.0
      %8585 = vmatpush2.msra.mxu0 0.0
      %8586 = vmatprep.subr.mxu0 0.0
      %8587 = vmatpush2.msra.mxu0 0.0
      %8588 = vmatprep.subr.mxu0 0.0
      %8589 = vmatpush2.msra.mxu0 0.0
      %8590 = vmatprep.subr.mxu0 0.0
      %8591 = vmatpush2.msra.mxu0 0.0
      %8592 = vmatprep.mubr.f32.mxu0 0.0
      %8593 = vmatmul.mubr.f32.gmra.mxu0 %v8418
      %v8594 = vpop.f32.mrf.mxu0
      %v8595 = vadd.f32 0.0, %v8594
      %v8596 = vpop.f32.mrf.mxu0
      %8597 = vmatprep.mubr.f32.mxu0 0.0
      %8598 = vmatmul.mubr.f32.gmra.mxu0 %v8421
      %v8599 = vpop.f32.mrf.mxu0
      %v8600 = vadd.f32 0.0, %v8599
      %v8601 = vpop.f32.mrf.mxu0
      %8602 = vmatprep.mubr.f32.mxu0 0.0
      %8603 = vmatmul.mubr.f32.gmra.mxu0 %v8424
      %v8604 = vpop.f32.mrf.mxu0
      %v8605 = vadd.f32 0.0, %v8604
      %v8606 = vpop.f32.mrf.mxu0
      %8607 = vmatprep.mubr.f32.mxu0 0.0
      %8608 = vmatmul.mubr.f32.gmra.mxu0 %v8427
      %v8609 = vpop.f32.mrf.mxu0
      %v8610 = vadd.f32 0.0, %v8609
      %v8611 = vpop.f32.mrf.mxu0
      %8612 = vmatprep.mubr.f32.mxu0 0.0
      %8613 = vmatmul.mubr.f32.gmra.mxu0 %v8430
      %v8614 = vpop.f32.mrf.mxu0
      %v8615 = vadd.f32 0.0, %v8614
      %v8616 = vpop.f32.mrf.mxu0
      %8617 = vmatprep.mubr.f32.mxu0 0.0
      %8618 = vmatmul.mubr.f32.gmra.mxu0 %v8433
      %v8619 = vpop.f32.mrf.mxu0
      %v8620 = vadd.f32 0.0, %v8619
      %v8621 = vpop.f32.mrf.mxu0
      %8622 = vmatprep.mubr.f32.mxu0 0.0
      %8623 = vmatmul.mubr.f32.gmra.mxu0 %v8436
      %v8624 = vpop.f32.mrf.mxu0
      %v8625 = vadd.f32 0.0, %v8624
      %v8626 = vpop.f32.mrf.mxu0
      %8627 = vmatprep.mubr.f32.mxu0 0.0
      %8628 = vmatmul.mubr.f32.gmra.mxu0 %v8439
      %v8629 = vpop.f32.mrf.mxu0
      %v8630 = vadd.f32 0.0, %v8629
      %v8631 = vpop.f32.mrf.mxu0
      %8632 = vmatprep.mubr.f32.mxu0 0.0
      %8633 = vmatmul.mubr.f32.gmra.mxu0 %v8442
      %v8634 = vpop.f32.mrf.mxu0
      %v8635 = vadd.f32 0.0, %v8634
      %v8636 = vpop.f32.mrf.mxu0
      %8637 = vmatprep.mubr.f32.mxu0 0.0
      %8638 = vmatmul.mubr.f32.gmra.mxu0 %v8445
      %v8639 = vpop.f32.mrf.mxu0
      %v8640 = vadd.f32 0.0, %v8639
      %v8641 = vpop.f32.mrf.mxu0
      %8642 = vmatprep.mubr.f32.mxu0 0.0
      %8643 = vmatmul.mubr.f32.gmra.mxu0 %v8448
      %v8644 = vpop.f32.mrf.mxu0
      %v8645 = vadd.f32 0.0, %v8644
      %v8646 = vpop.f32.mrf.mxu0
      %8647 = vmatprep.mubr.f32.mxu0 0.0
      %8648 = vmatmul.mubr.f32.gmra.mxu0 %v8451
      %v8649 = vpop.f32.mrf.mxu0
      %v8650 = vadd.f32 0.0, %v8649
      %v8651 = vpop.f32.mrf.mxu0
      %8652 = vmatprep.mubr.f32.mxu0 0.0
      %8653 = vmatmul.mubr.f32.gmra.mxu0 %v8454
      %v8654 = vpop.f32.mrf.mxu0
      %v8655 = vadd.f32 0.0, %v8654
      %v8656 = vpop.f32.mrf.mxu0
      %8657 = vmatprep.mubr.f32.mxu0 0.0
      %8658 = vmatmul.mubr.f32.gmra.mxu0 %v8457
      %v8659 = vpop.f32.mrf.mxu0
      %v8660 = vadd.f32 0.0, %v8659
      %v8661 = vpop.f32.mrf.mxu0
      %8662 = vmatprep.mubr.f32.mxu0 0.0
      %8663 = vmatmul.mubr.f32.gmra.mxu0 %v8460
      %v8664 = vpop.f32.mrf.mxu0
      %v8665 = vadd.f32 0.0, %v8664
      %v8666 = vpop.f32.mrf.mxu0
      %8667 = vmatprep.mubr.f32.mxu0 0.0
      %8668 = vmatmul.mubr.f32.gmra.mxu0 %v8463
      %v8669 = vpop.f32.mrf.mxu0
      %v8670 = vadd.f32 0.0, %v8669
      %v8671 = vpop.f32.mrf.mxu0
      %8672 = vmatprep.mubr.f32.mxu0 0.0
      %8673 = vmatmul.mubr.f32.gmra.mxu0 %v8466
      %v8674 = vpop.f32.mrf.mxu0
      %v8675 = vadd.f32 0.0, %v8674
      %v8676 = vpop.f32.mrf.mxu0
      %8677 = vmatprep.mubr.f32.mxu0 0.0
      %8678 = vmatmul.mubr.f32.gmra.mxu0 %v8469
      %v8679 = vpop.f32.mrf.mxu0
      %v8680 = vadd.f32 0.0, %v8679
      %v8681 = vpop.f32.mrf.mxu0
      %8682 = vmatprep.mubr.f32.mxu0 0.0
      %8683 = vmatmul.mubr.f32.gmra.mxu0 %v8472
      %v8684 = vpop.f32.mrf.mxu0
      %v8685 = vadd.f32 0.0, %v8684
      %v8686 = vpop.f32.mrf.mxu0
      %8687 = vmatprep.mubr.f32.mxu0 0.0
      %8688 = vmatmul.mubr.f32.gmra.mxu0 %v8475
      %v8689 = vpop.f32.mrf.mxu0
      %v8690 = vadd.f32 0.0, %v8689
      %v8691 = vpop.f32.mrf.mxu0
      %8692 = vmatprep.mubr.f32.mxu0 0.0
      %8693 = vmatmul.mubr.f32.gmra.mxu0 %v8478
      %v8694 = vpop.f32.mrf.mxu0
      %v8695 = vadd.f32 0.0, %v8694
      %v8696 = vpop.f32.mrf.mxu0
      %8697 = vmatprep.mubr.f32.mxu0 0.0
      %8698 = vmatmul.mubr.f32.gmra.mxu0 %v8481
      %v8699 = vpop.f32.mrf.mxu0
      %v8700 = vadd.f32 0.0, %v8699
      %v8701 = vpop.f32.mrf.mxu0
      %8702 = vmatprep.mubr.f32.mxu0 0.0
      %8703 = vmatmul.mubr.f32.gmra.mxu0 %v8484
      %v8704 = vpop.f32.mrf.mxu0
      %v8705 = vadd.f32 0.0, %v8704
      %v8706 = vpop.f32.mrf.mxu0
      %8707 = vmatprep.mubr.f32.mxu0 0.0
      %8708 = vmatmul.mubr.f32.gmra.mxu0 %v8487
      %v8709 = vpop.f32.mrf.mxu0
      %v8710 = vadd.f32 0.0, %v8709
      %v8711 = vpop.f32.mrf.mxu0
      %8712 = vmatprep.mubr.f32.mxu0 0.0
      %8713 = vmatmul.mubr.f32.gmra.mxu0 %v8490
      %v8714 = vpop.f32.mrf.mxu0
      %v8715 = vadd.f32 0.0, %v8714
      %v8716 = vpop.f32.mrf.mxu0
      %8717 = vmatprep.mubr.f32.mxu0 0.0
      %8718 = vmatmul.mubr.f32.gmra.mxu0 %v8493
      %v8719 = vpop.f32.mrf.mxu0
      %v8720 = vadd.f32 0.0, %v8719
      %v8721 = vpop.f32.mrf.mxu0
      %8722 = vmatprep.mubr.f32.mxu0 0.0
      %8723 = vmatmul.mubr.f32.gmra.mxu0 %v8496
      %v8724 = vpop.f32.mrf.mxu0
      %v8725 = vadd.f32 0.0, %v8724
      %v8726 = vpop.f32.mrf.mxu0
      %8727 = vmatprep.mubr.f32.mxu0 0.0
      %8728 = vmatmul.mubr.f32.gmra.mxu0 %v8499
      %v8729 = vpop.f32.mrf.mxu0
      %v8730 = vadd.f32 0.0, %v8729
      %v8731 = vpop.f32.mrf.mxu0
      %8732 = vmatprep.mubr.f32.mxu0 0.0
      %8733 = vmatmul.mubr.f32.gmra.mxu0 %v8502
      %v8734 = vpop.f32.mrf.mxu0
      %v8735 = vadd.f32 0.0, %v8734
      %v8736 = vpop.f32.mrf.mxu0
      %8737 = vmatprep.mubr.f32.mxu0 0.0
      %8738 = vmatmul.mubr.f32.gmra.mxu0 %v8505
      %v8739 = vpop.f32.mrf.mxu0
      %v8740 = vadd.f32 0.0, %v8739
      %v8741 = vpop.f32.mrf.mxu0
      %8742 = vmatprep.mubr.f32.mxu0 0.0
      %8743 = vmatmul.mubr.f32.gmra.mxu0 %v8508
      %v8744 = vpop.f32.mrf.mxu0
      %v8745 = vadd.f32 0.0, %v8744
      %v8746 = vpop.f32.mrf.mxu0
      %8747 = vmatprep.mubr.f32.mxu0 0.0
      %8748 = vmatmul.mubr.f32.gmra.mxu0 %v8511
      %v8749 = vpop.f32.mrf.mxu0
      %v8750 = vadd.f32 0.0, %v8749
      %v8751 = vpop.f32.mrf.mxu0
      %8752 = vmatprep.mubr.f32.mxu0 0.0
      %8753 = vmatmul.mubr.f32.gmra.mxu0 %v8514
      %v8754 = vpop.f32.mrf.mxu0
      %v8755 = vadd.f32 0.0, %v8754
      %v8756 = vpop.f32.mrf.mxu0
      %8757 = vmatprep.mubr.f32.mxu0 0.0
      %8758 = vmatmul.mubr.f32.gmra.mxu0 %v8517
      %v8759 = vpop.f32.mrf.mxu0
      %v8760 = vadd.f32 0.0, %v8759
      %v8761 = vpop.f32.mrf.mxu0
      %8762 = vmatprep.mubr.f32.mxu0 0.0
      %8763 = vmatmul.mubr.f32.gmra.mxu0 %v8520
      %v8764 = vpop.f32.mrf.mxu0
      %v8765 = vadd.f32 0.0, %v8764
      %v8766 = vpop.f32.mrf.mxu0
      %8767 = vmatprep.mubr.f32.mxu0 0.0
      %8768 = vmatmul.mubr.f32.gmra.mxu0 %v8523
      %v8769 = vpop.f32.mrf.mxu0
      %v8770 = vadd.f32 0.0, %v8769
      %v8771 = vpop.f32.mrf.mxu0
      %8772 = vdwg.mxu0
      %v8773 = vadd.f32 %v8343, %v8595
      %v8774 = vadd.f32 %v8344, %v8600
      %v8775 = vadd.f32 %v8345, %v8605
      %v8776 = vadd.f32 %v8346, %v8610
      %v8777 = vadd.f32 %v8347, %v8615
      %v8778 = vadd.f32 %v8348, %v8620
      %v8779 = vadd.f32 %v8349, %v8625
      %v8780 = vadd.f32 %v8350, %v8630
      %v8781 = vadd.f32 %v8351, %v8635
      %v8782 = vadd.f32 %v8352, %v8640
      %v8783 = vadd.f32 %v8353, %v8645
      %v8784 = vadd.f32 %v8354, %v8650
      %v8785 = vadd.f32 %v8355, %v8655
      %v8786 = vadd.f32 %v8356, %v8660
      %v8787 = vadd.f32 %v8357, %v8665
      %v8788 = vadd.f32 %v8358, %v8670
      %v8789 = vadd.f32 %v8359, %v8675
      %v8790 = vadd.f32 %v8360, %v8680
      %v8791 = vadd.f32 %v8361, %v8685
      %v8792 = vadd.f32 %v8362, %v8690
      %v8793 = vadd.f32 %v8363, %v8695
      %v8794 = vadd.f32 %v8364, %v8700
      %v8795 = vadd.f32 %v8365, %v8705
      %v8796 = vadd.f32 %v8366, %v8710
      %v8797 = vadd.f32 %v8367, %v8715
      %v8798 = vadd.f32 %v8368, %v8720
      %v8799 = vadd.f32 %v8369, %v8725
      %v8800 = vadd.f32 %v8370, %v8730
      %v8801 = vadd.f32 %v8371, %v8735
      %v8802 = vadd.f32 %v8372, %v8740
      %v8803 = vadd.f32 %v8373, %v8745
      %v8804 = vadd.f32 %v8374, %v8750
      %v8805 = vadd.f32 %v8375, %v8755
      %v8806 = vadd.f32 %v8376, %v8760
      %v8807 = vadd.f32 %v8377, %v8765
      %v8808 = vadd.f32 %v8378, %v8770
      %v8809 = vld [vmem:[%s4] sm:$0x1]
      %v8811 = vlaneseq
      %v8812 = vshrl.u32 %v8811, 7
      %v8813 = vsub.s32 0, %v8812
      %v8814 = vrot.slane %v8809, %v8813
      %v8816 = vadd.f32 %v8773, %v8814
      %v8817 = vadd.f32 %v8774, %v8814
      %v8818 = vadd.f32 %v8775, %v8814
      %v8819 = vadd.f32 %v8776, %v8814
      %v8820 = vadd.f32 %v8777, %v8814
      %v8821 = vadd.f32 %v8778, %v8814
      %v8822 = vadd.f32 %v8779, %v8814
      %v8823 = vadd.f32 %v8780, %v8814
      %v8824 = vadd.f32 %v8781, %v8814
      %v8825 = vadd.f32 %v8782, %v8814
      %v8826 = vadd.f32 %v8783, %v8814
      %v8827 = vadd.f32 %v8784, %v8814
      %v8828 = vadd.f32 %v8785, %v8814
      %v8829 = vadd.f32 %v8786, %v8814
      %v8830 = vadd.f32 %v8787, %v8814
      %v8831 = vadd.f32 %v8788, %v8814
      %v8832 = vadd.f32 %v8789, %v8814
      %v8833 = vadd.f32 %v8790, %v8814
      %v8834 = vadd.f32 %v8791, %v8814
      %v8835 = vadd.f32 %v8792, %v8814
      %v8836 = vadd.f32 %v8793, %v8814
      %v8837 = vadd.f32 %v8794, %v8814
      %v8838 = vadd.f32 %v8795, %v8814
      %v8839 = vadd.f32 %v8796, %v8814
      %v8840 = vadd.f32 %v8797, %v8814
      %v8841 = vadd.f32 %v8798, %v8814
      %v8842 = vadd.f32 %v8799, %v8814
      %v8843 = vadd.f32 %v8800, %v8814
      %v8844 = vadd.f32 %v8801, %v8814
      %v8845 = vadd.f32 %v8802, %v8814
      %v8846 = vadd.f32 %v8803, %v8814
      %v8847 = vadd.f32 %v8804, %v8814
      %v8848 = vadd.f32 %v8805, %v8814
      %v8849 = vadd.f32 %v8806, %v8814
      %v8850 = vadd.f32 %v8807, %v8814
      %v8851 = vadd.f32 %v8808, %v8814
      %vm8852 = vcmp.ge.f32.partialorder %v8816, 0.0
      %vm8853 = vcmp.ge.f32.partialorder %v8817, 0.0
      %vm8854 = vcmp.ge.f32.partialorder %v8818, 0.0
      %vm8855 = vcmp.ge.f32.partialorder %v8819, 0.0
      %vm8856 = vcmp.ge.f32.partialorder %v8820, 0.0
      %vm8857 = vcmp.ge.f32.partialorder %v8821, 0.0
      %vm8858 = vcmp.ge.f32.partialorder %v8822, 0.0
      %vm8859 = vcmp.ge.f32.partialorder %v8823, 0.0
      %vm8860 = vcmp.ge.f32.partialorder %v8824, 0.0
      %vm8861 = vcmp.ge.f32.partialorder %v8825, 0.0
      %vm8862 = vcmp.ge.f32.partialorder %v8826, 0.0
      %vm8863 = vcmp.ge.f32.partialorder %v8827, 0.0
      %vm8864 = vcmp.ge.f32.partialorder %v8828, 0.0
      %vm8865 = vcmp.ge.f32.partialorder %v8829, 0.0
      %vm8866 = vcmp.ge.f32.partialorder %v8830, 0.0
      %vm8867 = vcmp.ge.f32.partialorder %v8831, 0.0
      %vm8868 = vcmp.ge.f32.partialorder %v8832, 0.0
      %vm8869 = vcmp.ge.f32.partialorder %v8833, 0.0
      %vm8870 = vcmp.ge.f32.partialorder %v8834, 0.0
      %vm8871 = vcmp.ge.f32.partialorder %v8835, 0.0
      %vm8872 = vcmp.ge.f32.partialorder %v8836, 0.0
      %vm8873 = vcmp.ge.f32.partialorder %v8837, 0.0
      %vm8874 = vcmp.ge.f32.partialorder %v8838, 0.0
      %vm8875 = vcmp.ge.f32.partialorder %v8839, 0.0
      %vm8876 = vcmp.ge.f32.partialorder %v8840, 0.0
      %vm8877 = vcmp.ge.f32.partialorder %v8841, 0.0
      %vm8878 = vcmp.ge.f32.partialorder %v8842, 0.0
      %vm8879 = vcmp.ge.f32.partialorder %v8843, 0.0
      %vm8880 = vcmp.ge.f32.partialorder %v8844, 0.0
      %vm8881 = vcmp.ge.f32.partialorder %v8845, 0.0
      %vm8882 = vcmp.ge.f32.partialorder %v8846, 0.0
      %vm8883 = vcmp.ge.f32.partialorder %v8847, 0.0
      %vm8884 = vcmp.ge.f32.partialorder %v8848, 0.0
      %vm8885 = vcmp.ge.f32.partialorder %v8849, 0.0
      %vm8886 = vcmp.ge.f32.partialorder %v8850, 0.0
      %vm8887 = vcmp.ge.f32.partialorder %v8851, 0.0
      %v8888 = vmul.f32 %v8816, 0.01
      %v8889 = vmul.f32 %v8817, 0.01
      %v8890 = vmul.f32 %v8818, 0.01
      %v8891 = vmul.f32 %v8819, 0.01
      %v8892 = vmul.f32 %v8820, 0.01
      %v8893 = vmul.f32 %v8821, 0.01
      %v8894 = vmul.f32 %v8822, 0.01
      %v8895 = vmul.f32 %v8823, 0.01
      %v8896 = vmul.f32 %v8824, 0.01
      %v8897 = vmul.f32 %v8825, 0.01
      %v8898 = vmul.f32 %v8826, 0.01
      %v8899 = vmul.f32 %v8827, 0.01
      %v8900 = vmul.f32 %v8828, 0.01
      %v8901 = vmul.f32 %v8829, 0.01
      %v8902 = vmul.f32 %v8830, 0.01
      %v8903 = vmul.f32 %v8831, 0.01
      %v8904 = vmul.f32 %v8832, 0.01
      %v8905 = vmul.f32 %v8833, 0.01
      %v8906 = vmul.f32 %v8834, 0.01
      %v8907 = vmul.f32 %v8835, 0.01
      %v8908 = vmul.f32 %v8836, 0.01
      %v8909 = vmul.f32 %v8837, 0.01
      %v8910 = vmul.f32 %v8838, 0.01
      %v8911 = vmul.f32 %v8839, 0.01
      %v8912 = vmul.f32 %v8840, 0.01
      %v8913 = vmul.f32 %v8841, 0.01
      %v8914 = vmul.f32 %v8842, 0.01
      %v8915 = vmul.f32 %v8843, 0.01
      %v8916 = vmul.f32 %v8844, 0.01
      %v8917 = vmul.f32 %v8845, 0.01
      %v8918 = vmul.f32 %v8846, 0.01
      %v8919 = vmul.f32 %v8847, 0.01
      %v8920 = vmul.f32 %v8848, 0.01
      %v8921 = vmul.f32 %v8849, 0.01
      %v8922 = vmul.f32 %v8850, 0.01
      %v8923 = vmul.f32 %v8851, 0.01
      %v8924 = vsel %vm8852, %v8816, %v8888
      %v8925 = vsel %vm8853, %v8817, %v8889
      %v8926 = vsel %vm8854, %v8818, %v8890
      %v8927 = vsel %vm8855, %v8819, %v8891
      %v8928 = vsel %vm8856, %v8820, %v8892
      %v8929 = vsel %vm8857, %v8821, %v8893
      %v8930 = vsel %vm8858, %v8822, %v8894
      %v8931 = vsel %vm8859, %v8823, %v8895
      %v8932 = vsel %vm8860, %v8824, %v8896
      %v8933 = vsel %vm8861, %v8825, %v8897
      %v8934 = vsel %vm8862, %v8826, %v8898
      %v8935 = vsel %vm8863, %v8827, %v8899
      %v8936 = vsel %vm8864, %v8828, %v8900
      %v8937 = vsel %vm8865, %v8829, %v8901
      %v8938 = vsel %vm8866, %v8830, %v8902
      %v8939 = vsel %vm8867, %v8831, %v8903
      %v8940 = vsel %vm8868, %v8832, %v8904
      %v8941 = vsel %vm8869, %v8833, %v8905
      %v8942 = vsel %vm8870, %v8834, %v8906
      %v8943 = vsel %vm8871, %v8835, %v8907
      %v8944 = vsel %vm8872, %v8836, %v8908
      %v8945 = vsel %vm8873, %v8837, %v8909
      %v8946 = vsel %vm8874, %v8838, %v8910
      %v8947 = vsel %vm8875, %v8839, %v8911
      %v8948 = vsel %vm8876, %v8840, %v8912
      %v8949 = vsel %vm8877, %v8841, %v8913
      %v8950 = vsel %vm8878, %v8842, %v8914
      %v8951 = vsel %vm8879, %v8843, %v8915
      %v8952 = vsel %vm8880, %v8844, %v8916
      %v8953 = vsel %vm8881, %v8845, %v8917
      %v8954 = vsel %vm8882, %v8846, %v8918
      %v8955 = vsel %vm8883, %v8847, %v8919
      %v8956 = vsel %vm8884, %v8848, %v8920
      %v8957 = vsel %vm8885, %v8849, %v8921
      %v8958 = vsel %vm8886, %v8850, %v8922
      %v8959 = vsel %vm8887, %v8851, %v8923
      %vm8960 = vcmask 64512
      %8961 = vst.msk [vmem:[%s224] sm:$0xff] %vm8960, %v8924
      %8962 = vst.msk [vmem:[%s224 + $0x8] sm:$0xff] %vm8960, %v8925
      %8963 = vst.msk [vmem:[%s224 + $0x10] sm:$0xff] %vm8960, %v8926
      %8964 = vst.msk [vmem:[%s224 + $0x18] sm:$0xff] %vm8960, %v8927
      %8965 = vst.msk [vmem:[%s224 + $0x20] sm:$0xff] %vm8960, %v8928
      %8966 = vst.msk [vmem:[%s224 + $0x28] sm:$0xff] %vm8960, %v8929
      %8967 = vst.msk [vmem:[%s224 + $0x30] sm:$0xff] %vm8960, %v8930
      %8968 = vst.msk [vmem:[%s224 + $0x38] sm:$0xff] %vm8960, %v8931
      %8969 = vst.msk [vmem:[%s224 + $0x40] sm:$0xff] %vm8960, %v8932
      %8970 = vst.msk [vmem:[%s224 + $0x48] sm:$0xff] %vm8960, %v8933
      %8971 = vst.msk [vmem:[%s224 + $0x50] sm:$0xff] %vm8960, %v8934
      %8972 = vst.msk [vmem:[%s224 + $0x58] sm:$0xff] %vm8960, %v8935
      %8973 = vst.msk [vmem:[%s224 + $0x60] sm:$0xff] %vm8960, %v8936
      %8974 = vst.msk [vmem:[%s224 + $0x68] sm:$0xff] %vm8960, %v8937
      %8975 = vst.msk [vmem:[%s224 + $0x70] sm:$0xff] %vm8960, %v8938
      %8976 = vst.msk [vmem:[%s224 + $0x78] sm:$0xff] %vm8960, %v8939
      %8977 = vst.msk [vmem:[%s224 + $0x80] sm:$0xff] %vm8960, %v8940
      %8978 = vst.msk [vmem:[%s224 + $0x88] sm:$0xff] %vm8960, %v8941
      %8979 = vst.msk [vmem:[%s224 + $0x90] sm:$0xff] %vm8960, %v8942
      %8980 = vst.msk [vmem:[%s224 + $0x98] sm:$0xff] %vm8960, %v8943
      %8981 = vst.msk [vmem:[%s224 + $0xa0] sm:$0xff] %vm8960, %v8944
      %8982 = vst.msk [vmem:[%s224 + $0xa8] sm:$0xff] %vm8960, %v8945
      %8983 = vst.msk [vmem:[%s224 + $0xb0] sm:$0xff] %vm8960, %v8946
      %8984 = vst.msk [vmem:[%s224 + $0xb8] sm:$0xff] %vm8960, %v8947
      %8985 = vst.msk [vmem:[%s224 + $0xc0] sm:$0xff] %vm8960, %v8948
      %8986 = vst.msk [vmem:[%s224 + $0xc8] sm:$0xff] %vm8960, %v8949
      %8987 = vst.msk [vmem:[%s224 + $0xd0] sm:$0xff] %vm8960, %v8950
      %8988 = vst.msk [vmem:[%s224 + $0xd8] sm:$0xff] %vm8960, %v8951
      %8989 = vst.msk [vmem:[%s224 + $0xe0] sm:$0xff] %vm8960, %v8952
      %8990 = vst.msk [vmem:[%s224 + $0xe8] sm:$0xff] %vm8960, %v8953
      %8991 = vst.msk [vmem:[%s224 + $0xf0] sm:$0xff] %vm8960, %v8954
      %8992 = vst.msk [vmem:[%s224 + $0xf8] sm:$0xff] %vm8960, %v8955
      %8993 = vst.msk [vmem:[%s224 + $0x100] sm:$0xff] %vm8960, %v8956
      %8994 = vst.msk [vmem:[%s224 + $0x108] sm:$0xff] %vm8960, %v8957
      %8995 = vst.msk [vmem:[%s224 + $0x110] sm:$0xff] %vm8960, %v8958
      %8996 = vst.msk [vmem:[%s224 + $0x118] sm:$0xff] %vm8960, %v8959
      %p8997 = scmp.lt.s32.totalorder %s16, 1
      %s8998 = scalar_select %p8997, %s16, 1
      %s8999 = smul.addr %s8998, 36
      %s9000 = smul.addr %s8999, 8
      %s9001 = scalar_lea.vmem %s5, %s9000
      // Predicated region
      $region41: #{conv_h_forward.1} parent=39 // pred_check
        %p9002 = pneg %p144
      $region42: #{conv_h_forward.1} parent=39 // pred_check_branch
        %9004 = sbr.rel (%p9002) target = $region44
      $region43: #{conv_h_forward.1} parent=39 // pred_region
        _
      $region44: #{conv_h_forward.1} parent=39 // pred_fallthru
        _
    $region40: #{conv_h_forward.1} parent=5 // pred_fallthru
      _
    %p9005 = scmp.le.s32.totalorder 2, %s11
    // Predicated region
    $region45: #{conv_h_forward.1} parent=5 // pred_check
      %p9006 = pneg %p9005
    $region46: #{conv_h_forward.1} parent=5 // pred_check_branch
      %9008 = sbr.rel (%p9006) target = $region48
    $region47: #{conv_h_forward.1} parent=5 // pred_region
      %s9009 = ssub.s32 %s11, 2
      // Predicated region
      $region49: #{conv_h_forward.1} parent=47 // pred_check
        %p9010 = pneg %p150
      $region50: #{conv_h_forward.1} parent=47 // pred_check_branch
        %9012 = sbr.rel (%p9010) target = $region52
      $region51: #{conv_h_forward.1} parent=47 // pred_region
        %p9013 = scmp.lt.s32.totalorder %s17, 1
        %s9014 = scalar_select %p9013, %s17, 1
        %s9015 = smul.addr %s9014, 36
        %s9016 = smul.addr %s9015, 8
        %s9017 = scalar_lea.vmem %s5, %s9016
      $region52: #{conv_h_forward.1} parent=47 // pred_fallthru
        _
    $region48: #{conv_h_forward.1} parent=5 // pred_fallthru
      _
  $region6: #{conv_h_forward.1} parent=0 // loop_footer
    %s15 = sadd.s32 1, %s11
  $region7: #{conv_h_forward.1} parent=0 // loop_footer_branch
    %10 = sbr.rel target = $region3
  $region8: #{conv_h_forward.1} parent=0 // loop_exit
    _

</llo_original>
